<compile_context>
chip_gen: v7x
topology: tpu7x:2x2x1
jax: 0.10.0
libtpu: 0.0.40
codegen_flags: <defaults>
</compile_context>

<pallas_src>
import functools
import math

import jax
import jax.numpy as jnp
from jax.experimental import pallas as pl
from jax.experimental.pallas import tpu as pltpu

BN_EPS = 1e-5
FUSE_MAX_VMEM = 12 * 1024 * 1024     # single fused conv+BN+ReLU call if it fits
MAX_TILE_LANES = 2048                # lane-tile cap for gridded kernels
TILE_VMEM_BYTES = 8 * 1024 * 1024    # per-call working-set target (v7x-safe)


# ----------------------------------------------------------------------------
# Pallas kernels
# ----------------------------------------------------------------------------
def _conv_bn_relu_fused(patches, w2d, gamma, beta, n_phase, cout):
    """Gridless fused conv-as-matmul + batch-stat BN + ReLU (small/medium layers).

    patches: (CKK, L) bf16, w2d: (n_phase*cout, CKK) bf16, gamma/beta: (cout,1) f32.
    Returns (n_phase*cout, L) bf16.  BN stats per channel over n_phase*L elements.
    """
    CKK, L = patches.shape
    Cp = w2d.shape[0]
    inv_count = 1.0 / float(n_phase * L)

    def kernel(p_ref, w_ref, g_ref, b_ref, o_ref):
        y = jnp.dot(w_ref[...], p_ref[...], preferred_element_type=jnp.float32)
        rs = jnp.sum(y, axis=1, keepdims=True)          # (Cp, 1) row sums
        rq = jnp.sum(y * y, axis=1, keepdims=True)
        s, q = rs[0:cout], rq[0:cout]
        for ph in range(1, n_phase):                    # fold phase rows / channel
            s = s + rs[ph * cout:(ph + 1) * cout]
            q = q + rq[ph * cout:(ph + 1) * cout]
        mean = s * inv_count
        var = jnp.maximum(q * inv_count - mean * mean, 0.0)
        scale = g_ref[...] * jax.lax.rsqrt(var + BN_EPS)
        shift = b_ref[...] - mean * scale
        if n_phase > 1:
            scale = jnp.concatenate([scale] * n_phase, axis=0)
            shift = jnp.concatenate([shift] * n_phase, axis=0)
        o_ref[...] = jnp.maximum(y * scale + shift, 0.0).astype(o_ref.dtype)

    return pl.pallas_call(
        kernel,
        out_shape=jax.ShapeDtypeStruct((Cp, L), jnp.bfloat16),
        in_specs=[pl.BlockSpec(memory_space=pltpu.MemorySpace.VMEM)] * 4,
        out_specs=pl.BlockSpec(memory_space=pltpu.MemorySpace.VMEM),
    )(patches, w2d, gamma, beta)


def _conv_stats_scale_tiled(patches, w2d, gamma, beta, n_phase, cout, tile):
    """Lane-tiled conv-as-matmul; accumulates channel sums in VMEM scratch across
    the grid and finalizes BN scale/shift in-kernel on the last step.

    Returns y (Cp, L) bf16, scale (Cp, 1) f32, shift (Cp, 1) f32.
    """
    CKK, L = patches.shape
    Cp = w2d.shape[0]
    T = L // tile
    inv_count = 1.0 / float(n_phase * L)

    def kernel(p_ref, w_ref, g_ref, b_ref, y_ref, sc_ref, sh_ref, s_acc, q_acc):
        t = pl.program_id(0)

        @pl.when(t == 0)
        def _():
            s_acc[...] = jnp.zeros_like(s_acc)
            q_acc[...] = jnp.zeros_like(q_acc)

        y = jnp.dot(w_ref[...], p_ref[...], preferred_element_type=jnp.float32)
        y_ref[...] = y.astype(y_ref.dtype)
        s_acc[...] += jnp.sum(y, axis=1, keepdims=True)
        q_acc[...] += jnp.sum(y * y, axis=1, keepdims=True)

        @pl.when(t == T - 1)
        def _():
            rs, rq = s_acc[...], q_acc[...]
            s, q = rs[0:cout], rq[0:cout]
            for ph in range(1, n_phase):
                s = s + rs[ph * cout:(ph + 1) * cout]
                q = q + rq[ph * cout:(ph + 1) * cout]
            mean = s * inv_count
            var = jnp.maximum(q * inv_count - mean * mean, 0.0)
            scale = g_ref[...] * jax.lax.rsqrt(var + BN_EPS)
            shift = b_ref[...] - mean * scale
            if n_phase > 1:
                scale = jnp.concatenate([scale] * n_phase, axis=0)
                shift = jnp.concatenate([shift] * n_phase, axis=0)
            sc_ref[...] = scale
            sh_ref[...] = shift

    return pl.pallas_call(
        kernel,
        out_shape=(jax.ShapeDtypeStruct((Cp, L), jnp.bfloat16),
                   jax.ShapeDtypeStruct((Cp, 1), jnp.float32),
                   jax.ShapeDtypeStruct((Cp, 1), jnp.float32)),
        grid_spec=pltpu.PrefetchScalarGridSpec(
            num_scalar_prefetch=0,
            grid=(T,),
            in_specs=[pl.BlockSpec((CKK, tile), lambda t: (0, t)),
                      pl.BlockSpec((Cp, CKK), lambda t: (0, 0)),
                      pl.BlockSpec((cout, 1), lambda t: (0, 0)),
                      pl.BlockSpec((cout, 1), lambda t: (0, 0))],
            out_specs=(pl.BlockSpec((Cp, tile), lambda t: (0, t)),
                       pl.BlockSpec((Cp, 1), lambda t: (0, 0)),
                       pl.BlockSpec((Cp, 1), lambda t: (0, 0))),
            scratch_shapes=[pltpu.VMEM((Cp, 1), jnp.float32),
                            pltpu.VMEM((Cp, 1), jnp.float32)]),
        compiler_params=pltpu.CompilerParams(
            dimension_semantics=("arbitrary",)),
    )(patches, w2d, gamma, beta)


def _bn_relu_tiled(y, scale, shift, tile):
    """Lane-tiled per-channel affine + ReLU, bf16 in / bf16 out."""
    Cp, L = y.shape
    T = L // tile

    def kernel(y_ref, sc_ref, sh_ref, o_ref):
        v = y_ref[...].astype(jnp.float32) * sc_ref[...] + sh_ref[...]
        o_ref[...] = jnp.maximum(v, 0.0).astype(o_ref.dtype)

    return pl.pallas_call(
        kernel,
        out_shape=jax.ShapeDtypeStruct((Cp, L), jnp.bfloat16),
        grid_spec=pltpu.PrefetchScalarGridSpec(
            num_scalar_prefetch=0,
            grid=(T,),
            in_specs=[pl.BlockSpec((Cp, tile), lambda t: (0, t)),
                      pl.BlockSpec((Cp, 1), lambda t: (0, 0)),
                      pl.BlockSpec((Cp, 1), lambda t: (0, 0))],
            out_specs=pl.BlockSpec((Cp, tile), lambda t: (0, t))),
        compiler_params=pltpu.CompilerParams(
            dimension_semantics=("parallel",)),
    )(y, scale, shift)


def _conv_bias_tanh_tiled(patches, w2d, bias, tile):
    """Lane-tiled conv-as-matmul + bias + tanh (final generator layer)."""
    CKK, L = patches.shape
    Cp = w2d.shape[0]
    T = L // tile

    def kernel(p_ref, w_ref, b_ref, o_ref):
        y = jnp.dot(w_ref[...], p_ref[...], preferred_element_type=jnp.float32)
        o_ref[...] = jnp.tanh(y + b_ref[...])

    return pl.pallas_call(
        kernel,
        out_shape=jax.ShapeDtypeStruct((Cp, L), jnp.float32),
        grid_spec=pltpu.PrefetchScalarGridSpec(
            num_scalar_prefetch=0,
            grid=(T,),
            in_specs=[pl.BlockSpec((CKK, tile), lambda t: (0, t)),
                      pl.BlockSpec((Cp, CKK), lambda t: (0, 0)),
                      pl.BlockSpec((Cp, 1), lambda t: (0, 0))],
            out_specs=pl.BlockSpec((Cp, tile), lambda t: (0, t))),
        compiler_params=pltpu.CompilerParams(
            dimension_semantics=("parallel",)),
    )(patches, w2d, bias)


# ----------------------------------------------------------------------------
# JAX glue: patch construction (layout (C, N, H, W), bf16)
# ----------------------------------------------------------------------------
def _zero_insert(x, stride):
    if stride == 1:
        return x
    C, N, H, W = x.shape
    Hu, Wu = (H - 1) * stride + 1, (W - 1) * stride + 1
    up = jnp.zeros((C, N, Hu, Wu), x.dtype)
    return up.at[:, :, ::stride, ::stride].set(x)


def _deconv_patches(x_cnhw, K, stride, padding):
    """Generic zero-insert im2col: (Cin,N,H,W) -> ((K*K*Cin), N*Ho*Wo), rows (kh,kw,cin)."""
    xu = _zero_insert(x_cnhw, stride)
    pad = K - 1 - padding
    xp = jnp.pad(xu, ((0, 0), (0, 0), (pad, pad), (pad, pad)))
    C, N, Hp, Wp = xp.shape
    Ho, Wo = Hp - K + 1, Wp - K + 1
    cols = [xp[:, :, kh:kh + Ho, kw:kw + Wo] for kh in range(K) for kw in range(K)]
    patches = jnp.stack(cols, axis=0).reshape(K * K * C, N * Ho * Wo)
    return patches, Ho, Wo


def _subpixel_patches(x_cnhw):
    """3x3 im2col of the 1-padded, NON-upsampled input (shared by all 4 phases of a
    K=4/s=2/p=1 ConvTranspose).  Rows ordered (dy, dx, cin); lanes (n, h, w)."""
    xp = jnp.pad(x_cnhw, ((0, 0), (0, 0), (1, 1), (1, 1)))
    C, N, Hp, Wp = xp.shape
    H, W = Hp - 2, Wp - 2
    cols = [xp[:, :, dy:dy + H, dx:dx + W] for dy in range(3) for dx in range(3)]
    patches = jnp.stack(cols, axis=0).reshape(9 * C, N * H * W)
    return patches, H, W


def _interleave_phases(y4, cout, N, H, W):
    """(4*cout, N*H*W) phase-major output -> (cout, N, 2H, 2W)."""
    y = y4.reshape(2, 2, cout, N, H, W)           # (py, px, cout, n, h, w)
    y = y.transpose(2, 3, 4, 0, 5, 1)             # (cout, n, h, py, w, px)
    return y.reshape(cout, N, 2 * H, 2 * W)


# ----------------------------------------------------------------------------
# Weight preprocessing (done ONCE at init time)
# ----------------------------------------------------------------------------
def _flatten_deconv_weight(w_t):
    """ConvTranspose2d weight (Cin,Cout,K,K) -> (Cout, K*K*Cin) for the equivalent
    stride-1 conv with flipped kernel (matches _deconv_patches row order)."""
    w_conv = jnp.flip(w_t, axis=(2, 3)).transpose(1, 0, 2, 3)   # (Cout,Cin,K,K)
    Cout, Cin, K, _ = w_conv.shape
    return w_conv.transpose(0, 2, 3, 1).reshape(Cout, K * K * Cin)


def _subpixel_weight(w_t):
    """ConvTranspose2d (Cin,Cout,4,4), s=2, p=1 -> combined phase weight
    (4*Cout, 9*Cin); rows (py,px,cout), contraction (dy,dx,cin)."""
    w_flip = jnp.flip(w_t, axis=(2, 3)).transpose(1, 0, 2, 3)   # (Cout,Cin,4,4)
    Cout, Cin = w_flip.shape[0], w_flip.shape[1]
    W = jnp.zeros((2, 2, Cout, 3, 3, Cin), w_t.dtype)
    for py in range(2):
        for px in range(2):
            for dy in (py, py + 1):
                for dx in (px, px + 1):
                    W = W.at[py, px, :, dy, dx, :].set(
                        w_flip[:, :, 2 * dy - py, 2 * dx - px])
    return W.reshape(4 * Cout, 9 * Cin)


def _pad_rows_to_8(*arrays):
    rows = arrays[0].shape[0]
    rp = ((rows + 7) // 8) * 8
    if rp == rows:
        return tuple(arrays)
    return tuple(jnp.pad(a, ((0, rp - rows),) + ((0, 0),) * (a.ndim - 1))
                 for a in arrays)


def _pick_tile(L, CKK, Cp):
    """Largest multiple-of-128 lane tile dividing L within a VMEM budget; prefers
    >= 2 tiles so v7x's second TensorCore gets work."""
    if L <= 128:
        return L
    per_lane = 4 * CKK + 12 * Cp          # bytes/lane (double-buffered estimate)
    cap = max(128, (TILE_VMEM_BYTES // max(per_lane, 1)) // 128 * 128)
    t = min(MAX_TILE_LANES, cap, (L // 128) * 128)
    t = max(t, 128)
    while t > 128 and L % t != 0:
        t -= 128
    if L % t != 0:
        return L                          # full-extent fallback (T = 1)
    if t == L and L % 256 == 0:
        t = L // 2                        # ensure T >= 2 when cheap to do so
    return t


# ----------------------------------------------------------------------------
# Layers
# ----------------------------------------------------------------------------
def deconv_bn_relu_layer(h, blk, lc):
    K, stride, padding, cout, n_phase = lc
    N = h.shape[1]
    if n_phase == 4:
        patches, Hph, Wph = _subpixel_patches(h)
    else:
        patches, Hph, Wph = _deconv_patches(h, K, stride, padding)
    CKK, L = patches.shape
    w2d, g, b = blk["w2d"], blk["gamma"], blk["beta"]
    Cp = w2d.shape[0]

    vmem_est = 2 * CKK * L + 2 * Cp * CKK + 6 * Cp * L
    if vmem_est <= FUSE_MAX_VMEM:
        out = _conv_bn_relu_fused(patches, w2d, g, b, n_phase, cout)
    else:
        tile = _pick_tile(L, CKK, Cp)
        y, scale, shift = _conv_stats_scale_tiled(patches, w2d, g, b,
                                                  n_phase, cout, tile)
        out = _bn_relu_tiled(y, scale, shift, tile)

    if n_phase == 4:
        return _interleave_phases(out[:4 * cout], cout, N, Hph, Wph)
    return out[:cout].reshape(cout, N, Hph, Wph)


def deconv_bias_tanh_layer(h, fin, lc):
    K, stride, padding, cout, n_phase = lc
    N = h.shape[1]
    if n_phase == 4:
        patches, Hph, Wph = _subpixel_patches(h)
    else:
        patches, Hph, Wph = _deconv_patches(h, K, stride, padding)
    CKK, L = patches.shape
    w2d, b2d = fin["w2d"], fin["b2d"]

    tile = _pick_tile(L, CKK, w2d.shape[0])
    out = _conv_bias_tanh_tiled(patches, w2d, b2d, tile)

    if n_phase == 4:
        return _interleave_phases(out[:4 * cout], cout, N, Hph, Wph)
    return out[:cout].reshape(cout, N, Hph, Wph)


# ----------------------------------------------------------------------------
# Generator: parameter init + forward
# ----------------------------------------------------------------------------
def pack_params(raw, cfg):
    """Precompute flattened / phase-combined / padded bf16 weights once."""
    params = {"blocks": []}
    for blk, (K, s, p, cout, n_phase) in zip(raw["blocks"], cfg[:-1]):
        w2d = _subpixel_weight(blk["w"]) if n_phase == 4 else _flatten_deconv_weight(blk["w"])
        params["blocks"].append({
            "w2d": w2d.astype(jnp.bfloat16),
            "gamma": blk["gamma"].reshape(-1, 1).astype(jnp.float32),
            "beta": blk["beta"].reshape(-1, 1).astype(jnp.float32),
        })
    K, s, p, cout, n_phase = cfg[-1]
    if n_phase == 4:
        w2d = _subpixel_weight(raw["final"]["w"])
        b2d = jnp.broadcast_to(raw["final"]["b"].reshape(1, cout),
                               (4, cout)).reshape(4 * cout, 1)
    else:
        w2d = _flatten_deconv_weight(raw["final"]["w"])
        b2d = raw["final"]["b"].reshape(cout, 1)
    w2d, b2d = _pad_rows_to_8(w2d, b2d.astype(jnp.float32))
    params["final"] = {"w2d": w2d.astype(jnp.bfloat16), "b2d": b2d}
    return params


def init_generator_params(key, z_dim, channels_img, features_g):
    layer_dims = [
        (z_dim, features_g * 16, 4, 1, 0),
        (features_g * 16, features_g * 8, 4, 2, 1),
        (features_g * 8, features_g * 4, 4, 2, 1),
        (features_g * 4, features_g * 2, 4, 2, 1),
        (features_g * 2, channels_img, 4, 2, 1),
    ]
    cfg = tuple((K, s, p, cout, 4 if (K, s, p) == (4, 2, 1) else 1)
                for (_, cout, K, s, p) in layer_dims)

    raw = {"blocks": []}
    keys = jax.random.split(key, len(layer_dims) + 1)
    for i, (cin, cout, K, s, p) in enumerate(layer_dims[:-1]):
        bound = 1.0 / math.sqrt(cin * K * K)
        w = jax.random.uniform(keys[i], (cin, cout, K, K), jnp.float32, -bound, bound)
        raw["blocks"].append({"w": w,
                              "gamma": jnp.ones((cout,), jnp.float32),
                              "beta": jnp.zeros((cout,), jnp.float32)})
    cin, cout, K, s, p = layer_dims[-1]
    bound = 1.0 / math.sqrt(cin * K * K)
    raw["final"] = {
        "w": jax.random.uniform(keys[-2], (cin, cout, K, K), jnp.float32, -bound, bound),
        "b": jax.random.uniform(keys[-1], (cout,), jnp.float32, -bound, bound),
    }
    return pack_params(raw, cfg), cfg, raw


@functools.partial(jax.jit, static_argnames="cfg")
def generator_forward(params, x, cfg):
    # NCHW -> internal CNHW layout (batch fused into the lane axis), bf16 off-chip.
    h = jnp.transpose(x, (1, 0, 2, 3)).astype(jnp.bfloat16)
    for blk, lc in zip(params["blocks"], cfg[:-1]):
        h = deconv_bn_relu_layer(h, blk, lc)
    h = deconv_bias_tanh_layer(h, params["final"], cfg[-1])
    return jnp.transpose(h, (1, 0, 2, 3)).astype(jnp.float32)   # back to NCHW


# ----------------------------------------------------------------------------
# Pure-JAX reference (training-mode BatchNorm, matching the kernel path)
# ----------------------------------------------------------------------------
def _ref_deconv(x_nchw, w_t, stride, padding):
    K = w_t.shape[2]
    w_rot = jnp.flip(w_t, axis=(2, 3)).transpose(1, 0, 2, 3)   # (Cout,Cin,K,K)
    pad = K - 1 - padding
    return jax.lax.conv_general_dilated(
        x_nchw, w_rot, window_strides=(1, 1),
        padding=[(pad, pad), (pad, pad)], lhs_dilation=(stride, stride),
        dimension_numbers=("NCHW", "OIHW", "NCHW"))


def reference_forward(raw, x, cfg):
    h = x
    for blk, (K, s, p, _, _) in zip(raw["blocks"], cfg[:-1]):
        h = _ref_deconv(h, blk["w"], s, p)
        mean = jnp.mean(h, axis=(0, 2, 3), keepdims=True)
        var = jnp.mean((h - mean) ** 2, axis=(0, 2, 3), keepdims=True)
        h = (h - mean) * jax.lax.rsqrt(var + BN_EPS)
        h = h * blk["gamma"].reshape(1, -1, 1, 1) + blk["beta"].reshape(1, -1, 1, 1)
        h = jnp.maximum(h, 0.0)
    K, s, p, _, _ = cfg[-1]
    h = _ref_deconv(h, raw["final"]["w"], s, p) + raw["final"]["b"].reshape(1, -1, 1, 1)
    return jnp.tanh(h)


if __name__ == "__main__":
    # small shapes consistent with the module: z_dim=16, features_g=8, img channels=3
    z_dim, channels_img, features_g = 16, 3, 8
    batch = 2

    key = jax.random.PRNGKey(0)
    kp, kx = jax.random.split(key)
    params, cfg, raw = init_generator_params(kp, z_dim, channels_img, features_g)
    x = jax.random.normal(kx, (batch, z_dim, 1, 1), jnp.float32)  # latent noise

    y = generator_forward(params, x, cfg)
    y = jax.block_until_ready(y)

    assert y.shape == (batch, channels_img, 64, 64), y.shape
    assert bool(jnp.all(jnp.isfinite(y)))
    assert float(jnp.max(jnp.abs(y))) <= 1.0 + 1e-6   # tanh output range

    # loose check against a pure-JAX f32 reference (kernel path uses bf16 operands)
    y_ref = reference_forward(raw, x, cfg)
    max_err = float(jnp.max(jnp.abs(y - y_ref)))
    assert max_err < 0.1, f"mismatch vs reference: {max_err}"

    print("KERNEL_OK")
</pallas_src>

<mosaic_0001>
module attributes {stable_mosaic.version = 11 : i64} {
  func.func @kernel(%arg0: memref<256x32xbf16, #tpu.memory_space<vmem>>, %arg1: memref<128x256xbf16, #tpu.memory_space<vmem>>, %arg2: memref<128x1xf32, #tpu.memory_space<vmem>>, %arg3: memref<128x1xf32, #tpu.memory_space<vmem>>, %arg4: memref<128x32xbf16, #tpu.memory_space<vmem>>) attributes {dimension_semantics = [], scalar_prefetch = 0 : i64, scratch_operands = 0 : i64, tpu.core_type = #tpu.core_type<tc>} {
    %c0 = arith.constant 0 : index
    %c0_0 = arith.constant 0 : index
    %0 = vector.load %arg1[%c0, %c0_0] : memref<128x256xbf16, #tpu.memory_space<vmem>>, vector<128x256xbf16>
    %c0_1 = arith.constant 0 : index
    %c0_2 = arith.constant 0 : index
    %1 = vector.load %arg0[%c0_1, %c0_2] : memref<256x32xbf16, #tpu.memory_space<vmem>>, vector<256x32xbf16>
    %cst = arith.constant dense<0.000000e+00> : vector<128x32xf32>
    %2 = tpu.matmul %0, %1, %cst {dimension_numbers = #tpu.dot_dimension_numbers<[1], [0], [0], [1], [0, 0, 1, 1], [], []>} : vector<128x256xbf16>, vector<256x32xbf16>, vector<128x32xf32> -> vector<128x32xf32>
    %cst_3 = arith.constant dense<0.000000e+00> : vector<128xf32>
    %3 = vector.multi_reduction <add>, %2, %cst_3 [1] : vector<128x32xf32> to vector<128xf32>
    %4 = vector.shape_cast %3 : vector<128xf32> to vector<128x1xf32>
    %5 = arith.mulf %2, %2 : vector<128x32xf32>
    %cst_4 = arith.constant dense<0.000000e+00> : vector<128xf32>
    %6 = vector.multi_reduction <add>, %5, %cst_4 [1] : vector<128x32xf32> to vector<128xf32>
    %7 = vector.shape_cast %6 : vector<128xf32> to vector<128x1xf32>
    %cst_5 = arith.constant 3.125000e-02 : f32
    %8 = vector.broadcast %cst_5 : f32 to vector<128x1xf32>
    %9 = arith.mulf %4, %8 : vector<128x1xf32>
    %cst_6 = arith.constant 3.125000e-02 : f32
    %10 = vector.broadcast %cst_6 : f32 to vector<128x1xf32>
    %11 = arith.mulf %7, %10 : vector<128x1xf32>
    %12 = arith.mulf %9, %9 : vector<128x1xf32>
    %13 = arith.subf %11, %12 : vector<128x1xf32>
    %cst_7 = arith.constant 0.000000e+00 : f32
    %14 = vector.broadcast %cst_7 : f32 to vector<128x1xf32>
    %15 = arith.maximumf %13, %14 : vector<128x1xf32>
    %c0_8 = arith.constant 0 : index
    %c0_9 = arith.constant 0 : index
    %16 = vector.load %arg2[%c0_8, %c0_9] : memref<128x1xf32, #tpu.memory_space<vmem>>, vector<128x1xf32>
    %cst_10 = arith.constant 9.99999974E-6 : f32
    %17 = vector.broadcast %cst_10 : f32 to vector<128x1xf32>
    %18 = arith.addf %15, %17 : vector<128x1xf32>
    %19 = math.rsqrt %18 : vector<128x1xf32>
    %20 = arith.mulf %16, %19 : vector<128x1xf32>
    %c0_11 = arith.constant 0 : index
    %c0_12 = arith.constant 0 : index
    %21 = vector.load %arg3[%c0_11, %c0_12] : memref<128x1xf32, #tpu.memory_space<vmem>>, vector<128x1xf32>
    %22 = arith.mulf %9, %20 : vector<128x1xf32>
    %23 = arith.subf %21, %22 : vector<128x1xf32>
    %24 = vector.broadcast %20 : vector<128x1xf32> to vector<128x32xf32>
    %25 = arith.mulf %2, %24 : vector<128x32xf32>
    %26 = vector.broadcast %23 : vector<128x1xf32> to vector<128x32xf32>
    %27 = arith.addf %25, %26 : vector<128x32xf32>
    %cst_13 = arith.constant 0.000000e+00 : f32
    %28 = vector.broadcast %cst_13 : f32 to vector<128x32xf32>
    %29 = arith.maximumf %27, %28 : vector<128x32xf32>
    %30 = arith.truncf %29 : vector<128x32xf32> to vector<128x32xbf16>
    %c0_14 = arith.constant 0 : index
    %c0_15 = arith.constant 0 : index
    %31 = vector.load %arg4[%c0_14, %c0_15] : memref<128x32xbf16, #tpu.memory_space<vmem>>, vector<128x32xbf16>
    tpu.vector_store %arg4[%c0_14, %c0_15], %30 {strides = array<i32>} : memref<128x32xbf16, #tpu.memory_space<vmem>>, vector<128x32xbf16>,
    return
  }
}

module attributes {stable_mosaic.version = 11 : i64} {
  func.func @kernel(%arg0: memref<1152x32xbf16, #tpu.memory_space<vmem>>, %arg1: memref<256x1152xbf16, #tpu.memory_space<vmem>>, %arg2: memref<64x1xf32, #tpu.memory_space<vmem>>, %arg3: memref<64x1xf32, #tpu.memory_space<vmem>>, %arg4: memref<256x32xbf16, #tpu.memory_space<vmem>>) attributes {dimension_semantics = [], scalar_prefetch = 0 : i64, scratch_operands = 0 : i64, tpu.core_type = #tpu.core_type<tc>} {
    %c0 = arith.constant 0 : index
    %c0_0 = arith.constant 0 : index
    %0 = vector.load %arg1[%c0, %c0_0] : memref<256x1152xbf16, #tpu.memory_space<vmem>>, vector<256x1152xbf16>
    %c0_1 = arith.constant 0 : index
    %c0_2 = arith.constant 0 : index
    %1 = vector.load %arg0[%c0_1, %c0_2] : memref<1152x32xbf16, #tpu.memory_space<vmem>>, vector<1152x32xbf16>
    %cst = arith.constant dense<0.000000e+00> : vector<256x32xf32>
    %2 = tpu.matmul %0, %1, %cst {dimension_numbers = #tpu.dot_dimension_numbers<[1], [0], [0], [1], [0, 0, 1, 1], [], []>} : vector<256x1152xbf16>, vector<1152x32xbf16>, vector<256x32xf32> -> vector<256x32xf32>
    %cst_3 = arith.constant dense<0.000000e+00> : vector<256xf32>
    %3 = vector.multi_reduction <add>, %2, %cst_3 [1] : vector<256x32xf32> to vector<256xf32>
    %4 = vector.shape_cast %3 : vector<256xf32> to vector<256x1xf32>
    %5 = arith.mulf %2, %2 : vector<256x32xf32>
    %cst_4 = arith.constant dense<0.000000e+00> : vector<256xf32>
    %6 = vector.multi_reduction <add>, %5, %cst_4 [1] : vector<256x32xf32> to vector<256xf32>
    %7 = vector.shape_cast %6 : vector<256xf32> to vector<256x1xf32>
    %8 = vector.extract_strided_slice %4 {offsets = [0, 0], sizes = [64, 1], strides = [1, 1]} : vector<256x1xf32> to vector<64x1xf32>
    %9 = vector.extract_strided_slice %7 {offsets = [0, 0], sizes = [64, 1], strides = [1, 1]} : vector<256x1xf32> to vector<64x1xf32>
    %10 = vector.extract_strided_slice %4 {offsets = [64, 0], sizes = [64, 1], strides = [1, 1]} : vector<256x1xf32> to vector<64x1xf32>
    %11 = arith.addf %8, %10 : vector<64x1xf32>
    %12 = vector.extract_strided_slice %7 {offsets = [64, 0], sizes = [64, 1], strides = [1, 1]} : vector<256x1xf32> to vector<64x1xf32>
    %13 = arith.addf %9, %12 : vector<64x1xf32>
    %14 = vector.extract_strided_slice %4 {offsets = [128, 0], sizes = [64, 1], strides = [1, 1]} : vector<256x1xf32> to vector<64x1xf32>
    %15 = arith.addf %11, %14 : vector<64x1xf32>
    %16 = vector.extract_strided_slice %7 {offsets = [128, 0], sizes = [64, 1], strides = [1, 1]} : vector<256x1xf32> to vector<64x1xf32>
    %17 = arith.addf %13, %16 : vector<64x1xf32>
    %18 = vector.extract_strided_slice %4 {offsets = [192, 0], sizes = [64, 1], strides = [1, 1]} : vector<256x1xf32> to vector<64x1xf32>
    %19 = arith.addf %15, %18 : vector<64x1xf32>
    %20 = vector.extract_strided_slice %7 {offsets = [192, 0], sizes = [64, 1], strides = [1, 1]} : vector<256x1xf32> to vector<64x1xf32>
    %21 = arith.addf %17, %20 : vector<64x1xf32>
    %cst_5 = arith.constant 7.812500e-03 : f32
    %22 = vector.broadcast %cst_5 : f32 to vector<64x1xf32>
    %23 = arith.mulf %19, %22 : vector<64x1xf32>
    %cst_6 = arith.constant 7.812500e-03 : f32
    %24 = vector.broadcast %cst_6 : f32 to vector<64x1xf32>
    %25 = arith.mulf %21, %24 : vector<64x1xf32>
    %26 = arith.mulf %23, %23 : vector<64x1xf32>
    %27 = arith.subf %25, %26 : vector<64x1xf32>
    %cst_7 = arith.constant 0.000000e+00 : f32
    %28 = vector.broadcast %cst_7 : f32 to vector<64x1xf32>
    %29 = arith.maximumf %27, %28 : vector<64x1xf32>
    %c0_8 = arith.constant 0 : index
    %c0_9 = arith.constant 0 : index
    %30 = vector.load %arg2[%c0_8, %c0_9] : memref<64x1xf32, #tpu.memory_space<vmem>>, vector<64x1xf32>
    %cst_10 = arith.constant 9.99999974E-6 : f32
    %31 = vector.broadcast %cst_10 : f32 to vector<64x1xf32>
    %32 = arith.addf %29, %31 : vector<64x1xf32>
    %33 = math.rsqrt %32 : vector<64x1xf32>
    %34 = arith.mulf %30, %33 : vector<64x1xf32>
    %c0_11 = arith.constant 0 : index
    %c0_12 = arith.constant 0 : index
    %35 = vector.load %arg3[%c0_11, %c0_12] : memref<64x1xf32, #tpu.memory_space<vmem>>, vector<64x1xf32>
    %36 = arith.mulf %23, %34 : vector<64x1xf32>
    %37 = arith.subf %35, %36 : vector<64x1xf32>
    %38 = tpu.concatenate %34, %34, %34, %34 in 0 : vector<64x1xf32>, vector<64x1xf32>, vector<64x1xf32>, vector<64x1xf32> -> vector<256x1xf32>
    %39 = tpu.concatenate %37, %37, %37, %37 in 0 : vector<64x1xf32>, vector<64x1xf32>, vector<64x1xf32>, vector<64x1xf32> -> vector<256x1xf32>
    %40 = vector.broadcast %38 : vector<256x1xf32> to vector<256x32xf32>
    %41 = arith.mulf %2, %40 : vector<256x32xf32>
    %42 = vector.broadcast %39 : vector<256x1xf32> to vector<256x32xf32>
    %43 = arith.addf %41, %42 : vector<256x32xf32>
    %cst_13 = arith.constant 0.000000e+00 : f32
    %44 = vector.broadcast %cst_13 : f32 to vector<256x32xf32>
    %45 = arith.maximumf %43, %44 : vector<256x32xf32>
    %46 = arith.truncf %45 : vector<256x32xf32> to vector<256x32xbf16>
    %c0_14 = arith.constant 0 : index
    %c0_15 = arith.constant 0 : index
    %47 = vector.load %arg4[%c0_14, %c0_15] : memref<256x32xbf16, #tpu.memory_space<vmem>>, vector<256x32xbf16>
    tpu.vector_store %arg4[%c0_14, %c0_15], %46 {strides = array<i32>} : memref<256x32xbf16, #tpu.memory_space<vmem>>, vector<256x32xbf16>,
    return
  }
}

module attributes {stable_mosaic.version = 11 : i64} {
  func.func @kernel(%arg0: memref<576x128xbf16, #tpu.memory_space<vmem>>, %arg1: memref<128x576xbf16, #tpu.memory_space<vmem>>, %arg2: memref<32x1xf32, #tpu.memory_space<vmem>>, %arg3: memref<32x1xf32, #tpu.memory_space<vmem>>, %arg4: memref<128x128xbf16, #tpu.memory_space<vmem>>) attributes {dimension_semantics = [], scalar_prefetch = 0 : i64, scratch_operands = 0 : i64, tpu.core_type = #tpu.core_type<tc>} {
    %c0 = arith.constant 0 : index
    %c0_0 = arith.constant 0 : index
    %0 = vector.load %arg1[%c0, %c0_0] : memref<128x576xbf16, #tpu.memory_space<vmem>>, vector<128x576xbf16>
    %c0_1 = arith.constant 0 : index
    %c0_2 = arith.constant 0 : index
    %1 = vector.load %arg0[%c0_1, %c0_2] : memref<576x128xbf16, #tpu.memory_space<vmem>>, vector<576x128xbf16>
    %cst = arith.constant dense<0.000000e+00> : vector<128x128xf32>
    %2 = tpu.matmul %0, %1, %cst {dimension_numbers = #tpu.dot_dimension_numbers<[1], [0], [0], [1], [0, 0, 1, 1], [], []>} : vector<128x576xbf16>, vector<576x128xbf16>, vector<128x128xf32> -> vector<128x128xf32>
    %cst_3 = arith.constant dense<0.000000e+00> : vector<128xf32>
    %3 = vector.multi_reduction <add>, %2, %cst_3 [1] : vector<128x128xf32> to vector<128xf32>
    %4 = vector.shape_cast %3 : vector<128xf32> to vector<128x1xf32>
    %5 = arith.mulf %2, %2 : vector<128x128xf32>
    %cst_4 = arith.constant dense<0.000000e+00> : vector<128xf32>
    %6 = vector.multi_reduction <add>, %5, %cst_4 [1] : vector<128x128xf32> to vector<128xf32>
    %7 = vector.shape_cast %6 : vector<128xf32> to vector<128x1xf32>
    %8 = vector.extract_strided_slice %4 {offsets = [0, 0], sizes = [32, 1], strides = [1, 1]} : vector<128x1xf32> to vector<32x1xf32>
    %9 = vector.extract_strided_slice %7 {offsets = [0, 0], sizes = [32, 1], strides = [1, 1]} : vector<128x1xf32> to vector<32x1xf32>
    %10 = vector.extract_strided_slice %4 {offsets = [32, 0], sizes = [32, 1], strides = [1, 1]} : vector<128x1xf32> to vector<32x1xf32>
    %11 = arith.addf %8, %10 : vector<32x1xf32>
    %12 = vector.extract_strided_slice %7 {offsets = [32, 0], sizes = [32, 1], strides = [1, 1]} : vector<128x1xf32> to vector<32x1xf32>
    %13 = arith.addf %9, %12 : vector<32x1xf32>
    %14 = vector.extract_strided_slice %4 {offsets = [64, 0], sizes = [32, 1], strides = [1, 1]} : vector<128x1xf32> to vector<32x1xf32>
    %15 = arith.addf %11, %14 : vector<32x1xf32>
    %16 = vector.extract_strided_slice %7 {offsets = [64, 0], sizes = [32, 1], strides = [1, 1]} : vector<128x1xf32> to vector<32x1xf32>
    %17 = arith.addf %13, %16 : vector<32x1xf32>
    %18 = vector.extract_strided_slice %4 {offsets = [96, 0], sizes = [32, 1], strides = [1, 1]} : vector<128x1xf32> to vector<32x1xf32>
    %19 = arith.addf %15, %18 : vector<32x1xf32>
    %20 = vector.extract_strided_slice %7 {offsets = [96, 0], sizes = [32, 1], strides = [1, 1]} : vector<128x1xf32> to vector<32x1xf32>
    %21 = arith.addf %17, %20 : vector<32x1xf32>
    %cst_5 = arith.constant 0.001953125 : f32
    %22 = vector.broadcast %cst_5 : f32 to vector<32x1xf32>
    %23 = arith.mulf %19, %22 : vector<32x1xf32>
    %cst_6 = arith.constant 0.001953125 : f32
    %24 = vector.broadcast %cst_6 : f32 to vector<32x1xf32>
    %25 = arith.mulf %21, %24 : vector<32x1xf32>
    %26 = arith.mulf %23, %23 : vector<32x1xf32>
    %27 = arith.subf %25, %26 : vector<32x1xf32>
    %cst_7 = arith.constant 0.000000e+00 : f32
    %28 = vector.broadcast %cst_7 : f32 to vector<32x1xf32>
    %29 = arith.maximumf %27, %28 : vector<32x1xf32>
    %c0_8 = arith.constant 0 : index
    %c0_9 = arith.constant 0 : index
    %30 = vector.load %arg2[%c0_8, %c0_9] : memref<32x1xf32, #tpu.memory_space<vmem>>, vector<32x1xf32>
    %cst_10 = arith.constant 9.99999974E-6 : f32
    %31 = vector.broadcast %cst_10 : f32 to vector<32x1xf32>
    %32 = arith.addf %29, %31 : vector<32x1xf32>
    %33 = math.rsqrt %32 : vector<32x1xf32>
    %34 = arith.mulf %30, %33 : vector<32x1xf32>
    %c0_11 = arith.constant 0 : index
    %c0_12 = arith.constant 0 : index
    %35 = vector.load %arg3[%c0_11, %c0_12] : memref<32x1xf32, #tpu.memory_space<vmem>>, vector<32x1xf32>
    %36 = arith.mulf %23, %34 : vector<32x1xf32>
    %37 = arith.subf %35, %36 : vector<32x1xf32>
    %38 = tpu.concatenate %34, %34, %34, %34 in 0 : vector<32x1xf32>, vector<32x1xf32>, vector<32x1xf32>, vector<32x1xf32> -> vector<128x1xf32>
    %39 = tpu.concatenate %37, %37, %37, %37 in 0 : vector<32x1xf32>, vector<32x1xf32>, vector<32x1xf32>, vector<32x1xf32> -> vector<128x1xf32>
    %40 = vector.broadcast %38 : vector<128x1xf32> to vector<128x128xf32>
    %41 = arith.mulf %2, %40 : vector<128x128xf32>
    %42 = vector.broadcast %39 : vector<128x1xf32> to vector<128x128xf32>
    %43 = arith.addf %41, %42 : vector<128x128xf32>
    %cst_13 = arith.constant 0.000000e+00 : f32
    %44 = vector.broadcast %cst_13 : f32 to vector<128x128xf32>
    %45 = arith.maximumf %43, %44 : vector<128x128xf32>
    %46 = arith.truncf %45 : vector<128x128xf32> to vector<128x128xbf16>
    %c0_14 = arith.constant 0 : index
    %c0_15 = arith.constant 0 : index
    %47 = vector.load %arg4[%c0_14, %c0_15] : memref<128x128xbf16, #tpu.memory_space<vmem>>, vector<128x128xbf16>
    tpu.vector_store %arg4[%c0_14, %c0_15], %46 {strides = array<i32>} : memref<128x128xbf16, #tpu.memory_space<vmem>>, vector<128x128xbf16>,
    return
  }
}

module attributes {stable_mosaic.version = 11 : i64} {
  func.func @kernel(%arg0: memref<288x512xbf16, #tpu.memory_space<vmem>>, %arg1: memref<64x288xbf16, #tpu.memory_space<vmem>>, %arg2: memref<16x1xf32, #tpu.memory_space<vmem>>, %arg3: memref<16x1xf32, #tpu.memory_space<vmem>>, %arg4: memref<64x512xbf16, #tpu.memory_space<vmem>>) attributes {dimension_semantics = [], scalar_prefetch = 0 : i64, scratch_operands = 0 : i64, tpu.core_type = #tpu.core_type<tc>} {
    %c0 = arith.constant 0 : index
    %c0_0 = arith.constant 0 : index
    %0 = vector.load %arg1[%c0, %c0_0] : memref<64x288xbf16, #tpu.memory_space<vmem>>, vector<64x288xbf16>
    %c0_1 = arith.constant 0 : index
    %c0_2 = arith.constant 0 : index
    %1 = vector.load %arg0[%c0_1, %c0_2] : memref<288x512xbf16, #tpu.memory_space<vmem>>, vector<288x512xbf16>
    %cst = arith.constant dense<0.000000e+00> : vector<64x512xf32>
    %2 = tpu.matmul %0, %1, %cst {dimension_numbers = #tpu.dot_dimension_numbers<[1], [0], [0], [1], [0, 0, 1, 1], [], []>} : vector<64x288xbf16>, vector<288x512xbf16>, vector<64x512xf32> -> vector<64x512xf32>
    %cst_3 = arith.constant dense<0.000000e+00> : vector<64xf32>
    %3 = vector.multi_reduction <add>, %2, %cst_3 [1] : vector<64x512xf32> to vector<64xf32>
    %4 = vector.shape_cast %3 : vector<64xf32> to vector<64x1xf32>
    %5 = arith.mulf %2, %2 : vector<64x512xf32>
    %cst_4 = arith.constant dense<0.000000e+00> : vector<64xf32>
    %6 = vector.multi_reduction <add>, %5, %cst_4 [1] : vector<64x512xf32> to vector<64xf32>
    %7 = vector.shape_cast %6 : vector<64xf32> to vector<64x1xf32>
    %8 = vector.extract_strided_slice %4 {offsets = [0, 0], sizes = [16, 1], strides = [1, 1]} : vector<64x1xf32> to vector<16x1xf32>
    %9 = vector.extract_strided_slice %7 {offsets = [0, 0], sizes = [16, 1], strides = [1, 1]} : vector<64x1xf32> to vector<16x1xf32>
    %10 = vector.extract_strided_slice %4 {offsets = [16, 0], sizes = [16, 1], strides = [1, 1]} : vector<64x1xf32> to vector<16x1xf32>
    %11 = arith.addf %8, %10 : vector<16x1xf32>
    %12 = vector.extract_strided_slice %7 {offsets = [16, 0], sizes = [16, 1], strides = [1, 1]} : vector<64x1xf32> to vector<16x1xf32>
    %13 = arith.addf %9, %12 : vector<16x1xf32>
    %14 = vector.extract_strided_slice %4 {offsets = [32, 0], sizes = [16, 1], strides = [1, 1]} : vector<64x1xf32> to vector<16x1xf32>
    %15 = arith.addf %11, %14 : vector<16x1xf32>
    %16 = vector.extract_strided_slice %7 {offsets = [32, 0], sizes = [16, 1], strides = [1, 1]} : vector<64x1xf32> to vector<16x1xf32>
    %17 = arith.addf %13, %16 : vector<16x1xf32>
    %18 = vector.extract_strided_slice %4 {offsets = [48, 0], sizes = [16, 1], strides = [1, 1]} : vector<64x1xf32> to vector<16x1xf32>
    %19 = arith.addf %15, %18 : vector<16x1xf32>
    %20 = vector.extract_strided_slice %7 {offsets = [48, 0], sizes = [16, 1], strides = [1, 1]} : vector<64x1xf32> to vector<16x1xf32>
    %21 = arith.addf %17, %20 : vector<16x1xf32>
    %cst_5 = arith.constant 4.8828125E-4 : f32
    %22 = vector.broadcast %cst_5 : f32 to vector<16x1xf32>
    %23 = arith.mulf %19, %22 : vector<16x1xf32>
    %cst_6 = arith.constant 4.8828125E-4 : f32
    %24 = vector.broadcast %cst_6 : f32 to vector<16x1xf32>
    %25 = arith.mulf %21, %24 : vector<16x1xf32>
    %26 = arith.mulf %23, %23 : vector<16x1xf32>
    %27 = arith.subf %25, %26 : vector<16x1xf32>
    %cst_7 = arith.constant 0.000000e+00 : f32
    %28 = vector.broadcast %cst_7 : f32 to vector<16x1xf32>
    %29 = arith.maximumf %27, %28 : vector<16x1xf32>
    %c0_8 = arith.constant 0 : index
    %c0_9 = arith.constant 0 : index
    %30 = vector.load %arg2[%c0_8, %c0_9] : memref<16x1xf32, #tpu.memory_space<vmem>>, vector<16x1xf32>
    %cst_10 = arith.constant 9.99999974E-6 : f32
    %31 = vector.broadcast %cst_10 : f32 to vector<16x1xf32>
    %32 = arith.addf %29, %31 : vector<16x1xf32>
    %33 = math.rsqrt %32 : vector<16x1xf32>
    %34 = arith.mulf %30, %33 : vector<16x1xf32>
    %c0_11 = arith.constant 0 : index
    %c0_12 = arith.constant 0 : index
    %35 = vector.load %arg3[%c0_11, %c0_12] : memref<16x1xf32, #tpu.memory_space<vmem>>, vector<16x1xf32>
    %36 = arith.mulf %23, %34 : vector<16x1xf32>
    %37 = arith.subf %35, %36 : vector<16x1xf32>
    %38 = tpu.concatenate %34, %34, %34, %34 in 0 : vector<16x1xf32>, vector<16x1xf32>, vector<16x1xf32>, vector<16x1xf32> -> vector<64x1xf32>
    %39 = tpu.concatenate %37, %37, %37, %37 in 0 : vector<16x1xf32>, vector<16x1xf32>, vector<16x1xf32>, vector<16x1xf32> -> vector<64x1xf32>
    %40 = vector.broadcast %38 : vector<64x1xf32> to vector<64x512xf32>
    %41 = arith.mulf %2, %40 : vector<64x512xf32>
    %42 = vector.broadcast %39 : vector<64x1xf32> to vector<64x512xf32>
    %43 = arith.addf %41, %42 : vector<64x512xf32>
    %cst_13 = arith.constant 0.000000e+00 : f32
    %44 = vector.broadcast %cst_13 : f32 to vector<64x512xf32>
    %45 = arith.maximumf %43, %44 : vector<64x512xf32>
    %46 = arith.truncf %45 : vector<64x512xf32> to vector<64x512xbf16>
    %c0_14 = arith.constant 0 : index
    %c0_15 = arith.constant 0 : index
    %47 = vector.load %arg4[%c0_14, %c0_15] : memref<64x512xbf16, #tpu.memory_space<vmem>>, vector<64x512xbf16>
    tpu.vector_store %arg4[%c0_14, %c0_15], %46 {strides = array<i32>} : memref<64x512xbf16, #tpu.memory_space<vmem>>, vector<64x512xbf16>,
    return
  }
}

module attributes {stable_mosaic.version = 11 : i64} {
  func.func @kernel(%arg0: i32, %arg1: memref<144x1024xbf16, #tpu.memory_space<vmem>>, %arg2: memref<16x144xbf16, #tpu.memory_space<vmem>>, %arg3: memref<16x1xf32, #tpu.memory_space<vmem>>, %arg4: memref<16x1024xf32, #tpu.memory_space<vmem>>) attributes {dimension_semantics = [#tpu.dimension_semantics<parallel>], iteration_bounds = array<i64: 2>, scalar_prefetch = 0 : i64, scratch_operands = 0 : i64, tpu.core_type = #tpu.core_type<tc>, window_params = [{transform_indices = @transform_0, window_bounds = array<i64: 144, 1024>}, {pipeline_mode = #tpu.pipeline_mode<synchronous>, transform_indices = @transform_1, window_bounds = array<i64: 16, 144>}, {pipeline_mode = #tpu.pipeline_mode<synchronous>, transform_indices = @transform_2, window_bounds = array<i64: 16, 1>}, {transform_indices = @transform_3, window_bounds = array<i64: 16, 1024>}]} {
    %c0 = arith.constant 0 : index
    %c0_0 = arith.constant 0 : index
    %0 = vector.load %arg2[%c0, %c0_0] : memref<16x144xbf16, #tpu.memory_space<vmem>>, vector<16x144xbf16>
    %c0_1 = arith.constant 0 : index
    %c0_2 = arith.constant 0 : index
    %1 = vector.load %arg1[%c0_1, %c0_2] : memref<144x1024xbf16, #tpu.memory_space<vmem>>, vector<144x1024xbf16>
    %cst = arith.constant dense<0.000000e+00> : vector<16x1024xf32>
    %2 = tpu.matmul %0, %1, %cst {dimension_numbers = #tpu.dot_dimension_numbers<[1], [0], [0], [1], [0, 0, 1, 1], [], []>} : vector<16x144xbf16>, vector<144x1024xbf16>, vector<16x1024xf32> -> vector<16x1024xf32>
    %c0_3 = arith.constant 0 : index
    %c0_4 = arith.constant 0 : index
    %3 = vector.load %arg3[%c0_3, %c0_4] : memref<16x1xf32, #tpu.memory_space<vmem>>, vector<16x1xf32>
    %4 = vector.broadcast %3 : vector<16x1xf32> to vector<16x1024xf32>
    %5 = arith.addf %2, %4 : vector<16x1024xf32>
    %6 = math.tanh %5 : vector<16x1024xf32>
    %c0_5 = arith.constant 0 : index
    %c0_6 = arith.constant 0 : index
    %7 = vector.load %arg4[%c0_5, %c0_6] : memref<16x1024xf32, #tpu.memory_space<vmem>>, vector<16x1024xf32>
    tpu.vector_store %arg4[%c0_5, %c0_6], %6 {strides = array<i32>} : memref<16x1024xf32, #tpu.memory_space<vmem>>, vector<16x1024xf32>,
    return
  }
  func.func @transform_0(%arg0: i32) -> (i32, i32) {
    %c0_i32 = arith.constant 0 : i32
    %c0_i32_0 = arith.constant 0 : i32
    return %c0_i32, %arg0 : i32, i32
  }
  func.func @transform_1(%arg0: i32) -> (i32, i32) {
    %c0_i32 = arith.constant 0 : i32
    %c0_i32_0 = arith.constant 0 : i32
    %c0_i32_1 = arith.constant 0 : i32
    return %c0_i32, %c0_i32_0 : i32, i32
  }
  func.func @transform_2(%arg0: i32) -> (i32, i32) {
    %c0_i32 = arith.constant 0 : i32
    %c0_i32_0 = arith.constant 0 : i32
    %c0_i32_1 = arith.constant 0 : i32
    return %c0_i32, %c0_i32_0 : i32, i32
  }
  func.func @transform_3(%arg0: i32) -> (i32, i32) {
    %c0_i32 = arith.constant 0 : i32
    %c0_i32_0 = arith.constant 0 : i32
    return %c0_i32, %arg0 : i32, i32
  }
}

</mosaic_0001>

<llo_original>
// kernel: generator_forward.5
$region0: #{generator_forward.5}
  #allocation0 [shape = 'u32[]', space=smem, size = 0x4, offset = 0x4, fixed_abs, tag = 'smem constant byte address 0x4 - core index']
  #allocation1 [shape = 'u32[144,128]{1,0:T(1,128)}', space=vmem, size = 0x12000, scoped, tag = 'internal scratch']
  %s0 = inlined_call_operand.vmem [shape: bf16[256,32], index: 0, kind: input, shape index: {}]
  %s1 = inlined_call_operand.hbm [shape: bf16[128,256], index: 1, kind: input, shape index: {}]
  %s2 = inlined_call_operand.vmem [shape: f32[128,1], index: 2, kind: input, shape index: {}]
  %s3 = inlined_call_operand.vmem [shape: f32[128,1], index: 3, kind: input, shape index: {}]
  %s4 = inlined_call_operand.vmem [shape: bf16[128,32], index: 4, kind: output, shape index: {}]
  %s5 = sld [smem:[#allocation0]]
  $region30: #{generator_forward.5} parent=0
    _
  %s7 = ssub.s32 1, %s5
  %s8 = scalar_select 0, %s7, %s5
  $region1: #{generator_forward.5} parent=0
    #allocation2 [shape = 'u8[65536]{0}', space=vmem, size = 0x10000, scoped, tag = 'input window, operand 1, single buffered']
    #allocation3 [shape = 's32[1]{0}', space=sflag, size = 0x4, scoped, tag = 'scoped memory for generator_forward.5']
    %9 = vsyncpa [#allocation3], 0
    // Predicated region
    $region2: #{generator_forward.5} parent=1 // pred_check
      _
    $region3: #{generator_forward.5} parent=1 // pred_check_branch
      %11 = sbr.rel (0) target = $region5
    $region4: #{generator_forward.5} parent=1 // pred_region
      _
    $region5: #{generator_forward.5} parent=1 // pred_fallthru
      _
    // Predicated region
    $region6: #{generator_forward.5} parent=1 // pred_check
      _
    $region7: #{generator_forward.5} parent=1 // pred_check_branch
      %13 = sbr.rel (0) target = $region9
    $region8: #{generator_forward.5} parent=1 // pred_region
      %s15 = ssub.s32 2048, 2048
      %16 = vsyncadd [#allocation3], %s15
      %s17 = sshll.u32 [#allocation2], 4
      %s18 = int_to_ptr.vmem [resolvable:$true] %s17
      %23 = dma.hbm_to_vmem [thread:$0]  %s1, 2048, %s18, [#allocation3], 128, 128, 8
    $region9: #{generator_forward.5} parent=1 // pred_fallthru
      _
    // Predicated region
    $region10: #{generator_forward.5} parent=1 // pred_check
      _
    $region11: #{generator_forward.5} parent=1 // pred_check_branch
      %25 = sbr.rel (0) target = $region13
    $region12: #{generator_forward.5} parent=1 // pred_region
      _
    $region13: #{generator_forward.5} parent=1 // pred_fallthru
      _
    // Predicated region
    $region14: #{generator_forward.5} parent=1 // pred_check
      _
    $region15: #{generator_forward.5} parent=1 // pred_check_branch
      %27 = sbr.rel (0) target = $region17
    $region16: #{generator_forward.5} parent=1 // pred_region
      _
    $region17: #{generator_forward.5} parent=1 // pred_fallthru
      _
    // Predicated region
    $region18: #{generator_forward.5} parent=1 // pred_check
      _
    $region19: #{generator_forward.5} parent=1 // pred_check_branch
      %29 = sbr.rel (0) target = $region21
    $region20: #{generator_forward.5} parent=1 // pred_region
      %30 = dma.done [#allocation3], 2048
    $region21: #{generator_forward.5} parent=1 // pred_fallthru
      _
    %v32 = vld [vmem:[#allocation2] sm:$0xff]
    %v33 = vld [vmem:[#allocation2 + $0x8] sm:$0xff]
    %v34 = vld [vmem:[#allocation2 + $0x10] sm:$0xff]
    %v35 = vld [vmem:[#allocation2 + $0x18] sm:$0xff]
    %v36 = vld [vmem:[#allocation2 + $0x20] sm:$0xff]
    %v37 = vld [vmem:[#allocation2 + $0x28] sm:$0xff]
    %v38 = vld [vmem:[#allocation2 + $0x30] sm:$0xff]
    %v39 = vld [vmem:[#allocation2 + $0x38] sm:$0xff]
    %v40 = vld [vmem:[#allocation2 + $0x40] sm:$0xff]
    %v41 = vld [vmem:[#allocation2 + $0x48] sm:$0xff]
    %v42 = vld [vmem:[#allocation2 + $0x50] sm:$0xff]
    %v43 = vld [vmem:[#allocation2 + $0x58] sm:$0xff]
    %v44 = vld [vmem:[#allocation2 + $0x60] sm:$0xff]
    %v45 = vld [vmem:[#allocation2 + $0x68] sm:$0xff]
    %v46 = vld [vmem:[#allocation2 + $0x70] sm:$0xff]
    %v47 = vld [vmem:[#allocation2 + $0x78] sm:$0xff]
    %v48 = vld [vmem:[%s0] sm:$0xf]
    %v49 = vld [vmem:[%s0 + $0x4] sm:$0xf]
    %v50 = vld [vmem:[%s0 + $0x8] sm:$0xf]
    %v51 = vld [vmem:[%s0 + $0xc] sm:$0xf]
    %v52 = vld [vmem:[%s0 + $0x10] sm:$0xf]
    %v53 = vld [vmem:[%s0 + $0x14] sm:$0xf]
    %v54 = vld [vmem:[%s0 + $0x18] sm:$0xf]
    %v55 = vld [vmem:[%s0 + $0x1c] sm:$0xf]
    %v56 = vld [vmem:[%s0 + $0x20] sm:$0xf]
    %v57 = vld [vmem:[%s0 + $0x24] sm:$0xf]
    %v58 = vld [vmem:[%s0 + $0x28] sm:$0xf]
    %v59 = vld [vmem:[%s0 + $0x2c] sm:$0xf]
    %v60 = vld [vmem:[%s0 + $0x30] sm:$0xf]
    %v61 = vld [vmem:[%s0 + $0x34] sm:$0xf]
    %v62 = vld [vmem:[%s0 + $0x38] sm:$0xf]
    %v63 = vld [vmem:[%s0 + $0x3c] sm:$0xf]
    %v64 = vld [vmem:[%s0 + $0x40] sm:$0xf]
    %v65 = vld [vmem:[%s0 + $0x44] sm:$0xf]
    %v66 = vld [vmem:[%s0 + $0x48] sm:$0xf]
    %v67 = vld [vmem:[%s0 + $0x4c] sm:$0xf]
    %v68 = vld [vmem:[%s0 + $0x50] sm:$0xf]
    %v69 = vld [vmem:[%s0 + $0x54] sm:$0xf]
    %v70 = vld [vmem:[%s0 + $0x58] sm:$0xf]
    %v71 = vld [vmem:[%s0 + $0x5c] sm:$0xf]
    %v72 = vld [vmem:[%s0 + $0x60] sm:$0xf]
    %v73 = vld [vmem:[%s0 + $0x64] sm:$0xf]
    %v74 = vld [vmem:[%s0 + $0x68] sm:$0xf]
    %v75 = vld [vmem:[%s0 + $0x6c] sm:$0xf]
    %v76 = vld [vmem:[%s0 + $0x70] sm:$0xf]
    %v77 = vld [vmem:[%s0 + $0x74] sm:$0xf]
    %v78 = vld [vmem:[%s0 + $0x78] sm:$0xf]
    %v79 = vld [vmem:[%s0 + $0x7c] sm:$0xf]
    %v96 = vunpack.c.l.b16 %v32
    %v97 = vunpack.c.h.b16 %v32
    %v98 = vunpack.c.l.b16 %v33
    %v99 = vunpack.c.h.b16 %v33
    %v100 = vunpack.c.l.b16 %v34
    %v101 = vunpack.c.h.b16 %v34
    %v102 = vunpack.c.l.b16 %v35
    %v103 = vunpack.c.h.b16 %v35
    %v104 = vunpack.c.l.b16 %v36
    %v105 = vunpack.c.h.b16 %v36
    %v106 = vunpack.c.l.b16 %v37
    %v107 = vunpack.c.h.b16 %v37
    %v108 = vunpack.c.l.b16 %v38
    %v109 = vunpack.c.h.b16 %v38
    %v110 = vunpack.c.l.b16 %v39
    %v111 = vunpack.c.h.b16 %v39
    %v112 = vunpack.c.l.b16 %v40
    %v113 = vunpack.c.h.b16 %v40
    %v114 = vunpack.c.l.b16 %v41
    %v115 = vunpack.c.h.b16 %v41
    %v116 = vunpack.c.l.b16 %v42
    %v117 = vunpack.c.h.b16 %v42
    %v118 = vunpack.c.l.b16 %v43
    %v119 = vunpack.c.h.b16 %v43
    %v120 = vunpack.c.l.b16 %v44
    %v121 = vunpack.c.h.b16 %v44
    %v122 = vunpack.c.l.b16 %v45
    %v123 = vunpack.c.h.b16 %v45
    %v124 = vunpack.c.l.b16 %v46
    %v125 = vunpack.c.h.b16 %v46
    %v126 = vunpack.c.l.b16 %v47
    %v127 = vunpack.c.h.b16 %v47
    %v128 = vpack.c.b16 %v98, %v96
    %v129 = vpack.c.b16 %v99, %v97
    %v130 = vpack.c.b16 %v102, %v100
    %v131 = vpack.c.b16 %v103, %v101
    %v132 = vpack.c.b16 %v106, %v104
    %v133 = vpack.c.b16 %v107, %v105
    %v134 = vpack.c.b16 %v110, %v108
    %v135 = vpack.c.b16 %v111, %v109
    %v136 = vpack.c.b16 %v114, %v112
    %v137 = vpack.c.b16 %v115, %v113
    %v138 = vpack.c.b16 %v118, %v116
    %v139 = vpack.c.b16 %v119, %v117
    %v140 = vpack.c.b16 %v122, %v120
    %v141 = vpack.c.b16 %v123, %v121
    %v142 = vpack.c.b16 %v126, %v124
    %v143 = vpack.c.b16 %v127, %v125
    %v192 = vunpack.c.l.b16 %v48
    %v193 = vunpack.c.l.b16 %v49
    %v194 = vunpack.c.l.b16 %v50
    %v195 = vunpack.c.l.b16 %v51
    %v196 = vunpack.c.l.b16 %v52
    %v197 = vunpack.c.l.b16 %v53
    %v198 = vunpack.c.l.b16 %v54
    %v199 = vunpack.c.l.b16 %v55
    %v200 = vunpack.c.l.b16 %v56
    %v201 = vunpack.c.l.b16 %v57
    %v202 = vunpack.c.l.b16 %v58
    %v203 = vunpack.c.l.b16 %v59
    %v204 = vunpack.c.l.b16 %v60
    %v205 = vunpack.c.l.b16 %v61
    %v206 = vunpack.c.l.b16 %v62
    %v207 = vunpack.c.l.b16 %v63
    %v208 = vunpack.c.l.b16 %v64
    %v209 = vunpack.c.l.b16 %v65
    %v210 = vunpack.c.l.b16 %v66
    %v211 = vunpack.c.l.b16 %v67
    %v212 = vunpack.c.l.b16 %v68
    %v213 = vunpack.c.l.b16 %v69
    %v214 = vunpack.c.l.b16 %v70
    %v215 = vunpack.c.l.b16 %v71
    %v216 = vunpack.c.l.b16 %v72
    %v217 = vunpack.c.l.b16 %v73
    %v218 = vunpack.c.l.b16 %v74
    %v219 = vunpack.c.l.b16 %v75
    %v220 = vunpack.c.l.b16 %v76
    %v221 = vunpack.c.l.b16 %v77
    %v222 = vunpack.c.l.b16 %v78
    %v223 = vunpack.c.l.b16 %v79
    %v224 = vpack.c.b16 %v193, %v192
    %v225 = vpack.c.b16 %v195, %v194
    %v226 = vpack.c.b16 %v197, %v196
    %v227 = vpack.c.b16 %v199, %v198
    %v228 = vpack.c.b16 %v201, %v200
    %v229 = vpack.c.b16 %v203, %v202
    %v230 = vpack.c.b16 %v205, %v204
    %v231 = vpack.c.b16 %v207, %v206
    %v232 = vpack.c.b16 %v209, %v208
    %v233 = vpack.c.b16 %v211, %v210
    %v234 = vpack.c.b16 %v213, %v212
    %v235 = vpack.c.b16 %v215, %v214
    %v236 = vpack.c.b16 %v217, %v216
    %v237 = vpack.c.b16 %v219, %v218
    %v238 = vpack.c.b16 %v221, %v220
    %v239 = vpack.c.b16 %v223, %v222
    %256 = vmatprep.subr.bf16.mxu0 0
    %257 = vmatpush1.bf16.msra.mxu0 %v224
    %258 = vmatprep.subr.bf16.mxu0 0
    %259 = vmatpush1.bf16.msra.mxu0 %v225
    %260 = vmatprep.subr.bf16.mxu0 0
    %261 = vmatpush1.bf16.msra.mxu0 %v226
    %262 = vmatprep.subr.bf16.mxu0 0
    %263 = vmatpush1.bf16.msra.mxu0 %v227
    %264 = vmatprep.subr.bf16.mxu0 0
    %265 = vmatpush1.bf16.msra.mxu0 %v228
    %266 = vmatprep.subr.bf16.mxu0 0
    %267 = vmatpush1.bf16.msra.mxu0 %v229
    %268 = vmatprep.subr.bf16.mxu0 0
    %269 = vmatpush1.bf16.msra.mxu0 %v230
    %270 = vmatprep.subr.bf16.mxu0 0
    %271 = vmatpush1.bf16.msra.mxu0 %v231
    %272 = vmatprep.subr.bf16.mxu0 0
    %273 = vmatpush1.bf16.msra.mxu0 %v232
    %274 = vmatprep.subr.bf16.mxu0 0
    %275 = vmatpush1.bf16.msra.mxu0 %v233
    %276 = vmatprep.subr.bf16.mxu0 0
    %277 = vmatpush1.bf16.msra.mxu0 %v234
    %278 = vmatprep.subr.bf16.mxu0 0
    %279 = vmatpush1.bf16.msra.mxu0 %v235
    %280 = vmatprep.subr.bf16.mxu0 0
    %281 = vmatpush1.bf16.msra.mxu0 %v236
    %282 = vmatprep.subr.bf16.mxu0 0
    %283 = vmatpush1.bf16.msra.mxu0 %v237
    %284 = vmatprep.subr.bf16.mxu0 0
    %285 = vmatpush1.bf16.msra.mxu0 %v238
    %286 = vmatprep.subr.bf16.mxu0 0
    %287 = vmatpush1.bf16.msra.mxu0 %v239
    %288 = vmatprep.mubr.bf16.mxu0 %v129
    %289 = vmatmul.mubr.bf16.gmra.mrb[0].mxu0 %v128
    %v290 = vpop.f32.mrb[0].mxu0
    %v291 = vadd.f32 0.0, %v290
    %v292 = vpop.f32.mrb[0].mxu0
    %v293 = vpop.f32.mrb[0].mxu0
    %v294 = vadd.f32 0.0, %v293
    %v295 = vpop.f32.mrb[0].mxu0
    %296 = vmatprep.mubr.bf16.mxu0 %v131
    %297 = vmatmul.mubr.bf16.gmra.mrb[0].mxu0 %v130
    %v298 = vpop.f32.mrb[0].mxu0
    %v299 = vadd.f32 0.0, %v298
    %v300 = vpop.f32.mrb[0].mxu0
    %v301 = vpop.f32.mrb[0].mxu0
    %v302 = vadd.f32 0.0, %v301
    %v303 = vpop.f32.mrb[0].mxu0
    %304 = vmatprep.mubr.bf16.mxu0 %v133
    %305 = vmatmul.mubr.bf16.gmra.mrb[0].mxu0 %v132
    %v306 = vpop.f32.mrb[0].mxu0
    %v307 = vadd.f32 0.0, %v306
    %v308 = vpop.f32.mrb[0].mxu0
    %v309 = vpop.f32.mrb[0].mxu0
    %v310 = vadd.f32 0.0, %v309
    %v311 = vpop.f32.mrb[0].mxu0
    %312 = vmatprep.mubr.bf16.mxu0 %v135
    %313 = vmatmul.mubr.bf16.gmra.mrb[0].mxu0 %v134
    %v314 = vpop.f32.mrb[0].mxu0
    %v315 = vadd.f32 0.0, %v314
    %v316 = vpop.f32.mrb[0].mxu0
    %v317 = vpop.f32.mrb[0].mxu0
    %v318 = vadd.f32 0.0, %v317
    %v319 = vpop.f32.mrb[0].mxu0
    %320 = vmatprep.mubr.bf16.mxu0 %v137
    %321 = vmatmul.mubr.bf16.gmra.mrb[0].mxu0 %v136
    %v322 = vpop.f32.mrb[0].mxu0
    %v323 = vadd.f32 0.0, %v322
    %v324 = vpop.f32.mrb[0].mxu0
    %v325 = vpop.f32.mrb[0].mxu0
    %v326 = vadd.f32 0.0, %v325
    %v327 = vpop.f32.mrb[0].mxu0
    %328 = vmatprep.mubr.bf16.mxu0 %v139
    %329 = vmatmul.mubr.bf16.gmra.mrb[0].mxu0 %v138
    %v330 = vpop.f32.mrb[0].mxu0
    %v331 = vadd.f32 0.0, %v330
    %v332 = vpop.f32.mrb[0].mxu0
    %v333 = vpop.f32.mrb[0].mxu0
    %v334 = vadd.f32 0.0, %v333
    %v335 = vpop.f32.mrb[0].mxu0
    %336 = vmatprep.mubr.bf16.mxu0 %v141
    %337 = vmatmul.mubr.bf16.gmra.mrb[0].mxu0 %v140
    %v338 = vpop.f32.mrb[0].mxu0
    %v339 = vadd.f32 0.0, %v338
    %v340 = vpop.f32.mrb[0].mxu0
    %v341 = vpop.f32.mrb[0].mxu0
    %v342 = vadd.f32 0.0, %v341
    %v343 = vpop.f32.mrb[0].mxu0
    %344 = vmatprep.mubr.bf16.mxu0 %v143
    %345 = vmatmul.mubr.bf16.gmra.mrb[0].mxu0 %v142
    %v346 = vpop.f32.mrb[0].mxu0
    %v347 = vadd.f32 0.0, %v346
    %v348 = vpop.f32.mrb[0].mxu0
    %v349 = vpop.f32.mrb[0].mxu0
    %v350 = vadd.f32 0.0, %v349
    %v351 = vpop.f32.mrb[0].mxu0
    %352 = vdwg.mxu0
    %vm353 = vcmask 261120
    %v354 = vsel %vm353, %v291, 0.0
    %355 = vadd.xlane.f32.xlu0 %v354
    %v356 = vpop.xlane.xlu0 %355
    %v357 = vsel %vm353, %v294, 0.0
    %358 = vadd.xlane.f32.xlu0 %v357
    %v359 = vpop.xlane.xlu0 %358
    %v360 = vsel %vm353, %v299, 0.0
    %361 = vadd.xlane.f32.xlu0 %v360
    %v362 = vpop.xlane.xlu0 %361
    %v363 = vsel %vm353, %v302, 0.0
    %364 = vadd.xlane.f32.xlu0 %v363
    %v365 = vpop.xlane.xlu0 %364
    %v366 = vsel %vm353, %v307, 0.0
    %367 = vadd.xlane.f32.xlu0 %v366
    %v368 = vpop.xlane.xlu0 %367
    %v369 = vsel %vm353, %v310, 0.0
    %370 = vadd.xlane.f32.xlu0 %v369
    %v371 = vpop.xlane.xlu0 %370
    %v372 = vsel %vm353, %v315, 0.0
    %373 = vadd.xlane.f32.xlu0 %v372
    %v374 = vpop.xlane.xlu0 %373
    %v375 = vsel %vm353, %v318, 0.0
    %376 = vadd.xlane.f32.xlu0 %v375
    %v377 = vpop.xlane.xlu0 %376
    %v378 = vsel %vm353, %v323, 0.0
    %379 = vadd.xlane.f32.xlu0 %v378
    %v380 = vpop.xlane.xlu0 %379
    %v381 = vsel %vm353, %v326, 0.0
    %382 = vadd.xlane.f32.xlu0 %v381
    %v383 = vpop.xlane.xlu0 %382
    %v384 = vsel %vm353, %v331, 0.0
    %385 = vadd.xlane.f32.xlu0 %v384
    %v386 = vpop.xlane.xlu0 %385
    %v387 = vsel %vm353, %v334, 0.0
    %388 = vadd.xlane.f32.xlu0 %v387
    %v389 = vpop.xlane.xlu0 %388
    %v390 = vsel %vm353, %v339, 0.0
    %391 = vadd.xlane.f32.xlu0 %v390
    %v392 = vpop.xlane.xlu0 %391
    %v393 = vsel %vm353, %v342, 0.0
    %394 = vadd.xlane.f32.xlu0 %v393
    %v395 = vpop.xlane.xlu0 %394
    %v396 = vsel %vm353, %v347, 0.0
    %397 = vadd.xlane.f32.xlu0 %v396
    %v398 = vpop.xlane.xlu0 %397
    %v399 = vsel %vm353, %v350, 0.0
    %400 = vadd.xlane.f32.xlu0 %v399
    %v401 = vpop.xlane.xlu0 %400
    %v402 = vmul.f32 %v291, %v291
    %v403 = vmul.f32 %v294, %v294
    %v404 = vmul.f32 %v299, %v299
    %v405 = vmul.f32 %v302, %v302
    %v406 = vmul.f32 %v307, %v307
    %v407 = vmul.f32 %v310, %v310
    %v408 = vmul.f32 %v315, %v315
    %v409 = vmul.f32 %v318, %v318
    %v410 = vmul.f32 %v323, %v323
    %v411 = vmul.f32 %v326, %v326
    %v412 = vmul.f32 %v331, %v331
    %v413 = vmul.f32 %v334, %v334
    %v414 = vmul.f32 %v339, %v339
    %v415 = vmul.f32 %v342, %v342
    %v416 = vmul.f32 %v347, %v347
    %v417 = vmul.f32 %v350, %v350
    %v418 = vsel %vm353, %v402, 0.0
    %419 = vadd.xlane.f32.xlu0 %v418
    %v420 = vpop.xlane.xlu0 %419
    %v421 = vsel %vm353, %v403, 0.0
    %422 = vadd.xlane.f32.xlu0 %v421
    %v423 = vpop.xlane.xlu0 %422
    %v424 = vsel %vm353, %v404, 0.0
    %425 = vadd.xlane.f32.xlu0 %v424
    %v426 = vpop.xlane.xlu0 %425
    %v427 = vsel %vm353, %v405, 0.0
    %428 = vadd.xlane.f32.xlu0 %v427
    %v429 = vpop.xlane.xlu0 %428
    %v430 = vsel %vm353, %v406, 0.0
    %431 = vadd.xlane.f32.xlu0 %v430
    %v432 = vpop.xlane.xlu0 %431
    %v433 = vsel %vm353, %v407, 0.0
    %434 = vadd.xlane.f32.xlu0 %v433
    %v435 = vpop.xlane.xlu0 %434
    %v436 = vsel %vm353, %v408, 0.0
    %437 = vadd.xlane.f32.xlu0 %v436
    %v438 = vpop.xlane.xlu0 %437
    %v439 = vsel %vm353, %v409, 0.0
    %440 = vadd.xlane.f32.xlu0 %v439
    %v441 = vpop.xlane.xlu0 %440
    %v442 = vsel %vm353, %v410, 0.0
    %443 = vadd.xlane.f32.xlu0 %v442
    %v444 = vpop.xlane.xlu0 %443
    %v445 = vsel %vm353, %v411, 0.0
    %446 = vadd.xlane.f32.xlu0 %v445
    %v447 = vpop.xlane.xlu0 %446
    %v448 = vsel %vm353, %v412, 0.0
    %449 = vadd.xlane.f32.xlu0 %v448
    %v450 = vpop.xlane.xlu0 %449
    %v451 = vsel %vm353, %v413, 0.0
    %452 = vadd.xlane.f32.xlu0 %v451
    %v453 = vpop.xlane.xlu0 %452
    %v454 = vsel %vm353, %v414, 0.0
    %455 = vadd.xlane.f32.xlu0 %v454
    %v456 = vpop.xlane.xlu0 %455
    %v457 = vsel %vm353, %v415, 0.0
    %458 = vadd.xlane.f32.xlu0 %v457
    %v459 = vpop.xlane.xlu0 %458
    %v460 = vsel %vm353, %v416, 0.0
    %461 = vadd.xlane.f32.xlu0 %v460
    %v462 = vpop.xlane.xlu0 %461
    %v463 = vsel %vm353, %v417, 0.0
    %464 = vadd.xlane.f32.xlu0 %v463
    %v465 = vpop.xlane.xlu0 %464
    %v466 = vmul.f32 %v356, 0.03125
    %v467 = vmul.f32 %v359, 0.03125
    %v468 = vmul.f32 %v362, 0.03125
    %v469 = vmul.f32 %v365, 0.03125
    %v470 = vmul.f32 %v368, 0.03125
    %v471 = vmul.f32 %v371, 0.03125
    %v472 = vmul.f32 %v374, 0.03125
    %v473 = vmul.f32 %v377, 0.03125
    %v474 = vmul.f32 %v380, 0.03125
    %v475 = vmul.f32 %v383, 0.03125
    %v476 = vmul.f32 %v386, 0.03125
    %v477 = vmul.f32 %v389, 0.03125
    %v478 = vmul.f32 %v392, 0.03125
    %v479 = vmul.f32 %v395, 0.03125
    %v480 = vmul.f32 %v398, 0.03125
    %v481 = vmul.f32 %v401, 0.03125
    %v482 = vmul.f32 %v420, 0.03125
    %v483 = vmul.f32 %v423, 0.03125
    %v484 = vmul.f32 %v426, 0.03125
    %v485 = vmul.f32 %v429, 0.03125
    %v486 = vmul.f32 %v432, 0.03125
    %v487 = vmul.f32 %v435, 0.03125
    %v488 = vmul.f32 %v438, 0.03125
    %v489 = vmul.f32 %v441, 0.03125
    %v490 = vmul.f32 %v444, 0.03125
    %v491 = vmul.f32 %v447, 0.03125
    %v492 = vmul.f32 %v450, 0.03125
    %v493 = vmul.f32 %v453, 0.03125
    %v494 = vmul.f32 %v456, 0.03125
    %v495 = vmul.f32 %v459, 0.03125
    %v496 = vmul.f32 %v462, 0.03125
    %v497 = vmul.f32 %v465, 0.03125
    %v498 = vmul.f32 %v466, %v466
    %v499 = vmul.f32 %v467, %v467
    %v500 = vmul.f32 %v468, %v468
    %v501 = vmul.f32 %v469, %v469
    %v502 = vmul.f32 %v470, %v470
    %v503 = vmul.f32 %v471, %v471
    %v504 = vmul.f32 %v472, %v472
    %v505 = vmul.f32 %v473, %v473
    %v506 = vmul.f32 %v474, %v474
    %v507 = vmul.f32 %v475, %v475
    %v508 = vmul.f32 %v476, %v476
    %v509 = vmul.f32 %v477, %v477
    %v510 = vmul.f32 %v478, %v478
    %v511 = vmul.f32 %v479, %v479
    %v512 = vmul.f32 %v480, %v480
    %v513 = vmul.f32 %v481, %v481
    %v514 = vsub.f32 %v482, %v498
    %v515 = vsub.f32 %v483, %v499
    %v516 = vsub.f32 %v484, %v500
    %v517 = vsub.f32 %v485, %v501
    %v518 = vsub.f32 %v486, %v502
    %v519 = vsub.f32 %v487, %v503
    %v520 = vsub.f32 %v488, %v504
    %v521 = vsub.f32 %v489, %v505
    %v522 = vsub.f32 %v490, %v506
    %v523 = vsub.f32 %v491, %v507
    %v524 = vsub.f32 %v492, %v508
    %v525 = vsub.f32 %v493, %v509
    %v526 = vsub.f32 %v494, %v510
    %v527 = vsub.f32 %v495, %v511
    %v528 = vsub.f32 %v496, %v512
    %v529 = vsub.f32 %v497, %v513
    %v530 = vmax.f32 %v514, 0.0
    %v531 = vmax.f32 %v515, 0.0
    %v532 = vmax.f32 %v516, 0.0
    %v533 = vmax.f32 %v517, 0.0
    %v534 = vmax.f32 %v518, 0.0
    %v535 = vmax.f32 %v519, 0.0
    %v536 = vmax.f32 %v520, 0.0
    %v537 = vmax.f32 %v521, 0.0
    %v538 = vmax.f32 %v522, 0.0
    %v539 = vmax.f32 %v523, 0.0
    %v540 = vmax.f32 %v524, 0.0
    %v541 = vmax.f32 %v525, 0.0
    %v542 = vmax.f32 %v526, 0.0
    %v543 = vmax.f32 %v527, 0.0
    %v544 = vmax.f32 %v528, 0.0
    %v545 = vmax.f32 %v529, 0.0
    %v546 = vld [vmem:[%s2] sm:$0xff]
    %v547 = vld [vmem:[%s2 + $0x8] sm:$0xff]
    %v548 = vld [vmem:[%s2 + $0x10] sm:$0xff]
    %v549 = vld [vmem:[%s2 + $0x18] sm:$0xff]
    %v550 = vld [vmem:[%s2 + $0x20] sm:$0xff]
    %v551 = vld [vmem:[%s2 + $0x28] sm:$0xff]
    %v552 = vld [vmem:[%s2 + $0x30] sm:$0xff]
    %v553 = vld [vmem:[%s2 + $0x38] sm:$0xff]
    %v554 = vld [vmem:[%s2 + $0x40] sm:$0xff]
    %v555 = vld [vmem:[%s2 + $0x48] sm:$0xff]
    %v556 = vld [vmem:[%s2 + $0x50] sm:$0xff]
    %v557 = vld [vmem:[%s2 + $0x58] sm:$0xff]
    %v558 = vld [vmem:[%s2 + $0x60] sm:$0xff]
    %v559 = vld [vmem:[%s2 + $0x68] sm:$0xff]
    %v560 = vld [vmem:[%s2 + $0x70] sm:$0xff]
    %v561 = vld [vmem:[%s2 + $0x78] sm:$0xff]
    %v562 = vadd.f32 %v530, 1e-05
    %v563 = vadd.f32 %v531, 1e-05
    %v564 = vadd.f32 %v532, 1e-05
    %v565 = vadd.f32 %v533, 1e-05
    %v566 = vadd.f32 %v534, 1e-05
    %v567 = vadd.f32 %v535, 1e-05
    %v568 = vadd.f32 %v536, 1e-05
    %v569 = vadd.f32 %v537, 1e-05
    %v570 = vadd.f32 %v538, 1e-05
    %v571 = vadd.f32 %v539, 1e-05
    %v572 = vadd.f32 %v540, 1e-05
    %v573 = vadd.f32 %v541, 1e-05
    %v574 = vadd.f32 %v542, 1e-05
    %v575 = vadd.f32 %v543, 1e-05
    %v576 = vadd.f32 %v544, 1e-05
    %v577 = vadd.f32 %v545, 1e-05
    %v578 = vrsqrt.pop %v562
    %v579 = vrsqrt.pop %v563
    %v580 = vrsqrt.pop %v564
    %v581 = vrsqrt.pop %v565
    %v582 = vrsqrt.pop %v566
    %v583 = vrsqrt.pop %v567
    %v584 = vrsqrt.pop %v568
    %v585 = vrsqrt.pop %v569
    %v586 = vrsqrt.pop %v570
    %v587 = vrsqrt.pop %v571
    %v588 = vrsqrt.pop %v572
    %v589 = vrsqrt.pop %v573
    %v590 = vrsqrt.pop %v574
    %v591 = vrsqrt.pop %v575
    %v592 = vrsqrt.pop %v576
    %v593 = vrsqrt.pop %v577
    %v594 = vmul.f32 %v546, %v578
    %v595 = vmul.f32 %v547, %v579
    %v596 = vmul.f32 %v548, %v580
    %v597 = vmul.f32 %v549, %v581
    %v598 = vmul.f32 %v550, %v582
    %v599 = vmul.f32 %v551, %v583
    %v600 = vmul.f32 %v552, %v584
    %v601 = vmul.f32 %v553, %v585
    %v602 = vmul.f32 %v554, %v586
    %v603 = vmul.f32 %v555, %v587
    %v604 = vmul.f32 %v556, %v588
    %v605 = vmul.f32 %v557, %v589
    %v606 = vmul.f32 %v558, %v590
    %v607 = vmul.f32 %v559, %v591
    %v608 = vmul.f32 %v560, %v592
    %v609 = vmul.f32 %v561, %v593
    %v610 = vld [vmem:[%s3] sm:$0xff]
    %v611 = vld [vmem:[%s3 + $0x8] sm:$0xff]
    %v612 = vld [vmem:[%s3 + $0x10] sm:$0xff]
    %v613 = vld [vmem:[%s3 + $0x18] sm:$0xff]
    %v614 = vld [vmem:[%s3 + $0x20] sm:$0xff]
    %v615 = vld [vmem:[%s3 + $0x28] sm:$0xff]
    %v616 = vld [vmem:[%s3 + $0x30] sm:$0xff]
    %v617 = vld [vmem:[%s3 + $0x38] sm:$0xff]
    %v618 = vld [vmem:[%s3 + $0x40] sm:$0xff]
    %v619 = vld [vmem:[%s3 + $0x48] sm:$0xff]
    %v620 = vld [vmem:[%s3 + $0x50] sm:$0xff]
    %v621 = vld [vmem:[%s3 + $0x58] sm:$0xff]
    %v622 = vld [vmem:[%s3 + $0x60] sm:$0xff]
    %v623 = vld [vmem:[%s3 + $0x68] sm:$0xff]
    %v624 = vld [vmem:[%s3 + $0x70] sm:$0xff]
    %v625 = vld [vmem:[%s3 + $0x78] sm:$0xff]
    %v626 = vmul.f32 %v466, %v594
    %v627 = vmul.f32 %v467, %v595
    %v628 = vmul.f32 %v468, %v596
    %v629 = vmul.f32 %v469, %v597
    %v630 = vmul.f32 %v470, %v598
    %v631 = vmul.f32 %v471, %v599
    %v632 = vmul.f32 %v472, %v600
    %v633 = vmul.f32 %v473, %v601
    %v634 = vmul.f32 %v474, %v602
    %v635 = vmul.f32 %v475, %v603
    %v636 = vmul.f32 %v476, %v604
    %v637 = vmul.f32 %v477, %v605
    %v638 = vmul.f32 %v478, %v606
    %v639 = vmul.f32 %v479, %v607
    %v640 = vmul.f32 %v480, %v608
    %v641 = vmul.f32 %v481, %v609
    %v642 = vsub.f32 %v610, %v626
    %v643 = vsub.f32 %v611, %v627
    %v644 = vsub.f32 %v612, %v628
    %v645 = vsub.f32 %v613, %v629
    %v646 = vsub.f32 %v614, %v630
    %v647 = vsub.f32 %v615, %v631
    %v648 = vsub.f32 %v616, %v632
    %v649 = vsub.f32 %v617, %v633
    %v650 = vsub.f32 %v618, %v634
    %v651 = vsub.f32 %v619, %v635
    %v652 = vsub.f32 %v620, %v636
    %v653 = vsub.f32 %v621, %v637
    %v654 = vsub.f32 %v622, %v638
    %v655 = vsub.f32 %v623, %v639
    %v656 = vsub.f32 %v624, %v640
    %v657 = vsub.f32 %v625, %v641
    %659 = vset.pattern.permute.xlu0 0
    %660 = vperm.xlu0 %659, %v594
    %v661 = vpop.permute.xlu0 %660
    %664 = vset.pattern.permute.xlu0 0
    %665 = vperm.xlu0 %664, %v595
    %v666 = vpop.permute.xlu0 %665
    %669 = vset.pattern.permute.xlu0 0
    %670 = vperm.xlu0 %669, %v596
    %v671 = vpop.permute.xlu0 %670
    %674 = vset.pattern.permute.xlu0 0
    %675 = vperm.xlu0 %674, %v597
    %v676 = vpop.permute.xlu0 %675
    %679 = vset.pattern.permute.xlu0 0
    %680 = vperm.xlu0 %679, %v598
    %v681 = vpop.permute.xlu0 %680
    %684 = vset.pattern.permute.xlu0 0
    %685 = vperm.xlu0 %684, %v599
    %v686 = vpop.permute.xlu0 %685
    %689 = vset.pattern.permute.xlu0 0
    %690 = vperm.xlu0 %689, %v600
    %v691 = vpop.permute.xlu0 %690
    %694 = vset.pattern.permute.xlu0 0
    %695 = vperm.xlu0 %694, %v601
    %v696 = vpop.permute.xlu0 %695
    %699 = vset.pattern.permute.xlu0 0
    %700 = vperm.xlu0 %699, %v602
    %v701 = vpop.permute.xlu0 %700
    %704 = vset.pattern.permute.xlu0 0
    %705 = vperm.xlu0 %704, %v603
    %v706 = vpop.permute.xlu0 %705
    %709 = vset.pattern.permute.xlu0 0
    %710 = vperm.xlu0 %709, %v604
    %v711 = vpop.permute.xlu0 %710
    %714 = vset.pattern.permute.xlu0 0
    %715 = vperm.xlu0 %714, %v605
    %v716 = vpop.permute.xlu0 %715
    %719 = vset.pattern.permute.xlu0 0
    %720 = vperm.xlu0 %719, %v606
    %v721 = vpop.permute.xlu0 %720
    %724 = vset.pattern.permute.xlu0 0
    %725 = vperm.xlu0 %724, %v607
    %v726 = vpop.permute.xlu0 %725
    %729 = vset.pattern.permute.xlu0 0
    %730 = vperm.xlu0 %729, %v608
    %v731 = vpop.permute.xlu0 %730
    %734 = vset.pattern.permute.xlu0 0
    %735 = vperm.xlu0 %734, %v609
    %v736 = vpop.permute.xlu0 %735
    %v738 = vmul.f32 %v291, %v661
    %v739 = vmul.f32 %v294, %v666
    %v740 = vmul.f32 %v299, %v671
    %v741 = vmul.f32 %v302, %v676
    %v742 = vmul.f32 %v307, %v681
    %v743 = vmul.f32 %v310, %v686
    %v744 = vmul.f32 %v315, %v691
    %v745 = vmul.f32 %v318, %v696
    %v746 = vmul.f32 %v323, %v701
    %v747 = vmul.f32 %v326, %v706
    %v748 = vmul.f32 %v331, %v711
    %v749 = vmul.f32 %v334, %v716
    %v750 = vmul.f32 %v339, %v721
    %v751 = vmul.f32 %v342, %v726
    %v752 = vmul.f32 %v347, %v731
    %v753 = vmul.f32 %v350, %v736
    %755 = vset.pattern.permute.xlu0 0
    %756 = vperm.xlu0 %755, %v642
    %v757 = vpop.permute.xlu0 %756
    %760 = vset.pattern.permute.xlu0 0
    %761 = vperm.xlu0 %760, %v643
    %v762 = vpop.permute.xlu0 %761
    %765 = vset.pattern.permute.xlu0 0
    %766 = vperm.xlu0 %765, %v644
    %v767 = vpop.permute.xlu0 %766
    %770 = vset.pattern.permute.xlu0 0
    %771 = vperm.xlu0 %770, %v645
    %v772 = vpop.permute.xlu0 %771
    %775 = vset.pattern.permute.xlu0 0
    %776 = vperm.xlu0 %775, %v646
    %v777 = vpop.permute.xlu0 %776
    %780 = vset.pattern.permute.xlu0 0
    %781 = vperm.xlu0 %780, %v647
    %v782 = vpop.permute.xlu0 %781
    %785 = vset.pattern.permute.xlu0 0
    %786 = vperm.xlu0 %785, %v648
    %v787 = vpop.permute.xlu0 %786
    %790 = vset.pattern.permute.xlu0 0
    %791 = vperm.xlu0 %790, %v649
    %v792 = vpop.permute.xlu0 %791
    %795 = vset.pattern.permute.xlu0 0
    %796 = vperm.xlu0 %795, %v650
    %v797 = vpop.permute.xlu0 %796
    %800 = vset.pattern.permute.xlu0 0
    %801 = vperm.xlu0 %800, %v651
    %v802 = vpop.permute.xlu0 %801
    %805 = vset.pattern.permute.xlu0 0
    %806 = vperm.xlu0 %805, %v652
    %v807 = vpop.permute.xlu0 %806
    %810 = vset.pattern.permute.xlu0 0
    %811 = vperm.xlu0 %810, %v653
    %v812 = vpop.permute.xlu0 %811
    %815 = vset.pattern.permute.xlu0 0
    %816 = vperm.xlu0 %815, %v654
    %v817 = vpop.permute.xlu0 %816
    %820 = vset.pattern.permute.xlu0 0
    %821 = vperm.xlu0 %820, %v655
    %v822 = vpop.permute.xlu0 %821
    %825 = vset.pattern.permute.xlu0 0
    %826 = vperm.xlu0 %825, %v656
    %v827 = vpop.permute.xlu0 %826
    %830 = vset.pattern.permute.xlu0 0
    %831 = vperm.xlu0 %830, %v657
    %v832 = vpop.permute.xlu0 %831
    %v834 = vadd.f32 %v738, %v757
    %v835 = vadd.f32 %v739, %v762
    %v836 = vadd.f32 %v740, %v767
    %v837 = vadd.f32 %v741, %v772
    %v838 = vadd.f32 %v742, %v777
    %v839 = vadd.f32 %v743, %v782
    %v840 = vadd.f32 %v744, %v787
    %v841 = vadd.f32 %v745, %v792
    %v842 = vadd.f32 %v746, %v797
    %v843 = vadd.f32 %v747, %v802
    %v844 = vadd.f32 %v748, %v807
    %v845 = vadd.f32 %v749, %v812
    %v846 = vadd.f32 %v750, %v817
    %v847 = vadd.f32 %v751, %v822
    %v848 = vadd.f32 %v752, %v827
    %v849 = vadd.f32 %v753, %v832
    %v850 = vmax.f32 %v834, 0.0
    %v851 = vmax.f32 %v835, 0.0
    %v852 = vmax.f32 %v836, 0.0
    %v853 = vmax.f32 %v837, 0.0
    %v854 = vmax.f32 %v838, 0.0
    %v855 = vmax.f32 %v839, 0.0
    %v856 = vmax.f32 %v840, 0.0
    %v857 = vmax.f32 %v841, 0.0
    %v858 = vmax.f32 %v842, 0.0
    %v859 = vmax.f32 %v843, 0.0
    %v860 = vmax.f32 %v844, 0.0
    %v861 = vmax.f32 %v845, 0.0
    %v862 = vmax.f32 %v846, 0.0
    %v863 = vmax.f32 %v847, 0.0
    %v864 = vmax.f32 %v848, 0.0
    %v865 = vmax.f32 %v849, 0.0
    %v866 = vpack.c.bf16 %v851, %v850
    %v867 = vpack.c.bf16 %v853, %v852
    %v868 = vpack.c.bf16 %v855, %v854
    %v869 = vpack.c.bf16 %v857, %v856
    %v870 = vpack.c.bf16 %v859, %v858
    %v871 = vpack.c.bf16 %v861, %v860
    %v872 = vpack.c.bf16 %v863, %v862
    %v873 = vpack.c.bf16 %v865, %v864
    %v882 = vunpack.c.l.b16 %v866
    %v883 = vunpack.c.h.b16 %v866
    %v884 = vunpack.c.l.b16 %v867
    %v885 = vunpack.c.h.b16 %v867
    %v886 = vunpack.c.l.b16 %v868
    %v887 = vunpack.c.h.b16 %v868
    %v888 = vunpack.c.l.b16 %v869
    %v889 = vunpack.c.h.b16 %v869
    %v890 = vunpack.c.l.b16 %v870
    %v891 = vunpack.c.h.b16 %v870
    %v892 = vunpack.c.l.b16 %v871
    %v893 = vunpack.c.h.b16 %v871
    %v894 = vunpack.c.l.b16 %v872
    %v895 = vunpack.c.h.b16 %v872
    %v896 = vunpack.c.l.b16 %v873
    %v897 = vunpack.c.h.b16 %v873
    %v898 = vpack.c.b16 %v882, %v882
    %v899 = vpack.c.b16 %v883, %v883
    %v900 = vpack.c.b16 %v884, %v884
    %v901 = vpack.c.b16 %v885, %v885
    %v902 = vpack.c.b16 %v886, %v886
    %v903 = vpack.c.b16 %v887, %v887
    %v904 = vpack.c.b16 %v888, %v888
    %v905 = vpack.c.b16 %v889, %v889
    %v906 = vpack.c.b16 %v890, %v890
    %v907 = vpack.c.b16 %v891, %v891
    %v908 = vpack.c.b16 %v892, %v892
    %v909 = vpack.c.b16 %v893, %v893
    %v910 = vpack.c.b16 %v894, %v894
    %v911 = vpack.c.b16 %v895, %v895
    %v912 = vpack.c.b16 %v896, %v896
    %v913 = vpack.c.b16 %v897, %v897
    %vm930 = vcmask 257024
    %931 = vst.msk [vmem:[%s4] sm:$0xf] %vm930, %v898
    %932 = vst.msk [vmem:[%s4 + $0x4] sm:$0xf] %vm930, %v899
    %933 = vst.msk [vmem:[%s4 + $0x8] sm:$0xf] %vm930, %v900
    %934 = vst.msk [vmem:[%s4 + $0xc] sm:$0xf] %vm930, %v901
    %935 = vst.msk [vmem:[%s4 + $0x10] sm:$0xf] %vm930, %v902
    %936 = vst.msk [vmem:[%s4 + $0x14] sm:$0xf] %vm930, %v903
    %937 = vst.msk [vmem:[%s4 + $0x18] sm:$0xf] %vm930, %v904
    %938 = vst.msk [vmem:[%s4 + $0x1c] sm:$0xf] %vm930, %v905
    %939 = vst.msk [vmem:[%s4 + $0x20] sm:$0xf] %vm930, %v906
    %940 = vst.msk [vmem:[%s4 + $0x24] sm:$0xf] %vm930, %v907
    %941 = vst.msk [vmem:[%s4 + $0x28] sm:$0xf] %vm930, %v908
    %942 = vst.msk [vmem:[%s4 + $0x2c] sm:$0xf] %vm930, %v909
    %943 = vst.msk [vmem:[%s4 + $0x30] sm:$0xf] %vm930, %v910
    %944 = vst.msk [vmem:[%s4 + $0x34] sm:$0xf] %vm930, %v911
    %945 = vst.msk [vmem:[%s4 + $0x38] sm:$0xf] %vm930, %v912
    %946 = vst.msk [vmem:[%s4 + $0x3c] sm:$0xf] %vm930, %v913
    // Predicated region
    $region22: #{generator_forward.5} parent=1 // pred_check
      _
    $region23: #{generator_forward.5} parent=1 // pred_check_branch
      %948 = sbr.rel (0) target = $region25
    $region24: #{generator_forward.5} parent=1 // pred_region
      _
    $region25: #{generator_forward.5} parent=1 // pred_fallthru
      _
    // Predicated region
    $region26: #{generator_forward.5} parent=1 // pred_check
      _
    $region27: #{generator_forward.5} parent=1 // pred_check_branch
      %950 = sbr.rel (0) target = $region29
    $region28: #{generator_forward.5} parent=1 // pred_region
      _
    $region29: #{generator_forward.5} parent=1 // pred_fallthru
      _
    %951 = vsyncpa [#allocation3], 1

// kernel: generator_forward.6
$region0: #{generator_forward.6}
  #allocation0 [shape = 'u32[]', space=smem, size = 0x4, offset = 0x4, fixed_abs, tag = 'smem constant byte address 0x4 - core index']
  #allocation1 [shape = 'u32[144,128]{1,0:T(1,128)}', space=vmem, size = 0x12000, scoped, tag = 'internal scratch']
  %s0 = inlined_call_operand.vmem [shape: bf16[1152,32], index: 0, kind: input, shape index: {}]
  %s1 = inlined_call_operand.vmem [shape: bf16[256,1152], index: 1, kind: input, shape index: {}]
  %s2 = inlined_call_operand.vmem [shape: f32[64,1], index: 2, kind: input, shape index: {}]
  %s3 = inlined_call_operand.vmem [shape: f32[64,1], index: 3, kind: input, shape index: {}]
  %s4 = inlined_call_operand.vmem [shape: bf16[256,32], index: 4, kind: output, shape index: {}]
  %s5 = sld [smem:[#allocation0]]
  $region26: #{generator_forward.6} parent=0
    _
  %s7 = ssub.s32 1, %s5
  %s8 = scalar_select 0, %s7, %s5
  // Predicated region
  $region2: #{generator_forward.6} parent=0 // pred_check
    _
  $region3: #{generator_forward.6} parent=0 // pred_check_branch
    %10 = sbr.rel (0) target = $region5
  $region4: #{generator_forward.6} parent=0 // pred_region
    _
  $region5: #{generator_forward.6} parent=0 // pred_fallthru
    _
  // Predicated region
  $region6: #{generator_forward.6} parent=0 // pred_check
    _
  $region7: #{generator_forward.6} parent=0 // pred_check_branch
    %12 = sbr.rel (0) target = $region9
  $region8: #{generator_forward.6} parent=0 // pred_region
    _
  $region9: #{generator_forward.6} parent=0 // pred_fallthru
    _
  // Predicated region
  $region10: #{generator_forward.6} parent=0 // pred_check
    _
  $region11: #{generator_forward.6} parent=0 // pred_check_branch
    %14 = sbr.rel (0) target = $region13
  $region12: #{generator_forward.6} parent=0 // pred_region
    _
  $region13: #{generator_forward.6} parent=0 // pred_fallthru
    _
  // Predicated region
  $region14: #{generator_forward.6} parent=0 // pred_check
    _
  $region15: #{generator_forward.6} parent=0 // pred_check_branch
    %16 = sbr.rel (0) target = $region17
  $region16: #{generator_forward.6} parent=0 // pred_region
    _
  $region17: #{generator_forward.6} parent=0 // pred_fallthru
    _
  %v18 = vld [vmem:[%s1] sm:$0xff]
  %v19 = vld [vmem:[%s1 + $0x8] sm:$0xff]
  %v20 = vld [vmem:[%s1 + $0x10] sm:$0xff]
  %v21 = vld [vmem:[%s1 + $0x18] sm:$0xff]
  %v22 = vld [vmem:[%s1 + $0x20] sm:$0xf]
  %v23 = vld [vmem:[%s1 + $0x24] sm:$0xff]
  %v24 = vld [vmem:[%s1 + $0x2c] sm:$0xff]
  %v25 = vld [vmem:[%s1 + $0x34] sm:$0xff]
  %v26 = vld [vmem:[%s1 + $0x3c] sm:$0xff]
  %v27 = vld [vmem:[%s1 + $0x44] sm:$0xf]
  %v28 = vld [vmem:[%s1 + $0x48] sm:$0xff]
  %v29 = vld [vmem:[%s1 + $0x50] sm:$0xff]
  %v30 = vld [vmem:[%s1 + $0x58] sm:$0xff]
  %v31 = vld [vmem:[%s1 + $0x60] sm:$0xff]
  %v32 = vld [vmem:[%s1 + $0x68] sm:$0xf]
  %v33 = vld [vmem:[%s1 + $0x6c] sm:$0xff]
  %v34 = vld [vmem:[%s1 + $0x74] sm:$0xff]
  %v35 = vld [vmem:[%s1 + $0x7c] sm:$0xff]
  %v36 = vld [vmem:[%s1 + $0x84] sm:$0xff]
  %v37 = vld [vmem:[%s1 + $0x8c] sm:$0xf]
  %v38 = vld [vmem:[%s1 + $0x90] sm:$0xff]
  %v39 = vld [vmem:[%s1 + $0x98] sm:$0xff]
  %v40 = vld [vmem:[%s1 + $0xa0] sm:$0xff]
  %v41 = vld [vmem:[%s1 + $0xa8] sm:$0xff]
  %v42 = vld [vmem:[%s1 + $0xb0] sm:$0xf]
  %v43 = vld [vmem:[%s1 + $0xb4] sm:$0xff]
  %v44 = vld [vmem:[%s1 + $0xbc] sm:$0xff]
  %v45 = vld [vmem:[%s1 + $0xc4] sm:$0xff]
  %v46 = vld [vmem:[%s1 + $0xcc] sm:$0xff]
  %v47 = vld [vmem:[%s1 + $0xd4] sm:$0xf]
  %v48 = vld [vmem:[%s1 + $0xd8] sm:$0xff]
  %v49 = vld [vmem:[%s1 + $0xe0] sm:$0xff]
  %v50 = vld [vmem:[%s1 + $0xe8] sm:$0xff]
  %v51 = vld [vmem:[%s1 + $0xf0] sm:$0xff]
  %v52 = vld [vmem:[%s1 + $0xf8] sm:$0xf]
  %v53 = vld [vmem:[%s1 + $0xfc] sm:$0xff]
  %v54 = vld [vmem:[%s1 + $0x104] sm:$0xff]
  %v55 = vld [vmem:[%s1 + $0x10c] sm:$0xff]
  %v56 = vld [vmem:[%s1 + $0x114] sm:$0xff]
  %v57 = vld [vmem:[%s1 + $0x11c] sm:$0xf]
  %v58 = vld [vmem:[%s1 + $0x120] sm:$0xff]
  %v59 = vld [vmem:[%s1 + $0x128] sm:$0xff]
  %v60 = vld [vmem:[%s1 + $0x130] sm:$0xff]
  %v61 = vld [vmem:[%s1 + $0x138] sm:$0xff]
  %v62 = vld [vmem:[%s1 + $0x140] sm:$0xf]
  %v63 = vld [vmem:[%s1 + $0x144] sm:$0xff]
  %v64 = vld [vmem:[%s1 + $0x14c] sm:$0xff]
  %v65 = vld [vmem:[%s1 + $0x154] sm:$0xff]
  %v66 = vld [vmem:[%s1 + $0x15c] sm:$0xff]
  %v67 = vld [vmem:[%s1 + $0x164] sm:$0xf]
  %v68 = vld [vmem:[%s1 + $0x168] sm:$0xff]
  %v69 = vld [vmem:[%s1 + $0x170] sm:$0xff]
  %v70 = vld [vmem:[%s1 + $0x178] sm:$0xff]
  %v71 = vld [vmem:[%s1 + $0x180] sm:$0xff]
  %v72 = vld [vmem:[%s1 + $0x188] sm:$0xf]
  %v73 = vld [vmem:[%s1 + $0x18c] sm:$0xff]
  %v74 = vld [vmem:[%s1 + $0x194] sm:$0xff]
  %v75 = vld [vmem:[%s1 + $0x19c] sm:$0xff]
  %v76 = vld [vmem:[%s1 + $0x1a4] sm:$0xff]
  %v77 = vld [vmem:[%s1 + $0x1ac] sm:$0xf]
  %v78 = vld [vmem:[%s1 + $0x1b0] sm:$0xff]
  %v79 = vld [vmem:[%s1 + $0x1b8] sm:$0xff]
  %v80 = vld [vmem:[%s1 + $0x1c0] sm:$0xff]
  %v81 = vld [vmem:[%s1 + $0x1c8] sm:$0xff]
  %v82 = vld [vmem:[%s1 + $0x1d0] sm:$0xf]
  %v83 = vld [vmem:[%s1 + $0x1d4] sm:$0xff]
  %v84 = vld [vmem:[%s1 + $0x1dc] sm:$0xff]
  %v85 = vld [vmem:[%s1 + $0x1e4] sm:$0xff]
  %v86 = vld [vmem:[%s1 + $0x1ec] sm:$0xff]
  %v87 = vld [vmem:[%s1 + $0x1f4] sm:$0xf]
  %v88 = vld [vmem:[%s1 + $0x1f8] sm:$0xff]
  %v89 = vld [vmem:[%s1 + $0x200] sm:$0xff]
  %v90 = vld [vmem:[%s1 + $0x208] sm:$0xff]
  %v91 = vld [vmem:[%s1 + $0x210] sm:$0xff]
  %v92 = vld [vmem:[%s1 + $0x218] sm:$0xf]
  %v93 = vld [vmem:[%s1 + $0x21c] sm:$0xff]
  %v94 = vld [vmem:[%s1 + $0x224] sm:$0xff]
  %v95 = vld [vmem:[%s1 + $0x22c] sm:$0xff]
  %v96 = vld [vmem:[%s1 + $0x234] sm:$0xff]
  %v97 = vld [vmem:[%s1 + $0x23c] sm:$0xf]
  %v98 = vld [vmem:[%s1 + $0x240] sm:$0xff]
  %v99 = vld [vmem:[%s1 + $0x248] sm:$0xff]
  %v100 = vld [vmem:[%s1 + $0x250] sm:$0xff]
  %v101 = vld [vmem:[%s1 + $0x258] sm:$0xff]
  %v102 = vld [vmem:[%s1 + $0x260] sm:$0xf]
  %v103 = vld [vmem:[%s1 + $0x264] sm:$0xff]
  %v104 = vld [vmem:[%s1 + $0x26c] sm:$0xff]
  %v105 = vld [vmem:[%s1 + $0x274] sm:$0xff]
  %v106 = vld [vmem:[%s1 + $0x27c] sm:$0xff]
  %v107 = vld [vmem:[%s1 + $0x284] sm:$0xf]
  %v108 = vld [vmem:[%s1 + $0x288] sm:$0xff]
  %v109 = vld [vmem:[%s1 + $0x290] sm:$0xff]
  %v110 = vld [vmem:[%s1 + $0x298] sm:$0xff]
  %v111 = vld [vmem:[%s1 + $0x2a0] sm:$0xff]
  %v112 = vld [vmem:[%s1 + $0x2a8] sm:$0xf]
  %v113 = vld [vmem:[%s1 + $0x2ac] sm:$0xff]
  %v114 = vld [vmem:[%s1 + $0x2b4] sm:$0xff]
  %v115 = vld [vmem:[%s1 + $0x2bc] sm:$0xff]
  %v116 = vld [vmem:[%s1 + $0x2c4] sm:$0xff]
  %v117 = vld [vmem:[%s1 + $0x2cc] sm:$0xf]
  %v118 = vld [vmem:[%s1 + $0x2d0] sm:$0xff]
  %v119 = vld [vmem:[%s1 + $0x2d8] sm:$0xff]
  %v120 = vld [vmem:[%s1 + $0x2e0] sm:$0xff]
  %v121 = vld [vmem:[%s1 + $0x2e8] sm:$0xff]
  %v122 = vld [vmem:[%s1 + $0x2f0] sm:$0xf]
  %v123 = vld [vmem:[%s1 + $0x2f4] sm:$0xff]
  %v124 = vld [vmem:[%s1 + $0x2fc] sm:$0xff]
  %v125 = vld [vmem:[%s1 + $0x304] sm:$0xff]
  %v126 = vld [vmem:[%s1 + $0x30c] sm:$0xff]
  %v127 = vld [vmem:[%s1 + $0x314] sm:$0xf]
  %v128 = vld [vmem:[%s1 + $0x318] sm:$0xff]
  %v129 = vld [vmem:[%s1 + $0x320] sm:$0xff]
  %v130 = vld [vmem:[%s1 + $0x328] sm:$0xff]
  %v131 = vld [vmem:[%s1 + $0x330] sm:$0xff]
  %v132 = vld [vmem:[%s1 + $0x338] sm:$0xf]
  %v133 = vld [vmem:[%s1 + $0x33c] sm:$0xff]
  %v134 = vld [vmem:[%s1 + $0x344] sm:$0xff]
  %v135 = vld [vmem:[%s1 + $0x34c] sm:$0xff]
  %v136 = vld [vmem:[%s1 + $0x354] sm:$0xff]
  %v137 = vld [vmem:[%s1 + $0x35c] sm:$0xf]
  %v138 = vld [vmem:[%s1 + $0x360] sm:$0xff]
  %v139 = vld [vmem:[%s1 + $0x368] sm:$0xff]
  %v140 = vld [vmem:[%s1 + $0x370] sm:$0xff]
  %v141 = vld [vmem:[%s1 + $0x378] sm:$0xff]
  %v142 = vld [vmem:[%s1 + $0x380] sm:$0xf]
  %v143 = vld [vmem:[%s1 + $0x384] sm:$0xff]
  %v144 = vld [vmem:[%s1 + $0x38c] sm:$0xff]
  %v145 = vld [vmem:[%s1 + $0x394] sm:$0xff]
  %v146 = vld [vmem:[%s1 + $0x39c] sm:$0xff]
  %v147 = vld [vmem:[%s1 + $0x3a4] sm:$0xf]
  %v148 = vld [vmem:[%s1 + $0x3a8] sm:$0xff]
  %v149 = vld [vmem:[%s1 + $0x3b0] sm:$0xff]
  %v150 = vld [vmem:[%s1 + $0x3b8] sm:$0xff]
  %v151 = vld [vmem:[%s1 + $0x3c0] sm:$0xff]
  %v152 = vld [vmem:[%s1 + $0x3c8] sm:$0xf]
  %v153 = vld [vmem:[%s1 + $0x3cc] sm:$0xff]
  %v154 = vld [vmem:[%s1 + $0x3d4] sm:$0xff]
  %v155 = vld [vmem:[%s1 + $0x3dc] sm:$0xff]
  %v156 = vld [vmem:[%s1 + $0x3e4] sm:$0xff]
  %v157 = vld [vmem:[%s1 + $0x3ec] sm:$0xf]
  %v158 = vld [vmem:[%s1 + $0x3f0] sm:$0xff]
  %v159 = vld [vmem:[%s1 + $0x3f8] sm:$0xff]
  %v160 = vld [vmem:[%s1 + $0x400] sm:$0xff]
  %v161 = vld [vmem:[%s1 + $0x408] sm:$0xff]
  %v162 = vld [vmem:[%s1 + $0x410] sm:$0xf]
  %v163 = vld [vmem:[%s1 + $0x414] sm:$0xff]
  %v164 = vld [vmem:[%s1 + $0x41c] sm:$0xff]
  %v165 = vld [vmem:[%s1 + $0x424] sm:$0xff]
  %v166 = vld [vmem:[%s1 + $0x42c] sm:$0xff]
  %v167 = vld [vmem:[%s1 + $0x434] sm:$0xf]
  %v168 = vld [vmem:[%s1 + $0x438] sm:$0xff]
  %v169 = vld [vmem:[%s1 + $0x440] sm:$0xff]
  %v170 = vld [vmem:[%s1 + $0x448] sm:$0xff]
  %v171 = vld [vmem:[%s1 + $0x450] sm:$0xff]
  %v172 = vld [vmem:[%s1 + $0x458] sm:$0xf]
  %v173 = vld [vmem:[%s1 + $0x45c] sm:$0xff]
  %v174 = vld [vmem:[%s1 + $0x464] sm:$0xff]
  %v175 = vld [vmem:[%s1 + $0x46c] sm:$0xff]
  %v176 = vld [vmem:[%s1 + $0x474] sm:$0xff]
  %v177 = vld [vmem:[%s1 + $0x47c] sm:$0xf]
  %v178 = vld [vmem:[%s0] sm:$0xf]
  %v179 = vld [vmem:[%s0 + $0x4] sm:$0xf]
  %v180 = vld [vmem:[%s0 + $0x8] sm:$0xf]
  %v181 = vld [vmem:[%s0 + $0xc] sm:$0xf]
  %v182 = vld [vmem:[%s0 + $0x10] sm:$0xf]
  %v183 = vld [vmem:[%s0 + $0x14] sm:$0xf]
  %v184 = vld [vmem:[%s0 + $0x18] sm:$0xf]
  %v185 = vld [vmem:[%s0 + $0x1c] sm:$0xf]
  %v186 = vld [vmem:[%s0 + $0x20] sm:$0xf]
  %v187 = vld [vmem:[%s0 + $0x24] sm:$0xf]
  %v188 = vld [vmem:[%s0 + $0x28] sm:$0xf]
  %v189 = vld [vmem:[%s0 + $0x2c] sm:$0xf]
  %v190 = vld [vmem:[%s0 + $0x30] sm:$0xf]
  %v191 = vld [vmem:[%s0 + $0x34] sm:$0xf]
  %v192 = vld [vmem:[%s0 + $0x38] sm:$0xf]
  %v193 = vld [vmem:[%s0 + $0x3c] sm:$0xf]
  %v194 = vld [vmem:[%s0 + $0x40] sm:$0xf]
  %v195 = vld [vmem:[%s0 + $0x44] sm:$0xf]
  %v196 = vld [vmem:[%s0 + $0x48] sm:$0xf]
  %v197 = vld [vmem:[%s0 + $0x4c] sm:$0xf]
  %v198 = vld [vmem:[%s0 + $0x50] sm:$0xf]
  %v199 = vld [vmem:[%s0 + $0x54] sm:$0xf]
  %v200 = vld [vmem:[%s0 + $0x58] sm:$0xf]
  %v201 = vld [vmem:[%s0 + $0x5c] sm:$0xf]
  %v202 = vld [vmem:[%s0 + $0x60] sm:$0xf]
  %v203 = vld [vmem:[%s0 + $0x64] sm:$0xf]
  %v204 = vld [vmem:[%s0 + $0x68] sm:$0xf]
  %v205 = vld [vmem:[%s0 + $0x6c] sm:$0xf]
  %v206 = vld [vmem:[%s0 + $0x70] sm:$0xf]
  %v207 = vld [vmem:[%s0 + $0x74] sm:$0xf]
  %v208 = vld [vmem:[%s0 + $0x78] sm:$0xf]
  %v209 = vld [vmem:[%s0 + $0x7c] sm:$0xf]
  %v210 = vld [vmem:[%s0 + $0x80] sm:$0xf]
  %v211 = vld [vmem:[%s0 + $0x84] sm:$0xf]
  %v212 = vld [vmem:[%s0 + $0x88] sm:$0xf]
  %v213 = vld [vmem:[%s0 + $0x8c] sm:$0xf]
  %v214 = vld [vmem:[%s0 + $0x90] sm:$0xf]
  %v215 = vld [vmem:[%s0 + $0x94] sm:$0xf]
  %v216 = vld [vmem:[%s0 + $0x98] sm:$0xf]
  %v217 = vld [vmem:[%s0 + $0x9c] sm:$0xf]
  %v218 = vld [vmem:[%s0 + $0xa0] sm:$0xf]
  %v219 = vld [vmem:[%s0 + $0xa4] sm:$0xf]
  %v220 = vld [vmem:[%s0 + $0xa8] sm:$0xf]
  %v221 = vld [vmem:[%s0 + $0xac] sm:$0xf]
  %v222 = vld [vmem:[%s0 + $0xb0] sm:$0xf]
  %v223 = vld [vmem:[%s0 + $0xb4] sm:$0xf]
  %v224 = vld [vmem:[%s0 + $0xb8] sm:$0xf]
  %v225 = vld [vmem:[%s0 + $0xbc] sm:$0xf]
  %v226 = vld [vmem:[%s0 + $0xc0] sm:$0xf]
  %v227 = vld [vmem:[%s0 + $0xc4] sm:$0xf]
  %v228 = vld [vmem:[%s0 + $0xc8] sm:$0xf]
  %v229 = vld [vmem:[%s0 + $0xcc] sm:$0xf]
  %v230 = vld [vmem:[%s0 + $0xd0] sm:$0xf]
  %v231 = vld [vmem:[%s0 + $0xd4] sm:$0xf]
  %v232 = vld [vmem:[%s0 + $0xd8] sm:$0xf]
  %v233 = vld [vmem:[%s0 + $0xdc] sm:$0xf]
  %v234 = vld [vmem:[%s0 + $0xe0] sm:$0xf]
  %v235 = vld [vmem:[%s0 + $0xe4] sm:$0xf]
  %v236 = vld [vmem:[%s0 + $0xe8] sm:$0xf]
  %v237 = vld [vmem:[%s0 + $0xec] sm:$0xf]
  %v238 = vld [vmem:[%s0 + $0xf0] sm:$0xf]
  %v239 = vld [vmem:[%s0 + $0xf4] sm:$0xf]
  %v240 = vld [vmem:[%s0 + $0xf8] sm:$0xf]
  %v241 = vld [vmem:[%s0 + $0xfc] sm:$0xf]
  %v242 = vld [vmem:[%s0 + $0x100] sm:$0xf]
  %v243 = vld [vmem:[%s0 + $0x104] sm:$0xf]
  %v244 = vld [vmem:[%s0 + $0x108] sm:$0xf]
  %v245 = vld [vmem:[%s0 + $0x10c] sm:$0xf]
  %v246 = vld [vmem:[%s0 + $0x110] sm:$0xf]
  %v247 = vld [vmem:[%s0 + $0x114] sm:$0xf]
  %v248 = vld [vmem:[%s0 + $0x118] sm:$0xf]
  %v249 = vld [vmem:[%s0 + $0x11c] sm:$0xf]
  %v250 = vld [vmem:[%s0 + $0x120] sm:$0xf]
  %v251 = vld [vmem:[%s0 + $0x124] sm:$0xf]
  %v252 = vld [vmem:[%s0 + $0x128] sm:$0xf]
  %v253 = vld [vmem:[%s0 + $0x12c] sm:$0xf]
  %v254 = vld [vmem:[%s0 + $0x130] sm:$0xf]
  %v255 = vld [vmem:[%s0 + $0x134] sm:$0xf]
  %v256 = vld [vmem:[%s0 + $0x138] sm:$0xf]
  %v257 = vld [vmem:[%s0 + $0x13c] sm:$0xf]
  %v258 = vld [vmem:[%s0 + $0x140] sm:$0xf]
  %v259 = vld [vmem:[%s0 + $0x144] sm:$0xf]
  %v260 = vld [vmem:[%s0 + $0x148] sm:$0xf]
  %v261 = vld [vmem:[%s0 + $0x14c] sm:$0xf]
  %v262 = vld [vmem:[%s0 + $0x150] sm:$0xf]
  %v263 = vld [vmem:[%s0 + $0x154] sm:$0xf]
  %v264 = vld [vmem:[%s0 + $0x158] sm:$0xf]
  %v265 = vld [vmem:[%s0 + $0x15c] sm:$0xf]
  %v266 = vld [vmem:[%s0 + $0x160] sm:$0xf]
  %v267 = vld [vmem:[%s0 + $0x164] sm:$0xf]
  %v268 = vld [vmem:[%s0 + $0x168] sm:$0xf]
  %v269 = vld [vmem:[%s0 + $0x16c] sm:$0xf]
  %v270 = vld [vmem:[%s0 + $0x170] sm:$0xf]
  %v271 = vld [vmem:[%s0 + $0x174] sm:$0xf]
  %v272 = vld [vmem:[%s0 + $0x178] sm:$0xf]
  %v273 = vld [vmem:[%s0 + $0x17c] sm:$0xf]
  %v274 = vld [vmem:[%s0 + $0x180] sm:$0xf]
  %v275 = vld [vmem:[%s0 + $0x184] sm:$0xf]
  %v276 = vld [vmem:[%s0 + $0x188] sm:$0xf]
  %v277 = vld [vmem:[%s0 + $0x18c] sm:$0xf]
  %v278 = vld [vmem:[%s0 + $0x190] sm:$0xf]
  %v279 = vld [vmem:[%s0 + $0x194] sm:$0xf]
  %v280 = vld [vmem:[%s0 + $0x198] sm:$0xf]
  %v281 = vld [vmem:[%s0 + $0x19c] sm:$0xf]
  %v282 = vld [vmem:[%s0 + $0x1a0] sm:$0xf]
  %v283 = vld [vmem:[%s0 + $0x1a4] sm:$0xf]
  %v284 = vld [vmem:[%s0 + $0x1a8] sm:$0xf]
  %v285 = vld [vmem:[%s0 + $0x1ac] sm:$0xf]
  %v286 = vld [vmem:[%s0 + $0x1b0] sm:$0xf]
  %v287 = vld [vmem:[%s0 + $0x1b4] sm:$0xf]
  %v288 = vld [vmem:[%s0 + $0x1b8] sm:$0xf]
  %v289 = vld [vmem:[%s0 + $0x1bc] sm:$0xf]
  %v290 = vld [vmem:[%s0 + $0x1c0] sm:$0xf]
  %v291 = vld [vmem:[%s0 + $0x1c4] sm:$0xf]
  %v292 = vld [vmem:[%s0 + $0x1c8] sm:$0xf]
  %v293 = vld [vmem:[%s0 + $0x1cc] sm:$0xf]
  %v294 = vld [vmem:[%s0 + $0x1d0] sm:$0xf]
  %v295 = vld [vmem:[%s0 + $0x1d4] sm:$0xf]
  %v296 = vld [vmem:[%s0 + $0x1d8] sm:$0xf]
  %v297 = vld [vmem:[%s0 + $0x1dc] sm:$0xf]
  %v298 = vld [vmem:[%s0 + $0x1e0] sm:$0xf]
  %v299 = vld [vmem:[%s0 + $0x1e4] sm:$0xf]
  %v300 = vld [vmem:[%s0 + $0x1e8] sm:$0xf]
  %v301 = vld [vmem:[%s0 + $0x1ec] sm:$0xf]
  %v302 = vld [vmem:[%s0 + $0x1f0] sm:$0xf]
  %v303 = vld [vmem:[%s0 + $0x1f4] sm:$0xf]
  %v304 = vld [vmem:[%s0 + $0x1f8] sm:$0xf]
  %v305 = vld [vmem:[%s0 + $0x1fc] sm:$0xf]
  %v306 = vld [vmem:[%s0 + $0x200] sm:$0xf]
  %v307 = vld [vmem:[%s0 + $0x204] sm:$0xf]
  %v308 = vld [vmem:[%s0 + $0x208] sm:$0xf]
  %v309 = vld [vmem:[%s0 + $0x20c] sm:$0xf]
  %v310 = vld [vmem:[%s0 + $0x210] sm:$0xf]
  %v311 = vld [vmem:[%s0 + $0x214] sm:$0xf]
  %v312 = vld [vmem:[%s0 + $0x218] sm:$0xf]
  %v313 = vld [vmem:[%s0 + $0x21c] sm:$0xf]
  %v314 = vld [vmem:[%s0 + $0x220] sm:$0xf]
  %v315 = vld [vmem:[%s0 + $0x224] sm:$0xf]
  %v316 = vld [vmem:[%s0 + $0x228] sm:$0xf]
  %v317 = vld [vmem:[%s0 + $0x22c] sm:$0xf]
  %v318 = vld [vmem:[%s0 + $0x230] sm:$0xf]
  %v319 = vld [vmem:[%s0 + $0x234] sm:$0xf]
  %v320 = vld [vmem:[%s0 + $0x238] sm:$0xf]
  %v321 = vld [vmem:[%s0 + $0x23c] sm:$0xf]
  %v482 = vunpack.c.l.b16 %v18
  %v483 = vunpack.c.h.b16 %v18
  %v484 = vunpack.c.l.b16 %v19
  %v485 = vunpack.c.h.b16 %v19
  %v486 = vunpack.c.l.b16 %v20
  %v487 = vunpack.c.h.b16 %v20
  %v488 = vunpack.c.l.b16 %v21
  %v489 = vunpack.c.h.b16 %v21
  %v490 = vunpack.c.l.b16 %v22
  %v491 = vunpack.c.l.b16 %v23
  %v492 = vunpack.c.h.b16 %v23
  %v493 = vunpack.c.l.b16 %v24
  %v494 = vunpack.c.h.b16 %v24
  %v495 = vunpack.c.l.b16 %v25
  %v496 = vunpack.c.h.b16 %v25
  %v497 = vunpack.c.l.b16 %v26
  %v498 = vunpack.c.h.b16 %v26
  %v499 = vunpack.c.l.b16 %v27
  %v500 = vunpack.c.l.b16 %v28
  %v501 = vunpack.c.h.b16 %v28
  %v502 = vunpack.c.l.b16 %v29
  %v503 = vunpack.c.h.b16 %v29
  %v504 = vunpack.c.l.b16 %v30
  %v505 = vunpack.c.h.b16 %v30
  %v506 = vunpack.c.l.b16 %v31
  %v507 = vunpack.c.h.b16 %v31
  %v508 = vunpack.c.l.b16 %v32
  %v509 = vunpack.c.l.b16 %v33
  %v510 = vunpack.c.h.b16 %v33
  %v511 = vunpack.c.l.b16 %v34
  %v512 = vunpack.c.h.b16 %v34
  %v513 = vunpack.c.l.b16 %v35
  %v514 = vunpack.c.h.b16 %v35
  %v515 = vunpack.c.l.b16 %v36
  %v516 = vunpack.c.h.b16 %v36
  %v517 = vunpack.c.l.b16 %v37
  %v518 = vunpack.c.l.b16 %v38
  %v519 = vunpack.c.h.b16 %v38
  %v520 = vunpack.c.l.b16 %v39
  %v521 = vunpack.c.h.b16 %v39
  %v522 = vunpack.c.l.b16 %v40
  %v523 = vunpack.c.h.b16 %v40
  %v524 = vunpack.c.l.b16 %v41
  %v525 = vunpack.c.h.b16 %v41
  %v526 = vunpack.c.l.b16 %v42
  %v527 = vunpack.c.l.b16 %v43
  %v528 = vunpack.c.h.b16 %v43
  %v529 = vunpack.c.l.b16 %v44
  %v530 = vunpack.c.h.b16 %v44
  %v531 = vunpack.c.l.b16 %v45
  %v532 = vunpack.c.h.b16 %v45
  %v533 = vunpack.c.l.b16 %v46
  %v534 = vunpack.c.h.b16 %v46
  %v535 = vunpack.c.l.b16 %v47
  %v536 = vunpack.c.l.b16 %v48
  %v537 = vunpack.c.h.b16 %v48
  %v538 = vunpack.c.l.b16 %v49
  %v539 = vunpack.c.h.b16 %v49
  %v540 = vunpack.c.l.b16 %v50
  %v541 = vunpack.c.h.b16 %v50
  %v542 = vunpack.c.l.b16 %v51
  %v543 = vunpack.c.h.b16 %v51
  %v544 = vunpack.c.l.b16 %v52
  %v545 = vunpack.c.l.b16 %v53
  %v546 = vunpack.c.h.b16 %v53
  %v547 = vunpack.c.l.b16 %v54
  %v548 = vunpack.c.h.b16 %v54
  %v549 = vunpack.c.l.b16 %v55
  %v550 = vunpack.c.h.b16 %v55
  %v551 = vunpack.c.l.b16 %v56
  %v552 = vunpack.c.h.b16 %v56
  %v553 = vunpack.c.l.b16 %v57
  %v554 = vunpack.c.l.b16 %v58
  %v555 = vunpack.c.h.b16 %v58
  %v556 = vunpack.c.l.b16 %v59
  %v557 = vunpack.c.h.b16 %v59
  %v558 = vunpack.c.l.b16 %v60
  %v559 = vunpack.c.h.b16 %v60
  %v560 = vunpack.c.l.b16 %v61
  %v561 = vunpack.c.h.b16 %v61
  %v562 = vunpack.c.l.b16 %v62
  %v563 = vunpack.c.l.b16 %v63
  %v564 = vunpack.c.h.b16 %v63
  %v565 = vunpack.c.l.b16 %v64
  %v566 = vunpack.c.h.b16 %v64
  %v567 = vunpack.c.l.b16 %v65
  %v568 = vunpack.c.h.b16 %v65
  %v569 = vunpack.c.l.b16 %v66
  %v570 = vunpack.c.h.b16 %v66
  %v571 = vunpack.c.l.b16 %v67
  %v572 = vunpack.c.l.b16 %v68
  %v573 = vunpack.c.h.b16 %v68
  %v574 = vunpack.c.l.b16 %v69
  %v575 = vunpack.c.h.b16 %v69
  %v576 = vunpack.c.l.b16 %v70
  %v577 = vunpack.c.h.b16 %v70
  %v578 = vunpack.c.l.b16 %v71
  %v579 = vunpack.c.h.b16 %v71
  %v580 = vunpack.c.l.b16 %v72
  %v581 = vunpack.c.l.b16 %v73
  %v582 = vunpack.c.h.b16 %v73
  %v583 = vunpack.c.l.b16 %v74
  %v584 = vunpack.c.h.b16 %v74
  %v585 = vunpack.c.l.b16 %v75
  %v586 = vunpack.c.h.b16 %v75
  %v587 = vunpack.c.l.b16 %v76
  %v588 = vunpack.c.h.b16 %v76
  %v589 = vunpack.c.l.b16 %v77
  %v590 = vunpack.c.l.b16 %v78
  %v591 = vunpack.c.h.b16 %v78
  %v592 = vunpack.c.l.b16 %v79
  %v593 = vunpack.c.h.b16 %v79
  %v594 = vunpack.c.l.b16 %v80
  %v595 = vunpack.c.h.b16 %v80
  %v596 = vunpack.c.l.b16 %v81
  %v597 = vunpack.c.h.b16 %v81
  %v598 = vunpack.c.l.b16 %v82
  %v599 = vunpack.c.l.b16 %v83
  %v600 = vunpack.c.h.b16 %v83
  %v601 = vunpack.c.l.b16 %v84
  %v602 = vunpack.c.h.b16 %v84
  %v603 = vunpack.c.l.b16 %v85
  %v604 = vunpack.c.h.b16 %v85
  %v605 = vunpack.c.l.b16 %v86
  %v606 = vunpack.c.h.b16 %v86
  %v607 = vunpack.c.l.b16 %v87
  %v608 = vunpack.c.l.b16 %v88
  %v609 = vunpack.c.h.b16 %v88
  %v610 = vunpack.c.l.b16 %v89
  %v611 = vunpack.c.h.b16 %v89
  %v612 = vunpack.c.l.b16 %v90
  %v613 = vunpack.c.h.b16 %v90
  %v614 = vunpack.c.l.b16 %v91
  %v615 = vunpack.c.h.b16 %v91
  %v616 = vunpack.c.l.b16 %v92
  %v617 = vunpack.c.l.b16 %v93
  %v618 = vunpack.c.h.b16 %v93
  %v619 = vunpack.c.l.b16 %v94
  %v620 = vunpack.c.h.b16 %v94
  %v621 = vunpack.c.l.b16 %v95
  %v622 = vunpack.c.h.b16 %v95
  %v623 = vunpack.c.l.b16 %v96
  %v624 = vunpack.c.h.b16 %v96
  %v625 = vunpack.c.l.b16 %v97
  %v626 = vunpack.c.l.b16 %v98
  %v627 = vunpack.c.h.b16 %v98
  %v628 = vunpack.c.l.b16 %v99
  %v629 = vunpack.c.h.b16 %v99
  %v630 = vunpack.c.l.b16 %v100
  %v631 = vunpack.c.h.b16 %v100
  %v632 = vunpack.c.l.b16 %v101
  %v633 = vunpack.c.h.b16 %v101
  %v634 = vunpack.c.l.b16 %v102
  %v635 = vunpack.c.l.b16 %v103
  %v636 = vunpack.c.h.b16 %v103
  %v637 = vunpack.c.l.b16 %v104
  %v638 = vunpack.c.h.b16 %v104
  %v639 = vunpack.c.l.b16 %v105
  %v640 = vunpack.c.h.b16 %v105
  %v641 = vunpack.c.l.b16 %v106
  %v642 = vunpack.c.h.b16 %v106
  %v643 = vunpack.c.l.b16 %v107
  %v644 = vunpack.c.l.b16 %v108
  %v645 = vunpack.c.h.b16 %v108
  %v646 = vunpack.c.l.b16 %v109
  %v647 = vunpack.c.h.b16 %v109
  %v648 = vunpack.c.l.b16 %v110
  %v649 = vunpack.c.h.b16 %v110
  %v650 = vunpack.c.l.b16 %v111
  %v651 = vunpack.c.h.b16 %v111
  %v652 = vunpack.c.l.b16 %v112
  %v653 = vunpack.c.l.b16 %v113
  %v654 = vunpack.c.h.b16 %v113
  %v655 = vunpack.c.l.b16 %v114
  %v656 = vunpack.c.h.b16 %v114
  %v657 = vunpack.c.l.b16 %v115
  %v658 = vunpack.c.h.b16 %v115
  %v659 = vunpack.c.l.b16 %v116
  %v660 = vunpack.c.h.b16 %v116
  %v661 = vunpack.c.l.b16 %v117
  %v662 = vunpack.c.l.b16 %v118
  %v663 = vunpack.c.h.b16 %v118
  %v664 = vunpack.c.l.b16 %v119
  %v665 = vunpack.c.h.b16 %v119
  %v666 = vunpack.c.l.b16 %v120
  %v667 = vunpack.c.h.b16 %v120
  %v668 = vunpack.c.l.b16 %v121
  %v669 = vunpack.c.h.b16 %v121
  %v670 = vunpack.c.l.b16 %v122
  %v671 = vunpack.c.l.b16 %v123
  %v672 = vunpack.c.h.b16 %v123
  %v673 = vunpack.c.l.b16 %v124
  %v674 = vunpack.c.h.b16 %v124
  %v675 = vunpack.c.l.b16 %v125
  %v676 = vunpack.c.h.b16 %v125
  %v677 = vunpack.c.l.b16 %v126
  %v678 = vunpack.c.h.b16 %v126
  %v679 = vunpack.c.l.b16 %v127
  %v680 = vunpack.c.l.b16 %v128
  %v681 = vunpack.c.h.b16 %v128
  %v682 = vunpack.c.l.b16 %v129
  %v683 = vunpack.c.h.b16 %v129
  %v684 = vunpack.c.l.b16 %v130
  %v685 = vunpack.c.h.b16 %v130
  %v686 = vunpack.c.l.b16 %v131
  %v687 = vunpack.c.h.b16 %v131
  %v688 = vunpack.c.l.b16 %v132
  %v689 = vunpack.c.l.b16 %v133
  %v690 = vunpack.c.h.b16 %v133
  %v691 = vunpack.c.l.b16 %v134
  %v692 = vunpack.c.h.b16 %v134
  %v693 = vunpack.c.l.b16 %v135
  %v694 = vunpack.c.h.b16 %v135
  %v695 = vunpack.c.l.b16 %v136
  %v696 = vunpack.c.h.b16 %v136
  %v697 = vunpack.c.l.b16 %v137
  %v698 = vunpack.c.l.b16 %v138
  %v699 = vunpack.c.h.b16 %v138
  %v700 = vunpack.c.l.b16 %v139
  %v701 = vunpack.c.h.b16 %v139
  %v702 = vunpack.c.l.b16 %v140
  %v703 = vunpack.c.h.b16 %v140
  %v704 = vunpack.c.l.b16 %v141
  %v705 = vunpack.c.h.b16 %v141
  %v706 = vunpack.c.l.b16 %v142
  %v707 = vunpack.c.l.b16 %v143
  %v708 = vunpack.c.h.b16 %v143
  %v709 = vunpack.c.l.b16 %v144
  %v710 = vunpack.c.h.b16 %v144
  %v711 = vunpack.c.l.b16 %v145
  %v712 = vunpack.c.h.b16 %v145
  %v713 = vunpack.c.l.b16 %v146
  %v714 = vunpack.c.h.b16 %v146
  %v715 = vunpack.c.l.b16 %v147
  %v716 = vunpack.c.l.b16 %v148
  %v717 = vunpack.c.h.b16 %v148
  %v718 = vunpack.c.l.b16 %v149
  %v719 = vunpack.c.h.b16 %v149
  %v720 = vunpack.c.l.b16 %v150
  %v721 = vunpack.c.h.b16 %v150
  %v722 = vunpack.c.l.b16 %v151
  %v723 = vunpack.c.h.b16 %v151
  %v724 = vunpack.c.l.b16 %v152
  %v725 = vunpack.c.l.b16 %v153
  %v726 = vunpack.c.h.b16 %v153
  %v727 = vunpack.c.l.b16 %v154
  %v728 = vunpack.c.h.b16 %v154
  %v729 = vunpack.c.l.b16 %v155
  %v730 = vunpack.c.h.b16 %v155
  %v731 = vunpack.c.l.b16 %v156
  %v732 = vunpack.c.h.b16 %v156
  %v733 = vunpack.c.l.b16 %v157
  %v734 = vunpack.c.l.b16 %v158
  %v735 = vunpack.c.h.b16 %v158
  %v736 = vunpack.c.l.b16 %v159
  %v737 = vunpack.c.h.b16 %v159
  %v738 = vunpack.c.l.b16 %v160
  %v739 = vunpack.c.h.b16 %v160
  %v740 = vunpack.c.l.b16 %v161
  %v741 = vunpack.c.h.b16 %v161
  %v742 = vunpack.c.l.b16 %v162
  %v743 = vunpack.c.l.b16 %v163
  %v744 = vunpack.c.h.b16 %v163
  %v745 = vunpack.c.l.b16 %v164
  %v746 = vunpack.c.h.b16 %v164
  %v747 = vunpack.c.l.b16 %v165
  %v748 = vunpack.c.h.b16 %v165
  %v749 = vunpack.c.l.b16 %v166
  %v750 = vunpack.c.h.b16 %v166
  %v751 = vunpack.c.l.b16 %v167
  %v752 = vunpack.c.l.b16 %v168
  %v753 = vunpack.c.h.b16 %v168
  %v754 = vunpack.c.l.b16 %v169
  %v755 = vunpack.c.h.b16 %v169
  %v756 = vunpack.c.l.b16 %v170
  %v757 = vunpack.c.h.b16 %v170
  %v758 = vunpack.c.l.b16 %v171
  %v759 = vunpack.c.h.b16 %v171
  %v760 = vunpack.c.l.b16 %v172
  %v761 = vunpack.c.l.b16 %v173
  %v762 = vunpack.c.h.b16 %v173
  %v763 = vunpack.c.l.b16 %v174
  %v764 = vunpack.c.h.b16 %v174
  %v765 = vunpack.c.l.b16 %v175
  %v766 = vunpack.c.h.b16 %v175
  %v767 = vunpack.c.l.b16 %v176
  %v768 = vunpack.c.h.b16 %v176
  %v769 = vunpack.c.l.b16 %v177
  %v770 = vpack.c.b16 %v491, %v482
  %v771 = vpack.c.b16 %v492, %v483
  %v772 = vpack.c.b16 %v493, %v484
  %v773 = vpack.c.b16 %v494, %v485
  %v774 = vpack.c.b16 %v495, %v486
  %v775 = vpack.c.b16 %v496, %v487
  %v776 = vpack.c.b16 %v497, %v488
  %v777 = vpack.c.b16 %v498, %v489
  %v778 = vpack.c.b16 %v499, %v490
  %v779 = vpack.c.b16 %v509, %v500
  %v780 = vpack.c.b16 %v510, %v501
  %v781 = vpack.c.b16 %v511, %v502
  %v782 = vpack.c.b16 %v512, %v503
  %v783 = vpack.c.b16 %v513, %v504
  %v784 = vpack.c.b16 %v514, %v505
  %v785 = vpack.c.b16 %v515, %v506
  %v786 = vpack.c.b16 %v516, %v507
  %v787 = vpack.c.b16 %v517, %v508
  %v788 = vpack.c.b16 %v527, %v518
  %v789 = vpack.c.b16 %v528, %v519
  %v790 = vpack.c.b16 %v529, %v520
  %v791 = vpack.c.b16 %v530, %v521
  %v792 = vpack.c.b16 %v531, %v522
  %v793 = vpack.c.b16 %v532, %v523
  %v794 = vpack.c.b16 %v533, %v524
  %v795 = vpack.c.b16 %v534, %v525
  %v796 = vpack.c.b16 %v535, %v526
  %v797 = vpack.c.b16 %v545, %v536
  %v798 = vpack.c.b16 %v546, %v537
  %v799 = vpack.c.b16 %v547, %v538
  %v800 = vpack.c.b16 %v548, %v539
  %v801 = vpack.c.b16 %v549, %v540
  %v802 = vpack.c.b16 %v550, %v541
  %v803 = vpack.c.b16 %v551, %v542
  %v804 = vpack.c.b16 %v552, %v543
  %v805 = vpack.c.b16 %v553, %v544
  %v806 = vpack.c.b16 %v563, %v554
  %v807 = vpack.c.b16 %v564, %v555
  %v808 = vpack.c.b16 %v565, %v556
  %v809 = vpack.c.b16 %v566, %v557
  %v810 = vpack.c.b16 %v567, %v558
  %v811 = vpack.c.b16 %v568, %v559
  %v812 = vpack.c.b16 %v569, %v560
  %v813 = vpack.c.b16 %v570, %v561
  %v814 = vpack.c.b16 %v571, %v562
  %v815 = vpack.c.b16 %v581, %v572
  %v816 = vpack.c.b16 %v582, %v573
  %v817 = vpack.c.b16 %v583, %v574
  %v818 = vpack.c.b16 %v584, %v575
  %v819 = vpack.c.b16 %v585, %v576
  %v820 = vpack.c.b16 %v586, %v577
  %v821 = vpack.c.b16 %v587, %v578
  %v822 = vpack.c.b16 %v588, %v579
  %v823 = vpack.c.b16 %v589, %v580
  %v824 = vpack.c.b16 %v599, %v590
  %v825 = vpack.c.b16 %v600, %v591
  %v826 = vpack.c.b16 %v601, %v592
  %v827 = vpack.c.b16 %v602, %v593
  %v828 = vpack.c.b16 %v603, %v594
  %v829 = vpack.c.b16 %v604, %v595
  %v830 = vpack.c.b16 %v605, %v596
  %v831 = vpack.c.b16 %v606, %v597
  %v832 = vpack.c.b16 %v607, %v598
  %v833 = vpack.c.b16 %v617, %v608
  %v834 = vpack.c.b16 %v618, %v609
  %v835 = vpack.c.b16 %v619, %v610
  %v836 = vpack.c.b16 %v620, %v611
  %v837 = vpack.c.b16 %v621, %v612
  %v838 = vpack.c.b16 %v622, %v613
  %v839 = vpack.c.b16 %v623, %v614
  %v840 = vpack.c.b16 %v624, %v615
  %v841 = vpack.c.b16 %v625, %v616
  %v842 = vpack.c.b16 %v635, %v626
  %v843 = vpack.c.b16 %v636, %v627
  %v844 = vpack.c.b16 %v637, %v628
  %v845 = vpack.c.b16 %v638, %v629
  %v846 = vpack.c.b16 %v639, %v630
  %v847 = vpack.c.b16 %v640, %v631
  %v848 = vpack.c.b16 %v641, %v632
  %v849 = vpack.c.b16 %v642, %v633
  %v850 = vpack.c.b16 %v643, %v634
  %v851 = vpack.c.b16 %v653, %v644
  %v852 = vpack.c.b16 %v654, %v645
  %v853 = vpack.c.b16 %v655, %v646
  %v854 = vpack.c.b16 %v656, %v647
  %v855 = vpack.c.b16 %v657, %v648
  %v856 = vpack.c.b16 %v658, %v649
  %v857 = vpack.c.b16 %v659, %v650
  %v858 = vpack.c.b16 %v660, %v651
  %v859 = vpack.c.b16 %v661, %v652
  %v860 = vpack.c.b16 %v671, %v662
  %v861 = vpack.c.b16 %v672, %v663
  %v862 = vpack.c.b16 %v673, %v664
  %v863 = vpack.c.b16 %v674, %v665
  %v864 = vpack.c.b16 %v675, %v666
  %v865 = vpack.c.b16 %v676, %v667
  %v866 = vpack.c.b16 %v677, %v668
  %v867 = vpack.c.b16 %v678, %v669
  %v868 = vpack.c.b16 %v679, %v670
  %v869 = vpack.c.b16 %v689, %v680
  %v870 = vpack.c.b16 %v690, %v681
  %v871 = vpack.c.b16 %v691, %v682
  %v872 = vpack.c.b16 %v692, %v683
  %v873 = vpack.c.b16 %v693, %v684
  %v874 = vpack.c.b16 %v694, %v685
  %v875 = vpack.c.b16 %v695, %v686
  %v876 = vpack.c.b16 %v696, %v687
  %v877 = vpack.c.b16 %v697, %v688
  %v878 = vpack.c.b16 %v707, %v698
  %v879 = vpack.c.b16 %v708, %v699
  %v880 = vpack.c.b16 %v709, %v700
  %v881 = vpack.c.b16 %v710, %v701
  %v882 = vpack.c.b16 %v711, %v702
  %v883 = vpack.c.b16 %v712, %v703
  %v884 = vpack.c.b16 %v713, %v704
  %v885 = vpack.c.b16 %v714, %v705
  %v886 = vpack.c.b16 %v715, %v706
  %v887 = vpack.c.b16 %v725, %v716
  %v888 = vpack.c.b16 %v726, %v717
  %v889 = vpack.c.b16 %v727, %v718
  %v890 = vpack.c.b16 %v728, %v719
  %v891 = vpack.c.b16 %v729, %v720
  %v892 = vpack.c.b16 %v730, %v721
  %v893 = vpack.c.b16 %v731, %v722
  %v894 = vpack.c.b16 %v732, %v723
  %v895 = vpack.c.b16 %v733, %v724
  %v896 = vpack.c.b16 %v743, %v734
  %v897 = vpack.c.b16 %v744, %v735
  %v898 = vpack.c.b16 %v745, %v736
  %v899 = vpack.c.b16 %v746, %v737
  %v900 = vpack.c.b16 %v747, %v738
  %v901 = vpack.c.b16 %v748, %v739
  %v902 = vpack.c.b16 %v749, %v740
  %v903 = vpack.c.b16 %v750, %v741
  %v904 = vpack.c.b16 %v751, %v742
  %v905 = vpack.c.b16 %v761, %v752
  %v906 = vpack.c.b16 %v762, %v753
  %v907 = vpack.c.b16 %v763, %v754
  %v908 = vpack.c.b16 %v764, %v755
  %v909 = vpack.c.b16 %v765, %v756
  %v910 = vpack.c.b16 %v766, %v757
  %v911 = vpack.c.b16 %v767, %v758
  %v912 = vpack.c.b16 %v768, %v759
  %v913 = vpack.c.b16 %v769, %v760
  %v1202 = vunpack.c.l.b16 %v178
  %v1203 = vunpack.c.l.b16 %v179
  %v1204 = vunpack.c.l.b16 %v180
  %v1205 = vunpack.c.l.b16 %v181
  %v1206 = vunpack.c.l.b16 %v182
  %v1207 = vunpack.c.l.b16 %v183
  %v1208 = vunpack.c.l.b16 %v184
  %v1209 = vunpack.c.l.b16 %v185
  %v1210 = vunpack.c.l.b16 %v186
  %v1211 = vunpack.c.l.b16 %v187
  %v1212 = vunpack.c.l.b16 %v188
  %v1213 = vunpack.c.l.b16 %v189
  %v1214 = vunpack.c.l.b16 %v190
  %v1215 = vunpack.c.l.b16 %v191
  %v1216 = vunpack.c.l.b16 %v192
  %v1217 = vunpack.c.l.b16 %v193
  %v1218 = vunpack.c.l.b16 %v194
  %v1219 = vunpack.c.l.b16 %v195
  %v1220 = vunpack.c.l.b16 %v196
  %v1221 = vunpack.c.l.b16 %v197
  %v1222 = vunpack.c.l.b16 %v198
  %v1223 = vunpack.c.l.b16 %v199
  %v1224 = vunpack.c.l.b16 %v200
  %v1225 = vunpack.c.l.b16 %v201
  %v1226 = vunpack.c.l.b16 %v202
  %v1227 = vunpack.c.l.b16 %v203
  %v1228 = vunpack.c.l.b16 %v204
  %v1229 = vunpack.c.l.b16 %v205
  %v1230 = vunpack.c.l.b16 %v206
  %v1231 = vunpack.c.l.b16 %v207
  %v1232 = vunpack.c.l.b16 %v208
  %v1233 = vunpack.c.l.b16 %v209
  %v1234 = vunpack.c.l.b16 %v210
  %v1235 = vunpack.c.l.b16 %v211
  %v1236 = vunpack.c.l.b16 %v212
  %v1237 = vunpack.c.l.b16 %v213
  %v1238 = vunpack.c.l.b16 %v214
  %v1239 = vunpack.c.l.b16 %v215
  %v1240 = vunpack.c.l.b16 %v216
  %v1241 = vunpack.c.l.b16 %v217
  %v1242 = vunpack.c.l.b16 %v218
  %v1243 = vunpack.c.l.b16 %v219
  %v1244 = vunpack.c.l.b16 %v220
  %v1245 = vunpack.c.l.b16 %v221
  %v1246 = vunpack.c.l.b16 %v222
  %v1247 = vunpack.c.l.b16 %v223
  %v1248 = vunpack.c.l.b16 %v224
  %v1249 = vunpack.c.l.b16 %v225
  %v1250 = vunpack.c.l.b16 %v226
  %v1251 = vunpack.c.l.b16 %v227
  %v1252 = vunpack.c.l.b16 %v228
  %v1253 = vunpack.c.l.b16 %v229
  %v1254 = vunpack.c.l.b16 %v230
  %v1255 = vunpack.c.l.b16 %v231
  %v1256 = vunpack.c.l.b16 %v232
  %v1257 = vunpack.c.l.b16 %v233
  %v1258 = vunpack.c.l.b16 %v234
  %v1259 = vunpack.c.l.b16 %v235
  %v1260 = vunpack.c.l.b16 %v236
  %v1261 = vunpack.c.l.b16 %v237
  %v1262 = vunpack.c.l.b16 %v238
  %v1263 = vunpack.c.l.b16 %v239
  %v1264 = vunpack.c.l.b16 %v240
  %v1265 = vunpack.c.l.b16 %v241
  %v1266 = vunpack.c.l.b16 %v242
  %v1267 = vunpack.c.l.b16 %v243
  %v1268 = vunpack.c.l.b16 %v244
  %v1269 = vunpack.c.l.b16 %v245
  %v1270 = vunpack.c.l.b16 %v246
  %v1271 = vunpack.c.l.b16 %v247
  %v1272 = vunpack.c.l.b16 %v248
  %v1273 = vunpack.c.l.b16 %v249
  %v1274 = vunpack.c.l.b16 %v250
  %v1275 = vunpack.c.l.b16 %v251
  %v1276 = vunpack.c.l.b16 %v252
  %v1277 = vunpack.c.l.b16 %v253
  %v1278 = vunpack.c.l.b16 %v254
  %v1279 = vunpack.c.l.b16 %v255
  %v1280 = vunpack.c.l.b16 %v256
  %v1281 = vunpack.c.l.b16 %v257
  %v1282 = vunpack.c.l.b16 %v258
  %v1283 = vunpack.c.l.b16 %v259
  %v1284 = vunpack.c.l.b16 %v260
  %v1285 = vunpack.c.l.b16 %v261
  %v1286 = vunpack.c.l.b16 %v262
  %v1287 = vunpack.c.l.b16 %v263
  %v1288 = vunpack.c.l.b16 %v264
  %v1289 = vunpack.c.l.b16 %v265
  %v1290 = vunpack.c.l.b16 %v266
  %v1291 = vunpack.c.l.b16 %v267
  %v1292 = vunpack.c.l.b16 %v268
  %v1293 = vunpack.c.l.b16 %v269
  %v1294 = vunpack.c.l.b16 %v270
  %v1295 = vunpack.c.l.b16 %v271
  %v1296 = vunpack.c.l.b16 %v272
  %v1297 = vunpack.c.l.b16 %v273
  %v1298 = vunpack.c.l.b16 %v274
  %v1299 = vunpack.c.l.b16 %v275
  %v1300 = vunpack.c.l.b16 %v276
  %v1301 = vunpack.c.l.b16 %v277
  %v1302 = vunpack.c.l.b16 %v278
  %v1303 = vunpack.c.l.b16 %v279
  %v1304 = vunpack.c.l.b16 %v280
  %v1305 = vunpack.c.l.b16 %v281
  %v1306 = vunpack.c.l.b16 %v282
  %v1307 = vunpack.c.l.b16 %v283
  %v1308 = vunpack.c.l.b16 %v284
  %v1309 = vunpack.c.l.b16 %v285
  %v1310 = vunpack.c.l.b16 %v286
  %v1311 = vunpack.c.l.b16 %v287
  %v1312 = vunpack.c.l.b16 %v288
  %v1313 = vunpack.c.l.b16 %v289
  %v1314 = vunpack.c.l.b16 %v290
  %v1315 = vunpack.c.l.b16 %v291
  %v1316 = vunpack.c.l.b16 %v292
  %v1317 = vunpack.c.l.b16 %v293
  %v1318 = vunpack.c.l.b16 %v294
  %v1319 = vunpack.c.l.b16 %v295
  %v1320 = vunpack.c.l.b16 %v296
  %v1321 = vunpack.c.l.b16 %v297
  %v1322 = vunpack.c.l.b16 %v298
  %v1323 = vunpack.c.l.b16 %v299
  %v1324 = vunpack.c.l.b16 %v300
  %v1325 = vunpack.c.l.b16 %v301
  %v1326 = vunpack.c.l.b16 %v302
  %v1327 = vunpack.c.l.b16 %v303
  %v1328 = vunpack.c.l.b16 %v304
  %v1329 = vunpack.c.l.b16 %v305
  %v1330 = vunpack.c.l.b16 %v306
  %v1331 = vunpack.c.l.b16 %v307
  %v1332 = vunpack.c.l.b16 %v308
  %v1333 = vunpack.c.l.b16 %v309
  %v1334 = vunpack.c.l.b16 %v310
  %v1335 = vunpack.c.l.b16 %v311
  %v1336 = vunpack.c.l.b16 %v312
  %v1337 = vunpack.c.l.b16 %v313
  %v1338 = vunpack.c.l.b16 %v314
  %v1339 = vunpack.c.l.b16 %v315
  %v1340 = vunpack.c.l.b16 %v316
  %v1341 = vunpack.c.l.b16 %v317
  %v1342 = vunpack.c.l.b16 %v318
  %v1343 = vunpack.c.l.b16 %v319
  %v1344 = vunpack.c.l.b16 %v320
  %v1345 = vunpack.c.l.b16 %v321
  %v1346 = vpack.c.b16 %v1203, %v1202
  %v1347 = vpack.c.b16 %v1205, %v1204
  %v1348 = vpack.c.b16 %v1207, %v1206
  %v1349 = vpack.c.b16 %v1209, %v1208
  %v1350 = vpack.c.b16 %v1211, %v1210
  %v1351 = vpack.c.b16 %v1213, %v1212
  %v1352 = vpack.c.b16 %v1215, %v1214
  %v1353 = vpack.c.b16 %v1217, %v1216
  %v1354 = vpack.c.b16 %v1219, %v1218
  %v1355 = vpack.c.b16 %v1221, %v1220
  %v1356 = vpack.c.b16 %v1223, %v1222
  %v1357 = vpack.c.b16 %v1225, %v1224
  %v1358 = vpack.c.b16 %v1227, %v1226
  %v1359 = vpack.c.b16 %v1229, %v1228
  %v1360 = vpack.c.b16 %v1231, %v1230
  %v1361 = vpack.c.b16 %v1233, %v1232
  %v1362 = vpack.c.b16 %v1235, %v1234
  %v1363 = vpack.c.b16 %v1237, %v1236
  %v1364 = vpack.c.b16 %v1239, %v1238
  %v1365 = vpack.c.b16 %v1241, %v1240
  %v1366 = vpack.c.b16 %v1243, %v1242
  %v1367 = vpack.c.b16 %v1245, %v1244
  %v1368 = vpack.c.b16 %v1247, %v1246
  %v1369 = vpack.c.b16 %v1249, %v1248
  %v1370 = vpack.c.b16 %v1251, %v1250
  %v1371 = vpack.c.b16 %v1253, %v1252
  %v1372 = vpack.c.b16 %v1255, %v1254
  %v1373 = vpack.c.b16 %v1257, %v1256
  %v1374 = vpack.c.b16 %v1259, %v1258
  %v1375 = vpack.c.b16 %v1261, %v1260
  %v1376 = vpack.c.b16 %v1263, %v1262
  %v1377 = vpack.c.b16 %v1265, %v1264
  %v1378 = vpack.c.b16 %v1267, %v1266
  %v1379 = vpack.c.b16 %v1269, %v1268
  %v1380 = vpack.c.b16 %v1271, %v1270
  %v1381 = vpack.c.b16 %v1273, %v1272
  %v1382 = vpack.c.b16 %v1275, %v1274
  %v1383 = vpack.c.b16 %v1277, %v1276
  %v1384 = vpack.c.b16 %v1279, %v1278
  %v1385 = vpack.c.b16 %v1281, %v1280
  %v1386 = vpack.c.b16 %v1283, %v1282
  %v1387 = vpack.c.b16 %v1285, %v1284
  %v1388 = vpack.c.b16 %v1287, %v1286
  %v1389 = vpack.c.b16 %v1289, %v1288
  %v1390 = vpack.c.b16 %v1291, %v1290
  %v1391 = vpack.c.b16 %v1293, %v1292
  %v1392 = vpack.c.b16 %v1295, %v1294
  %v1393 = vpack.c.b16 %v1297, %v1296
  %v1394 = vpack.c.b16 %v1299, %v1298
  %v1395 = vpack.c.b16 %v1301, %v1300
  %v1396 = vpack.c.b16 %v1303, %v1302
  %v1397 = vpack.c.b16 %v1305, %v1304
  %v1398 = vpack.c.b16 %v1307, %v1306
  %v1399 = vpack.c.b16 %v1309, %v1308
  %v1400 = vpack.c.b16 %v1311, %v1310
  %v1401 = vpack.c.b16 %v1313, %v1312
  %v1402 = vpack.c.b16 %v1315, %v1314
  %v1403 = vpack.c.b16 %v1317, %v1316
  %v1404 = vpack.c.b16 %v1319, %v1318
  %v1405 = vpack.c.b16 %v1321, %v1320
  %v1406 = vpack.c.b16 %v1323, %v1322
  %v1407 = vpack.c.b16 %v1325, %v1324
  %v1408 = vpack.c.b16 %v1327, %v1326
  %v1409 = vpack.c.b16 %v1329, %v1328
  %v1410 = vpack.c.b16 %v1331, %v1330
  %v1411 = vpack.c.b16 %v1333, %v1332
  %v1412 = vpack.c.b16 %v1335, %v1334
  %v1413 = vpack.c.b16 %v1337, %v1336
  %v1414 = vpack.c.b16 %v1339, %v1338
  %v1415 = vpack.c.b16 %v1341, %v1340
  %v1416 = vpack.c.b16 %v1343, %v1342
  %v1417 = vpack.c.b16 %v1345, %v1344
  %1490 = vmatprep.subr.bf16.mxu0 0
  %1491 = vmatpush1.bf16.msra.mxu0 %v1346
  %1492 = vmatprep.subr.bf16.mxu0 0
  %1493 = vmatpush1.bf16.msra.mxu0 %v1347
  %1494 = vmatprep.subr.bf16.mxu0 0
  %1495 = vmatpush1.bf16.msra.mxu0 %v1348
  %1496 = vmatprep.subr.bf16.mxu0 0
  %1497 = vmatpush1.bf16.msra.mxu0 %v1349
  %1498 = vmatprep.subr.bf16.mxu0 0
  %1499 = vmatpush1.bf16.msra.mxu0 %v1350
  %1500 = vmatprep.subr.bf16.mxu0 0
  %1501 = vmatpush1.bf16.msra.mxu0 %v1351
  %1502 = vmatprep.subr.bf16.mxu0 0
  %1503 = vmatpush1.bf16.msra.mxu0 %v1352
  %1504 = vmatprep.subr.bf16.mxu0 0
  %1505 = vmatpush1.bf16.msra.mxu0 %v1353
  %1506 = vmatprep.subr.bf16.mxu0 0
  %1507 = vmatpush1.bf16.msra.mxu0 %v1354
  %1508 = vmatprep.subr.bf16.mxu0 0
  %1509 = vmatpush1.bf16.msra.mxu0 %v1355
  %1510 = vmatprep.subr.bf16.mxu0 0
  %1511 = vmatpush1.bf16.msra.mxu0 %v1356
  %1512 = vmatprep.subr.bf16.mxu0 0
  %1513 = vmatpush1.bf16.msra.mxu0 %v1357
  %1514 = vmatprep.subr.bf16.mxu0 0
  %1515 = vmatpush1.bf16.msra.mxu0 %v1358
  %1516 = vmatprep.subr.bf16.mxu0 0
  %1517 = vmatpush1.bf16.msra.mxu0 %v1359
  %1518 = vmatprep.subr.bf16.mxu0 0
  %1519 = vmatpush1.bf16.msra.mxu0 %v1360
  %1520 = vmatprep.subr.bf16.mxu0 0
  %1521 = vmatpush1.bf16.msra.mxu0 %v1361
  %1522 = vmatprep.mubr.bf16.mxu0 %v771
  %1523 = vmatmul.mubr.bf16.gmra.mrb[0].mxu0 %v770
  %v1524 = vpop.f32.mrb[0].mxu0
  %v1525 = vadd.f32 0.0, %v1524
  %v1526 = vpop.f32.mrb[0].mxu0
  %v1527 = vpop.f32.mrb[0].mxu0
  %v1528 = vadd.f32 0.0, %v1527
  %v1529 = vpop.f32.mrb[0].mxu0
  %1530 = vmatprep.mubr.bf16.mxu0 %v780
  %1531 = vmatmul.mubr.bf16.gmra.mrb[0].mxu0 %v779
  %v1532 = vpop.f32.mrb[0].mxu0
  %v1533 = vadd.f32 0.0, %v1532
  %v1534 = vpop.f32.mrb[0].mxu0
  %v1535 = vpop.f32.mrb[0].mxu0
  %v1536 = vadd.f32 0.0, %v1535
  %v1537 = vpop.f32.mrb[0].mxu0
  %1538 = vmatprep.mubr.bf16.mxu0 %v789
  %1539 = vmatmul.mubr.bf16.gmra.mrb[0].mxu0 %v788
  %v1540 = vpop.f32.mrb[0].mxu0
  %v1541 = vadd.f32 0.0, %v1540
  %v1542 = vpop.f32.mrb[0].mxu0
  %v1543 = vpop.f32.mrb[0].mxu0
  %v1544 = vadd.f32 0.0, %v1543
  %v1545 = vpop.f32.mrb[0].mxu0
  %1546 = vmatprep.mubr.bf16.mxu0 %v798
  %1547 = vmatmul.mubr.bf16.gmra.mrb[0].mxu0 %v797
  %v1548 = vpop.f32.mrb[0].mxu0
  %v1549 = vadd.f32 0.0, %v1548
  %v1550 = vpop.f32.mrb[0].mxu0
  %v1551 = vpop.f32.mrb[0].mxu0
  %v1552 = vadd.f32 0.0, %v1551
  %v1553 = vpop.f32.mrb[0].mxu0
  %1554 = vmatprep.mubr.bf16.mxu0 %v807
  %1555 = vmatmul.mubr.bf16.gmra.mrb[0].mxu0 %v806
  %v1556 = vpop.f32.mrb[0].mxu0
  %v1557 = vadd.f32 0.0, %v1556
  %v1558 = vpop.f32.mrb[0].mxu0
  %v1559 = vpop.f32.mrb[0].mxu0
  %v1560 = vadd.f32 0.0, %v1559
  %v1561 = vpop.f32.mrb[0].mxu0
  %1562 = vmatprep.mubr.bf16.mxu0 %v816
  %1563 = vmatmul.mubr.bf16.gmra.mrb[0].mxu0 %v815
  %v1564 = vpop.f32.mrb[0].mxu0
  %v1565 = vadd.f32 0.0, %v1564
  %v1566 = vpop.f32.mrb[0].mxu0
  %v1567 = vpop.f32.mrb[0].mxu0
  %v1568 = vadd.f32 0.0, %v1567
  %v1569 = vpop.f32.mrb[0].mxu0
  %1570 = vmatprep.mubr.bf16.mxu0 %v825
  %1571 = vmatmul.mubr.bf16.gmra.mrb[0].mxu0 %v824
  %v1572 = vpop.f32.mrb[0].mxu0
  %v1573 = vadd.f32 0.0, %v1572
  %v1574 = vpop.f32.mrb[0].mxu0
  %v1575 = vpop.f32.mrb[0].mxu0
  %v1576 = vadd.f32 0.0, %v1575
  %v1577 = vpop.f32.mrb[0].mxu0
  %1578 = vmatprep.mubr.bf16.mxu0 %v834
  %1579 = vmatmul.mubr.bf16.gmra.mrb[0].mxu0 %v833
  %v1580 = vpop.f32.mrb[0].mxu0
  %v1581 = vadd.f32 0.0, %v1580
  %v1582 = vpop.f32.mrb[0].mxu0
  %v1583 = vpop.f32.mrb[0].mxu0
  %v1584 = vadd.f32 0.0, %v1583
  %v1585 = vpop.f32.mrb[0].mxu0
  %1586 = vmatprep.mubr.bf16.mxu0 %v843
  %1587 = vmatmul.mubr.bf16.gmra.mrb[0].mxu0 %v842
  %v1588 = vpop.f32.mrb[0].mxu0
  %v1589 = vadd.f32 0.0, %v1588
  %v1590 = vpop.f32.mrb[0].mxu0
  %v1591 = vpop.f32.mrb[0].mxu0
  %v1592 = vadd.f32 0.0, %v1591
  %v1593 = vpop.f32.mrb[0].mxu0
  %1594 = vmatprep.mubr.bf16.mxu0 %v852
  %1595 = vmatmul.mubr.bf16.gmra.mrb[0].mxu0 %v851
  %v1596 = vpop.f32.mrb[0].mxu0
  %v1597 = vadd.f32 0.0, %v1596
  %v1598 = vpop.f32.mrb[0].mxu0
  %v1599 = vpop.f32.mrb[0].mxu0
  %v1600 = vadd.f32 0.0, %v1599
  %v1601 = vpop.f32.mrb[0].mxu0
  %1602 = vmatprep.mubr.bf16.mxu0 %v861
  %1603 = vmatmul.mubr.bf16.gmra.mrb[0].mxu0 %v860
  %v1604 = vpop.f32.mrb[0].mxu0
  %v1605 = vadd.f32 0.0, %v1604
  %v1606 = vpop.f32.mrb[0].mxu0
  %v1607 = vpop.f32.mrb[0].mxu0
  %v1608 = vadd.f32 0.0, %v1607
  %v1609 = vpop.f32.mrb[0].mxu0
  %1610 = vmatprep.mubr.bf16.mxu0 %v870
  %1611 = vmatmul.mubr.bf16.gmra.mrb[0].mxu0 %v869
  %v1612 = vpop.f32.mrb[0].mxu0
  %v1613 = vadd.f32 0.0, %v1612
  %v1614 = vpop.f32.mrb[0].mxu0
  %v1615 = vpop.f32.mrb[0].mxu0
  %v1616 = vadd.f32 0.0, %v1615
  %v1617 = vpop.f32.mrb[0].mxu0
  %1618 = vmatprep.mubr.bf16.mxu0 %v879
  %1619 = vmatmul.mubr.bf16.gmra.mrb[0].mxu0 %v878
  %v1620 = vpop.f32.mrb[0].mxu0
  %v1621 = vadd.f32 0.0, %v1620
  %v1622 = vpop.f32.mrb[0].mxu0
  %v1623 = vpop.f32.mrb[0].mxu0
  %v1624 = vadd.f32 0.0, %v1623
  %v1625 = vpop.f32.mrb[0].mxu0
  %1626 = vmatprep.mubr.bf16.mxu0 %v888
  %1627 = vmatmul.mubr.bf16.gmra.mrb[0].mxu0 %v887
  %v1628 = vpop.f32.mrb[0].mxu0
  %v1629 = vadd.f32 0.0, %v1628
  %v1630 = vpop.f32.mrb[0].mxu0
  %v1631 = vpop.f32.mrb[0].mxu0
  %v1632 = vadd.f32 0.0, %v1631
  %v1633 = vpop.f32.mrb[0].mxu0
  %1634 = vmatprep.mubr.bf16.mxu0 %v897
  %1635 = vmatmul.mubr.bf16.gmra.mrb[0].mxu0 %v896
  %v1636 = vpop.f32.mrb[0].mxu0
  %v1637 = vadd.f32 0.0, %v1636
  %v1638 = vpop.f32.mrb[0].mxu0
  %v1639 = vpop.f32.mrb[0].mxu0
  %v1640 = vadd.f32 0.0, %v1639
  %v1641 = vpop.f32.mrb[0].mxu0
  %1642 = vmatprep.mubr.bf16.mxu0 %v906
  %1643 = vmatmul.mubr.bf16.gmra.mrb[0].mxu0 %v905
  %v1644 = vpop.f32.mrb[0].mxu0
  %v1645 = vadd.f32 0.0, %v1644
  %v1646 = vpop.f32.mrb[0].mxu0
  %v1647 = vpop.f32.mrb[0].mxu0
  %v1648 = vadd.f32 0.0, %v1647
  %v1649 = vpop.f32.mrb[0].mxu0
  %1650 = vdwg.mxu0
  %1651 = vmatprep.subr.bf16.mxu0 0
  %1652 = vmatpush1.bf16.msra.mxu0 %v1362
  %1653 = vmatprep.subr.bf16.mxu0 0
  %1654 = vmatpush1.bf16.msra.mxu0 %v1363
  %1655 = vmatprep.subr.bf16.mxu0 0
  %1656 = vmatpush1.bf16.msra.mxu0 %v1364
  %1657 = vmatprep.subr.bf16.mxu0 0
  %1658 = vmatpush1.bf16.msra.mxu0 %v1365
  %1659 = vmatprep.subr.bf16.mxu0 0
  %1660 = vmatpush1.bf16.msra.mxu0 %v1366
  %1661 = vmatprep.subr.bf16.mxu0 0
  %1662 = vmatpush1.bf16.msra.mxu0 %v1367
  %1663 = vmatprep.subr.bf16.mxu0 0
  %1664 = vmatpush1.bf16.msra.mxu0 %v1368
  %1665 = vmatprep.subr.bf16.mxu0 0
  %1666 = vmatpush1.bf16.msra.mxu0 %v1369
  %1667 = vmatprep.subr.bf16.mxu0 0
  %1668 = vmatpush1.bf16.msra.mxu0 %v1370
  %1669 = vmatprep.subr.bf16.mxu0 0
  %1670 = vmatpush1.bf16.msra.mxu0 %v1371
  %1671 = vmatprep.subr.bf16.mxu0 0
  %1672 = vmatpush1.bf16.msra.mxu0 %v1372
  %1673 = vmatprep.subr.bf16.mxu0 0
  %1674 = vmatpush1.bf16.msra.mxu0 %v1373
  %1675 = vmatprep.subr.bf16.mxu0 0
  %1676 = vmatpush1.bf16.msra.mxu0 %v1374
  %1677 = vmatprep.subr.bf16.mxu0 0
  %1678 = vmatpush1.bf16.msra.mxu0 %v1375
  %1679 = vmatprep.subr.bf16.mxu0 0
  %1680 = vmatpush1.bf16.msra.mxu0 %v1376
  %1681 = vmatprep.subr.bf16.mxu0 0
  %1682 = vmatpush1.bf16.msra.mxu0 %v1377
  %1683 = vmatprep.mubr.bf16.mxu0 %v773
  %1684 = vmatmul.mubr.bf16.gmra.mrb[0].mxu0 %v772
  %v1685 = vpop.f32.mrb[0].mxu0
  %v1686 = vadd.f32 %v1525, %v1685
  %v1687 = vpop.f32.mrb[0].mxu0
  %v1688 = vpop.f32.mrb[0].mxu0
  %v1689 = vadd.f32 %v1528, %v1688
  %v1690 = vpop.f32.mrb[0].mxu0
  %1691 = vmatprep.mubr.bf16.mxu0 %v782
  %1692 = vmatmul.mubr.bf16.gmra.mrb[0].mxu0 %v781
  %v1693 = vpop.f32.mrb[0].mxu0
  %v1694 = vadd.f32 %v1533, %v1693
  %v1695 = vpop.f32.mrb[0].mxu0
  %v1696 = vpop.f32.mrb[0].mxu0
  %v1697 = vadd.f32 %v1536, %v1696
  %v1698 = vpop.f32.mrb[0].mxu0
  %1699 = vmatprep.mubr.bf16.mxu0 %v791
  %1700 = vmatmul.mubr.bf16.gmra.mrb[0].mxu0 %v790
  %v1701 = vpop.f32.mrb[0].mxu0
  %v1702 = vadd.f32 %v1541, %v1701
  %v1703 = vpop.f32.mrb[0].mxu0
  %v1704 = vpop.f32.mrb[0].mxu0
  %v1705 = vadd.f32 %v1544, %v1704
  %v1706 = vpop.f32.mrb[0].mxu0
  %1707 = vmatprep.mubr.bf16.mxu0 %v800
  %1708 = vmatmul.mubr.bf16.gmra.mrb[0].mxu0 %v799
  %v1709 = vpop.f32.mrb[0].mxu0
  %v1710 = vadd.f32 %v1549, %v1709
  %v1711 = vpop.f32.mrb[0].mxu0
  %v1712 = vpop.f32.mrb[0].mxu0
  %v1713 = vadd.f32 %v1552, %v1712
  %v1714 = vpop.f32.mrb[0].mxu0
  %1715 = vmatprep.mubr.bf16.mxu0 %v809
  %1716 = vmatmul.mubr.bf16.gmra.mrb[0].mxu0 %v808
  %v1717 = vpop.f32.mrb[0].mxu0
  %v1718 = vadd.f32 %v1557, %v1717
  %v1719 = vpop.f32.mrb[0].mxu0
  %v1720 = vpop.f32.mrb[0].mxu0
  %v1721 = vadd.f32 %v1560, %v1720
  %v1722 = vpop.f32.mrb[0].mxu0
  %1723 = vmatprep.mubr.bf16.mxu0 %v818
  %1724 = vmatmul.mubr.bf16.gmra.mrb[0].mxu0 %v817
  %v1725 = vpop.f32.mrb[0].mxu0
  %v1726 = vadd.f32 %v1565, %v1725
  %v1727 = vpop.f32.mrb[0].mxu0
  %v1728 = vpop.f32.mrb[0].mxu0
  %v1729 = vadd.f32 %v1568, %v1728
  %v1730 = vpop.f32.mrb[0].mxu0
  %1731 = vmatprep.mubr.bf16.mxu0 %v827
  %1732 = vmatmul.mubr.bf16.gmra.mrb[0].mxu0 %v826
  %v1733 = vpop.f32.mrb[0].mxu0
  %v1734 = vadd.f32 %v1573, %v1733
  %v1735 = vpop.f32.mrb[0].mxu0
  %v1736 = vpop.f32.mrb[0].mxu0
  %v1737 = vadd.f32 %v1576, %v1736
  %v1738 = vpop.f32.mrb[0].mxu0
  %1739 = vmatprep.mubr.bf16.mxu0 %v836
  %1740 = vmatmul.mubr.bf16.gmra.mrb[0].mxu0 %v835
  %v1741 = vpop.f32.mrb[0].mxu0
  %v1742 = vadd.f32 %v1581, %v1741
  %v1743 = vpop.f32.mrb[0].mxu0
  %v1744 = vpop.f32.mrb[0].mxu0
  %v1745 = vadd.f32 %v1584, %v1744
  %v1746 = vpop.f32.mrb[0].mxu0
  %1747 = vmatprep.mubr.bf16.mxu0 %v845
  %1748 = vmatmul.mubr.bf16.gmra.mrb[0].mxu0 %v844
  %v1749 = vpop.f32.mrb[0].mxu0
  %v1750 = vadd.f32 %v1589, %v1749
  %v1751 = vpop.f32.mrb[0].mxu0
  %v1752 = vpop.f32.mrb[0].mxu0
  %v1753 = vadd.f32 %v1592, %v1752
  %v1754 = vpop.f32.mrb[0].mxu0
  %1755 = vmatprep.mubr.bf16.mxu0 %v854
  %1756 = vmatmul.mubr.bf16.gmra.mrb[0].mxu0 %v853
  %v1757 = vpop.f32.mrb[0].mxu0
  %v1758 = vadd.f32 %v1597, %v1757
  %v1759 = vpop.f32.mrb[0].mxu0
  %v1760 = vpop.f32.mrb[0].mxu0
  %v1761 = vadd.f32 %v1600, %v1760
  %v1762 = vpop.f32.mrb[0].mxu0
  %1763 = vmatprep.mubr.bf16.mxu0 %v863
  %1764 = vmatmul.mubr.bf16.gmra.mrb[0].mxu0 %v862
  %v1765 = vpop.f32.mrb[0].mxu0
  %v1766 = vadd.f32 %v1605, %v1765
  %v1767 = vpop.f32.mrb[0].mxu0
  %v1768 = vpop.f32.mrb[0].mxu0
  %v1769 = vadd.f32 %v1608, %v1768
  %v1770 = vpop.f32.mrb[0].mxu0
  %1771 = vmatprep.mubr.bf16.mxu0 %v872
  %1772 = vmatmul.mubr.bf16.gmra.mrb[0].mxu0 %v871
  %v1773 = vpop.f32.mrb[0].mxu0
  %v1774 = vadd.f32 %v1613, %v1773
  %v1775 = vpop.f32.mrb[0].mxu0
  %v1776 = vpop.f32.mrb[0].mxu0
  %v1777 = vadd.f32 %v1616, %v1776
  %v1778 = vpop.f32.mrb[0].mxu0
  %1779 = vmatprep.mubr.bf16.mxu0 %v881
  %1780 = vmatmul.mubr.bf16.gmra.mrb[0].mxu0 %v880
  %v1781 = vpop.f32.mrb[0].mxu0
  %v1782 = vadd.f32 %v1621, %v1781
  %v1783 = vpop.f32.mrb[0].mxu0
  %v1784 = vpop.f32.mrb[0].mxu0
  %v1785 = vadd.f32 %v1624, %v1784
  %v1786 = vpop.f32.mrb[0].mxu0
  %1787 = vmatprep.mubr.bf16.mxu0 %v890
  %1788 = vmatmul.mubr.bf16.gmra.mrb[0].mxu0 %v889
  %v1789 = vpop.f32.mrb[0].mxu0
  %v1790 = vadd.f32 %v1629, %v1789
  %v1791 = vpop.f32.mrb[0].mxu0
  %v1792 = vpop.f32.mrb[0].mxu0
  %v1793 = vadd.f32 %v1632, %v1792
  %v1794 = vpop.f32.mrb[0].mxu0
  %1795 = vmatprep.mubr.bf16.mxu0 %v899
  %1796 = vmatmul.mubr.bf16.gmra.mrb[0].mxu0 %v898
  %v1797 = vpop.f32.mrb[0].mxu0
  %v1798 = vadd.f32 %v1637, %v1797
  %v1799 = vpop.f32.mrb[0].mxu0
  %v1800 = vpop.f32.mrb[0].mxu0
  %v1801 = vadd.f32 %v1640, %v1800
  %v1802 = vpop.f32.mrb[0].mxu0
  %1803 = vmatprep.mubr.bf16.mxu0 %v908
  %1804 = vmatmul.mubr.bf16.gmra.mrb[0].mxu0 %v907
  %v1805 = vpop.f32.mrb[0].mxu0
  %v1806 = vadd.f32 %v1645, %v1805
  %v1807 = vpop.f32.mrb[0].mxu0
  %v1808 = vpop.f32.mrb[0].mxu0
  %v1809 = vadd.f32 %v1648, %v1808
  %v1810 = vpop.f32.mrb[0].mxu0
  %1811 = vdwg.mxu0
  %1812 = vmatprep.subr.bf16.mxu0 0
  %1813 = vmatpush1.bf16.msra.mxu0 %v1378
  %1814 = vmatprep.subr.bf16.mxu0 0
  %1815 = vmatpush1.bf16.msra.mxu0 %v1379
  %1816 = vmatprep.subr.bf16.mxu0 0
  %1817 = vmatpush1.bf16.msra.mxu0 %v1380
  %1818 = vmatprep.subr.bf16.mxu0 0
  %1819 = vmatpush1.bf16.msra.mxu0 %v1381
  %1820 = vmatprep.subr.bf16.mxu0 0
  %1821 = vmatpush1.bf16.msra.mxu0 %v1382
  %1822 = vmatprep.subr.bf16.mxu0 0
  %1823 = vmatpush1.bf16.msra.mxu0 %v1383
  %1824 = vmatprep.subr.bf16.mxu0 0
  %1825 = vmatpush1.bf16.msra.mxu0 %v1384
  %1826 = vmatprep.subr.bf16.mxu0 0
  %1827 = vmatpush1.bf16.msra.mxu0 %v1385
  %1828 = vmatprep.subr.bf16.mxu0 0
  %1829 = vmatpush1.bf16.msra.mxu0 %v1386
  %1830 = vmatprep.subr.bf16.mxu0 0
  %1831 = vmatpush1.bf16.msra.mxu0 %v1387
  %1832 = vmatprep.subr.bf16.mxu0 0
  %1833 = vmatpush1.bf16.msra.mxu0 %v1388
  %1834 = vmatprep.subr.bf16.mxu0 0
  %1835 = vmatpush1.bf16.msra.mxu0 %v1389
  %1836 = vmatprep.subr.bf16.mxu0 0
  %1837 = vmatpush1.bf16.msra.mxu0 %v1390
  %1838 = vmatprep.subr.bf16.mxu0 0
  %1839 = vmatpush1.bf16.msra.mxu0 %v1391
  %1840 = vmatprep.subr.bf16.mxu0 0
  %1841 = vmatpush1.bf16.msra.mxu0 %v1392
  %1842 = vmatprep.subr.bf16.mxu0 0
  %1843 = vmatpush1.bf16.msra.mxu0 %v1393
  %1844 = vmatprep.mubr.bf16.mxu0 %v775
  %1845 = vmatmul.mubr.bf16.gmra.mrb[0].mxu0 %v774
  %v1846 = vpop.f32.mrb[0].mxu0
  %v1847 = vadd.f32 %v1686, %v1846
  %v1848 = vpop.f32.mrb[0].mxu0
  %v1849 = vpop.f32.mrb[0].mxu0
  %v1850 = vadd.f32 %v1689, %v1849
  %v1851 = vpop.f32.mrb[0].mxu0
  %1852 = vmatprep.mubr.bf16.mxu0 %v784
  %1853 = vmatmul.mubr.bf16.gmra.mrb[0].mxu0 %v783
  %v1854 = vpop.f32.mrb[0].mxu0
  %v1855 = vadd.f32 %v1694, %v1854
  %v1856 = vpop.f32.mrb[0].mxu0
  %v1857 = vpop.f32.mrb[0].mxu0
  %v1858 = vadd.f32 %v1697, %v1857
  %v1859 = vpop.f32.mrb[0].mxu0
  %1860 = vmatprep.mubr.bf16.mxu0 %v793
  %1861 = vmatmul.mubr.bf16.gmra.mrb[0].mxu0 %v792
  %v1862 = vpop.f32.mrb[0].mxu0
  %v1863 = vadd.f32 %v1702, %v1862
  %v1864 = vpop.f32.mrb[0].mxu0
  %v1865 = vpop.f32.mrb[0].mxu0
  %v1866 = vadd.f32 %v1705, %v1865
  %v1867 = vpop.f32.mrb[0].mxu0
  %1868 = vmatprep.mubr.bf16.mxu0 %v802
  %1869 = vmatmul.mubr.bf16.gmra.mrb[0].mxu0 %v801
  %v1870 = vpop.f32.mrb[0].mxu0
  %v1871 = vadd.f32 %v1710, %v1870
  %v1872 = vpop.f32.mrb[0].mxu0
  %v1873 = vpop.f32.mrb[0].mxu0
  %v1874 = vadd.f32 %v1713, %v1873
  %v1875 = vpop.f32.mrb[0].mxu0
  %1876 = vmatprep.mubr.bf16.mxu0 %v811
  %1877 = vmatmul.mubr.bf16.gmra.mrb[0].mxu0 %v810
  %v1878 = vpop.f32.mrb[0].mxu0
  %v1879 = vadd.f32 %v1718, %v1878
  %v1880 = vpop.f32.mrb[0].mxu0
  %v1881 = vpop.f32.mrb[0].mxu0
  %v1882 = vadd.f32 %v1721, %v1881
  %v1883 = vpop.f32.mrb[0].mxu0
  %1884 = vmatprep.mubr.bf16.mxu0 %v820
  %1885 = vmatmul.mubr.bf16.gmra.mrb[0].mxu0 %v819
  %v1886 = vpop.f32.mrb[0].mxu0
  %v1887 = vadd.f32 %v1726, %v1886
  %v1888 = vpop.f32.mrb[0].mxu0
  %v1889 = vpop.f32.mrb[0].mxu0
  %v1890 = vadd.f32 %v1729, %v1889
  %v1891 = vpop.f32.mrb[0].mxu0
  %1892 = vmatprep.mubr.bf16.mxu0 %v829
  %1893 = vmatmul.mubr.bf16.gmra.mrb[0].mxu0 %v828
  %v1894 = vpop.f32.mrb[0].mxu0
  %v1895 = vadd.f32 %v1734, %v1894
  %v1896 = vpop.f32.mrb[0].mxu0
  %v1897 = vpop.f32.mrb[0].mxu0
  %v1898 = vadd.f32 %v1737, %v1897
  %v1899 = vpop.f32.mrb[0].mxu0
  %1900 = vmatprep.mubr.bf16.mxu0 %v838
  %1901 = vmatmul.mubr.bf16.gmra.mrb[0].mxu0 %v837
  %v1902 = vpop.f32.mrb[0].mxu0
  %v1903 = vadd.f32 %v1742, %v1902
  %v1904 = vpop.f32.mrb[0].mxu0
  %v1905 = vpop.f32.mrb[0].mxu0
  %v1906 = vadd.f32 %v1745, %v1905
  %v1907 = vpop.f32.mrb[0].mxu0
  %1908 = vmatprep.mubr.bf16.mxu0 %v847
  %1909 = vmatmul.mubr.bf16.gmra.mrb[0].mxu0 %v846
  %v1910 = vpop.f32.mrb[0].mxu0
  %v1911 = vadd.f32 %v1750, %v1910
  %v1912 = vpop.f32.mrb[0].mxu0
  %v1913 = vpop.f32.mrb[0].mxu0
  %v1914 = vadd.f32 %v1753, %v1913
  %v1915 = vpop.f32.mrb[0].mxu0
  %1916 = vmatprep.mubr.bf16.mxu0 %v856
  %1917 = vmatmul.mubr.bf16.gmra.mrb[0].mxu0 %v855
  %v1918 = vpop.f32.mrb[0].mxu0
  %v1919 = vadd.f32 %v1758, %v1918
  %v1920 = vpop.f32.mrb[0].mxu0
  %v1921 = vpop.f32.mrb[0].mxu0
  %v1922 = vadd.f32 %v1761, %v1921
  %v1923 = vpop.f32.mrb[0].mxu0
  %1924 = vmatprep.mubr.bf16.mxu0 %v865
  %1925 = vmatmul.mubr.bf16.gmra.mrb[0].mxu0 %v864
  %v1926 = vpop.f32.mrb[0].mxu0
  %v1927 = vadd.f32 %v1766, %v1926
  %v1928 = vpop.f32.mrb[0].mxu0
  %v1929 = vpop.f32.mrb[0].mxu0
  %v1930 = vadd.f32 %v1769, %v1929
  %v1931 = vpop.f32.mrb[0].mxu0
  %1932 = vmatprep.mubr.bf16.mxu0 %v874
  %1933 = vmatmul.mubr.bf16.gmra.mrb[0].mxu0 %v873
  %v1934 = vpop.f32.mrb[0].mxu0
  %v1935 = vadd.f32 %v1774, %v1934
  %v1936 = vpop.f32.mrb[0].mxu0
  %v1937 = vpop.f32.mrb[0].mxu0
  %v1938 = vadd.f32 %v1777, %v1937
  %v1939 = vpop.f32.mrb[0].mxu0
  %1940 = vmatprep.mubr.bf16.mxu0 %v883
  %1941 = vmatmul.mubr.bf16.gmra.mrb[0].mxu0 %v882
  %v1942 = vpop.f32.mrb[0].mxu0
  %v1943 = vadd.f32 %v1782, %v1942
  %v1944 = vpop.f32.mrb[0].mxu0
  %v1945 = vpop.f32.mrb[0].mxu0
  %v1946 = vadd.f32 %v1785, %v1945
  %v1947 = vpop.f32.mrb[0].mxu0
  %1948 = vmatprep.mubr.bf16.mxu0 %v892
  %1949 = vmatmul.mubr.bf16.gmra.mrb[0].mxu0 %v891
  %v1950 = vpop.f32.mrb[0].mxu0
  %v1951 = vadd.f32 %v1790, %v1950
  %v1952 = vpop.f32.mrb[0].mxu0
  %v1953 = vpop.f32.mrb[0].mxu0
  %v1954 = vadd.f32 %v1793, %v1953
  %v1955 = vpop.f32.mrb[0].mxu0
  %1956 = vmatprep.mubr.bf16.mxu0 %v901
  %1957 = vmatmul.mubr.bf16.gmra.mrb[0].mxu0 %v900
  %v1958 = vpop.f32.mrb[0].mxu0
  %v1959 = vadd.f32 %v1798, %v1958
  %v1960 = vpop.f32.mrb[0].mxu0
  %v1961 = vpop.f32.mrb[0].mxu0
  %v1962 = vadd.f32 %v1801, %v1961
  %v1963 = vpop.f32.mrb[0].mxu0
  %1964 = vmatprep.mubr.bf16.mxu0 %v910
  %1965 = vmatmul.mubr.bf16.gmra.mrb[0].mxu0 %v909
  %v1966 = vpop.f32.mrb[0].mxu0
  %v1967 = vadd.f32 %v1806, %v1966
  %v1968 = vpop.f32.mrb[0].mxu0
  %v1969 = vpop.f32.mrb[0].mxu0
  %v1970 = vadd.f32 %v1809, %v1969
  %v1971 = vpop.f32.mrb[0].mxu0
  %1972 = vdwg.mxu0
  %1973 = vmatprep.subr.bf16.mxu0 0
  %1974 = vmatpush1.bf16.msra.mxu0 %v1394
  %1975 = vmatprep.subr.bf16.mxu0 0
  %1976 = vmatpush1.bf16.msra.mxu0 %v1395
  %1977 = vmatprep.subr.bf16.mxu0 0
  %1978 = vmatpush1.bf16.msra.mxu0 %v1396
  %1979 = vmatprep.subr.bf16.mxu0 0
  %1980 = vmatpush1.bf16.msra.mxu0 %v1397
  %1981 = vmatprep.subr.bf16.mxu0 0
  %1982 = vmatpush1.bf16.msra.mxu0 %v1398
  %1983 = vmatprep.subr.bf16.mxu0 0
  %1984 = vmatpush1.bf16.msra.mxu0 %v1399
  %1985 = vmatprep.subr.bf16.mxu0 0
  %1986 = vmatpush1.bf16.msra.mxu0 %v1400
  %1987 = vmatprep.subr.bf16.mxu0 0
  %1988 = vmatpush1.bf16.msra.mxu0 %v1401
  %1989 = vmatprep.subr.bf16.mxu0 0
  %1990 = vmatpush1.bf16.msra.mxu0 %v1402
  %1991 = vmatprep.subr.bf16.mxu0 0
  %1992 = vmatpush1.bf16.msra.mxu0 %v1403
  %1993 = vmatprep.subr.bf16.mxu0 0
  %1994 = vmatpush1.bf16.msra.mxu0 %v1404
  %1995 = vmatprep.subr.bf16.mxu0 0
  %1996 = vmatpush1.bf16.msra.mxu0 %v1405
  %1997 = vmatprep.subr.bf16.mxu0 0
  %1998 = vmatpush1.bf16.msra.mxu0 %v1406
  %1999 = vmatprep.subr.bf16.mxu0 0
  %2000 = vmatpush1.bf16.msra.mxu0 %v1407
  %2001 = vmatprep.subr.bf16.mxu0 0
  %2002 = vmatpush1.bf16.msra.mxu0 %v1408
  %2003 = vmatprep.subr.bf16.mxu0 0
  %2004 = vmatpush1.bf16.msra.mxu0 %v1409
  %2005 = vmatprep.mubr.bf16.mxu0 %v777
  %2006 = vmatmul.mubr.bf16.gmra.mrb[0].mxu0 %v776
  %v2007 = vpop.f32.mrb[0].mxu0
  %v2008 = vadd.f32 %v1847, %v2007
  %v2009 = vpop.f32.mrb[0].mxu0
  %v2010 = vpop.f32.mrb[0].mxu0
  %v2011 = vadd.f32 %v1850, %v2010
  %v2012 = vpop.f32.mrb[0].mxu0
  %2013 = vmatprep.mubr.bf16.mxu0 %v786
  %2014 = vmatmul.mubr.bf16.gmra.mrb[0].mxu0 %v785
  %v2015 = vpop.f32.mrb[0].mxu0
  %v2016 = vadd.f32 %v1855, %v2015
  %v2017 = vpop.f32.mrb[0].mxu0
  %v2018 = vpop.f32.mrb[0].mxu0
  %v2019 = vadd.f32 %v1858, %v2018
  %v2020 = vpop.f32.mrb[0].mxu0
  %2021 = vmatprep.mubr.bf16.mxu0 %v795
  %2022 = vmatmul.mubr.bf16.gmra.mrb[0].mxu0 %v794
  %v2023 = vpop.f32.mrb[0].mxu0
  %v2024 = vadd.f32 %v1863, %v2023
  %v2025 = vpop.f32.mrb[0].mxu0
  %v2026 = vpop.f32.mrb[0].mxu0
  %v2027 = vadd.f32 %v1866, %v2026
  %v2028 = vpop.f32.mrb[0].mxu0
  %2029 = vmatprep.mubr.bf16.mxu0 %v804
  %2030 = vmatmul.mubr.bf16.gmra.mrb[0].mxu0 %v803
  %v2031 = vpop.f32.mrb[0].mxu0
  %v2032 = vadd.f32 %v1871, %v2031
  %v2033 = vpop.f32.mrb[0].mxu0
  %v2034 = vpop.f32.mrb[0].mxu0
  %v2035 = vadd.f32 %v1874, %v2034
  %v2036 = vpop.f32.mrb[0].mxu0
  %2037 = vmatprep.mubr.bf16.mxu0 %v813
  %2038 = vmatmul.mubr.bf16.gmra.mrb[0].mxu0 %v812
  %v2039 = vpop.f32.mrb[0].mxu0
  %v2040 = vadd.f32 %v1879, %v2039
  %v2041 = vpop.f32.mrb[0].mxu0
  %v2042 = vpop.f32.mrb[0].mxu0
  %v2043 = vadd.f32 %v1882, %v2042
  %v2044 = vpop.f32.mrb[0].mxu0
  %2045 = vmatprep.mubr.bf16.mxu0 %v822
  %2046 = vmatmul.mubr.bf16.gmra.mrb[0].mxu0 %v821
  %v2047 = vpop.f32.mrb[0].mxu0
  %v2048 = vadd.f32 %v1887, %v2047
  %v2049 = vpop.f32.mrb[0].mxu0
  %v2050 = vpop.f32.mrb[0].mxu0
  %v2051 = vadd.f32 %v1890, %v2050
  %v2052 = vpop.f32.mrb[0].mxu0
  %2053 = vmatprep.mubr.bf16.mxu0 %v831
  %2054 = vmatmul.mubr.bf16.gmra.mrb[0].mxu0 %v830
  %v2055 = vpop.f32.mrb[0].mxu0
  %v2056 = vadd.f32 %v1895, %v2055
  %v2057 = vpop.f32.mrb[0].mxu0
  %v2058 = vpop.f32.mrb[0].mxu0
  %v2059 = vadd.f32 %v1898, %v2058
  %v2060 = vpop.f32.mrb[0].mxu0
  %2061 = vmatprep.mubr.bf16.mxu0 %v840
  %2062 = vmatmul.mubr.bf16.gmra.mrb[0].mxu0 %v839
  %v2063 = vpop.f32.mrb[0].mxu0
  %v2064 = vadd.f32 %v1903, %v2063
  %v2065 = vpop.f32.mrb[0].mxu0
  %v2066 = vpop.f32.mrb[0].mxu0
  %v2067 = vadd.f32 %v1906, %v2066
  %v2068 = vpop.f32.mrb[0].mxu0
  %2069 = vmatprep.mubr.bf16.mxu0 %v849
  %2070 = vmatmul.mubr.bf16.gmra.mrb[0].mxu0 %v848
  %v2071 = vpop.f32.mrb[0].mxu0
  %v2072 = vadd.f32 %v1911, %v2071
  %v2073 = vpop.f32.mrb[0].mxu0
  %v2074 = vpop.f32.mrb[0].mxu0
  %v2075 = vadd.f32 %v1914, %v2074
  %v2076 = vpop.f32.mrb[0].mxu0
  %2077 = vmatprep.mubr.bf16.mxu0 %v858
  %2078 = vmatmul.mubr.bf16.gmra.mrb[0].mxu0 %v857
  %v2079 = vpop.f32.mrb[0].mxu0
  %v2080 = vadd.f32 %v1919, %v2079
  %v2081 = vpop.f32.mrb[0].mxu0
  %v2082 = vpop.f32.mrb[0].mxu0
  %v2083 = vadd.f32 %v1922, %v2082
  %v2084 = vpop.f32.mrb[0].mxu0
  %2085 = vmatprep.mubr.bf16.mxu0 %v867
  %2086 = vmatmul.mubr.bf16.gmra.mrb[0].mxu0 %v866
  %v2087 = vpop.f32.mrb[0].mxu0
  %v2088 = vadd.f32 %v1927, %v2087
  %v2089 = vpop.f32.mrb[0].mxu0
  %v2090 = vpop.f32.mrb[0].mxu0
  %v2091 = vadd.f32 %v1930, %v2090
  %v2092 = vpop.f32.mrb[0].mxu0
  %2093 = vmatprep.mubr.bf16.mxu0 %v876
  %2094 = vmatmul.mubr.bf16.gmra.mrb[0].mxu0 %v875
  %v2095 = vpop.f32.mrb[0].mxu0
  %v2096 = vadd.f32 %v1935, %v2095
  %v2097 = vpop.f32.mrb[0].mxu0
  %v2098 = vpop.f32.mrb[0].mxu0
  %v2099 = vadd.f32 %v1938, %v2098
  %v2100 = vpop.f32.mrb[0].mxu0
  %2101 = vmatprep.mubr.bf16.mxu0 %v885
  %2102 = vmatmul.mubr.bf16.gmra.mrb[0].mxu0 %v884
  %v2103 = vpop.f32.mrb[0].mxu0
  %v2104 = vadd.f32 %v1943, %v2103
  %v2105 = vpop.f32.mrb[0].mxu0
  %v2106 = vpop.f32.mrb[0].mxu0
  %v2107 = vadd.f32 %v1946, %v2106
  %v2108 = vpop.f32.mrb[0].mxu0
  %2109 = vmatprep.mubr.bf16.mxu0 %v894
  %2110 = vmatmul.mubr.bf16.gmra.mrb[0].mxu0 %v893
  %v2111 = vpop.f32.mrb[0].mxu0
  %v2112 = vadd.f32 %v1951, %v2111
  %v2113 = vpop.f32.mrb[0].mxu0
  %v2114 = vpop.f32.mrb[0].mxu0
  %v2115 = vadd.f32 %v1954, %v2114
  %v2116 = vpop.f32.mrb[0].mxu0
  %2117 = vmatprep.mubr.bf16.mxu0 %v903
  %2118 = vmatmul.mubr.bf16.gmra.mrb[0].mxu0 %v902
  %v2119 = vpop.f32.mrb[0].mxu0
  %v2120 = vadd.f32 %v1959, %v2119
  %v2121 = vpop.f32.mrb[0].mxu0
  %v2122 = vpop.f32.mrb[0].mxu0
  %v2123 = vadd.f32 %v1962, %v2122
  %v2124 = vpop.f32.mrb[0].mxu0
  %2125 = vmatprep.mubr.bf16.mxu0 %v912
  %2126 = vmatmul.mubr.bf16.gmra.mrb[0].mxu0 %v911
  %v2127 = vpop.f32.mrb[0].mxu0
  %v2128 = vadd.f32 %v1967, %v2127
  %v2129 = vpop.f32.mrb[0].mxu0
  %v2130 = vpop.f32.mrb[0].mxu0
  %v2131 = vadd.f32 %v1970, %v2130
  %v2132 = vpop.f32.mrb[0].mxu0
  %2133 = vdwg.mxu0
  %2134 = vmatprep.subr.bf16.mxu0 0
  %2135 = vmatpush1.bf16.msra.mxu0 %v1410
  %2136 = vmatprep.subr.bf16.mxu0 0
  %2137 = vmatpush1.bf16.msra.mxu0 %v1411
  %2138 = vmatprep.subr.bf16.mxu0 0
  %2139 = vmatpush1.bf16.msra.mxu0 %v1412
  %2140 = vmatprep.subr.bf16.mxu0 0
  %2141 = vmatpush1.bf16.msra.mxu0 %v1413
  %2142 = vmatprep.subr.bf16.mxu0 0
  %2143 = vmatpush1.bf16.msra.mxu0 %v1414
  %2144 = vmatprep.subr.bf16.mxu0 0
  %2145 = vmatpush1.bf16.msra.mxu0 %v1415
  %2146 = vmatprep.subr.bf16.mxu0 0
  %2147 = vmatpush1.bf16.msra.mxu0 %v1416
  %2148 = vmatprep.subr.bf16.mxu0 0
  %2149 = vmatpush1.bf16.msra.mxu0 %v1417
  %2150 = vmatprep.subr.bf16.mxu0 0
  %2151 = vmatpush1.bf16.msra.mxu0 0
  %2152 = vmatprep.subr.bf16.mxu0 0
  %2153 = vmatpush1.bf16.msra.mxu0 0
  %2154 = vmatprep.subr.bf16.mxu0 0
  %2155 = vmatpush1.bf16.msra.mxu0 0
  %2156 = vmatprep.subr.bf16.mxu0 0
  %2157 = vmatpush1.bf16.msra.mxu0 0
  %2158 = vmatprep.subr.bf16.mxu0 0
  %2159 = vmatpush1.bf16.msra.mxu0 0
  %2160 = vmatprep.subr.bf16.mxu0 0
  %2161 = vmatpush1.bf16.msra.mxu0 0
  %2162 = vmatprep.subr.bf16.mxu0 0
  %2163 = vmatpush1.bf16.msra.mxu0 0
  %2164 = vmatprep.subr.bf16.mxu0 0
  %2165 = vmatpush1.bf16.msra.mxu0 0
  %2166 = vmatprep.mubr.bf16.mxu0 0
  %2167 = vmatmul.mubr.bf16.gmra.mrb[0].mxu0 %v778
  %v2168 = vpop.f32.mrb[0].mxu0
  %v2169 = vadd.f32 %v2008, %v2168
  %v2170 = vpop.f32.mrb[0].mxu0
  %v2171 = vpop.f32.mrb[0].mxu0
  %v2172 = vadd.f32 %v2011, %v2171
  %v2173 = vpop.f32.mrb[0].mxu0
  %2174 = vmatprep.mubr.bf16.mxu0 0
  %2175 = vmatmul.mubr.bf16.gmra.mrb[0].mxu0 %v787
  %v2176 = vpop.f32.mrb[0].mxu0
  %v2177 = vadd.f32 %v2016, %v2176
  %v2178 = vpop.f32.mrb[0].mxu0
  %v2179 = vpop.f32.mrb[0].mxu0
  %v2180 = vadd.f32 %v2019, %v2179
  %v2181 = vpop.f32.mrb[0].mxu0
  %2182 = vmatprep.mubr.bf16.mxu0 0
  %2183 = vmatmul.mubr.bf16.gmra.mrb[0].mxu0 %v796
  %v2184 = vpop.f32.mrb[0].mxu0
  %v2185 = vadd.f32 %v2024, %v2184
  %v2186 = vpop.f32.mrb[0].mxu0
  %v2187 = vpop.f32.mrb[0].mxu0
  %v2188 = vadd.f32 %v2027, %v2187
  %v2189 = vpop.f32.mrb[0].mxu0
  %2190 = vmatprep.mubr.bf16.mxu0 0
  %2191 = vmatmul.mubr.bf16.gmra.mrb[0].mxu0 %v805
  %v2192 = vpop.f32.mrb[0].mxu0
  %v2193 = vadd.f32 %v2032, %v2192
  %v2194 = vpop.f32.mrb[0].mxu0
  %v2195 = vpop.f32.mrb[0].mxu0
  %v2196 = vadd.f32 %v2035, %v2195
  %v2197 = vpop.f32.mrb[0].mxu0
  %2198 = vmatprep.mubr.bf16.mxu0 0
  %2199 = vmatmul.mubr.bf16.gmra.mrb[0].mxu0 %v814
  %v2200 = vpop.f32.mrb[0].mxu0
  %v2201 = vadd.f32 %v2040, %v2200
  %v2202 = vpop.f32.mrb[0].mxu0
  %v2203 = vpop.f32.mrb[0].mxu0
  %v2204 = vadd.f32 %v2043, %v2203
  %v2205 = vpop.f32.mrb[0].mxu0
  %2206 = vmatprep.mubr.bf16.mxu0 0
  %2207 = vmatmul.mubr.bf16.gmra.mrb[0].mxu0 %v823
  %v2208 = vpop.f32.mrb[0].mxu0
  %v2209 = vadd.f32 %v2048, %v2208
  %v2210 = vpop.f32.mrb[0].mxu0
  %v2211 = vpop.f32.mrb[0].mxu0
  %v2212 = vadd.f32 %v2051, %v2211
  %v2213 = vpop.f32.mrb[0].mxu0
  %2214 = vmatprep.mubr.bf16.mxu0 0
  %2215 = vmatmul.mubr.bf16.gmra.mrb[0].mxu0 %v832
  %v2216 = vpop.f32.mrb[0].mxu0
  %v2217 = vadd.f32 %v2056, %v2216
  %v2218 = vpop.f32.mrb[0].mxu0
  %v2219 = vpop.f32.mrb[0].mxu0
  %v2220 = vadd.f32 %v2059, %v2219
  %v2221 = vpop.f32.mrb[0].mxu0
  %2222 = vmatprep.mubr.bf16.mxu0 0
  %2223 = vmatmul.mubr.bf16.gmra.mrb[0].mxu0 %v841
  %v2224 = vpop.f32.mrb[0].mxu0
  %v2225 = vadd.f32 %v2064, %v2224
  %v2226 = vpop.f32.mrb[0].mxu0
  %v2227 = vpop.f32.mrb[0].mxu0
  %v2228 = vadd.f32 %v2067, %v2227
  %v2229 = vpop.f32.mrb[0].mxu0
  %2230 = vmatprep.mubr.bf16.mxu0 0
  %2231 = vmatmul.mubr.bf16.gmra.mrb[0].mxu0 %v850
  %v2232 = vpop.f32.mrb[0].mxu0
  %v2233 = vadd.f32 %v2072, %v2232
  %v2234 = vpop.f32.mrb[0].mxu0
  %v2235 = vpop.f32.mrb[0].mxu0
  %v2236 = vadd.f32 %v2075, %v2235
  %v2237 = vpop.f32.mrb[0].mxu0
  %2238 = vmatprep.mubr.bf16.mxu0 0
  %2239 = vmatmul.mubr.bf16.gmra.mrb[0].mxu0 %v859
  %v2240 = vpop.f32.mrb[0].mxu0
  %v2241 = vadd.f32 %v2080, %v2240
  %v2242 = vpop.f32.mrb[0].mxu0
  %v2243 = vpop.f32.mrb[0].mxu0
  %v2244 = vadd.f32 %v2083, %v2243
  %v2245 = vpop.f32.mrb[0].mxu0
  %2246 = vmatprep.mubr.bf16.mxu0 0
  %2247 = vmatmul.mubr.bf16.gmra.mrb[0].mxu0 %v868
  %v2248 = vpop.f32.mrb[0].mxu0
  %v2249 = vadd.f32 %v2088, %v2248
  %v2250 = vpop.f32.mrb[0].mxu0
  %v2251 = vpop.f32.mrb[0].mxu0
  %v2252 = vadd.f32 %v2091, %v2251
  %v2253 = vpop.f32.mrb[0].mxu0
  %2254 = vmatprep.mubr.bf16.mxu0 0
  %2255 = vmatmul.mubr.bf16.gmra.mrb[0].mxu0 %v877
  %v2256 = vpop.f32.mrb[0].mxu0
  %v2257 = vadd.f32 %v2096, %v2256
  %v2258 = vpop.f32.mrb[0].mxu0
  %v2259 = vpop.f32.mrb[0].mxu0
  %v2260 = vadd.f32 %v2099, %v2259
  %v2261 = vpop.f32.mrb[0].mxu0
  %2262 = vmatprep.mubr.bf16.mxu0 0
  %2263 = vmatmul.mubr.bf16.gmra.mrb[0].mxu0 %v886
  %v2264 = vpop.f32.mrb[0].mxu0
  %v2265 = vadd.f32 %v2104, %v2264
  %v2266 = vpop.f32.mrb[0].mxu0
  %v2267 = vpop.f32.mrb[0].mxu0
  %v2268 = vadd.f32 %v2107, %v2267
  %v2269 = vpop.f32.mrb[0].mxu0
  %2270 = vmatprep.mubr.bf16.mxu0 0
  %2271 = vmatmul.mubr.bf16.gmra.mrb[0].mxu0 %v895
  %v2272 = vpop.f32.mrb[0].mxu0
  %v2273 = vadd.f32 %v2112, %v2272
  %v2274 = vpop.f32.mrb[0].mxu0
  %v2275 = vpop.f32.mrb[0].mxu0
  %v2276 = vadd.f32 %v2115, %v2275
  %v2277 = vpop.f32.mrb[0].mxu0
  %2278 = vmatprep.mubr.bf16.mxu0 0
  %2279 = vmatmul.mubr.bf16.gmra.mrb[0].mxu0 %v904
  %v2280 = vpop.f32.mrb[0].mxu0
  %v2281 = vadd.f32 %v2120, %v2280
  %v2282 = vpop.f32.mrb[0].mxu0
  %v2283 = vpop.f32.mrb[0].mxu0
  %v2284 = vadd.f32 %v2123, %v2283
  %v2285 = vpop.f32.mrb[0].mxu0
  %2286 = vmatprep.mubr.bf16.mxu0 0
  %2287 = vmatmul.mubr.bf16.gmra.mrb[0].mxu0 %v913
  %v2288 = vpop.f32.mrb[0].mxu0
  %v2289 = vadd.f32 %v2128, %v2288
  %v2290 = vpop.f32.mrb[0].mxu0
  %v2291 = vpop.f32.mrb[0].mxu0
  %v2292 = vadd.f32 %v2131, %v2291
  %v2293 = vpop.f32.mrb[0].mxu0
  %2294 = vdwg.mxu0
  %vm2295 = vcmask 261120
  %v2296 = vsel %vm2295, %v2169, 0.0
  %2297 = vadd.xlane.f32.xlu0 %v2296
  %v2298 = vpop.xlane.xlu0 %2297
  %v2299 = vsel %vm2295, %v2172, 0.0
  %2300 = vadd.xlane.f32.xlu0 %v2299
  %v2301 = vpop.xlane.xlu0 %2300
  %v2302 = vsel %vm2295, %v2177, 0.0
  %2303 = vadd.xlane.f32.xlu0 %v2302
  %v2304 = vpop.xlane.xlu0 %2303
  %v2305 = vsel %vm2295, %v2180, 0.0
  %2306 = vadd.xlane.f32.xlu0 %v2305
  %v2307 = vpop.xlane.xlu0 %2306
  %v2308 = vsel %vm2295, %v2185, 0.0
  %2309 = vadd.xlane.f32.xlu0 %v2308
  %v2310 = vpop.xlane.xlu0 %2309
  %v2311 = vsel %vm2295, %v2188, 0.0
  %2312 = vadd.xlane.f32.xlu0 %v2311
  %v2313 = vpop.xlane.xlu0 %2312
  %v2314 = vsel %vm2295, %v2193, 0.0
  %2315 = vadd.xlane.f32.xlu0 %v2314
  %v2316 = vpop.xlane.xlu0 %2315
  %v2317 = vsel %vm2295, %v2196, 0.0
  %2318 = vadd.xlane.f32.xlu0 %v2317
  %v2319 = vpop.xlane.xlu0 %2318
  %v2320 = vsel %vm2295, %v2201, 0.0
  %2321 = vadd.xlane.f32.xlu0 %v2320
  %v2322 = vpop.xlane.xlu0 %2321
  %v2323 = vsel %vm2295, %v2204, 0.0
  %2324 = vadd.xlane.f32.xlu0 %v2323
  %v2325 = vpop.xlane.xlu0 %2324
  %v2326 = vsel %vm2295, %v2209, 0.0
  %2327 = vadd.xlane.f32.xlu0 %v2326
  %v2328 = vpop.xlane.xlu0 %2327
  %v2329 = vsel %vm2295, %v2212, 0.0
  %2330 = vadd.xlane.f32.xlu0 %v2329
  %v2331 = vpop.xlane.xlu0 %2330
  %v2332 = vsel %vm2295, %v2217, 0.0
  %2333 = vadd.xlane.f32.xlu0 %v2332
  %v2334 = vpop.xlane.xlu0 %2333
  %v2335 = vsel %vm2295, %v2220, 0.0
  %2336 = vadd.xlane.f32.xlu0 %v2335
  %v2337 = vpop.xlane.xlu0 %2336
  %v2338 = vsel %vm2295, %v2225, 0.0
  %2339 = vadd.xlane.f32.xlu0 %v2338
  %v2340 = vpop.xlane.xlu0 %2339
  %v2341 = vsel %vm2295, %v2228, 0.0
  %2342 = vadd.xlane.f32.xlu0 %v2341
  %v2343 = vpop.xlane.xlu0 %2342
  %v2344 = vsel %vm2295, %v2233, 0.0
  %2345 = vadd.xlane.f32.xlu0 %v2344
  %v2346 = vpop.xlane.xlu0 %2345
  %v2347 = vsel %vm2295, %v2236, 0.0
  %2348 = vadd.xlane.f32.xlu0 %v2347
  %v2349 = vpop.xlane.xlu0 %2348
  %v2350 = vsel %vm2295, %v2241, 0.0
  %2351 = vadd.xlane.f32.xlu0 %v2350
  %v2352 = vpop.xlane.xlu0 %2351
  %v2353 = vsel %vm2295, %v2244, 0.0
  %2354 = vadd.xlane.f32.xlu0 %v2353
  %v2355 = vpop.xlane.xlu0 %2354
  %v2356 = vsel %vm2295, %v2249, 0.0
  %2357 = vadd.xlane.f32.xlu0 %v2356
  %v2358 = vpop.xlane.xlu0 %2357
  %v2359 = vsel %vm2295, %v2252, 0.0
  %2360 = vadd.xlane.f32.xlu0 %v2359
  %v2361 = vpop.xlane.xlu0 %2360
  %v2362 = vsel %vm2295, %v2257, 0.0
  %2363 = vadd.xlane.f32.xlu0 %v2362
  %v2364 = vpop.xlane.xlu0 %2363
  %v2365 = vsel %vm2295, %v2260, 0.0
  %2366 = vadd.xlane.f32.xlu0 %v2365
  %v2367 = vpop.xlane.xlu0 %2366
  %v2368 = vsel %vm2295, %v2265, 0.0
  %2369 = vadd.xlane.f32.xlu0 %v2368
  %v2370 = vpop.xlane.xlu0 %2369
  %v2371 = vsel %vm2295, %v2268, 0.0
  %2372 = vadd.xlane.f32.xlu0 %v2371
  %v2373 = vpop.xlane.xlu0 %2372
  %v2374 = vsel %vm2295, %v2273, 0.0
  %2375 = vadd.xlane.f32.xlu0 %v2374
  %v2376 = vpop.xlane.xlu0 %2375
  %v2377 = vsel %vm2295, %v2276, 0.0
  %2378 = vadd.xlane.f32.xlu0 %v2377
  %v2379 = vpop.xlane.xlu0 %2378
  %v2380 = vsel %vm2295, %v2281, 0.0
  %2381 = vadd.xlane.f32.xlu0 %v2380
  %v2382 = vpop.xlane.xlu0 %2381
  %v2383 = vsel %vm2295, %v2284, 0.0
  %2384 = vadd.xlane.f32.xlu0 %v2383
  %v2385 = vpop.xlane.xlu0 %2384
  %v2386 = vsel %vm2295, %v2289, 0.0
  %2387 = vadd.xlane.f32.xlu0 %v2386
  %v2388 = vpop.xlane.xlu0 %2387
  %v2389 = vsel %vm2295, %v2292, 0.0
  %2390 = vadd.xlane.f32.xlu0 %v2389
  %v2391 = vpop.xlane.xlu0 %2390
  %v2392 = vmul.f32 %v2169, %v2169
  %v2393 = vmul.f32 %v2172, %v2172
  %v2394 = vmul.f32 %v2177, %v2177
  %v2395 = vmul.f32 %v2180, %v2180
  %v2396 = vmul.f32 %v2185, %v2185
  %v2397 = vmul.f32 %v2188, %v2188
  %v2398 = vmul.f32 %v2193, %v2193
  %v2399 = vmul.f32 %v2196, %v2196
  %v2400 = vmul.f32 %v2201, %v2201
  %v2401 = vmul.f32 %v2204, %v2204
  %v2402 = vmul.f32 %v2209, %v2209
  %v2403 = vmul.f32 %v2212, %v2212
  %v2404 = vmul.f32 %v2217, %v2217
  %v2405 = vmul.f32 %v2220, %v2220
  %v2406 = vmul.f32 %v2225, %v2225
  %v2407 = vmul.f32 %v2228, %v2228
  %v2408 = vmul.f32 %v2233, %v2233
  %v2409 = vmul.f32 %v2236, %v2236
  %v2410 = vmul.f32 %v2241, %v2241
  %v2411 = vmul.f32 %v2244, %v2244
  %v2412 = vmul.f32 %v2249, %v2249
  %v2413 = vmul.f32 %v2252, %v2252
  %v2414 = vmul.f32 %v2257, %v2257
  %v2415 = vmul.f32 %v2260, %v2260
  %v2416 = vmul.f32 %v2265, %v2265
  %v2417 = vmul.f32 %v2268, %v2268
  %v2418 = vmul.f32 %v2273, %v2273
  %v2419 = vmul.f32 %v2276, %v2276
  %v2420 = vmul.f32 %v2281, %v2281
  %v2421 = vmul.f32 %v2284, %v2284
  %v2422 = vmul.f32 %v2289, %v2289
  %v2423 = vmul.f32 %v2292, %v2292
  %v2424 = vsel %vm2295, %v2392, 0.0
  %2425 = vadd.xlane.f32.xlu0 %v2424
  %v2426 = vpop.xlane.xlu0 %2425
  %v2427 = vsel %vm2295, %v2393, 0.0
  %2428 = vadd.xlane.f32.xlu0 %v2427
  %v2429 = vpop.xlane.xlu0 %2428
  %v2430 = vsel %vm2295, %v2394, 0.0
  %2431 = vadd.xlane.f32.xlu0 %v2430
  %v2432 = vpop.xlane.xlu0 %2431
  %v2433 = vsel %vm2295, %v2395, 0.0
  %2434 = vadd.xlane.f32.xlu0 %v2433
  %v2435 = vpop.xlane.xlu0 %2434
  %v2436 = vsel %vm2295, %v2396, 0.0
  %2437 = vadd.xlane.f32.xlu0 %v2436
  %v2438 = vpop.xlane.xlu0 %2437
  %v2439 = vsel %vm2295, %v2397, 0.0
  %2440 = vadd.xlane.f32.xlu0 %v2439
  %v2441 = vpop.xlane.xlu0 %2440
  %v2442 = vsel %vm2295, %v2398, 0.0
  %2443 = vadd.xlane.f32.xlu0 %v2442
  %v2444 = vpop.xlane.xlu0 %2443
  %v2445 = vsel %vm2295, %v2399, 0.0
  %2446 = vadd.xlane.f32.xlu0 %v2445
  %v2447 = vpop.xlane.xlu0 %2446
  %v2448 = vsel %vm2295, %v2400, 0.0
  %2449 = vadd.xlane.f32.xlu0 %v2448
  %v2450 = vpop.xlane.xlu0 %2449
  %v2451 = vsel %vm2295, %v2401, 0.0
  %2452 = vadd.xlane.f32.xlu0 %v2451
  %v2453 = vpop.xlane.xlu0 %2452
  %v2454 = vsel %vm2295, %v2402, 0.0
  %2455 = vadd.xlane.f32.xlu0 %v2454
  %v2456 = vpop.xlane.xlu0 %2455
  %v2457 = vsel %vm2295, %v2403, 0.0
  %2458 = vadd.xlane.f32.xlu0 %v2457
  %v2459 = vpop.xlane.xlu0 %2458
  %v2460 = vsel %vm2295, %v2404, 0.0
  %2461 = vadd.xlane.f32.xlu0 %v2460
  %v2462 = vpop.xlane.xlu0 %2461
  %v2463 = vsel %vm2295, %v2405, 0.0
  %2464 = vadd.xlane.f32.xlu0 %v2463
  %v2465 = vpop.xlane.xlu0 %2464
  %v2466 = vsel %vm2295, %v2406, 0.0
  %2467 = vadd.xlane.f32.xlu0 %v2466
  %v2468 = vpop.xlane.xlu0 %2467
  %v2469 = vsel %vm2295, %v2407, 0.0
  %2470 = vadd.xlane.f32.xlu0 %v2469
  %v2471 = vpop.xlane.xlu0 %2470
  %v2472 = vsel %vm2295, %v2408, 0.0
  %2473 = vadd.xlane.f32.xlu0 %v2472
  %v2474 = vpop.xlane.xlu0 %2473
  %v2475 = vsel %vm2295, %v2409, 0.0
  %2476 = vadd.xlane.f32.xlu0 %v2475
  %v2477 = vpop.xlane.xlu0 %2476
  %v2478 = vsel %vm2295, %v2410, 0.0
  %2479 = vadd.xlane.f32.xlu0 %v2478
  %v2480 = vpop.xlane.xlu0 %2479
  %v2481 = vsel %vm2295, %v2411, 0.0
  %2482 = vadd.xlane.f32.xlu0 %v2481
  %v2483 = vpop.xlane.xlu0 %2482
  %v2484 = vsel %vm2295, %v2412, 0.0
  %2485 = vadd.xlane.f32.xlu0 %v2484
  %v2486 = vpop.xlane.xlu0 %2485
  %v2487 = vsel %vm2295, %v2413, 0.0
  %2488 = vadd.xlane.f32.xlu0 %v2487
  %v2489 = vpop.xlane.xlu0 %2488
  %v2490 = vsel %vm2295, %v2414, 0.0
  %2491 = vadd.xlane.f32.xlu0 %v2490
  %v2492 = vpop.xlane.xlu0 %2491
  %v2493 = vsel %vm2295, %v2415, 0.0
  %2494 = vadd.xlane.f32.xlu0 %v2493
  %v2495 = vpop.xlane.xlu0 %2494
  %v2496 = vsel %vm2295, %v2416, 0.0
  %2497 = vadd.xlane.f32.xlu0 %v2496
  %v2498 = vpop.xlane.xlu0 %2497
  %v2499 = vsel %vm2295, %v2417, 0.0
  %2500 = vadd.xlane.f32.xlu0 %v2499
  %v2501 = vpop.xlane.xlu0 %2500
  %v2502 = vsel %vm2295, %v2418, 0.0
  %2503 = vadd.xlane.f32.xlu0 %v2502
  %v2504 = vpop.xlane.xlu0 %2503
  %v2505 = vsel %vm2295, %v2419, 0.0
  %2506 = vadd.xlane.f32.xlu0 %v2505
  %v2507 = vpop.xlane.xlu0 %2506
  %v2508 = vsel %vm2295, %v2420, 0.0
  %2509 = vadd.xlane.f32.xlu0 %v2508
  %v2510 = vpop.xlane.xlu0 %2509
  %v2511 = vsel %vm2295, %v2421, 0.0
  %2512 = vadd.xlane.f32.xlu0 %v2511
  %v2513 = vpop.xlane.xlu0 %2512
  %v2514 = vsel %vm2295, %v2422, 0.0
  %2515 = vadd.xlane.f32.xlu0 %v2514
  %v2516 = vpop.xlane.xlu0 %2515
  %v2517 = vsel %vm2295, %v2423, 0.0
  %2518 = vadd.xlane.f32.xlu0 %v2517
  %v2519 = vpop.xlane.xlu0 %2518
  %v2520 = vadd.f32 %v2298, %v2322
  %v2521 = vadd.f32 %v2301, %v2325
  %v2522 = vadd.f32 %v2304, %v2328
  %v2523 = vadd.f32 %v2307, %v2331
  %v2524 = vadd.f32 %v2310, %v2334
  %v2525 = vadd.f32 %v2313, %v2337
  %v2526 = vadd.f32 %v2316, %v2340
  %v2527 = vadd.f32 %v2319, %v2343
  %v2528 = vadd.f32 %v2426, %v2450
  %v2529 = vadd.f32 %v2429, %v2453
  %v2530 = vadd.f32 %v2432, %v2456
  %v2531 = vadd.f32 %v2435, %v2459
  %v2532 = vadd.f32 %v2438, %v2462
  %v2533 = vadd.f32 %v2441, %v2465
  %v2534 = vadd.f32 %v2444, %v2468
  %v2535 = vadd.f32 %v2447, %v2471
  %v2536 = vadd.f32 %v2520, %v2346
  %v2537 = vadd.f32 %v2521, %v2349
  %v2538 = vadd.f32 %v2522, %v2352
  %v2539 = vadd.f32 %v2523, %v2355
  %v2540 = vadd.f32 %v2524, %v2358
  %v2541 = vadd.f32 %v2525, %v2361
  %v2542 = vadd.f32 %v2526, %v2364
  %v2543 = vadd.f32 %v2527, %v2367
  %v2544 = vadd.f32 %v2528, %v2474
  %v2545 = vadd.f32 %v2529, %v2477
  %v2546 = vadd.f32 %v2530, %v2480
  %v2547 = vadd.f32 %v2531, %v2483
  %v2548 = vadd.f32 %v2532, %v2486
  %v2549 = vadd.f32 %v2533, %v2489
  %v2550 = vadd.f32 %v2534, %v2492
  %v2551 = vadd.f32 %v2535, %v2495
  %v2552 = vadd.f32 %v2536, %v2370
  %v2553 = vadd.f32 %v2537, %v2373
  %v2554 = vadd.f32 %v2538, %v2376
  %v2555 = vadd.f32 %v2539, %v2379
  %v2556 = vadd.f32 %v2540, %v2382
  %v2557 = vadd.f32 %v2541, %v2385
  %v2558 = vadd.f32 %v2542, %v2388
  %v2559 = vadd.f32 %v2543, %v2391
  %v2560 = vadd.f32 %v2544, %v2498
  %v2561 = vadd.f32 %v2545, %v2501
  %v2562 = vadd.f32 %v2546, %v2504
  %v2563 = vadd.f32 %v2547, %v2507
  %v2564 = vadd.f32 %v2548, %v2510
  %v2565 = vadd.f32 %v2549, %v2513
  %v2566 = vadd.f32 %v2550, %v2516
  %v2567 = vadd.f32 %v2551, %v2519
  %v2568 = vmul.f32 %v2552, 0.0078125
  %v2569 = vmul.f32 %v2553, 0.0078125
  %v2570 = vmul.f32 %v2554, 0.0078125
  %v2571 = vmul.f32 %v2555, 0.0078125
  %v2572 = vmul.f32 %v2556, 0.0078125
  %v2573 = vmul.f32 %v2557, 0.0078125
  %v2574 = vmul.f32 %v2558, 0.0078125
  %v2575 = vmul.f32 %v2559, 0.0078125
  %v2576 = vmul.f32 %v2560, 0.0078125
  %v2577 = vmul.f32 %v2561, 0.0078125
  %v2578 = vmul.f32 %v2562, 0.0078125
  %v2579 = vmul.f32 %v2563, 0.0078125
  %v2580 = vmul.f32 %v2564, 0.0078125
  %v2581 = vmul.f32 %v2565, 0.0078125
  %v2582 = vmul.f32 %v2566, 0.0078125
  %v2583 = vmul.f32 %v2567, 0.0078125
  %v2584 = vmul.f32 %v2568, %v2568
  %v2585 = vmul.f32 %v2569, %v2569
  %v2586 = vmul.f32 %v2570, %v2570
  %v2587 = vmul.f32 %v2571, %v2571
  %v2588 = vmul.f32 %v2572, %v2572
  %v2589 = vmul.f32 %v2573, %v2573
  %v2590 = vmul.f32 %v2574, %v2574
  %v2591 = vmul.f32 %v2575, %v2575
  %v2592 = vsub.f32 %v2576, %v2584
  %v2593 = vsub.f32 %v2577, %v2585
  %v2594 = vsub.f32 %v2578, %v2586
  %v2595 = vsub.f32 %v2579, %v2587
  %v2596 = vsub.f32 %v2580, %v2588
  %v2597 = vsub.f32 %v2581, %v2589
  %v2598 = vsub.f32 %v2582, %v2590
  %v2599 = vsub.f32 %v2583, %v2591
  %v2600 = vmax.f32 %v2592, 0.0
  %v2601 = vmax.f32 %v2593, 0.0
  %v2602 = vmax.f32 %v2594, 0.0
  %v2603 = vmax.f32 %v2595, 0.0
  %v2604 = vmax.f32 %v2596, 0.0
  %v2605 = vmax.f32 %v2597, 0.0
  %v2606 = vmax.f32 %v2598, 0.0
  %v2607 = vmax.f32 %v2599, 0.0
  %v2608 = vld [vmem:[%s2] sm:$0xff]
  %v2609 = vld [vmem:[%s2 + $0x8] sm:$0xff]
  %v2610 = vld [vmem:[%s2 + $0x10] sm:$0xff]
  %v2611 = vld [vmem:[%s2 + $0x18] sm:$0xff]
  %v2612 = vld [vmem:[%s2 + $0x20] sm:$0xff]
  %v2613 = vld [vmem:[%s2 + $0x28] sm:$0xff]
  %v2614 = vld [vmem:[%s2 + $0x30] sm:$0xff]
  %v2615 = vld [vmem:[%s2 + $0x38] sm:$0xff]
  %v2616 = vadd.f32 %v2600, 1e-05
  %v2617 = vadd.f32 %v2601, 1e-05
  %v2618 = vadd.f32 %v2602, 1e-05
  %v2619 = vadd.f32 %v2603, 1e-05
  %v2620 = vadd.f32 %v2604, 1e-05
  %v2621 = vadd.f32 %v2605, 1e-05
  %v2622 = vadd.f32 %v2606, 1e-05
  %v2623 = vadd.f32 %v2607, 1e-05
  %v2624 = vrsqrt.pop %v2616
  %v2625 = vrsqrt.pop %v2617
  %v2626 = vrsqrt.pop %v2618
  %v2627 = vrsqrt.pop %v2619
  %v2628 = vrsqrt.pop %v2620
  %v2629 = vrsqrt.pop %v2621
  %v2630 = vrsqrt.pop %v2622
  %v2631 = vrsqrt.pop %v2623
  %v2632 = vmul.f32 %v2608, %v2624
  %v2633 = vmul.f32 %v2609, %v2625
  %v2634 = vmul.f32 %v2610, %v2626
  %v2635 = vmul.f32 %v2611, %v2627
  %v2636 = vmul.f32 %v2612, %v2628
  %v2637 = vmul.f32 %v2613, %v2629
  %v2638 = vmul.f32 %v2614, %v2630
  %v2639 = vmul.f32 %v2615, %v2631
  %v2640 = vld [vmem:[%s3] sm:$0xff]
  %v2641 = vld [vmem:[%s3 + $0x8] sm:$0xff]
  %v2642 = vld [vmem:[%s3 + $0x10] sm:$0xff]
  %v2643 = vld [vmem:[%s3 + $0x18] sm:$0xff]
  %v2644 = vld [vmem:[%s3 + $0x20] sm:$0xff]
  %v2645 = vld [vmem:[%s3 + $0x28] sm:$0xff]
  %v2646 = vld [vmem:[%s3 + $0x30] sm:$0xff]
  %v2647 = vld [vmem:[%s3 + $0x38] sm:$0xff]
  %v2648 = vmul.f32 %v2568, %v2632
  %v2649 = vmul.f32 %v2569, %v2633
  %v2650 = vmul.f32 %v2570, %v2634
  %v2651 = vmul.f32 %v2571, %v2635
  %v2652 = vmul.f32 %v2572, %v2636
  %v2653 = vmul.f32 %v2573, %v2637
  %v2654 = vmul.f32 %v2574, %v2638
  %v2655 = vmul.f32 %v2575, %v2639
  %v2656 = vsub.f32 %v2640, %v2648
  %v2657 = vsub.f32 %v2641, %v2649
  %v2658 = vsub.f32 %v2642, %v2650
  %v2659 = vsub.f32 %v2643, %v2651
  %v2660 = vsub.f32 %v2644, %v2652
  %v2661 = vsub.f32 %v2645, %v2653
  %v2662 = vsub.f32 %v2646, %v2654
  %v2663 = vsub.f32 %v2647, %v2655
  %2665 = vset.pattern.permute.xlu0 0
  %2666 = vperm.xlu0 %2665, %v2632
  %v2667 = vpop.permute.xlu0 %2666
  %2670 = vset.pattern.permute.xlu0 0
  %2671 = vperm.xlu0 %2670, %v2633
  %v2672 = vpop.permute.xlu0 %2671
  %2675 = vset.pattern.permute.xlu0 0
  %2676 = vperm.xlu0 %2675, %v2634
  %v2677 = vpop.permute.xlu0 %2676
  %2680 = vset.pattern.permute.xlu0 0
  %2681 = vperm.xlu0 %2680, %v2635
  %v2682 = vpop.permute.xlu0 %2681
  %2685 = vset.pattern.permute.xlu0 0
  %2686 = vperm.xlu0 %2685, %v2636
  %v2687 = vpop.permute.xlu0 %2686
  %2690 = vset.pattern.permute.xlu0 0
  %2691 = vperm.xlu0 %2690, %v2637
  %v2692 = vpop.permute.xlu0 %2691
  %2695 = vset.pattern.permute.xlu0 0
  %2696 = vperm.xlu0 %2695, %v2638
  %v2697 = vpop.permute.xlu0 %2696
  %2700 = vset.pattern.permute.xlu0 0
  %2701 = vperm.xlu0 %2700, %v2639
  %v2702 = vpop.permute.xlu0 %2701
  %v2704 = vmul.f32 %v2169, %v2667
  %v2705 = vmul.f32 %v2172, %v2672
  %v2706 = vmul.f32 %v2177, %v2677
  %v2707 = vmul.f32 %v2180, %v2682
  %v2708 = vmul.f32 %v2185, %v2687
  %v2709 = vmul.f32 %v2188, %v2692
  %v2710 = vmul.f32 %v2193, %v2697
  %v2711 = vmul.f32 %v2196, %v2702
  %v2712 = vmul.f32 %v2201, %v2667
  %v2713 = vmul.f32 %v2204, %v2672
  %v2714 = vmul.f32 %v2209, %v2677
  %v2715 = vmul.f32 %v2212, %v2682
  %v2716 = vmul.f32 %v2217, %v2687
  %v2717 = vmul.f32 %v2220, %v2692
  %v2718 = vmul.f32 %v2225, %v2697
  %v2719 = vmul.f32 %v2228, %v2702
  %v2720 = vmul.f32 %v2233, %v2667
  %v2721 = vmul.f32 %v2236, %v2672
  %v2722 = vmul.f32 %v2241, %v2677
  %v2723 = vmul.f32 %v2244, %v2682
  %v2724 = vmul.f32 %v2249, %v2687
  %v2725 = vmul.f32 %v2252, %v2692
  %v2726 = vmul.f32 %v2257, %v2697
  %v2727 = vmul.f32 %v2260, %v2702
  %v2728 = vmul.f32 %v2265, %v2667
  %v2729 = vmul.f32 %v2268, %v2672
  %v2730 = vmul.f32 %v2273, %v2677
  %v2731 = vmul.f32 %v2276, %v2682
  %v2732 = vmul.f32 %v2281, %v2687
  %v2733 = vmul.f32 %v2284, %v2692
  %v2734 = vmul.f32 %v2289, %v2697
  %v2735 = vmul.f32 %v2292, %v2702
  %2737 = vset.pattern.permute.xlu0 0
  %2738 = vperm.xlu0 %2737, %v2656
  %v2739 = vpop.permute.xlu0 %2738
  %2742 = vset.pattern.permute.xlu0 0
  %2743 = vperm.xlu0 %2742, %v2657
  %v2744 = vpop.permute.xlu0 %2743
  %2747 = vset.pattern.permute.xlu0 0
  %2748 = vperm.xlu0 %2747, %v2658
  %v2749 = vpop.permute.xlu0 %2748
  %2752 = vset.pattern.permute.xlu0 0
  %2753 = vperm.xlu0 %2752, %v2659
  %v2754 = vpop.permute.xlu0 %2753
  %2757 = vset.pattern.permute.xlu0 0
  %2758 = vperm.xlu0 %2757, %v2660
  %v2759 = vpop.permute.xlu0 %2758
  %2762 = vset.pattern.permute.xlu0 0
  %2763 = vperm.xlu0 %2762, %v2661
  %v2764 = vpop.permute.xlu0 %2763
  %2767 = vset.pattern.permute.xlu0 0
  %2768 = vperm.xlu0 %2767, %v2662
  %v2769 = vpop.permute.xlu0 %2768
  %2772 = vset.pattern.permute.xlu0 0
  %2773 = vperm.xlu0 %2772, %v2663
  %v2774 = vpop.permute.xlu0 %2773
  %v2776 = vadd.f32 %v2704, %v2739
  %v2777 = vadd.f32 %v2705, %v2744
  %v2778 = vadd.f32 %v2706, %v2749
  %v2779 = vadd.f32 %v2707, %v2754
  %v2780 = vadd.f32 %v2708, %v2759
  %v2781 = vadd.f32 %v2709, %v2764
  %v2782 = vadd.f32 %v2710, %v2769
  %v2783 = vadd.f32 %v2711, %v2774
  %v2784 = vadd.f32 %v2712, %v2739
  %v2785 = vadd.f32 %v2713, %v2744
  %v2786 = vadd.f32 %v2714, %v2749
  %v2787 = vadd.f32 %v2715, %v2754
  %v2788 = vadd.f32 %v2716, %v2759
  %v2789 = vadd.f32 %v2717, %v2764
  %v2790 = vadd.f32 %v2718, %v2769
  %v2791 = vadd.f32 %v2719, %v2774
  %v2792 = vadd.f32 %v2720, %v2739
  %v2793 = vadd.f32 %v2721, %v2744
  %v2794 = vadd.f32 %v2722, %v2749
  %v2795 = vadd.f32 %v2723, %v2754
  %v2796 = vadd.f32 %v2724, %v2759
  %v2797 = vadd.f32 %v2725, %v2764
  %v2798 = vadd.f32 %v2726, %v2769
  %v2799 = vadd.f32 %v2727, %v2774
  %v2800 = vadd.f32 %v2728, %v2739
  %v2801 = vadd.f32 %v2729, %v2744
  %v2802 = vadd.f32 %v2730, %v2749
  %v2803 = vadd.f32 %v2731, %v2754
  %v2804 = vadd.f32 %v2732, %v2759
  %v2805 = vadd.f32 %v2733, %v2764
  %v2806 = vadd.f32 %v2734, %v2769
  %v2807 = vadd.f32 %v2735, %v2774
  %v2808 = vmax.f32 %v2776, 0.0
  %v2809 = vmax.f32 %v2777, 0.0
  %v2810 = vmax.f32 %v2778, 0.0
  %v2811 = vmax.f32 %v2779, 0.0
  %v2812 = vmax.f32 %v2780, 0.0
  %v2813 = vmax.f32 %v2781, 0.0
  %v2814 = vmax.f32 %v2782, 0.0
  %v2815 = vmax.f32 %v2783, 0.0
  %v2816 = vmax.f32 %v2784, 0.0
  %v2817 = vmax.f32 %v2785, 0.0
  %v2818 = vmax.f32 %v2786, 0.0
  %v2819 = vmax.f32 %v2787, 0.0
  %v2820 = vmax.f32 %v2788, 0.0
  %v2821 = vmax.f32 %v2789, 0.0
  %v2822 = vmax.f32 %v2790, 0.0
  %v2823 = vmax.f32 %v2791, 0.0
  %v2824 = vmax.f32 %v2792, 0.0
  %v2825 = vmax.f32 %v2793, 0.0
  %v2826 = vmax.f32 %v2794, 0.0
  %v2827 = vmax.f32 %v2795, 0.0
  %v2828 = vmax.f32 %v2796, 0.0
  %v2829 = vmax.f32 %v2797, 0.0
  %v2830 = vmax.f32 %v2798, 0.0
  %v2831 = vmax.f32 %v2799, 0.0
  %v2832 = vmax.f32 %v2800, 0.0
  %v2833 = vmax.f32 %v2801, 0.0
  %v2834 = vmax.f32 %v2802, 0.0
  %v2835 = vmax.f32 %v2803, 0.0
  %v2836 = vmax.f32 %v2804, 0.0
  %v2837 = vmax.f32 %v2805, 0.0
  %v2838 = vmax.f32 %v2806, 0.0
  %v2839 = vmax.f32 %v2807, 0.0
  %v2840 = vpack.c.bf16 %v2809, %v2808
  %v2841 = vpack.c.bf16 %v2811, %v2810
  %v2842 = vpack.c.bf16 %v2813, %v2812
  %v2843 = vpack.c.bf16 %v2815, %v2814
  %v2844 = vpack.c.bf16 %v2817, %v2816
  %v2845 = vpack.c.bf16 %v2819, %v2818
  %v2846 = vpack.c.bf16 %v2821, %v2820
  %v2847 = vpack.c.bf16 %v2823, %v2822
  %v2848 = vpack.c.bf16 %v2825, %v2824
  %v2849 = vpack.c.bf16 %v2827, %v2826
  %v2850 = vpack.c.bf16 %v2829, %v2828
  %v2851 = vpack.c.bf16 %v2831, %v2830
  %v2852 = vpack.c.bf16 %v2833, %v2832
  %v2853 = vpack.c.bf16 %v2835, %v2834
  %v2854 = vpack.c.bf16 %v2837, %v2836
  %v2855 = vpack.c.bf16 %v2839, %v2838
  %v2872 = vunpack.c.l.b16 %v2840
  %v2873 = vunpack.c.h.b16 %v2840
  %v2874 = vunpack.c.l.b16 %v2841
  %v2875 = vunpack.c.h.b16 %v2841
  %v2876 = vunpack.c.l.b16 %v2842
  %v2877 = vunpack.c.h.b16 %v2842
  %v2878 = vunpack.c.l.b16 %v2843
  %v2879 = vunpack.c.h.b16 %v2843
  %v2880 = vunpack.c.l.b16 %v2844
  %v2881 = vunpack.c.h.b16 %v2844
  %v2882 = vunpack.c.l.b16 %v2845
  %v2883 = vunpack.c.h.b16 %v2845
  %v2884 = vunpack.c.l.b16 %v2846
  %v2885 = vunpack.c.h.b16 %v2846
  %v2886 = vunpack.c.l.b16 %v2847
  %v2887 = vunpack.c.h.b16 %v2847
  %v2888 = vunpack.c.l.b16 %v2848
  %v2889 = vunpack.c.h.b16 %v2848
  %v2890 = vunpack.c.l.b16 %v2849
  %v2891 = vunpack.c.h.b16 %v2849
  %v2892 = vunpack.c.l.b16 %v2850
  %v2893 = vunpack.c.h.b16 %v2850
  %v2894 = vunpack.c.l.b16 %v2851
  %v2895 = vunpack.c.h.b16 %v2851
  %v2896 = vunpack.c.l.b16 %v2852
  %v2897 = vunpack.c.h.b16 %v2852
  %v2898 = vunpack.c.l.b16 %v2853
  %v2899 = vunpack.c.h.b16 %v2853
  %v2900 = vunpack.c.l.b16 %v2854
  %v2901 = vunpack.c.h.b16 %v2854
  %v2902 = vunpack.c.l.b16 %v2855
  %v2903 = vunpack.c.h.b16 %v2855
  %v2904 = vpack.c.b16 %v2872, %v2872
  %v2905 = vpack.c.b16 %v2873, %v2873
  %v2906 = vpack.c.b16 %v2874, %v2874
  %v2907 = vpack.c.b16 %v2875, %v2875
  %v2908 = vpack.c.b16 %v2876, %v2876
  %v2909 = vpack.c.b16 %v2877, %v2877
  %v2910 = vpack.c.b16 %v2878, %v2878
  %v2911 = vpack.c.b16 %v2879, %v2879
  %v2912 = vpack.c.b16 %v2880, %v2880
  %v2913 = vpack.c.b16 %v2881, %v2881
  %v2914 = vpack.c.b16 %v2882, %v2882
  %v2915 = vpack.c.b16 %v2883, %v2883
  %v2916 = vpack.c.b16 %v2884, %v2884
  %v2917 = vpack.c.b16 %v2885, %v2885
  %v2918 = vpack.c.b16 %v2886, %v2886
  %v2919 = vpack.c.b16 %v2887, %v2887
  %v2920 = vpack.c.b16 %v2888, %v2888
  %v2921 = vpack.c.b16 %v2889, %v2889
  %v2922 = vpack.c.b16 %v2890, %v2890
  %v2923 = vpack.c.b16 %v2891, %v2891
  %v2924 = vpack.c.b16 %v2892, %v2892
  %v2925 = vpack.c.b16 %v2893, %v2893
  %v2926 = vpack.c.b16 %v2894, %v2894
  %v2927 = vpack.c.b16 %v2895, %v2895
  %v2928 = vpack.c.b16 %v2896, %v2896
  %v2929 = vpack.c.b16 %v2897, %v2897
  %v2930 = vpack.c.b16 %v2898, %v2898
  %v2931 = vpack.c.b16 %v2899, %v2899
  %v2932 = vpack.c.b16 %v2900, %v2900
  %v2933 = vpack.c.b16 %v2901, %v2901
  %v2934 = vpack.c.b16 %v2902, %v2902
  %v2935 = vpack.c.b16 %v2903, %v2903
  %vm2968 = vcmask 257024
  %2969 = vst.msk [vmem:[%s4] sm:$0xf] %vm2968, %v2904
  %2970 = vst.msk [vmem:[%s4 + $0x4] sm:$0xf] %vm2968, %v2905
  %2971 = vst.msk [vmem:[%s4 + $0x8] sm:$0xf] %vm2968, %v2906
  %2972 = vst.msk [vmem:[%s4 + $0xc] sm:$0xf] %vm2968, %v2907
  %2973 = vst.msk [vmem:[%s4 + $0x10] sm:$0xf] %vm2968, %v2908
  %2974 = vst.msk [vmem:[%s4 + $0x14] sm:$0xf] %vm2968, %v2909
  %2975 = vst.msk [vmem:[%s4 + $0x18] sm:$0xf] %vm2968, %v2910
  %2976 = vst.msk [vmem:[%s4 + $0x1c] sm:$0xf] %vm2968, %v2911
  %2977 = vst.msk [vmem:[%s4 + $0x20] sm:$0xf] %vm2968, %v2912
  %2978 = vst.msk [vmem:[%s4 + $0x24] sm:$0xf] %vm2968, %v2913
  %2979 = vst.msk [vmem:[%s4 + $0x28] sm:$0xf] %vm2968, %v2914
  %2980 = vst.msk [vmem:[%s4 + $0x2c] sm:$0xf] %vm2968, %v2915
  %2981 = vst.msk [vmem:[%s4 + $0x30] sm:$0xf] %vm2968, %v2916
  %2982 = vst.msk [vmem:[%s4 + $0x34] sm:$0xf] %vm2968, %v2917
  %2983 = vst.msk [vmem:[%s4 + $0x38] sm:$0xf] %vm2968, %v2918
  %2984 = vst.msk [vmem:[%s4 + $0x3c] sm:$0xf] %vm2968, %v2919
  %2985 = vst.msk [vmem:[%s4 + $0x40] sm:$0xf] %vm2968, %v2920
  %2986 = vst.msk [vmem:[%s4 + $0x44] sm:$0xf] %vm2968, %v2921
  %2987 = vst.msk [vmem:[%s4 + $0x48] sm:$0xf] %vm2968, %v2922
  %2988 = vst.msk [vmem:[%s4 + $0x4c] sm:$0xf] %vm2968, %v2923
  %2989 = vst.msk [vmem:[%s4 + $0x50] sm:$0xf] %vm2968, %v2924
  %2990 = vst.msk [vmem:[%s4 + $0x54] sm:$0xf] %vm2968, %v2925
  %2991 = vst.msk [vmem:[%s4 + $0x58] sm:$0xf] %vm2968, %v2926
  %2992 = vst.msk [vmem:[%s4 + $0x5c] sm:$0xf] %vm2968, %v2927
  %2993 = vst.msk [vmem:[%s4 + $0x60] sm:$0xf] %vm2968, %v2928
  %2994 = vst.msk [vmem:[%s4 + $0x64] sm:$0xf] %vm2968, %v2929
  %2995 = vst.msk [vmem:[%s4 + $0x68] sm:$0xf] %vm2968, %v2930
  %2996 = vst.msk [vmem:[%s4 + $0x6c] sm:$0xf] %vm2968, %v2931
  %2997 = vst.msk [vmem:[%s4 + $0x70] sm:$0xf] %vm2968, %v2932
  %2998 = vst.msk [vmem:[%s4 + $0x74] sm:$0xf] %vm2968, %v2933
  %2999 = vst.msk [vmem:[%s4 + $0x78] sm:$0xf] %vm2968, %v2934
  %3000 = vst.msk [vmem:[%s4 + $0x7c] sm:$0xf] %vm2968, %v2935
  // Predicated region
  $region18: #{generator_forward.6} parent=0 // pred_check
    _
  $region19: #{generator_forward.6} parent=0 // pred_check_branch
    %3002 = sbr.rel (0) target = $region21
  $region20: #{generator_forward.6} parent=0 // pred_region
    _
  $region21: #{generator_forward.6} parent=0 // pred_fallthru
    _
  // Predicated region
  $region22: #{generator_forward.6} parent=0 // pred_check
    _
  $region23: #{generator_forward.6} parent=0 // pred_check_branch
    %3004 = sbr.rel (0) target = $region25
  $region24: #{generator_forward.6} parent=0 // pred_region
    _
  $region25: #{generator_forward.6} parent=0 // pred_fallthru
    _

// kernel: generator_forward.7
$region0: #{generator_forward.7}
  #allocation0 [shape = 'u32[]', space=smem, size = 0x4, offset = 0x4, fixed_abs, tag = 'smem constant byte address 0x4 - core index']
  #allocation1 [shape = 'u32[144,128]{1,0:T(1,128)}', space=vmem, size = 0x12000, scoped, tag = 'internal scratch']
  %s0 = inlined_call_operand.vmem [shape: bf16[576,128], index: 0, kind: input, shape index: {}]
  %s1 = inlined_call_operand.vmem [shape: bf16[128,576], index: 1, kind: input, shape index: {}]
  %s2 = inlined_call_operand.vmem [shape: f32[32,1], index: 2, kind: input, shape index: {}]
  %s3 = inlined_call_operand.vmem [shape: f32[32,1], index: 3, kind: input, shape index: {}]
  %s4 = inlined_call_operand.vmem [shape: bf16[128,128], index: 4, kind: output, shape index: {}]
  %s5 = sld [smem:[#allocation0]]
  $region26: #{generator_forward.7} parent=0
    _
  %s7 = ssub.s32 1, %s5
  %s8 = scalar_select 0, %s7, %s5
  // Predicated region
  $region2: #{generator_forward.7} parent=0 // pred_check
    _
  $region3: #{generator_forward.7} parent=0 // pred_check_branch
    %10 = sbr.rel (0) target = $region5
  $region4: #{generator_forward.7} parent=0 // pred_region
    _
  $region5: #{generator_forward.7} parent=0 // pred_fallthru
    _
  // Predicated region
  $region6: #{generator_forward.7} parent=0 // pred_check
    _
  $region7: #{generator_forward.7} parent=0 // pred_check_branch
    %12 = sbr.rel (0) target = $region9
  $region8: #{generator_forward.7} parent=0 // pred_region
    _
  $region9: #{generator_forward.7} parent=0 // pred_fallthru
    _
  // Predicated region
  $region10: #{generator_forward.7} parent=0 // pred_check
    _
  $region11: #{generator_forward.7} parent=0 // pred_check_branch
    %14 = sbr.rel (0) target = $region13
  $region12: #{generator_forward.7} parent=0 // pred_region
    _
  $region13: #{generator_forward.7} parent=0 // pred_fallthru
    _
  // Predicated region
  $region14: #{generator_forward.7} parent=0 // pred_check
    _
  $region15: #{generator_forward.7} parent=0 // pred_check_branch
    %16 = sbr.rel (0) target = $region17
  $region16: #{generator_forward.7} parent=0 // pred_region
    _
  $region17: #{generator_forward.7} parent=0 // pred_fallthru
    _
  %v18 = vld [vmem:[%s1] sm:$0xff]
  %v19 = vld [vmem:[%s1 + $0x8] sm:$0xff]
  %v20 = vld [vmem:[%s1 + $0x10] sm:$0xf]
  %v21 = vld [vmem:[%s1 + $0x14] sm:$0xff]
  %v22 = vld [vmem:[%s1 + $0x1c] sm:$0xff]
  %v23 = vld [vmem:[%s1 + $0x24] sm:$0xf]
  %v24 = vld [vmem:[%s1 + $0x28] sm:$0xff]
  %v25 = vld [vmem:[%s1 + $0x30] sm:$0xff]
  %v26 = vld [vmem:[%s1 + $0x38] sm:$0xf]
  %v27 = vld [vmem:[%s1 + $0x3c] sm:$0xff]
  %v28 = vld [vmem:[%s1 + $0x44] sm:$0xff]
  %v29 = vld [vmem:[%s1 + $0x4c] sm:$0xf]
  %v30 = vld [vmem:[%s1 + $0x50] sm:$0xff]
  %v31 = vld [vmem:[%s1 + $0x58] sm:$0xff]
  %v32 = vld [vmem:[%s1 + $0x60] sm:$0xf]
  %v33 = vld [vmem:[%s1 + $0x64] sm:$0xff]
  %v34 = vld [vmem:[%s1 + $0x6c] sm:$0xff]
  %v35 = vld [vmem:[%s1 + $0x74] sm:$0xf]
  %v36 = vld [vmem:[%s1 + $0x78] sm:$0xff]
  %v37 = vld [vmem:[%s1 + $0x80] sm:$0xff]
  %v38 = vld [vmem:[%s1 + $0x88] sm:$0xf]
  %v39 = vld [vmem:[%s1 + $0x8c] sm:$0xff]
  %v40 = vld [vmem:[%s1 + $0x94] sm:$0xff]
  %v41 = vld [vmem:[%s1 + $0x9c] sm:$0xf]
  %v42 = vld [vmem:[%s1 + $0xa0] sm:$0xff]
  %v43 = vld [vmem:[%s1 + $0xa8] sm:$0xff]
  %v44 = vld [vmem:[%s1 + $0xb0] sm:$0xf]
  %v45 = vld [vmem:[%s1 + $0xb4] sm:$0xff]
  %v46 = vld [vmem:[%s1 + $0xbc] sm:$0xff]
  %v47 = vld [vmem:[%s1 + $0xc4] sm:$0xf]
  %v48 = vld [vmem:[%s1 + $0xc8] sm:$0xff]
  %v49 = vld [vmem:[%s1 + $0xd0] sm:$0xff]
  %v50 = vld [vmem:[%s1 + $0xd8] sm:$0xf]
  %v51 = vld [vmem:[%s1 + $0xdc] sm:$0xff]
  %v52 = vld [vmem:[%s1 + $0xe4] sm:$0xff]
  %v53 = vld [vmem:[%s1 + $0xec] sm:$0xf]
  %v54 = vld [vmem:[%s1 + $0xf0] sm:$0xff]
  %v55 = vld [vmem:[%s1 + $0xf8] sm:$0xff]
  %v56 = vld [vmem:[%s1 + $0x100] sm:$0xf]
  %v57 = vld [vmem:[%s1 + $0x104] sm:$0xff]
  %v58 = vld [vmem:[%s1 + $0x10c] sm:$0xff]
  %v59 = vld [vmem:[%s1 + $0x114] sm:$0xf]
  %v60 = vld [vmem:[%s1 + $0x118] sm:$0xff]
  %v61 = vld [vmem:[%s1 + $0x120] sm:$0xff]
  %v62 = vld [vmem:[%s1 + $0x128] sm:$0xf]
  %v63 = vld [vmem:[%s1 + $0x12c] sm:$0xff]
  %v64 = vld [vmem:[%s1 + $0x134] sm:$0xff]
  %v65 = vld [vmem:[%s1 + $0x13c] sm:$0xf]
  %v66 = vld [vmem:[%s0] sm:$0xf]
  %v67 = vld [vmem:[%s0 + $0x4] sm:$0xf]
  %v68 = vld [vmem:[%s0 + $0x8] sm:$0xf]
  %v69 = vld [vmem:[%s0 + $0xc] sm:$0xf]
  %v70 = vld [vmem:[%s0 + $0x10] sm:$0xf]
  %v71 = vld [vmem:[%s0 + $0x14] sm:$0xf]
  %v72 = vld [vmem:[%s0 + $0x18] sm:$0xf]
  %v73 = vld [vmem:[%s0 + $0x1c] sm:$0xf]
  %v74 = vld [vmem:[%s0 + $0x20] sm:$0xf]
  %v75 = vld [vmem:[%s0 + $0x24] sm:$0xf]
  %v76 = vld [vmem:[%s0 + $0x28] sm:$0xf]
  %v77 = vld [vmem:[%s0 + $0x2c] sm:$0xf]
  %v78 = vld [vmem:[%s0 + $0x30] sm:$0xf]
  %v79 = vld [vmem:[%s0 + $0x34] sm:$0xf]
  %v80 = vld [vmem:[%s0 + $0x38] sm:$0xf]
  %v81 = vld [vmem:[%s0 + $0x3c] sm:$0xf]
  %v82 = vld [vmem:[%s0 + $0x40] sm:$0xf]
  %v83 = vld [vmem:[%s0 + $0x44] sm:$0xf]
  %v84 = vld [vmem:[%s0 + $0x48] sm:$0xf]
  %v85 = vld [vmem:[%s0 + $0x4c] sm:$0xf]
  %v86 = vld [vmem:[%s0 + $0x50] sm:$0xf]
  %v87 = vld [vmem:[%s0 + $0x54] sm:$0xf]
  %v88 = vld [vmem:[%s0 + $0x58] sm:$0xf]
  %v89 = vld [vmem:[%s0 + $0x5c] sm:$0xf]
  %v90 = vld [vmem:[%s0 + $0x60] sm:$0xf]
  %v91 = vld [vmem:[%s0 + $0x64] sm:$0xf]
  %v92 = vld [vmem:[%s0 + $0x68] sm:$0xf]
  %v93 = vld [vmem:[%s0 + $0x6c] sm:$0xf]
  %v94 = vld [vmem:[%s0 + $0x70] sm:$0xf]
  %v95 = vld [vmem:[%s0 + $0x74] sm:$0xf]
  %v96 = vld [vmem:[%s0 + $0x78] sm:$0xf]
  %v97 = vld [vmem:[%s0 + $0x7c] sm:$0xf]
  %v98 = vld [vmem:[%s0 + $0x80] sm:$0xf]
  %v99 = vld [vmem:[%s0 + $0x84] sm:$0xf]
  %v100 = vld [vmem:[%s0 + $0x88] sm:$0xf]
  %v101 = vld [vmem:[%s0 + $0x8c] sm:$0xf]
  %v102 = vld [vmem:[%s0 + $0x90] sm:$0xf]
  %v103 = vld [vmem:[%s0 + $0x94] sm:$0xf]
  %v104 = vld [vmem:[%s0 + $0x98] sm:$0xf]
  %v105 = vld [vmem:[%s0 + $0x9c] sm:$0xf]
  %v106 = vld [vmem:[%s0 + $0xa0] sm:$0xf]
  %v107 = vld [vmem:[%s0 + $0xa4] sm:$0xf]
  %v108 = vld [vmem:[%s0 + $0xa8] sm:$0xf]
  %v109 = vld [vmem:[%s0 + $0xac] sm:$0xf]
  %v110 = vld [vmem:[%s0 + $0xb0] sm:$0xf]
  %v111 = vld [vmem:[%s0 + $0xb4] sm:$0xf]
  %v112 = vld [vmem:[%s0 + $0xb8] sm:$0xf]
  %v113 = vld [vmem:[%s0 + $0xbc] sm:$0xf]
  %v114 = vld [vmem:[%s0 + $0xc0] sm:$0xf]
  %v115 = vld [vmem:[%s0 + $0xc4] sm:$0xf]
  %v116 = vld [vmem:[%s0 + $0xc8] sm:$0xf]
  %v117 = vld [vmem:[%s0 + $0xcc] sm:$0xf]
  %v118 = vld [vmem:[%s0 + $0xd0] sm:$0xf]
  %v119 = vld [vmem:[%s0 + $0xd4] sm:$0xf]
  %v120 = vld [vmem:[%s0 + $0xd8] sm:$0xf]
  %v121 = vld [vmem:[%s0 + $0xdc] sm:$0xf]
  %v122 = vld [vmem:[%s0 + $0xe0] sm:$0xf]
  %v123 = vld [vmem:[%s0 + $0xe4] sm:$0xf]
  %v124 = vld [vmem:[%s0 + $0xe8] sm:$0xf]
  %v125 = vld [vmem:[%s0 + $0xec] sm:$0xf]
  %v126 = vld [vmem:[%s0 + $0xf0] sm:$0xf]
  %v127 = vld [vmem:[%s0 + $0xf4] sm:$0xf]
  %v128 = vld [vmem:[%s0 + $0xf8] sm:$0xf]
  %v129 = vld [vmem:[%s0 + $0xfc] sm:$0xf]
  %v130 = vld [vmem:[%s0 + $0x100] sm:$0xf]
  %v131 = vld [vmem:[%s0 + $0x104] sm:$0xf]
  %v132 = vld [vmem:[%s0 + $0x108] sm:$0xf]
  %v133 = vld [vmem:[%s0 + $0x10c] sm:$0xf]
  %v134 = vld [vmem:[%s0 + $0x110] sm:$0xf]
  %v135 = vld [vmem:[%s0 + $0x114] sm:$0xf]
  %v136 = vld [vmem:[%s0 + $0x118] sm:$0xf]
  %v137 = vld [vmem:[%s0 + $0x11c] sm:$0xf]
  %v186 = vunpack.c.l.b16 %v18
  %v187 = vunpack.c.h.b16 %v18
  %v188 = vunpack.c.l.b16 %v19
  %v189 = vunpack.c.h.b16 %v19
  %v190 = vunpack.c.l.b16 %v20
  %v191 = vunpack.c.l.b16 %v21
  %v192 = vunpack.c.h.b16 %v21
  %v193 = vunpack.c.l.b16 %v22
  %v194 = vunpack.c.h.b16 %v22
  %v195 = vunpack.c.l.b16 %v23
  %v196 = vunpack.c.l.b16 %v24
  %v197 = vunpack.c.h.b16 %v24
  %v198 = vunpack.c.l.b16 %v25
  %v199 = vunpack.c.h.b16 %v25
  %v200 = vunpack.c.l.b16 %v26
  %v201 = vunpack.c.l.b16 %v27
  %v202 = vunpack.c.h.b16 %v27
  %v203 = vunpack.c.l.b16 %v28
  %v204 = vunpack.c.h.b16 %v28
  %v205 = vunpack.c.l.b16 %v29
  %v206 = vunpack.c.l.b16 %v30
  %v207 = vunpack.c.h.b16 %v30
  %v208 = vunpack.c.l.b16 %v31
  %v209 = vunpack.c.h.b16 %v31
  %v210 = vunpack.c.l.b16 %v32
  %v211 = vunpack.c.l.b16 %v33
  %v212 = vunpack.c.h.b16 %v33
  %v213 = vunpack.c.l.b16 %v34
  %v214 = vunpack.c.h.b16 %v34
  %v215 = vunpack.c.l.b16 %v35
  %v216 = vunpack.c.l.b16 %v36
  %v217 = vunpack.c.h.b16 %v36
  %v218 = vunpack.c.l.b16 %v37
  %v219 = vunpack.c.h.b16 %v37
  %v220 = vunpack.c.l.b16 %v38
  %v221 = vunpack.c.l.b16 %v39
  %v222 = vunpack.c.h.b16 %v39
  %v223 = vunpack.c.l.b16 %v40
  %v224 = vunpack.c.h.b16 %v40
  %v225 = vunpack.c.l.b16 %v41
  %v226 = vunpack.c.l.b16 %v42
  %v227 = vunpack.c.h.b16 %v42
  %v228 = vunpack.c.l.b16 %v43
  %v229 = vunpack.c.h.b16 %v43
  %v230 = vunpack.c.l.b16 %v44
  %v231 = vunpack.c.l.b16 %v45
  %v232 = vunpack.c.h.b16 %v45
  %v233 = vunpack.c.l.b16 %v46
  %v234 = vunpack.c.h.b16 %v46
  %v235 = vunpack.c.l.b16 %v47
  %v236 = vunpack.c.l.b16 %v48
  %v237 = vunpack.c.h.b16 %v48
  %v238 = vunpack.c.l.b16 %v49
  %v239 = vunpack.c.h.b16 %v49
  %v240 = vunpack.c.l.b16 %v50
  %v241 = vunpack.c.l.b16 %v51
  %v242 = vunpack.c.h.b16 %v51
  %v243 = vunpack.c.l.b16 %v52
  %v244 = vunpack.c.h.b16 %v52
  %v245 = vunpack.c.l.b16 %v53
  %v246 = vunpack.c.l.b16 %v54
  %v247 = vunpack.c.h.b16 %v54
  %v248 = vunpack.c.l.b16 %v55
  %v249 = vunpack.c.h.b16 %v55
  %v250 = vunpack.c.l.b16 %v56
  %v251 = vunpack.c.l.b16 %v57
  %v252 = vunpack.c.h.b16 %v57
  %v253 = vunpack.c.l.b16 %v58
  %v254 = vunpack.c.h.b16 %v58
  %v255 = vunpack.c.l.b16 %v59
  %v256 = vunpack.c.l.b16 %v60
  %v257 = vunpack.c.h.b16 %v60
  %v258 = vunpack.c.l.b16 %v61
  %v259 = vunpack.c.h.b16 %v61
  %v260 = vunpack.c.l.b16 %v62
  %v261 = vunpack.c.l.b16 %v63
  %v262 = vunpack.c.h.b16 %v63
  %v263 = vunpack.c.l.b16 %v64
  %v264 = vunpack.c.h.b16 %v64
  %v265 = vunpack.c.l.b16 %v65
  %v266 = vpack.c.b16 %v191, %v186
  %v267 = vpack.c.b16 %v192, %v187
  %v268 = vpack.c.b16 %v193, %v188
  %v269 = vpack.c.b16 %v194, %v189
  %v270 = vpack.c.b16 %v195, %v190
  %v271 = vpack.c.b16 %v201, %v196
  %v272 = vpack.c.b16 %v202, %v197
  %v273 = vpack.c.b16 %v203, %v198
  %v274 = vpack.c.b16 %v204, %v199
  %v275 = vpack.c.b16 %v205, %v200
  %v276 = vpack.c.b16 %v211, %v206
  %v277 = vpack.c.b16 %v212, %v207
  %v278 = vpack.c.b16 %v213, %v208
  %v279 = vpack.c.b16 %v214, %v209
  %v280 = vpack.c.b16 %v215, %v210
  %v281 = vpack.c.b16 %v221, %v216
  %v282 = vpack.c.b16 %v222, %v217
  %v283 = vpack.c.b16 %v223, %v218
  %v284 = vpack.c.b16 %v224, %v219
  %v285 = vpack.c.b16 %v225, %v220
  %v286 = vpack.c.b16 %v231, %v226
  %v287 = vpack.c.b16 %v232, %v227
  %v288 = vpack.c.b16 %v233, %v228
  %v289 = vpack.c.b16 %v234, %v229
  %v290 = vpack.c.b16 %v235, %v230
  %v291 = vpack.c.b16 %v241, %v236
  %v292 = vpack.c.b16 %v242, %v237
  %v293 = vpack.c.b16 %v243, %v238
  %v294 = vpack.c.b16 %v244, %v239
  %v295 = vpack.c.b16 %v245, %v240
  %v296 = vpack.c.b16 %v251, %v246
  %v297 = vpack.c.b16 %v252, %v247
  %v298 = vpack.c.b16 %v253, %v248
  %v299 = vpack.c.b16 %v254, %v249
  %v300 = vpack.c.b16 %v255, %v250
  %v301 = vpack.c.b16 %v261, %v256
  %v302 = vpack.c.b16 %v262, %v257
  %v303 = vpack.c.b16 %v263, %v258
  %v304 = vpack.c.b16 %v264, %v259
  %v305 = vpack.c.b16 %v265, %v260
  %v410 = vunpack.c.l.b16 %v66
  %v411 = vunpack.c.l.b16 %v67
  %v412 = vunpack.c.l.b16 %v68
  %v413 = vunpack.c.l.b16 %v69
  %v414 = vunpack.c.l.b16 %v70
  %v415 = vunpack.c.l.b16 %v71
  %v416 = vunpack.c.l.b16 %v72
  %v417 = vunpack.c.l.b16 %v73
  %v418 = vunpack.c.l.b16 %v74
  %v419 = vunpack.c.l.b16 %v75
  %v420 = vunpack.c.l.b16 %v76
  %v421 = vunpack.c.l.b16 %v77
  %v422 = vunpack.c.l.b16 %v78
  %v423 = vunpack.c.l.b16 %v79
  %v424 = vunpack.c.l.b16 %v80
  %v425 = vunpack.c.l.b16 %v81
  %v426 = vunpack.c.l.b16 %v82
  %v427 = vunpack.c.l.b16 %v83
  %v428 = vunpack.c.l.b16 %v84
  %v429 = vunpack.c.l.b16 %v85
  %v430 = vunpack.c.l.b16 %v86
  %v431 = vunpack.c.l.b16 %v87
  %v432 = vunpack.c.l.b16 %v88
  %v433 = vunpack.c.l.b16 %v89
  %v434 = vunpack.c.l.b16 %v90
  %v435 = vunpack.c.l.b16 %v91
  %v436 = vunpack.c.l.b16 %v92
  %v437 = vunpack.c.l.b16 %v93
  %v438 = vunpack.c.l.b16 %v94
  %v439 = vunpack.c.l.b16 %v95
  %v440 = vunpack.c.l.b16 %v96
  %v441 = vunpack.c.l.b16 %v97
  %v442 = vunpack.c.l.b16 %v98
  %v443 = vunpack.c.l.b16 %v99
  %v444 = vunpack.c.l.b16 %v100
  %v445 = vunpack.c.l.b16 %v101
  %v446 = vunpack.c.l.b16 %v102
  %v447 = vunpack.c.l.b16 %v103
  %v448 = vunpack.c.l.b16 %v104
  %v449 = vunpack.c.l.b16 %v105
  %v450 = vunpack.c.l.b16 %v106
  %v451 = vunpack.c.l.b16 %v107
  %v452 = vunpack.c.l.b16 %v108
  %v453 = vunpack.c.l.b16 %v109
  %v454 = vunpack.c.l.b16 %v110
  %v455 = vunpack.c.l.b16 %v111
  %v456 = vunpack.c.l.b16 %v112
  %v457 = vunpack.c.l.b16 %v113
  %v458 = vunpack.c.l.b16 %v114
  %v459 = vunpack.c.l.b16 %v115
  %v460 = vunpack.c.l.b16 %v116
  %v461 = vunpack.c.l.b16 %v117
  %v462 = vunpack.c.l.b16 %v118
  %v463 = vunpack.c.l.b16 %v119
  %v464 = vunpack.c.l.b16 %v120
  %v465 = vunpack.c.l.b16 %v121
  %v466 = vunpack.c.l.b16 %v122
  %v467 = vunpack.c.l.b16 %v123
  %v468 = vunpack.c.l.b16 %v124
  %v469 = vunpack.c.l.b16 %v125
  %v470 = vunpack.c.l.b16 %v126
  %v471 = vunpack.c.l.b16 %v127
  %v472 = vunpack.c.l.b16 %v128
  %v473 = vunpack.c.l.b16 %v129
  %v474 = vunpack.c.l.b16 %v130
  %v475 = vunpack.c.l.b16 %v131
  %v476 = vunpack.c.l.b16 %v132
  %v477 = vunpack.c.l.b16 %v133
  %v478 = vunpack.c.l.b16 %v134
  %v479 = vunpack.c.l.b16 %v135
  %v480 = vunpack.c.l.b16 %v136
  %v481 = vunpack.c.l.b16 %v137
  %v482 = vpack.c.b16 %v411, %v410
  %v483 = vpack.c.b16 %v413, %v412
  %v484 = vpack.c.b16 %v415, %v414
  %v485 = vpack.c.b16 %v417, %v416
  %v486 = vpack.c.b16 %v419, %v418
  %v487 = vpack.c.b16 %v421, %v420
  %v488 = vpack.c.b16 %v423, %v422
  %v489 = vpack.c.b16 %v425, %v424
  %v490 = vpack.c.b16 %v427, %v426
  %v491 = vpack.c.b16 %v429, %v428
  %v492 = vpack.c.b16 %v431, %v430
  %v493 = vpack.c.b16 %v433, %v432
  %v494 = vpack.c.b16 %v435, %v434
  %v495 = vpack.c.b16 %v437, %v436
  %v496 = vpack.c.b16 %v439, %v438
  %v497 = vpack.c.b16 %v441, %v440
  %v498 = vpack.c.b16 %v443, %v442
  %v499 = vpack.c.b16 %v445, %v444
  %v500 = vpack.c.b16 %v447, %v446
  %v501 = vpack.c.b16 %v449, %v448
  %v502 = vpack.c.b16 %v451, %v450
  %v503 = vpack.c.b16 %v453, %v452
  %v504 = vpack.c.b16 %v455, %v454
  %v505 = vpack.c.b16 %v457, %v456
  %v506 = vpack.c.b16 %v459, %v458
  %v507 = vpack.c.b16 %v461, %v460
  %v508 = vpack.c.b16 %v463, %v462
  %v509 = vpack.c.b16 %v465, %v464
  %v510 = vpack.c.b16 %v467, %v466
  %v511 = vpack.c.b16 %v469, %v468
  %v512 = vpack.c.b16 %v471, %v470
  %v513 = vpack.c.b16 %v473, %v472
  %v514 = vpack.c.b16 %v475, %v474
  %v515 = vpack.c.b16 %v477, %v476
  %v516 = vpack.c.b16 %v479, %v478
  %v517 = vpack.c.b16 %v481, %v480
  %vm554 = vcmask 523264
  %v556 = vsel %vm554, %v270, 0
  %v559 = vsel %vm554, %v275, 0
  %v562 = vsel %vm554, %v280, 0
  %v565 = vsel %vm554, %v285, 0
  %v568 = vsel %vm554, %v290, 0
  %v571 = vsel %vm554, %v295, 0
  %v574 = vsel %vm554, %v300, 0
  %v577 = vsel %vm554, %v305, 0
  %579 = vmatprep.subr.bf16.mxu0 0
  %580 = vmatpush1.bf16.msra.mxu0 %v482
  %581 = vmatprep.subr.bf16.mxu0 0
  %582 = vmatpush1.bf16.msra.mxu0 %v483
  %583 = vmatprep.subr.bf16.mxu0 0
  %584 = vmatpush1.bf16.msra.mxu0 %v484
  %585 = vmatprep.subr.bf16.mxu0 0
  %586 = vmatpush1.bf16.msra.mxu0 %v485
  %587 = vmatprep.subr.bf16.mxu0 0
  %588 = vmatpush1.bf16.msra.mxu0 %v486
  %589 = vmatprep.subr.bf16.mxu0 0
  %590 = vmatpush1.bf16.msra.mxu0 %v487
  %591 = vmatprep.subr.bf16.mxu0 0
  %592 = vmatpush1.bf16.msra.mxu0 %v488
  %593 = vmatprep.subr.bf16.mxu0 0
  %594 = vmatpush1.bf16.msra.mxu0 %v489
  %595 = vmatprep.subr.bf16.mxu0 0
  %596 = vmatpush1.bf16.msra.mxu0 %v490
  %597 = vmatprep.subr.bf16.mxu0 0
  %598 = vmatpush1.bf16.msra.mxu0 %v491
  %599 = vmatprep.subr.bf16.mxu0 0
  %600 = vmatpush1.bf16.msra.mxu0 %v492
  %601 = vmatprep.subr.bf16.mxu0 0
  %602 = vmatpush1.bf16.msra.mxu0 %v493
  %603 = vmatprep.subr.bf16.mxu0 0
  %604 = vmatpush1.bf16.msra.mxu0 %v494
  %605 = vmatprep.subr.bf16.mxu0 0
  %606 = vmatpush1.bf16.msra.mxu0 %v495
  %607 = vmatprep.subr.bf16.mxu0 0
  %608 = vmatpush1.bf16.msra.mxu0 %v496
  %609 = vmatprep.subr.bf16.mxu0 0
  %610 = vmatpush1.bf16.msra.mxu0 %v497
  %611 = vmatprep.mubr.bf16.mxu0 %v267
  %612 = vmatmul.mubr.bf16.gmra.mrb[0].mxu0 %v266
  %v613 = vpop.f32.mrb[0].mxu0
  %v614 = vadd.f32 0.0, %v613
  %v615 = vpop.f32.mrb[0].mxu0
  %v616 = vpop.f32.mrb[0].mxu0
  %v617 = vadd.f32 0.0, %v616
  %v618 = vpop.f32.mrb[0].mxu0
  %619 = vmatprep.mubr.bf16.mxu0 %v272
  %620 = vmatmul.mubr.bf16.gmra.mrb[0].mxu0 %v271
  %v621 = vpop.f32.mrb[0].mxu0
  %v622 = vadd.f32 0.0, %v621
  %v623 = vpop.f32.mrb[0].mxu0
  %v624 = vpop.f32.mrb[0].mxu0
  %v625 = vadd.f32 0.0, %v624
  %v626 = vpop.f32.mrb[0].mxu0
  %627 = vmatprep.mubr.bf16.mxu0 %v277
  %628 = vmatmul.mubr.bf16.gmra.mrb[0].mxu0 %v276
  %v629 = vpop.f32.mrb[0].mxu0
  %v630 = vadd.f32 0.0, %v629
  %v631 = vpop.f32.mrb[0].mxu0
  %v632 = vpop.f32.mrb[0].mxu0
  %v633 = vadd.f32 0.0, %v632
  %v634 = vpop.f32.mrb[0].mxu0
  %635 = vmatprep.mubr.bf16.mxu0 %v282
  %636 = vmatmul.mubr.bf16.gmra.mrb[0].mxu0 %v281
  %v637 = vpop.f32.mrb[0].mxu0
  %v638 = vadd.f32 0.0, %v637
  %v639 = vpop.f32.mrb[0].mxu0
  %v640 = vpop.f32.mrb[0].mxu0
  %v641 = vadd.f32 0.0, %v640
  %v642 = vpop.f32.mrb[0].mxu0
  %643 = vmatprep.mubr.bf16.mxu0 %v287
  %644 = vmatmul.mubr.bf16.gmra.mrb[0].mxu0 %v286
  %v645 = vpop.f32.mrb[0].mxu0
  %v646 = vadd.f32 0.0, %v645
  %v647 = vpop.f32.mrb[0].mxu0
  %v648 = vpop.f32.mrb[0].mxu0
  %v649 = vadd.f32 0.0, %v648
  %v650 = vpop.f32.mrb[0].mxu0
  %651 = vmatprep.mubr.bf16.mxu0 %v292
  %652 = vmatmul.mubr.bf16.gmra.mrb[0].mxu0 %v291
  %v653 = vpop.f32.mrb[0].mxu0
  %v654 = vadd.f32 0.0, %v653
  %v655 = vpop.f32.mrb[0].mxu0
  %v656 = vpop.f32.mrb[0].mxu0
  %v657 = vadd.f32 0.0, %v656
  %v658 = vpop.f32.mrb[0].mxu0
  %659 = vmatprep.mubr.bf16.mxu0 %v297
  %660 = vmatmul.mubr.bf16.gmra.mrb[0].mxu0 %v296
  %v661 = vpop.f32.mrb[0].mxu0
  %v662 = vadd.f32 0.0, %v661
  %v663 = vpop.f32.mrb[0].mxu0
  %v664 = vpop.f32.mrb[0].mxu0
  %v665 = vadd.f32 0.0, %v664
  %v666 = vpop.f32.mrb[0].mxu0
  %667 = vmatprep.mubr.bf16.mxu0 %v302
  %668 = vmatmul.mubr.bf16.gmra.mrb[0].mxu0 %v301
  %v669 = vpop.f32.mrb[0].mxu0
  %v670 = vadd.f32 0.0, %v669
  %v671 = vpop.f32.mrb[0].mxu0
  %v672 = vpop.f32.mrb[0].mxu0
  %v673 = vadd.f32 0.0, %v672
  %v674 = vpop.f32.mrb[0].mxu0
  %675 = vdwg.mxu0
  %676 = vmatprep.subr.bf16.mxu0 0
  %677 = vmatpush1.bf16.msra.mxu0 %v498
  %678 = vmatprep.subr.bf16.mxu0 0
  %679 = vmatpush1.bf16.msra.mxu0 %v499
  %680 = vmatprep.subr.bf16.mxu0 0
  %681 = vmatpush1.bf16.msra.mxu0 %v500
  %682 = vmatprep.subr.bf16.mxu0 0
  %683 = vmatpush1.bf16.msra.mxu0 %v501
  %684 = vmatprep.subr.bf16.mxu0 0
  %685 = vmatpush1.bf16.msra.mxu0 %v502
  %686 = vmatprep.subr.bf16.mxu0 0
  %687 = vmatpush1.bf16.msra.mxu0 %v503
  %688 = vmatprep.subr.bf16.mxu0 0
  %689 = vmatpush1.bf16.msra.mxu0 %v504
  %690 = vmatprep.subr.bf16.mxu0 0
  %691 = vmatpush1.bf16.msra.mxu0 %v505
  %692 = vmatprep.subr.bf16.mxu0 0
  %693 = vmatpush1.bf16.msra.mxu0 %v506
  %694 = vmatprep.subr.bf16.mxu0 0
  %695 = vmatpush1.bf16.msra.mxu0 %v507
  %696 = vmatprep.subr.bf16.mxu0 0
  %697 = vmatpush1.bf16.msra.mxu0 %v508
  %698 = vmatprep.subr.bf16.mxu0 0
  %699 = vmatpush1.bf16.msra.mxu0 %v509
  %700 = vmatprep.subr.bf16.mxu0 0
  %701 = vmatpush1.bf16.msra.mxu0 %v510
  %702 = vmatprep.subr.bf16.mxu0 0
  %703 = vmatpush1.bf16.msra.mxu0 %v511
  %704 = vmatprep.subr.bf16.mxu0 0
  %705 = vmatpush1.bf16.msra.mxu0 %v512
  %706 = vmatprep.subr.bf16.mxu0 0
  %707 = vmatpush1.bf16.msra.mxu0 %v513
  %708 = vmatprep.mubr.bf16.mxu0 %v269
  %709 = vmatmul.mubr.bf16.gmra.mrb[0].mxu0 %v268
  %v710 = vpop.f32.mrb[0].mxu0
  %v711 = vadd.f32 %v614, %v710
  %v712 = vpop.f32.mrb[0].mxu0
  %v713 = vpop.f32.mrb[0].mxu0
  %v714 = vadd.f32 %v617, %v713
  %v715 = vpop.f32.mrb[0].mxu0
  %716 = vmatprep.mubr.bf16.mxu0 %v274
  %717 = vmatmul.mubr.bf16.gmra.mrb[0].mxu0 %v273
  %v718 = vpop.f32.mrb[0].mxu0
  %v719 = vadd.f32 %v622, %v718
  %v720 = vpop.f32.mrb[0].mxu0
  %v721 = vpop.f32.mrb[0].mxu0
  %v722 = vadd.f32 %v625, %v721
  %v723 = vpop.f32.mrb[0].mxu0
  %724 = vmatprep.mubr.bf16.mxu0 %v279
  %725 = vmatmul.mubr.bf16.gmra.mrb[0].mxu0 %v278
  %v726 = vpop.f32.mrb[0].mxu0
  %v727 = vadd.f32 %v630, %v726
  %v728 = vpop.f32.mrb[0].mxu0
  %v729 = vpop.f32.mrb[0].mxu0
  %v730 = vadd.f32 %v633, %v729
  %v731 = vpop.f32.mrb[0].mxu0
  %732 = vmatprep.mubr.bf16.mxu0 %v284
  %733 = vmatmul.mubr.bf16.gmra.mrb[0].mxu0 %v283
  %v734 = vpop.f32.mrb[0].mxu0
  %v735 = vadd.f32 %v638, %v734
  %v736 = vpop.f32.mrb[0].mxu0
  %v737 = vpop.f32.mrb[0].mxu0
  %v738 = vadd.f32 %v641, %v737
  %v739 = vpop.f32.mrb[0].mxu0
  %740 = vmatprep.mubr.bf16.mxu0 %v289
  %741 = vmatmul.mubr.bf16.gmra.mrb[0].mxu0 %v288
  %v742 = vpop.f32.mrb[0].mxu0
  %v743 = vadd.f32 %v646, %v742
  %v744 = vpop.f32.mrb[0].mxu0
  %v745 = vpop.f32.mrb[0].mxu0
  %v746 = vadd.f32 %v649, %v745
  %v747 = vpop.f32.mrb[0].mxu0
  %748 = vmatprep.mubr.bf16.mxu0 %v294
  %749 = vmatmul.mubr.bf16.gmra.mrb[0].mxu0 %v293
  %v750 = vpop.f32.mrb[0].mxu0
  %v751 = vadd.f32 %v654, %v750
  %v752 = vpop.f32.mrb[0].mxu0
  %v753 = vpop.f32.mrb[0].mxu0
  %v754 = vadd.f32 %v657, %v753
  %v755 = vpop.f32.mrb[0].mxu0
  %756 = vmatprep.mubr.bf16.mxu0 %v299
  %757 = vmatmul.mubr.bf16.gmra.mrb[0].mxu0 %v298
  %v758 = vpop.f32.mrb[0].mxu0
  %v759 = vadd.f32 %v662, %v758
  %v760 = vpop.f32.mrb[0].mxu0
  %v761 = vpop.f32.mrb[0].mxu0
  %v762 = vadd.f32 %v665, %v761
  %v763 = vpop.f32.mrb[0].mxu0
  %764 = vmatprep.mubr.bf16.mxu0 %v304
  %765 = vmatmul.mubr.bf16.gmra.mrb[0].mxu0 %v303
  %v766 = vpop.f32.mrb[0].mxu0
  %v767 = vadd.f32 %v670, %v766
  %v768 = vpop.f32.mrb[0].mxu0
  %v769 = vpop.f32.mrb[0].mxu0
  %v770 = vadd.f32 %v673, %v769
  %v771 = vpop.f32.mrb[0].mxu0
  %772 = vdwg.mxu0
  %773 = vmatprep.subr.bf16.mxu0 0
  %774 = vmatpush1.bf16.msra.mxu0 %v514
  %775 = vmatprep.subr.bf16.mxu0 0
  %776 = vmatpush1.bf16.msra.mxu0 %v515
  %777 = vmatprep.subr.bf16.mxu0 0
  %778 = vmatpush1.bf16.msra.mxu0 %v516
  %779 = vmatprep.subr.bf16.mxu0 0
  %780 = vmatpush1.bf16.msra.mxu0 %v517
  %781 = vmatprep.subr.bf16.mxu0 0
  %782 = vmatpush1.bf16.msra.mxu0 0
  %783 = vmatprep.subr.bf16.mxu0 0
  %784 = vmatpush1.bf16.msra.mxu0 0
  %785 = vmatprep.subr.bf16.mxu0 0
  %786 = vmatpush1.bf16.msra.mxu0 0
  %787 = vmatprep.subr.bf16.mxu0 0
  %788 = vmatpush1.bf16.msra.mxu0 0
  %789 = vmatprep.subr.bf16.mxu0 0
  %790 = vmatpush1.bf16.msra.mxu0 0
  %791 = vmatprep.subr.bf16.mxu0 0
  %792 = vmatpush1.bf16.msra.mxu0 0
  %793 = vmatprep.subr.bf16.mxu0 0
  %794 = vmatpush1.bf16.msra.mxu0 0
  %795 = vmatprep.subr.bf16.mxu0 0
  %796 = vmatpush1.bf16.msra.mxu0 0
  %797 = vmatprep.subr.bf16.mxu0 0
  %798 = vmatpush1.bf16.msra.mxu0 0
  %799 = vmatprep.subr.bf16.mxu0 0
  %800 = vmatpush1.bf16.msra.mxu0 0
  %801 = vmatprep.subr.bf16.mxu0 0
  %802 = vmatpush1.bf16.msra.mxu0 0
  %803 = vmatprep.subr.bf16.mxu0 0
  %804 = vmatpush1.bf16.msra.mxu0 0
  %805 = vmatprep.mubr.bf16.mxu0 0
  %806 = vmatmul.mubr.bf16.gmra.mrb[0].mxu0 %v556
  %v807 = vpop.f32.mrb[0].mxu0
  %v808 = vadd.f32 %v711, %v807
  %v809 = vpop.f32.mrb[0].mxu0
  %v810 = vpop.f32.mrb[0].mxu0
  %v811 = vadd.f32 %v714, %v810
  %v812 = vpop.f32.mrb[0].mxu0
  %813 = vmatprep.mubr.bf16.mxu0 0
  %814 = vmatmul.mubr.bf16.gmra.mrb[0].mxu0 %v559
  %v815 = vpop.f32.mrb[0].mxu0
  %v816 = vadd.f32 %v719, %v815
  %v817 = vpop.f32.mrb[0].mxu0
  %v818 = vpop.f32.mrb[0].mxu0
  %v819 = vadd.f32 %v722, %v818
  %v820 = vpop.f32.mrb[0].mxu0
  %821 = vmatprep.mubr.bf16.mxu0 0
  %822 = vmatmul.mubr.bf16.gmra.mrb[0].mxu0 %v562
  %v823 = vpop.f32.mrb[0].mxu0
  %v824 = vadd.f32 %v727, %v823
  %v825 = vpop.f32.mrb[0].mxu0
  %v826 = vpop.f32.mrb[0].mxu0
  %v827 = vadd.f32 %v730, %v826
  %v828 = vpop.f32.mrb[0].mxu0
  %829 = vmatprep.mubr.bf16.mxu0 0
  %830 = vmatmul.mubr.bf16.gmra.mrb[0].mxu0 %v565
  %v831 = vpop.f32.mrb[0].mxu0
  %v832 = vadd.f32 %v735, %v831
  %v833 = vpop.f32.mrb[0].mxu0
  %v834 = vpop.f32.mrb[0].mxu0
  %v835 = vadd.f32 %v738, %v834
  %v836 = vpop.f32.mrb[0].mxu0
  %837 = vmatprep.mubr.bf16.mxu0 0
  %838 = vmatmul.mubr.bf16.gmra.mrb[0].mxu0 %v568
  %v839 = vpop.f32.mrb[0].mxu0
  %v840 = vadd.f32 %v743, %v839
  %v841 = vpop.f32.mrb[0].mxu0
  %v842 = vpop.f32.mrb[0].mxu0
  %v843 = vadd.f32 %v746, %v842
  %v844 = vpop.f32.mrb[0].mxu0
  %845 = vmatprep.mubr.bf16.mxu0 0
  %846 = vmatmul.mubr.bf16.gmra.mrb[0].mxu0 %v571
  %v847 = vpop.f32.mrb[0].mxu0
  %v848 = vadd.f32 %v751, %v847
  %v849 = vpop.f32.mrb[0].mxu0
  %v850 = vpop.f32.mrb[0].mxu0
  %v851 = vadd.f32 %v754, %v850
  %v852 = vpop.f32.mrb[0].mxu0
  %853 = vmatprep.mubr.bf16.mxu0 0
  %854 = vmatmul.mubr.bf16.gmra.mrb[0].mxu0 %v574
  %v855 = vpop.f32.mrb[0].mxu0
  %v856 = vadd.f32 %v759, %v855
  %v857 = vpop.f32.mrb[0].mxu0
  %v858 = vpop.f32.mrb[0].mxu0
  %v859 = vadd.f32 %v762, %v858
  %v860 = vpop.f32.mrb[0].mxu0
  %861 = vmatprep.mubr.bf16.mxu0 0
  %862 = vmatmul.mubr.bf16.gmra.mrb[0].mxu0 %v577
  %v863 = vpop.f32.mrb[0].mxu0
  %v864 = vadd.f32 %v767, %v863
  %v865 = vpop.f32.mrb[0].mxu0
  %v866 = vpop.f32.mrb[0].mxu0
  %v867 = vadd.f32 %v770, %v866
  %v868 = vpop.f32.mrb[0].mxu0
  %869 = vdwg.mxu0
  %870 = vadd.xlane.f32.xlu0 %v808
  %v871 = vpop.xlane.xlu0 %870
  %872 = vadd.xlane.f32.xlu0 %v811
  %v873 = vpop.xlane.xlu0 %872
  %874 = vadd.xlane.f32.xlu0 %v816
  %v875 = vpop.xlane.xlu0 %874
  %876 = vadd.xlane.f32.xlu0 %v819
  %v877 = vpop.xlane.xlu0 %876
  %878 = vadd.xlane.f32.xlu0 %v824
  %v879 = vpop.xlane.xlu0 %878
  %880 = vadd.xlane.f32.xlu0 %v827
  %v881 = vpop.xlane.xlu0 %880
  %882 = vadd.xlane.f32.xlu0 %v832
  %v883 = vpop.xlane.xlu0 %882
  %884 = vadd.xlane.f32.xlu0 %v835
  %v885 = vpop.xlane.xlu0 %884
  %886 = vadd.xlane.f32.xlu0 %v840
  %v887 = vpop.xlane.xlu0 %886
  %888 = vadd.xlane.f32.xlu0 %v843
  %v889 = vpop.xlane.xlu0 %888
  %890 = vadd.xlane.f32.xlu0 %v848
  %v891 = vpop.xlane.xlu0 %890
  %892 = vadd.xlane.f32.xlu0 %v851
  %v893 = vpop.xlane.xlu0 %892
  %894 = vadd.xlane.f32.xlu0 %v856
  %v895 = vpop.xlane.xlu0 %894
  %896 = vadd.xlane.f32.xlu0 %v859
  %v897 = vpop.xlane.xlu0 %896
  %898 = vadd.xlane.f32.xlu0 %v864
  %v899 = vpop.xlane.xlu0 %898
  %900 = vadd.xlane.f32.xlu0 %v867
  %v901 = vpop.xlane.xlu0 %900
  %v902 = vmul.f32 %v808, %v808
  %v903 = vmul.f32 %v811, %v811
  %v904 = vmul.f32 %v816, %v816
  %v905 = vmul.f32 %v819, %v819
  %v906 = vmul.f32 %v824, %v824
  %v907 = vmul.f32 %v827, %v827
  %v908 = vmul.f32 %v832, %v832
  %v909 = vmul.f32 %v835, %v835
  %v910 = vmul.f32 %v840, %v840
  %v911 = vmul.f32 %v843, %v843
  %v912 = vmul.f32 %v848, %v848
  %v913 = vmul.f32 %v851, %v851
  %v914 = vmul.f32 %v856, %v856
  %v915 = vmul.f32 %v859, %v859
  %v916 = vmul.f32 %v864, %v864
  %v917 = vmul.f32 %v867, %v867
  %918 = vadd.xlane.f32.xlu0 %v902
  %v919 = vpop.xlane.xlu0 %918
  %920 = vadd.xlane.f32.xlu0 %v903
  %v921 = vpop.xlane.xlu0 %920
  %922 = vadd.xlane.f32.xlu0 %v904
  %v923 = vpop.xlane.xlu0 %922
  %924 = vadd.xlane.f32.xlu0 %v905
  %v925 = vpop.xlane.xlu0 %924
  %926 = vadd.xlane.f32.xlu0 %v906
  %v927 = vpop.xlane.xlu0 %926
  %928 = vadd.xlane.f32.xlu0 %v907
  %v929 = vpop.xlane.xlu0 %928
  %930 = vadd.xlane.f32.xlu0 %v908
  %v931 = vpop.xlane.xlu0 %930
  %932 = vadd.xlane.f32.xlu0 %v909
  %v933 = vpop.xlane.xlu0 %932
  %934 = vadd.xlane.f32.xlu0 %v910
  %v935 = vpop.xlane.xlu0 %934
  %936 = vadd.xlane.f32.xlu0 %v911
  %v937 = vpop.xlane.xlu0 %936
  %938 = vadd.xlane.f32.xlu0 %v912
  %v939 = vpop.xlane.xlu0 %938
  %940 = vadd.xlane.f32.xlu0 %v913
  %v941 = vpop.xlane.xlu0 %940
  %942 = vadd.xlane.f32.xlu0 %v914
  %v943 = vpop.xlane.xlu0 %942
  %944 = vadd.xlane.f32.xlu0 %v915
  %v945 = vpop.xlane.xlu0 %944
  %946 = vadd.xlane.f32.xlu0 %v916
  %v947 = vpop.xlane.xlu0 %946
  %948 = vadd.xlane.f32.xlu0 %v917
  %v949 = vpop.xlane.xlu0 %948
  %v950 = vadd.f32 %v871, %v879
  %v951 = vadd.f32 %v873, %v881
  %v952 = vadd.f32 %v875, %v883
  %v953 = vadd.f32 %v877, %v885
  %v954 = vadd.f32 %v919, %v927
  %v955 = vadd.f32 %v921, %v929
  %v956 = vadd.f32 %v923, %v931
  %v957 = vadd.f32 %v925, %v933
  %v958 = vadd.f32 %v950, %v887
  %v959 = vadd.f32 %v951, %v889
  %v960 = vadd.f32 %v952, %v891
  %v961 = vadd.f32 %v953, %v893
  %v962 = vadd.f32 %v954, %v935
  %v963 = vadd.f32 %v955, %v937
  %v964 = vadd.f32 %v956, %v939
  %v965 = vadd.f32 %v957, %v941
  %v966 = vadd.f32 %v958, %v895
  %v967 = vadd.f32 %v959, %v897
  %v968 = vadd.f32 %v960, %v899
  %v969 = vadd.f32 %v961, %v901
  %v970 = vadd.f32 %v962, %v943
  %v971 = vadd.f32 %v963, %v945
  %v972 = vadd.f32 %v964, %v947
  %v973 = vadd.f32 %v965, %v949
  %v974 = vmul.f32 %v966, 0.001953125
  %v975 = vmul.f32 %v967, 0.001953125
  %v976 = vmul.f32 %v968, 0.001953125
  %v977 = vmul.f32 %v969, 0.001953125
  %v978 = vmul.f32 %v970, 0.001953125
  %v979 = vmul.f32 %v971, 0.001953125
  %v980 = vmul.f32 %v972, 0.001953125
  %v981 = vmul.f32 %v973, 0.001953125
  %v982 = vmul.f32 %v974, %v974
  %v983 = vmul.f32 %v975, %v975
  %v984 = vmul.f32 %v976, %v976
  %v985 = vmul.f32 %v977, %v977
  %v986 = vsub.f32 %v978, %v982
  %v987 = vsub.f32 %v979, %v983
  %v988 = vsub.f32 %v980, %v984
  %v989 = vsub.f32 %v981, %v985
  %v990 = vmax.f32 %v986, 0.0
  %v991 = vmax.f32 %v987, 0.0
  %v992 = vmax.f32 %v988, 0.0
  %v993 = vmax.f32 %v989, 0.0
  %v994 = vld [vmem:[%s2] sm:$0xff]
  %v995 = vld [vmem:[%s2 + $0x8] sm:$0xff]
  %v996 = vld [vmem:[%s2 + $0x10] sm:$0xff]
  %v997 = vld [vmem:[%s2 + $0x18] sm:$0xff]
  %v998 = vadd.f32 %v990, 1e-05
  %v999 = vadd.f32 %v991, 1e-05
  %v1000 = vadd.f32 %v992, 1e-05
  %v1001 = vadd.f32 %v993, 1e-05
  %v1002 = vrsqrt.pop %v998
  %v1003 = vrsqrt.pop %v999
  %v1004 = vrsqrt.pop %v1000
  %v1005 = vrsqrt.pop %v1001
  %v1006 = vmul.f32 %v994, %v1002
  %v1007 = vmul.f32 %v995, %v1003
  %v1008 = vmul.f32 %v996, %v1004
  %v1009 = vmul.f32 %v997, %v1005
  %v1010 = vld [vmem:[%s3] sm:$0xff]
  %v1011 = vld [vmem:[%s3 + $0x8] sm:$0xff]
  %v1012 = vld [vmem:[%s3 + $0x10] sm:$0xff]
  %v1013 = vld [vmem:[%s3 + $0x18] sm:$0xff]
  %v1014 = vmul.f32 %v974, %v1006
  %v1015 = vmul.f32 %v975, %v1007
  %v1016 = vmul.f32 %v976, %v1008
  %v1017 = vmul.f32 %v977, %v1009
  %v1018 = vsub.f32 %v1010, %v1014
  %v1019 = vsub.f32 %v1011, %v1015
  %v1020 = vsub.f32 %v1012, %v1016
  %v1021 = vsub.f32 %v1013, %v1017
  %1023 = vset.pattern.permute.xlu0 0
  %1024 = vperm.xlu0 %1023, %v1006
  %v1025 = vpop.permute.xlu0 %1024
  %1028 = vset.pattern.permute.xlu0 0
  %1029 = vperm.xlu0 %1028, %v1007
  %v1030 = vpop.permute.xlu0 %1029
  %1033 = vset.pattern.permute.xlu0 0
  %1034 = vperm.xlu0 %1033, %v1008
  %v1035 = vpop.permute.xlu0 %1034
  %1038 = vset.pattern.permute.xlu0 0
  %1039 = vperm.xlu0 %1038, %v1009
  %v1040 = vpop.permute.xlu0 %1039
  %v1042 = vmul.f32 %v808, %v1025
  %v1043 = vmul.f32 %v811, %v1030
  %v1044 = vmul.f32 %v816, %v1035
  %v1045 = vmul.f32 %v819, %v1040
  %v1046 = vmul.f32 %v824, %v1025
  %v1047 = vmul.f32 %v827, %v1030
  %v1048 = vmul.f32 %v832, %v1035
  %v1049 = vmul.f32 %v835, %v1040
  %v1050 = vmul.f32 %v840, %v1025
  %v1051 = vmul.f32 %v843, %v1030
  %v1052 = vmul.f32 %v848, %v1035
  %v1053 = vmul.f32 %v851, %v1040
  %v1054 = vmul.f32 %v856, %v1025
  %v1055 = vmul.f32 %v859, %v1030
  %v1056 = vmul.f32 %v864, %v1035
  %v1057 = vmul.f32 %v867, %v1040
  %1059 = vset.pattern.permute.xlu0 0
  %1060 = vperm.xlu0 %1059, %v1018
  %v1061 = vpop.permute.xlu0 %1060
  %1064 = vset.pattern.permute.xlu0 0
  %1065 = vperm.xlu0 %1064, %v1019
  %v1066 = vpop.permute.xlu0 %1065
  %1069 = vset.pattern.permute.xlu0 0
  %1070 = vperm.xlu0 %1069, %v1020
  %v1071 = vpop.permute.xlu0 %1070
  %1074 = vset.pattern.permute.xlu0 0
  %1075 = vperm.xlu0 %1074, %v1021
  %v1076 = vpop.permute.xlu0 %1075
  %v1078 = vadd.f32 %v1042, %v1061
  %v1079 = vadd.f32 %v1043, %v1066
  %v1080 = vadd.f32 %v1044, %v1071
  %v1081 = vadd.f32 %v1045, %v1076
  %v1082 = vadd.f32 %v1046, %v1061
  %v1083 = vadd.f32 %v1047, %v1066
  %v1084 = vadd.f32 %v1048, %v1071
  %v1085 = vadd.f32 %v1049, %v1076
  %v1086 = vadd.f32 %v1050, %v1061
  %v1087 = vadd.f32 %v1051, %v1066
  %v1088 = vadd.f32 %v1052, %v1071
  %v1089 = vadd.f32 %v1053, %v1076
  %v1090 = vadd.f32 %v1054, %v1061
  %v1091 = vadd.f32 %v1055, %v1066
  %v1092 = vadd.f32 %v1056, %v1071
  %v1093 = vadd.f32 %v1057, %v1076
  %v1094 = vmax.f32 %v1078, 0.0
  %v1095 = vmax.f32 %v1079, 0.0
  %v1096 = vmax.f32 %v1080, 0.0
  %v1097 = vmax.f32 %v1081, 0.0
  %v1098 = vmax.f32 %v1082, 0.0
  %v1099 = vmax.f32 %v1083, 0.0
  %v1100 = vmax.f32 %v1084, 0.0
  %v1101 = vmax.f32 %v1085, 0.0
  %v1102 = vmax.f32 %v1086, 0.0
  %v1103 = vmax.f32 %v1087, 0.0
  %v1104 = vmax.f32 %v1088, 0.0
  %v1105 = vmax.f32 %v1089, 0.0
  %v1106 = vmax.f32 %v1090, 0.0
  %v1107 = vmax.f32 %v1091, 0.0
  %v1108 = vmax.f32 %v1092, 0.0
  %v1109 = vmax.f32 %v1093, 0.0
  %v1110 = vpack.c.bf16 %v1095, %v1094
  %v1111 = vpack.c.bf16 %v1097, %v1096
  %v1112 = vpack.c.bf16 %v1099, %v1098
  %v1113 = vpack.c.bf16 %v1101, %v1100
  %v1114 = vpack.c.bf16 %v1103, %v1102
  %v1115 = vpack.c.bf16 %v1105, %v1104
  %v1116 = vpack.c.bf16 %v1107, %v1106
  %v1117 = vpack.c.bf16 %v1109, %v1108
  %v1126 = vunpack.c.l.b16 %v1110
  %v1127 = vunpack.c.h.b16 %v1110
  %v1128 = vunpack.c.l.b16 %v1111
  %v1129 = vunpack.c.h.b16 %v1111
  %v1130 = vunpack.c.l.b16 %v1112
  %v1131 = vunpack.c.h.b16 %v1112
  %v1132 = vunpack.c.l.b16 %v1113
  %v1133 = vunpack.c.h.b16 %v1113
  %v1134 = vunpack.c.l.b16 %v1114
  %v1135 = vunpack.c.h.b16 %v1114
  %v1136 = vunpack.c.l.b16 %v1115
  %v1137 = vunpack.c.h.b16 %v1115
  %v1138 = vunpack.c.l.b16 %v1116
  %v1139 = vunpack.c.h.b16 %v1116
  %v1140 = vunpack.c.l.b16 %v1117
  %v1141 = vunpack.c.h.b16 %v1117
  %v1142 = vpack.c.b16 %v1126, %v1126
  %v1143 = vpack.c.b16 %v1127, %v1127
  %v1144 = vpack.c.b16 %v1128, %v1128
  %v1145 = vpack.c.b16 %v1129, %v1129
  %v1146 = vpack.c.b16 %v1130, %v1130
  %v1147 = vpack.c.b16 %v1131, %v1131
  %v1148 = vpack.c.b16 %v1132, %v1132
  %v1149 = vpack.c.b16 %v1133, %v1133
  %v1150 = vpack.c.b16 %v1134, %v1134
  %v1151 = vpack.c.b16 %v1135, %v1135
  %v1152 = vpack.c.b16 %v1136, %v1136
  %v1153 = vpack.c.b16 %v1137, %v1137
  %v1154 = vpack.c.b16 %v1138, %v1138
  %v1155 = vpack.c.b16 %v1139, %v1139
  %v1156 = vpack.c.b16 %v1140, %v1140
  %v1157 = vpack.c.b16 %v1141, %v1141
  %1174 = vst [vmem:[%s4] sm:$0xf] %v1142
  %1175 = vst [vmem:[%s4 + $0x4] sm:$0xf] %v1143
  %1176 = vst [vmem:[%s4 + $0x8] sm:$0xf] %v1144
  %1177 = vst [vmem:[%s4 + $0xc] sm:$0xf] %v1145
  %1178 = vst [vmem:[%s4 + $0x10] sm:$0xf] %v1146
  %1179 = vst [vmem:[%s4 + $0x14] sm:$0xf] %v1147
  %1180 = vst [vmem:[%s4 + $0x18] sm:$0xf] %v1148
  %1181 = vst [vmem:[%s4 + $0x1c] sm:$0xf] %v1149
  %1182 = vst [vmem:[%s4 + $0x20] sm:$0xf] %v1150
  %1183 = vst [vmem:[%s4 + $0x24] sm:$0xf] %v1151
  %1184 = vst [vmem:[%s4 + $0x28] sm:$0xf] %v1152
  %1185 = vst [vmem:[%s4 + $0x2c] sm:$0xf] %v1153
  %1186 = vst [vmem:[%s4 + $0x30] sm:$0xf] %v1154
  %1187 = vst [vmem:[%s4 + $0x34] sm:$0xf] %v1155
  %1188 = vst [vmem:[%s4 + $0x38] sm:$0xf] %v1156
  %1189 = vst [vmem:[%s4 + $0x3c] sm:$0xf] %v1157
  // Predicated region
  $region18: #{generator_forward.7} parent=0 // pred_check
    _
  $region19: #{generator_forward.7} parent=0 // pred_check_branch
    %1191 = sbr.rel (0) target = $region21
  $region20: #{generator_forward.7} parent=0 // pred_region
    _
  $region21: #{generator_forward.7} parent=0 // pred_fallthru
    _
  // Predicated region
  $region22: #{generator_forward.7} parent=0 // pred_check
    _
  $region23: #{generator_forward.7} parent=0 // pred_check_branch
    %1193 = sbr.rel (0) target = $region25
  $region24: #{generator_forward.7} parent=0 // pred_region
    _
  $region25: #{generator_forward.7} parent=0 // pred_fallthru
    _

// kernel: generator_forward.8
$region0: #{generator_forward.8}
  #allocation0 [shape = 'u32[]', space=smem, size = 0x4, offset = 0x4, fixed_abs, tag = 'smem constant byte address 0x4 - core index']
  #allocation1 [shape = 'u32[144,128]{1,0:T(1,128)}', space=vmem, size = 0x12000, scoped, tag = 'internal scratch']
  %s0 = inlined_call_operand.vmem [shape: bf16[288,512], index: 0, kind: input, shape index: {}]
  %s1 = inlined_call_operand.vmem [shape: bf16[64,288], index: 1, kind: input, shape index: {}]
  %s2 = inlined_call_operand.vmem [shape: f32[16,1], index: 2, kind: input, shape index: {}]
  %s3 = inlined_call_operand.vmem [shape: f32[16,1], index: 3, kind: input, shape index: {}]
  %s4 = inlined_call_operand.vmem [shape: bf16[64,512], index: 4, kind: output, shape index: {}]
  %s5 = sld [smem:[#allocation0]]
  $region26: #{generator_forward.8} parent=0
    _
  %s7 = ssub.s32 1, %s5
  %s8 = scalar_select 0, %s7, %s5
  // Predicated region
  $region2: #{generator_forward.8} parent=0 // pred_check
    _
  $region3: #{generator_forward.8} parent=0 // pred_check_branch
    %10 = sbr.rel (0) target = $region5
  $region4: #{generator_forward.8} parent=0 // pred_region
    _
  $region5: #{generator_forward.8} parent=0 // pred_fallthru
    _
  // Predicated region
  $region6: #{generator_forward.8} parent=0 // pred_check
    _
  $region7: #{generator_forward.8} parent=0 // pred_check_branch
    %12 = sbr.rel (0) target = $region9
  $region8: #{generator_forward.8} parent=0 // pred_region
    _
  $region9: #{generator_forward.8} parent=0 // pred_fallthru
    _
  // Predicated region
  $region10: #{generator_forward.8} parent=0 // pred_check
    _
  $region11: #{generator_forward.8} parent=0 // pred_check_branch
    %14 = sbr.rel (0) target = $region13
  $region12: #{generator_forward.8} parent=0 // pred_region
    _
  $region13: #{generator_forward.8} parent=0 // pred_fallthru
    _
  // Predicated region
  $region14: #{generator_forward.8} parent=0 // pred_check
    _
  $region15: #{generator_forward.8} parent=0 // pred_check_branch
    %16 = sbr.rel (0) target = $region17
  $region16: #{generator_forward.8} parent=0 // pred_region
    _
  $region17: #{generator_forward.8} parent=0 // pred_fallthru
    _
  %v18 = vld [vmem:[%s1] sm:$0xff]
  %v19 = vld [vmem:[%s1 + $0x8] sm:$0xf]
  %v20 = vld [vmem:[%s1 + $0xc] sm:$0xff]
  %v21 = vld [vmem:[%s1 + $0x14] sm:$0xf]
  %v22 = vld [vmem:[%s1 + $0x18] sm:$0xff]
  %v23 = vld [vmem:[%s1 + $0x20] sm:$0xf]
  %v24 = vld [vmem:[%s1 + $0x24] sm:$0xff]
  %v25 = vld [vmem:[%s1 + $0x2c] sm:$0xf]
  %v26 = vld [vmem:[%s1 + $0x30] sm:$0xff]
  %v27 = vld [vmem:[%s1 + $0x38] sm:$0xf]
  %v28 = vld [vmem:[%s1 + $0x3c] sm:$0xff]
  %v29 = vld [vmem:[%s1 + $0x44] sm:$0xf]
  %v30 = vld [vmem:[%s1 + $0x48] sm:$0xff]
  %v31 = vld [vmem:[%s1 + $0x50] sm:$0xf]
  %v32 = vld [vmem:[%s1 + $0x54] sm:$0xff]
  %v33 = vld [vmem:[%s1 + $0x5c] sm:$0xf]
  %v34 = vld [vmem:[%s0] sm:$0xff]
  %v35 = vld [vmem:[%s0 + $0x8] sm:$0xff]
  %v36 = vld [vmem:[%s0 + $0x10] sm:$0xff]
  %v37 = vld [vmem:[%s0 + $0x18] sm:$0xff]
  %v38 = vld [vmem:[%s0 + $0x20] sm:$0xff]
  %v39 = vld [vmem:[%s0 + $0x28] sm:$0xff]
  %v40 = vld [vmem:[%s0 + $0x30] sm:$0xff]
  %v41 = vld [vmem:[%s0 + $0x38] sm:$0xff]
  %v42 = vld [vmem:[%s0 + $0x40] sm:$0xff]
  %v43 = vld [vmem:[%s0 + $0x48] sm:$0xff]
  %v44 = vld [vmem:[%s0 + $0x50] sm:$0xff]
  %v45 = vld [vmem:[%s0 + $0x58] sm:$0xff]
  %v46 = vld [vmem:[%s0 + $0x60] sm:$0xff]
  %v47 = vld [vmem:[%s0 + $0x68] sm:$0xff]
  %v48 = vld [vmem:[%s0 + $0x70] sm:$0xff]
  %v49 = vld [vmem:[%s0 + $0x78] sm:$0xff]
  %v50 = vld [vmem:[%s0 + $0x80] sm:$0xff]
  %v51 = vld [vmem:[%s0 + $0x88] sm:$0xff]
  %v52 = vld [vmem:[%s0 + $0x90] sm:$0xff]
  %v53 = vld [vmem:[%s0 + $0x98] sm:$0xff]
  %v54 = vld [vmem:[%s0 + $0xa0] sm:$0xff]
  %v55 = vld [vmem:[%s0 + $0xa8] sm:$0xff]
  %v56 = vld [vmem:[%s0 + $0xb0] sm:$0xff]
  %v57 = vld [vmem:[%s0 + $0xb8] sm:$0xff]
  %v58 = vld [vmem:[%s0 + $0xc0] sm:$0xff]
  %v59 = vld [vmem:[%s0 + $0xc8] sm:$0xff]
  %v60 = vld [vmem:[%s0 + $0xd0] sm:$0xff]
  %v61 = vld [vmem:[%s0 + $0xd8] sm:$0xff]
  %v62 = vld [vmem:[%s0 + $0xe0] sm:$0xff]
  %v63 = vld [vmem:[%s0 + $0xe8] sm:$0xff]
  %v64 = vld [vmem:[%s0 + $0xf0] sm:$0xff]
  %v65 = vld [vmem:[%s0 + $0xf8] sm:$0xff]
  %v66 = vld [vmem:[%s0 + $0x100] sm:$0xff]
  %v67 = vld [vmem:[%s0 + $0x108] sm:$0xff]
  %v68 = vld [vmem:[%s0 + $0x110] sm:$0xff]
  %v69 = vld [vmem:[%s0 + $0x118] sm:$0xff]
  %v70 = vld [vmem:[%s0 + $0x120] sm:$0xff]
  %v71 = vld [vmem:[%s0 + $0x128] sm:$0xff]
  %v72 = vld [vmem:[%s0 + $0x130] sm:$0xff]
  %v73 = vld [vmem:[%s0 + $0x138] sm:$0xff]
  %v74 = vld [vmem:[%s0 + $0x140] sm:$0xff]
  %v75 = vld [vmem:[%s0 + $0x148] sm:$0xff]
  %v76 = vld [vmem:[%s0 + $0x150] sm:$0xff]
  %v77 = vld [vmem:[%s0 + $0x158] sm:$0xff]
  %v78 = vld [vmem:[%s0 + $0x160] sm:$0xff]
  %v79 = vld [vmem:[%s0 + $0x168] sm:$0xff]
  %v80 = vld [vmem:[%s0 + $0x170] sm:$0xff]
  %v81 = vld [vmem:[%s0 + $0x178] sm:$0xff]
  %v82 = vld [vmem:[%s0 + $0x180] sm:$0xff]
  %v83 = vld [vmem:[%s0 + $0x188] sm:$0xff]
  %v84 = vld [vmem:[%s0 + $0x190] sm:$0xff]
  %v85 = vld [vmem:[%s0 + $0x198] sm:$0xff]
  %v86 = vld [vmem:[%s0 + $0x1a0] sm:$0xff]
  %v87 = vld [vmem:[%s0 + $0x1a8] sm:$0xff]
  %v88 = vld [vmem:[%s0 + $0x1b0] sm:$0xff]
  %v89 = vld [vmem:[%s0 + $0x1b8] sm:$0xff]
  %v90 = vld [vmem:[%s0 + $0x1c0] sm:$0xff]
  %v91 = vld [vmem:[%s0 + $0x1c8] sm:$0xff]
  %v92 = vld [vmem:[%s0 + $0x1d0] sm:$0xff]
  %v93 = vld [vmem:[%s0 + $0x1d8] sm:$0xff]
  %v94 = vld [vmem:[%s0 + $0x1e0] sm:$0xff]
  %v95 = vld [vmem:[%s0 + $0x1e8] sm:$0xff]
  %v96 = vld [vmem:[%s0 + $0x1f0] sm:$0xff]
  %v97 = vld [vmem:[%s0 + $0x1f8] sm:$0xff]
  %v98 = vld [vmem:[%s0 + $0x200] sm:$0xff]
  %v99 = vld [vmem:[%s0 + $0x208] sm:$0xff]
  %v100 = vld [vmem:[%s0 + $0x210] sm:$0xff]
  %v101 = vld [vmem:[%s0 + $0x218] sm:$0xff]
  %v102 = vld [vmem:[%s0 + $0x220] sm:$0xff]
  %v103 = vld [vmem:[%s0 + $0x228] sm:$0xff]
  %v104 = vld [vmem:[%s0 + $0x230] sm:$0xff]
  %v105 = vld [vmem:[%s0 + $0x238] sm:$0xff]
  %v122 = vunpack.c.l.b16 %v18
  %v123 = vunpack.c.h.b16 %v18
  %v124 = vunpack.c.l.b16 %v19
  %v125 = vunpack.c.l.b16 %v20
  %v126 = vunpack.c.h.b16 %v20
  %v127 = vunpack.c.l.b16 %v21
  %v128 = vunpack.c.l.b16 %v22
  %v129 = vunpack.c.h.b16 %v22
  %v130 = vunpack.c.l.b16 %v23
  %v131 = vunpack.c.l.b16 %v24
  %v132 = vunpack.c.h.b16 %v24
  %v133 = vunpack.c.l.b16 %v25
  %v134 = vunpack.c.l.b16 %v26
  %v135 = vunpack.c.h.b16 %v26
  %v136 = vunpack.c.l.b16 %v27
  %v137 = vunpack.c.l.b16 %v28
  %v138 = vunpack.c.h.b16 %v28
  %v139 = vunpack.c.l.b16 %v29
  %v140 = vunpack.c.l.b16 %v30
  %v141 = vunpack.c.h.b16 %v30
  %v142 = vunpack.c.l.b16 %v31
  %v143 = vunpack.c.l.b16 %v32
  %v144 = vunpack.c.h.b16 %v32
  %v145 = vunpack.c.l.b16 %v33
  %v146 = vpack.c.b16 %v125, %v122
  %v147 = vpack.c.b16 %v126, %v123
  %v148 = vpack.c.b16 %v127, %v124
  %v149 = vpack.c.b16 %v131, %v128
  %v150 = vpack.c.b16 %v132, %v129
  %v151 = vpack.c.b16 %v133, %v130
  %v152 = vpack.c.b16 %v137, %v134
  %v153 = vpack.c.b16 %v138, %v135
  %v154 = vpack.c.b16 %v139, %v136
  %v155 = vpack.c.b16 %v143, %v140
  %v156 = vpack.c.b16 %v144, %v141
  %v157 = vpack.c.b16 %v145, %v142
  %v238 = vunpack.c.l.b16 %v34
  %v239 = vunpack.c.h.b16 %v34
  %v240 = vunpack.c.l.b16 %v35
  %v241 = vunpack.c.h.b16 %v35
  %v242 = vunpack.c.l.b16 %v36
  %v243 = vunpack.c.h.b16 %v36
  %v244 = vunpack.c.l.b16 %v37
  %v245 = vunpack.c.h.b16 %v37
  %v246 = vunpack.c.l.b16 %v38
  %v247 = vunpack.c.h.b16 %v38
  %v248 = vunpack.c.l.b16 %v39
  %v249 = vunpack.c.h.b16 %v39
  %v250 = vunpack.c.l.b16 %v40
  %v251 = vunpack.c.h.b16 %v40
  %v252 = vunpack.c.l.b16 %v41
  %v253 = vunpack.c.h.b16 %v41
  %v254 = vunpack.c.l.b16 %v42
  %v255 = vunpack.c.h.b16 %v42
  %v256 = vunpack.c.l.b16 %v43
  %v257 = vunpack.c.h.b16 %v43
  %v258 = vunpack.c.l.b16 %v44
  %v259 = vunpack.c.h.b16 %v44
  %v260 = vunpack.c.l.b16 %v45
  %v261 = vunpack.c.h.b16 %v45
  %v262 = vunpack.c.l.b16 %v46
  %v263 = vunpack.c.h.b16 %v46
  %v264 = vunpack.c.l.b16 %v47
  %v265 = vunpack.c.h.b16 %v47
  %v266 = vunpack.c.l.b16 %v48
  %v267 = vunpack.c.h.b16 %v48
  %v268 = vunpack.c.l.b16 %v49
  %v269 = vunpack.c.h.b16 %v49
  %v270 = vunpack.c.l.b16 %v50
  %v271 = vunpack.c.h.b16 %v50
  %v272 = vunpack.c.l.b16 %v51
  %v273 = vunpack.c.h.b16 %v51
  %v274 = vunpack.c.l.b16 %v52
  %v275 = vunpack.c.h.b16 %v52
  %v276 = vunpack.c.l.b16 %v53
  %v277 = vunpack.c.h.b16 %v53
  %v278 = vunpack.c.l.b16 %v54
  %v279 = vunpack.c.h.b16 %v54
  %v280 = vunpack.c.l.b16 %v55
  %v281 = vunpack.c.h.b16 %v55
  %v282 = vunpack.c.l.b16 %v56
  %v283 = vunpack.c.h.b16 %v56
  %v284 = vunpack.c.l.b16 %v57
  %v285 = vunpack.c.h.b16 %v57
  %v286 = vunpack.c.l.b16 %v58
  %v287 = vunpack.c.h.b16 %v58
  %v288 = vunpack.c.l.b16 %v59
  %v289 = vunpack.c.h.b16 %v59
  %v290 = vunpack.c.l.b16 %v60
  %v291 = vunpack.c.h.b16 %v60
  %v292 = vunpack.c.l.b16 %v61
  %v293 = vunpack.c.h.b16 %v61
  %v294 = vunpack.c.l.b16 %v62
  %v295 = vunpack.c.h.b16 %v62
  %v296 = vunpack.c.l.b16 %v63
  %v297 = vunpack.c.h.b16 %v63
  %v298 = vunpack.c.l.b16 %v64
  %v299 = vunpack.c.h.b16 %v64
  %v300 = vunpack.c.l.b16 %v65
  %v301 = vunpack.c.h.b16 %v65
  %v302 = vunpack.c.l.b16 %v66
  %v303 = vunpack.c.h.b16 %v66
  %v304 = vunpack.c.l.b16 %v67
  %v305 = vunpack.c.h.b16 %v67
  %v306 = vunpack.c.l.b16 %v68
  %v307 = vunpack.c.h.b16 %v68
  %v308 = vunpack.c.l.b16 %v69
  %v309 = vunpack.c.h.b16 %v69
  %v310 = vunpack.c.l.b16 %v70
  %v311 = vunpack.c.h.b16 %v70
  %v312 = vunpack.c.l.b16 %v71
  %v313 = vunpack.c.h.b16 %v71
  %v314 = vunpack.c.l.b16 %v72
  %v315 = vunpack.c.h.b16 %v72
  %v316 = vunpack.c.l.b16 %v73
  %v317 = vunpack.c.h.b16 %v73
  %v318 = vunpack.c.l.b16 %v74
  %v319 = vunpack.c.h.b16 %v74
  %v320 = vunpack.c.l.b16 %v75
  %v321 = vunpack.c.h.b16 %v75
  %v322 = vunpack.c.l.b16 %v76
  %v323 = vunpack.c.h.b16 %v76
  %v324 = vunpack.c.l.b16 %v77
  %v325 = vunpack.c.h.b16 %v77
  %v326 = vunpack.c.l.b16 %v78
  %v327 = vunpack.c.h.b16 %v78
  %v328 = vunpack.c.l.b16 %v79
  %v329 = vunpack.c.h.b16 %v79
  %v330 = vunpack.c.l.b16 %v80
  %v331 = vunpack.c.h.b16 %v80
  %v332 = vunpack.c.l.b16 %v81
  %v333 = vunpack.c.h.b16 %v81
  %v334 = vunpack.c.l.b16 %v82
  %v335 = vunpack.c.h.b16 %v82
  %v336 = vunpack.c.l.b16 %v83
  %v337 = vunpack.c.h.b16 %v83
  %v338 = vunpack.c.l.b16 %v84
  %v339 = vunpack.c.h.b16 %v84
  %v340 = vunpack.c.l.b16 %v85
  %v341 = vunpack.c.h.b16 %v85
  %v342 = vunpack.c.l.b16 %v86
  %v343 = vunpack.c.h.b16 %v86
  %v344 = vunpack.c.l.b16 %v87
  %v345 = vunpack.c.h.b16 %v87
  %v346 = vunpack.c.l.b16 %v88
  %v347 = vunpack.c.h.b16 %v88
  %v348 = vunpack.c.l.b16 %v89
  %v349 = vunpack.c.h.b16 %v89
  %v350 = vunpack.c.l.b16 %v90
  %v351 = vunpack.c.h.b16 %v90
  %v352 = vunpack.c.l.b16 %v91
  %v353 = vunpack.c.h.b16 %v91
  %v354 = vunpack.c.l.b16 %v92
  %v355 = vunpack.c.h.b16 %v92
  %v356 = vunpack.c.l.b16 %v93
  %v357 = vunpack.c.h.b16 %v93
  %v358 = vunpack.c.l.b16 %v94
  %v359 = vunpack.c.h.b16 %v94
  %v360 = vunpack.c.l.b16 %v95
  %v361 = vunpack.c.h.b16 %v95
  %v362 = vunpack.c.l.b16 %v96
  %v363 = vunpack.c.h.b16 %v96
  %v364 = vunpack.c.l.b16 %v97
  %v365 = vunpack.c.h.b16 %v97
  %v366 = vunpack.c.l.b16 %v98
  %v367 = vunpack.c.h.b16 %v98
  %v368 = vunpack.c.l.b16 %v99
  %v369 = vunpack.c.h.b16 %v99
  %v370 = vunpack.c.l.b16 %v100
  %v371 = vunpack.c.h.b16 %v100
  %v372 = vunpack.c.l.b16 %v101
  %v373 = vunpack.c.h.b16 %v101
  %v374 = vunpack.c.l.b16 %v102
  %v375 = vunpack.c.h.b16 %v102
  %v376 = vunpack.c.l.b16 %v103
  %v377 = vunpack.c.h.b16 %v103
  %v378 = vunpack.c.l.b16 %v104
  %v379 = vunpack.c.h.b16 %v104
  %v380 = vunpack.c.l.b16 %v105
  %v381 = vunpack.c.h.b16 %v105
  %v382 = vpack.c.b16 %v242, %v238
  %v383 = vpack.c.b16 %v243, %v239
  %v384 = vpack.c.b16 %v244, %v240
  %v385 = vpack.c.b16 %v245, %v241
  %v386 = vpack.c.b16 %v250, %v246
  %v387 = vpack.c.b16 %v251, %v247
  %v388 = vpack.c.b16 %v252, %v248
  %v389 = vpack.c.b16 %v253, %v249
  %v390 = vpack.c.b16 %v258, %v254
  %v391 = vpack.c.b16 %v259, %v255
  %v392 = vpack.c.b16 %v260, %v256
  %v393 = vpack.c.b16 %v261, %v257
  %v394 = vpack.c.b16 %v266, %v262
  %v395 = vpack.c.b16 %v267, %v263
  %v396 = vpack.c.b16 %v268, %v264
  %v397 = vpack.c.b16 %v269, %v265
  %v398 = vpack.c.b16 %v274, %v270
  %v399 = vpack.c.b16 %v275, %v271
  %v400 = vpack.c.b16 %v276, %v272
  %v401 = vpack.c.b16 %v277, %v273
  %v402 = vpack.c.b16 %v282, %v278
  %v403 = vpack.c.b16 %v283, %v279
  %v404 = vpack.c.b16 %v284, %v280
  %v405 = vpack.c.b16 %v285, %v281
  %v406 = vpack.c.b16 %v290, %v286
  %v407 = vpack.c.b16 %v291, %v287
  %v408 = vpack.c.b16 %v292, %v288
  %v409 = vpack.c.b16 %v293, %v289
  %v410 = vpack.c.b16 %v298, %v294
  %v411 = vpack.c.b16 %v299, %v295
  %v412 = vpack.c.b16 %v300, %v296
  %v413 = vpack.c.b16 %v301, %v297
  %v414 = vpack.c.b16 %v306, %v302
  %v415 = vpack.c.b16 %v307, %v303
  %v416 = vpack.c.b16 %v308, %v304
  %v417 = vpack.c.b16 %v309, %v305
  %v418 = vpack.c.b16 %v314, %v310
  %v419 = vpack.c.b16 %v315, %v311
  %v420 = vpack.c.b16 %v316, %v312
  %v421 = vpack.c.b16 %v317, %v313
  %v422 = vpack.c.b16 %v322, %v318
  %v423 = vpack.c.b16 %v323, %v319
  %v424 = vpack.c.b16 %v324, %v320
  %v425 = vpack.c.b16 %v325, %v321
  %v426 = vpack.c.b16 %v330, %v326
  %v427 = vpack.c.b16 %v331, %v327
  %v428 = vpack.c.b16 %v332, %v328
  %v429 = vpack.c.b16 %v333, %v329
  %v430 = vpack.c.b16 %v338, %v334
  %v431 = vpack.c.b16 %v339, %v335
  %v432 = vpack.c.b16 %v340, %v336
  %v433 = vpack.c.b16 %v341, %v337
  %v434 = vpack.c.b16 %v346, %v342
  %v435 = vpack.c.b16 %v347, %v343
  %v436 = vpack.c.b16 %v348, %v344
  %v437 = vpack.c.b16 %v349, %v345
  %v438 = vpack.c.b16 %v354, %v350
  %v439 = vpack.c.b16 %v355, %v351
  %v440 = vpack.c.b16 %v356, %v352
  %v441 = vpack.c.b16 %v357, %v353
  %v442 = vpack.c.b16 %v362, %v358
  %v443 = vpack.c.b16 %v363, %v359
  %v444 = vpack.c.b16 %v364, %v360
  %v445 = vpack.c.b16 %v365, %v361
  %v446 = vpack.c.b16 %v370, %v366
  %v447 = vpack.c.b16 %v371, %v367
  %v448 = vpack.c.b16 %v372, %v368
  %v449 = vpack.c.b16 %v373, %v369
  %v450 = vpack.c.b16 %v378, %v374
  %v451 = vpack.c.b16 %v379, %v375
  %v452 = vpack.c.b16 %v380, %v376
  %v453 = vpack.c.b16 %v381, %v377
  %vm526 = vcmask 261120
  %v528 = vsel %vm526, %v148, 0
  %v531 = vsel %vm526, %v151, 0
  %v534 = vsel %vm526, %v154, 0
  %v537 = vsel %vm526, %v157, 0
  %539 = vmatprep.subr.bf16.mxu0 %v383
  %540 = vmatpush1.bf16.msra.mxu0 %v382
  %541 = vmatprep.subr.bf16.mxu0 %v387
  %542 = vmatpush1.bf16.msra.mxu0 %v386
  %543 = vmatprep.subr.bf16.mxu0 %v391
  %544 = vmatpush1.bf16.msra.mxu0 %v390
  %545 = vmatprep.subr.bf16.mxu0 %v395
  %546 = vmatpush1.bf16.msra.mxu0 %v394
  %547 = vmatprep.subr.bf16.mxu0 %v399
  %548 = vmatpush1.bf16.msra.mxu0 %v398
  %549 = vmatprep.subr.bf16.mxu0 %v403
  %550 = vmatpush1.bf16.msra.mxu0 %v402
  %551 = vmatprep.subr.bf16.mxu0 %v407
  %552 = vmatpush1.bf16.msra.mxu0 %v406
  %553 = vmatprep.subr.bf16.mxu0 %v411
  %554 = vmatpush1.bf16.msra.mxu0 %v410
  %555 = vmatprep.subr.bf16.mxu0 %v415
  %556 = vmatpush1.bf16.msra.mxu0 %v414
  %557 = vmatprep.subr.bf16.mxu0 %v419
  %558 = vmatpush1.bf16.msra.mxu0 %v418
  %559 = vmatprep.subr.bf16.mxu0 %v423
  %560 = vmatpush1.bf16.msra.mxu0 %v422
  %561 = vmatprep.subr.bf16.mxu0 %v427
  %562 = vmatpush1.bf16.msra.mxu0 %v426
  %563 = vmatprep.subr.bf16.mxu0 %v431
  %564 = vmatpush1.bf16.msra.mxu0 %v430
  %565 = vmatprep.subr.bf16.mxu0 %v435
  %566 = vmatpush1.bf16.msra.mxu0 %v434
  %567 = vmatprep.subr.bf16.mxu0 %v439
  %568 = vmatpush1.bf16.msra.mxu0 %v438
  %569 = vmatprep.subr.bf16.mxu0 %v443
  %570 = vmatpush1.bf16.msra.mxu0 %v442
  %571 = vmatprep.mubr.bf16.mxu0 %v147
  %572 = vmatmul.mubr.bf16.gmra.mrb[0].mxu0 %v146
  %v573 = vpop.f32.mrb[0].mxu0
  %v574 = vadd.f32 0.0, %v573
  %v575 = vpop.f32.mrb[0].mxu0
  %v576 = vadd.f32 0.0, %v575
  %v577 = vpop.f32.mrb[0].mxu0
  %v578 = vadd.f32 0.0, %v577
  %v579 = vpop.f32.mrb[0].mxu0
  %v580 = vadd.f32 0.0, %v579
  %581 = vmatprep.mubr.bf16.mxu0 %v150
  %582 = vmatmul.mubr.bf16.gmra.mrb[0].mxu0 %v149
  %v583 = vpop.f32.mrb[0].mxu0
  %v584 = vadd.f32 0.0, %v583
  %v585 = vpop.f32.mrb[0].mxu0
  %v586 = vadd.f32 0.0, %v585
  %v587 = vpop.f32.mrb[0].mxu0
  %v588 = vadd.f32 0.0, %v587
  %v589 = vpop.f32.mrb[0].mxu0
  %v590 = vadd.f32 0.0, %v589
  %591 = vmatprep.mubr.bf16.mxu0 %v153
  %592 = vmatmul.mubr.bf16.gmra.mrb[0].mxu0 %v152
  %v593 = vpop.f32.mrb[0].mxu0
  %v594 = vadd.f32 0.0, %v593
  %v595 = vpop.f32.mrb[0].mxu0
  %v596 = vadd.f32 0.0, %v595
  %v597 = vpop.f32.mrb[0].mxu0
  %v598 = vadd.f32 0.0, %v597
  %v599 = vpop.f32.mrb[0].mxu0
  %v600 = vadd.f32 0.0, %v599
  %601 = vmatprep.mubr.bf16.mxu0 %v156
  %602 = vmatmul.mubr.bf16.gmra.mrb[0].mxu0 %v155
  %v603 = vpop.f32.mrb[0].mxu0
  %v604 = vadd.f32 0.0, %v603
  %v605 = vpop.f32.mrb[0].mxu0
  %v606 = vadd.f32 0.0, %v605
  %v607 = vpop.f32.mrb[0].mxu0
  %v608 = vadd.f32 0.0, %v607
  %v609 = vpop.f32.mrb[0].mxu0
  %v610 = vadd.f32 0.0, %v609
  %611 = vdwg.mxu0
  %612 = vmatprep.subr.bf16.mxu0 %v447
  %613 = vmatpush1.bf16.msra.mxu0 %v446
  %614 = vmatprep.subr.bf16.mxu0 %v451
  %615 = vmatpush1.bf16.msra.mxu0 %v450
  %616 = vmatprep.subr.bf16.mxu0 0
  %617 = vmatpush1.bf16.msra.mxu0 0
  %618 = vmatprep.subr.bf16.mxu0 0
  %619 = vmatpush1.bf16.msra.mxu0 0
  %620 = vmatprep.subr.bf16.mxu0 0
  %621 = vmatpush1.bf16.msra.mxu0 0
  %622 = vmatprep.subr.bf16.mxu0 0
  %623 = vmatpush1.bf16.msra.mxu0 0
  %624 = vmatprep.subr.bf16.mxu0 0
  %625 = vmatpush1.bf16.msra.mxu0 0
  %626 = vmatprep.subr.bf16.mxu0 0
  %627 = vmatpush1.bf16.msra.mxu0 0
  %628 = vmatprep.subr.bf16.mxu0 0
  %629 = vmatpush1.bf16.msra.mxu0 0
  %630 = vmatprep.subr.bf16.mxu0 0
  %631 = vmatpush1.bf16.msra.mxu0 0
  %632 = vmatprep.subr.bf16.mxu0 0
  %633 = vmatpush1.bf16.msra.mxu0 0
  %634 = vmatprep.subr.bf16.mxu0 0
  %635 = vmatpush1.bf16.msra.mxu0 0
  %636 = vmatprep.subr.bf16.mxu0 0
  %637 = vmatpush1.bf16.msra.mxu0 0
  %638 = vmatprep.subr.bf16.mxu0 0
  %639 = vmatpush1.bf16.msra.mxu0 0
  %640 = vmatprep.subr.bf16.mxu0 0
  %641 = vmatpush1.bf16.msra.mxu0 0
  %642 = vmatprep.subr.bf16.mxu0 0
  %643 = vmatpush1.bf16.msra.mxu0 0
  %644 = vmatprep.mubr.bf16.mxu0 0
  %645 = vmatmul.mubr.bf16.gmra.mrb[0].mxu0 %v528
  %v646 = vpop.f32.mrb[0].mxu0
  %v647 = vadd.f32 %v574, %v646
  %v648 = vpop.f32.mrb[0].mxu0
  %v649 = vadd.f32 %v576, %v648
  %v650 = vpop.f32.mrb[0].mxu0
  %v651 = vadd.f32 %v578, %v650
  %v652 = vpop.f32.mrb[0].mxu0
  %v653 = vadd.f32 %v580, %v652
  %654 = vmatprep.mubr.bf16.mxu0 0
  %655 = vmatmul.mubr.bf16.gmra.mrb[0].mxu0 %v531
  %v656 = vpop.f32.mrb[0].mxu0
  %v657 = vadd.f32 %v584, %v656
  %v658 = vpop.f32.mrb[0].mxu0
  %v659 = vadd.f32 %v586, %v658
  %v660 = vpop.f32.mrb[0].mxu0
  %v661 = vadd.f32 %v588, %v660
  %v662 = vpop.f32.mrb[0].mxu0
  %v663 = vadd.f32 %v590, %v662
  %664 = vmatprep.mubr.bf16.mxu0 0
  %665 = vmatmul.mubr.bf16.gmra.mrb[0].mxu0 %v534
  %v666 = vpop.f32.mrb[0].mxu0
  %v667 = vadd.f32 %v594, %v666
  %v668 = vpop.f32.mrb[0].mxu0
  %v669 = vadd.f32 %v596, %v668
  %v670 = vpop.f32.mrb[0].mxu0
  %v671 = vadd.f32 %v598, %v670
  %v672 = vpop.f32.mrb[0].mxu0
  %v673 = vadd.f32 %v600, %v672
  %674 = vmatprep.mubr.bf16.mxu0 0
  %675 = vmatmul.mubr.bf16.gmra.mrb[0].mxu0 %v537
  %v676 = vpop.f32.mrb[0].mxu0
  %v677 = vadd.f32 %v604, %v676
  %v678 = vpop.f32.mrb[0].mxu0
  %v679 = vadd.f32 %v606, %v678
  %v680 = vpop.f32.mrb[0].mxu0
  %v681 = vadd.f32 %v608, %v680
  %v682 = vpop.f32.mrb[0].mxu0
  %v683 = vadd.f32 %v610, %v682
  %684 = vdwg.mxu0
  %685 = vmatprep.subr.bf16.mxu0 %v385
  %686 = vmatpush1.bf16.msra.mxu0 %v384
  %687 = vmatprep.subr.bf16.mxu0 %v389
  %688 = vmatpush1.bf16.msra.mxu0 %v388
  %689 = vmatprep.subr.bf16.mxu0 %v393
  %690 = vmatpush1.bf16.msra.mxu0 %v392
  %691 = vmatprep.subr.bf16.mxu0 %v397
  %692 = vmatpush1.bf16.msra.mxu0 %v396
  %693 = vmatprep.subr.bf16.mxu0 %v401
  %694 = vmatpush1.bf16.msra.mxu0 %v400
  %695 = vmatprep.subr.bf16.mxu0 %v405
  %696 = vmatpush1.bf16.msra.mxu0 %v404
  %697 = vmatprep.subr.bf16.mxu0 %v409
  %698 = vmatpush1.bf16.msra.mxu0 %v408
  %699 = vmatprep.subr.bf16.mxu0 %v413
  %700 = vmatpush1.bf16.msra.mxu0 %v412
  %701 = vmatprep.subr.bf16.mxu0 %v417
  %702 = vmatpush1.bf16.msra.mxu0 %v416
  %703 = vmatprep.subr.bf16.mxu0 %v421
  %704 = vmatpush1.bf16.msra.mxu0 %v420
  %705 = vmatprep.subr.bf16.mxu0 %v425
  %706 = vmatpush1.bf16.msra.mxu0 %v424
  %707 = vmatprep.subr.bf16.mxu0 %v429
  %708 = vmatpush1.bf16.msra.mxu0 %v428
  %709 = vmatprep.subr.bf16.mxu0 %v433
  %710 = vmatpush1.bf16.msra.mxu0 %v432
  %711 = vmatprep.subr.bf16.mxu0 %v437
  %712 = vmatpush1.bf16.msra.mxu0 %v436
  %713 = vmatprep.subr.bf16.mxu0 %v441
  %714 = vmatpush1.bf16.msra.mxu0 %v440
  %715 = vmatprep.subr.bf16.mxu0 %v445
  %716 = vmatpush1.bf16.msra.mxu0 %v444
  %717 = vmatprep.mubr.bf16.mxu0 %v147
  %718 = vmatmul.mubr.bf16.gmra.mrb[0].mxu0 %v146
  %v719 = vpop.f32.mrb[0].mxu0
  %v720 = vadd.f32 0.0, %v719
  %v721 = vpop.f32.mrb[0].mxu0
  %v722 = vadd.f32 0.0, %v721
  %v723 = vpop.f32.mrb[0].mxu0
  %v724 = vadd.f32 0.0, %v723
  %v725 = vpop.f32.mrb[0].mxu0
  %v726 = vadd.f32 0.0, %v725
  %727 = vmatprep.mubr.bf16.mxu0 %v150
  %728 = vmatmul.mubr.bf16.gmra.mrb[0].mxu0 %v149
  %v729 = vpop.f32.mrb[0].mxu0
  %v730 = vadd.f32 0.0, %v729
  %v731 = vpop.f32.mrb[0].mxu0
  %v732 = vadd.f32 0.0, %v731
  %v733 = vpop.f32.mrb[0].mxu0
  %v734 = vadd.f32 0.0, %v733
  %v735 = vpop.f32.mrb[0].mxu0
  %v736 = vadd.f32 0.0, %v735
  %737 = vmatprep.mubr.bf16.mxu0 %v153
  %738 = vmatmul.mubr.bf16.gmra.mrb[0].mxu0 %v152
  %v739 = vpop.f32.mrb[0].mxu0
  %v740 = vadd.f32 0.0, %v739
  %v741 = vpop.f32.mrb[0].mxu0
  %v742 = vadd.f32 0.0, %v741
  %v743 = vpop.f32.mrb[0].mxu0
  %v744 = vadd.f32 0.0, %v743
  %v745 = vpop.f32.mrb[0].mxu0
  %v746 = vadd.f32 0.0, %v745
  %747 = vmatprep.mubr.bf16.mxu0 %v156
  %748 = vmatmul.mubr.bf16.gmra.mrb[0].mxu0 %v155
  %v749 = vpop.f32.mrb[0].mxu0
  %v750 = vadd.f32 0.0, %v749
  %v751 = vpop.f32.mrb[0].mxu0
  %v752 = vadd.f32 0.0, %v751
  %v753 = vpop.f32.mrb[0].mxu0
  %v754 = vadd.f32 0.0, %v753
  %v755 = vpop.f32.mrb[0].mxu0
  %v756 = vadd.f32 0.0, %v755
  %757 = vdwg.mxu0
  %758 = vmatprep.subr.bf16.mxu0 %v449
  %759 = vmatpush1.bf16.msra.mxu0 %v448
  %760 = vmatprep.subr.bf16.mxu0 %v453
  %761 = vmatpush1.bf16.msra.mxu0 %v452
  %762 = vmatprep.subr.bf16.mxu0 0
  %763 = vmatpush1.bf16.msra.mxu0 0
  %764 = vmatprep.subr.bf16.mxu0 0
  %765 = vmatpush1.bf16.msra.mxu0 0
  %766 = vmatprep.subr.bf16.mxu0 0
  %767 = vmatpush1.bf16.msra.mxu0 0
  %768 = vmatprep.subr.bf16.mxu0 0
  %769 = vmatpush1.bf16.msra.mxu0 0
  %770 = vmatprep.subr.bf16.mxu0 0
  %771 = vmatpush1.bf16.msra.mxu0 0
  %772 = vmatprep.subr.bf16.mxu0 0
  %773 = vmatpush1.bf16.msra.mxu0 0
  %774 = vmatprep.subr.bf16.mxu0 0
  %775 = vmatpush1.bf16.msra.mxu0 0
  %776 = vmatprep.subr.bf16.mxu0 0
  %777 = vmatpush1.bf16.msra.mxu0 0
  %778 = vmatprep.subr.bf16.mxu0 0
  %779 = vmatpush1.bf16.msra.mxu0 0
  %780 = vmatprep.subr.bf16.mxu0 0
  %781 = vmatpush1.bf16.msra.mxu0 0
  %782 = vmatprep.subr.bf16.mxu0 0
  %783 = vmatpush1.bf16.msra.mxu0 0
  %784 = vmatprep.subr.bf16.mxu0 0
  %785 = vmatpush1.bf16.msra.mxu0 0
  %786 = vmatprep.subr.bf16.mxu0 0
  %787 = vmatpush1.bf16.msra.mxu0 0
  %788 = vmatprep.subr.bf16.mxu0 0
  %789 = vmatpush1.bf16.msra.mxu0 0
  %790 = vmatprep.mubr.bf16.mxu0 0
  %791 = vmatmul.mubr.bf16.gmra.mrb[0].mxu0 %v528
  %v792 = vpop.f32.mrb[0].mxu0
  %v793 = vadd.f32 %v720, %v792
  %v794 = vpop.f32.mrb[0].mxu0
  %v795 = vadd.f32 %v722, %v794
  %v796 = vpop.f32.mrb[0].mxu0
  %v797 = vadd.f32 %v724, %v796
  %v798 = vpop.f32.mrb[0].mxu0
  %v799 = vadd.f32 %v726, %v798
  %800 = vmatprep.mubr.bf16.mxu0 0
  %801 = vmatmul.mubr.bf16.gmra.mrb[0].mxu0 %v531
  %v802 = vpop.f32.mrb[0].mxu0
  %v803 = vadd.f32 %v730, %v802
  %v804 = vpop.f32.mrb[0].mxu0
  %v805 = vadd.f32 %v732, %v804
  %v806 = vpop.f32.mrb[0].mxu0
  %v807 = vadd.f32 %v734, %v806
  %v808 = vpop.f32.mrb[0].mxu0
  %v809 = vadd.f32 %v736, %v808
  %810 = vmatprep.mubr.bf16.mxu0 0
  %811 = vmatmul.mubr.bf16.gmra.mrb[0].mxu0 %v534
  %v812 = vpop.f32.mrb[0].mxu0
  %v813 = vadd.f32 %v740, %v812
  %v814 = vpop.f32.mrb[0].mxu0
  %v815 = vadd.f32 %v742, %v814
  %v816 = vpop.f32.mrb[0].mxu0
  %v817 = vadd.f32 %v744, %v816
  %v818 = vpop.f32.mrb[0].mxu0
  %v819 = vadd.f32 %v746, %v818
  %820 = vmatprep.mubr.bf16.mxu0 0
  %821 = vmatmul.mubr.bf16.gmra.mrb[0].mxu0 %v537
  %v822 = vpop.f32.mrb[0].mxu0
  %v823 = vadd.f32 %v750, %v822
  %v824 = vpop.f32.mrb[0].mxu0
  %v825 = vadd.f32 %v752, %v824
  %v826 = vpop.f32.mrb[0].mxu0
  %v827 = vadd.f32 %v754, %v826
  %v828 = vpop.f32.mrb[0].mxu0
  %v829 = vadd.f32 %v756, %v828
  %830 = vdwg.mxu0
  %v831 = vadd.f32 %v647, %v649
  %v832 = vadd.f32 %v831, %v793
  %v833 = vadd.f32 %v832, %v795
  %834 = vadd.xlane.f32.xlu0 %v833
  %v835 = vpop.xlane.xlu0 %834
  %v836 = vadd.f32 %v651, %v653
  %v837 = vadd.f32 %v836, %v797
  %v838 = vadd.f32 %v837, %v799
  %839 = vadd.xlane.f32.xlu0 %v838
  %v840 = vpop.xlane.xlu0 %839
  %v841 = vadd.f32 %v657, %v659
  %v842 = vadd.f32 %v841, %v803
  %v843 = vadd.f32 %v842, %v805
  %844 = vadd.xlane.f32.xlu0 %v843
  %v845 = vpop.xlane.xlu0 %844
  %v846 = vadd.f32 %v661, %v663
  %v847 = vadd.f32 %v846, %v807
  %v848 = vadd.f32 %v847, %v809
  %849 = vadd.xlane.f32.xlu0 %v848
  %v850 = vpop.xlane.xlu0 %849
  %v851 = vadd.f32 %v667, %v669
  %v852 = vadd.f32 %v851, %v813
  %v853 = vadd.f32 %v852, %v815
  %854 = vadd.xlane.f32.xlu0 %v853
  %v855 = vpop.xlane.xlu0 %854
  %v856 = vadd.f32 %v671, %v673
  %v857 = vadd.f32 %v856, %v817
  %v858 = vadd.f32 %v857, %v819
  %859 = vadd.xlane.f32.xlu0 %v858
  %v860 = vpop.xlane.xlu0 %859
  %v861 = vadd.f32 %v677, %v679
  %v862 = vadd.f32 %v861, %v823
  %v863 = vadd.f32 %v862, %v825
  %864 = vadd.xlane.f32.xlu0 %v863
  %v865 = vpop.xlane.xlu0 %864
  %v866 = vadd.f32 %v681, %v683
  %v867 = vadd.f32 %v866, %v827
  %v868 = vadd.f32 %v867, %v829
  %869 = vadd.xlane.f32.xlu0 %v868
  %v870 = vpop.xlane.xlu0 %869
  %v871 = vmul.f32 %v647, %v647
  %v872 = vmul.f32 %v649, %v649
  %v873 = vmul.f32 %v793, %v793
  %v874 = vmul.f32 %v795, %v795
  %v875 = vmul.f32 %v651, %v651
  %v876 = vmul.f32 %v653, %v653
  %v877 = vmul.f32 %v797, %v797
  %v878 = vmul.f32 %v799, %v799
  %v879 = vmul.f32 %v657, %v657
  %v880 = vmul.f32 %v659, %v659
  %v881 = vmul.f32 %v803, %v803
  %v882 = vmul.f32 %v805, %v805
  %v883 = vmul.f32 %v661, %v661
  %v884 = vmul.f32 %v663, %v663
  %v885 = vmul.f32 %v807, %v807
  %v886 = vmul.f32 %v809, %v809
  %v887 = vmul.f32 %v667, %v667
  %v888 = vmul.f32 %v669, %v669
  %v889 = vmul.f32 %v813, %v813
  %v890 = vmul.f32 %v815, %v815
  %v891 = vmul.f32 %v671, %v671
  %v892 = vmul.f32 %v673, %v673
  %v893 = vmul.f32 %v817, %v817
  %v894 = vmul.f32 %v819, %v819
  %v895 = vmul.f32 %v677, %v677
  %v896 = vmul.f32 %v679, %v679
  %v897 = vmul.f32 %v823, %v823
  %v898 = vmul.f32 %v825, %v825
  %v899 = vmul.f32 %v681, %v681
  %v900 = vmul.f32 %v683, %v683
  %v901 = vmul.f32 %v827, %v827
  %v902 = vmul.f32 %v829, %v829
  %v903 = vadd.f32 %v871, %v872
  %v904 = vadd.f32 %v903, %v873
  %v905 = vadd.f32 %v904, %v874
  %906 = vadd.xlane.f32.xlu0 %v905
  %v907 = vpop.xlane.xlu0 %906
  %v908 = vadd.f32 %v875, %v876
  %v909 = vadd.f32 %v908, %v877
  %v910 = vadd.f32 %v909, %v878
  %911 = vadd.xlane.f32.xlu0 %v910
  %v912 = vpop.xlane.xlu0 %911
  %v913 = vadd.f32 %v879, %v880
  %v914 = vadd.f32 %v913, %v881
  %v915 = vadd.f32 %v914, %v882
  %916 = vadd.xlane.f32.xlu0 %v915
  %v917 = vpop.xlane.xlu0 %916
  %v918 = vadd.f32 %v883, %v884
  %v919 = vadd.f32 %v918, %v885
  %v920 = vadd.f32 %v919, %v886
  %921 = vadd.xlane.f32.xlu0 %v920
  %v922 = vpop.xlane.xlu0 %921
  %v923 = vadd.f32 %v887, %v888
  %v924 = vadd.f32 %v923, %v889
  %v925 = vadd.f32 %v924, %v890
  %926 = vadd.xlane.f32.xlu0 %v925
  %v927 = vpop.xlane.xlu0 %926
  %v928 = vadd.f32 %v891, %v892
  %v929 = vadd.f32 %v928, %v893
  %v930 = vadd.f32 %v929, %v894
  %931 = vadd.xlane.f32.xlu0 %v930
  %v932 = vpop.xlane.xlu0 %931
  %v933 = vadd.f32 %v895, %v896
  %v934 = vadd.f32 %v933, %v897
  %v935 = vadd.f32 %v934, %v898
  %936 = vadd.xlane.f32.xlu0 %v935
  %v937 = vpop.xlane.xlu0 %936
  %v938 = vadd.f32 %v899, %v900
  %v939 = vadd.f32 %v938, %v901
  %v940 = vadd.f32 %v939, %v902
  %941 = vadd.xlane.f32.xlu0 %v940
  %v942 = vpop.xlane.xlu0 %941
  %v943 = vadd.f32 %v835, %v845
  %v944 = vadd.f32 %v840, %v850
  %v945 = vadd.f32 %v907, %v917
  %v946 = vadd.f32 %v912, %v922
  %v947 = vadd.f32 %v943, %v855
  %v948 = vadd.f32 %v944, %v860
  %v949 = vadd.f32 %v945, %v927
  %v950 = vadd.f32 %v946, %v932
  %v951 = vadd.f32 %v947, %v865
  %v952 = vadd.f32 %v948, %v870
  %v953 = vadd.f32 %v949, %v937
  %v954 = vadd.f32 %v950, %v942
  %v955 = vmul.f32 %v951, 0.00048828125
  %v956 = vmul.f32 %v952, 0.00048828125
  %v957 = vmul.f32 %v953, 0.00048828125
  %v958 = vmul.f32 %v954, 0.00048828125
  %v959 = vmul.f32 %v955, %v955
  %v960 = vmul.f32 %v956, %v956
  %v961 = vsub.f32 %v957, %v959
  %v962 = vsub.f32 %v958, %v960
  %v963 = vmax.f32 %v961, 0.0
  %v964 = vmax.f32 %v962, 0.0
  %v965 = vld [vmem:[%s2] sm:$0xff]
  %v966 = vld [vmem:[%s2 + $0x8] sm:$0xff]
  %v967 = vadd.f32 %v963, 1e-05
  %v968 = vadd.f32 %v964, 1e-05
  %v969 = vrsqrt.pop %v967
  %v970 = vrsqrt.pop %v968
  %v971 = vmul.f32 %v965, %v969
  %v972 = vmul.f32 %v966, %v970
  %v973 = vld [vmem:[%s3] sm:$0xff]
  %v974 = vld [vmem:[%s3 + $0x8] sm:$0xff]
  %v975 = vmul.f32 %v955, %v971
  %v976 = vmul.f32 %v956, %v972
  %v977 = vsub.f32 %v973, %v975
  %v978 = vsub.f32 %v974, %v976
  %980 = vset.pattern.permute.xlu0 0
  %981 = vperm.xlu0 %980, %v971
  %v982 = vpop.permute.xlu0 %981
  %985 = vset.pattern.permute.xlu0 0
  %986 = vperm.xlu0 %985, %v972
  %v987 = vpop.permute.xlu0 %986
  %v989 = vmul.f32 %v647, %v982
  %v990 = vmul.f32 %v649, %v982
  %v991 = vmul.f32 %v793, %v982
  %v992 = vmul.f32 %v795, %v982
  %v993 = vmul.f32 %v651, %v987
  %v994 = vmul.f32 %v653, %v987
  %v995 = vmul.f32 %v797, %v987
  %v996 = vmul.f32 %v799, %v987
  %v997 = vmul.f32 %v657, %v982
  %v998 = vmul.f32 %v659, %v982
  %v999 = vmul.f32 %v803, %v982
  %v1000 = vmul.f32 %v805, %v982
  %v1001 = vmul.f32 %v661, %v987
  %v1002 = vmul.f32 %v663, %v987
  %v1003 = vmul.f32 %v807, %v987
  %v1004 = vmul.f32 %v809, %v987
  %v1005 = vmul.f32 %v667, %v982
  %v1006 = vmul.f32 %v669, %v982
  %v1007 = vmul.f32 %v813, %v982
  %v1008 = vmul.f32 %v815, %v982
  %v1009 = vmul.f32 %v671, %v987
  %v1010 = vmul.f32 %v673, %v987
  %v1011 = vmul.f32 %v817, %v987
  %v1012 = vmul.f32 %v819, %v987
  %v1013 = vmul.f32 %v677, %v982
  %v1014 = vmul.f32 %v679, %v982
  %v1015 = vmul.f32 %v823, %v982
  %v1016 = vmul.f32 %v825, %v982
  %v1017 = vmul.f32 %v681, %v987
  %v1018 = vmul.f32 %v683, %v987
  %v1019 = vmul.f32 %v827, %v987
  %v1020 = vmul.f32 %v829, %v987
  %1022 = vset.pattern.permute.xlu0 0
  %1023 = vperm.xlu0 %1022, %v977
  %v1024 = vpop.permute.xlu0 %1023
  %1027 = vset.pattern.permute.xlu0 0
  %1028 = vperm.xlu0 %1027, %v978
  %v1029 = vpop.permute.xlu0 %1028
  %v1031 = vadd.f32 %v989, %v1024
  %v1032 = vadd.f32 %v990, %v1024
  %v1033 = vadd.f32 %v991, %v1024
  %v1034 = vadd.f32 %v992, %v1024
  %v1035 = vadd.f32 %v993, %v1029
  %v1036 = vadd.f32 %v994, %v1029
  %v1037 = vadd.f32 %v995, %v1029
  %v1038 = vadd.f32 %v996, %v1029
  %v1039 = vadd.f32 %v997, %v1024
  %v1040 = vadd.f32 %v998, %v1024
  %v1041 = vadd.f32 %v999, %v1024
  %v1042 = vadd.f32 %v1000, %v1024
  %v1043 = vadd.f32 %v1001, %v1029
  %v1044 = vadd.f32 %v1002, %v1029
  %v1045 = vadd.f32 %v1003, %v1029
  %v1046 = vadd.f32 %v1004, %v1029
  %v1047 = vadd.f32 %v1005, %v1024
  %v1048 = vadd.f32 %v1006, %v1024
  %v1049 = vadd.f32 %v1007, %v1024
  %v1050 = vadd.f32 %v1008, %v1024
  %v1051 = vadd.f32 %v1009, %v1029
  %v1052 = vadd.f32 %v1010, %v1029
  %v1053 = vadd.f32 %v1011, %v1029
  %v1054 = vadd.f32 %v1012, %v1029
  %v1055 = vadd.f32 %v1013, %v1024
  %v1056 = vadd.f32 %v1014, %v1024
  %v1057 = vadd.f32 %v1015, %v1024
  %v1058 = vadd.f32 %v1016, %v1024
  %v1059 = vadd.f32 %v1017, %v1029
  %v1060 = vadd.f32 %v1018, %v1029
  %v1061 = vadd.f32 %v1019, %v1029
  %v1062 = vadd.f32 %v1020, %v1029
  %v1063 = vmax.f32 %v1031, 0.0
  %v1064 = vmax.f32 %v1032, 0.0
  %v1065 = vmax.f32 %v1033, 0.0
  %v1066 = vmax.f32 %v1034, 0.0
  %v1067 = vmax.f32 %v1035, 0.0
  %v1068 = vmax.f32 %v1036, 0.0
  %v1069 = vmax.f32 %v1037, 0.0
  %v1070 = vmax.f32 %v1038, 0.0
  %v1071 = vmax.f32 %v1039, 0.0
  %v1072 = vmax.f32 %v1040, 0.0
  %v1073 = vmax.f32 %v1041, 0.0
  %v1074 = vmax.f32 %v1042, 0.0
  %v1075 = vmax.f32 %v1043, 0.0
  %v1076 = vmax.f32 %v1044, 0.0
  %v1077 = vmax.f32 %v1045, 0.0
  %v1078 = vmax.f32 %v1046, 0.0
  %v1079 = vmax.f32 %v1047, 0.0
  %v1080 = vmax.f32 %v1048, 0.0
  %v1081 = vmax.f32 %v1049, 0.0
  %v1082 = vmax.f32 %v1050, 0.0
  %v1083 = vmax.f32 %v1051, 0.0
  %v1084 = vmax.f32 %v1052, 0.0
  %v1085 = vmax.f32 %v1053, 0.0
  %v1086 = vmax.f32 %v1054, 0.0
  %v1087 = vmax.f32 %v1055, 0.0
  %v1088 = vmax.f32 %v1056, 0.0
  %v1089 = vmax.f32 %v1057, 0.0
  %v1090 = vmax.f32 %v1058, 0.0
  %v1091 = vmax.f32 %v1059, 0.0
  %v1092 = vmax.f32 %v1060, 0.0
  %v1093 = vmax.f32 %v1061, 0.0
  %v1094 = vmax.f32 %v1062, 0.0
  %v1095 = vpack.c.bf16 %v1067, %v1063
  %v1096 = vpack.c.bf16 %v1068, %v1064
  %v1097 = vpack.c.bf16 %v1069, %v1065
  %v1098 = vpack.c.bf16 %v1070, %v1066
  %v1099 = vpack.c.bf16 %v1075, %v1071
  %v1100 = vpack.c.bf16 %v1076, %v1072
  %v1101 = vpack.c.bf16 %v1077, %v1073
  %v1102 = vpack.c.bf16 %v1078, %v1074
  %v1103 = vpack.c.bf16 %v1083, %v1079
  %v1104 = vpack.c.bf16 %v1084, %v1080
  %v1105 = vpack.c.bf16 %v1085, %v1081
  %v1106 = vpack.c.bf16 %v1086, %v1082
  %v1107 = vpack.c.bf16 %v1091, %v1087
  %v1108 = vpack.c.bf16 %v1092, %v1088
  %v1109 = vpack.c.bf16 %v1093, %v1089
  %v1110 = vpack.c.bf16 %v1094, %v1090
  %v1127 = vunpack.c.l.b16 %v1095
  %v1128 = vunpack.c.l.b16 %v1096
  %v1129 = vunpack.c.l.b16 %v1097
  %v1130 = vunpack.c.l.b16 %v1098
  %v1131 = vunpack.c.h.b16 %v1095
  %v1132 = vunpack.c.h.b16 %v1096
  %v1133 = vunpack.c.h.b16 %v1097
  %v1134 = vunpack.c.h.b16 %v1098
  %v1135 = vunpack.c.l.b16 %v1099
  %v1136 = vunpack.c.l.b16 %v1100
  %v1137 = vunpack.c.l.b16 %v1101
  %v1138 = vunpack.c.l.b16 %v1102
  %v1139 = vunpack.c.h.b16 %v1099
  %v1140 = vunpack.c.h.b16 %v1100
  %v1141 = vunpack.c.h.b16 %v1101
  %v1142 = vunpack.c.h.b16 %v1102
  %v1143 = vunpack.c.l.b16 %v1103
  %v1144 = vunpack.c.l.b16 %v1104
  %v1145 = vunpack.c.l.b16 %v1105
  %v1146 = vunpack.c.l.b16 %v1106
  %v1147 = vunpack.c.h.b16 %v1103
  %v1148 = vunpack.c.h.b16 %v1104
  %v1149 = vunpack.c.h.b16 %v1105
  %v1150 = vunpack.c.h.b16 %v1106
  %v1151 = vunpack.c.l.b16 %v1107
  %v1152 = vunpack.c.l.b16 %v1108
  %v1153 = vunpack.c.l.b16 %v1109
  %v1154 = vunpack.c.l.b16 %v1110
  %v1155 = vunpack.c.h.b16 %v1107
  %v1156 = vunpack.c.h.b16 %v1108
  %v1157 = vunpack.c.h.b16 %v1109
  %v1158 = vunpack.c.h.b16 %v1110
  %v1159 = vpack.c.b16 %v1128, %v1127
  %v1160 = vpack.c.b16 %v1130, %v1129
  %v1161 = vpack.c.b16 %v1132, %v1131
  %v1162 = vpack.c.b16 %v1134, %v1133
  %v1163 = vpack.c.b16 %v1136, %v1135
  %v1164 = vpack.c.b16 %v1138, %v1137
  %v1165 = vpack.c.b16 %v1140, %v1139
  %v1166 = vpack.c.b16 %v1142, %v1141
  %v1167 = vpack.c.b16 %v1144, %v1143
  %v1168 = vpack.c.b16 %v1146, %v1145
  %v1169 = vpack.c.b16 %v1148, %v1147
  %v1170 = vpack.c.b16 %v1150, %v1149
  %v1171 = vpack.c.b16 %v1152, %v1151
  %v1172 = vpack.c.b16 %v1154, %v1153
  %v1173 = vpack.c.b16 %v1156, %v1155
  %v1174 = vpack.c.b16 %v1158, %v1157
  %1191 = vst [vmem:[%s4] sm:$0xff] %v1159
  %1192 = vst [vmem:[%s4 + $0x8] sm:$0xff] %v1160
  %1193 = vst [vmem:[%s4 + $0x10] sm:$0xff] %v1161
  %1194 = vst [vmem:[%s4 + $0x18] sm:$0xff] %v1162
  %1195 = vst [vmem:[%s4 + $0x20] sm:$0xff] %v1163
  %1196 = vst [vmem:[%s4 + $0x28] sm:$0xff] %v1164
  %1197 = vst [vmem:[%s4 + $0x30] sm:$0xff] %v1165
  %1198 = vst [vmem:[%s4 + $0x38] sm:$0xff] %v1166
  %1199 = vst [vmem:[%s4 + $0x40] sm:$0xff] %v1167
  %1200 = vst [vmem:[%s4 + $0x48] sm:$0xff] %v1168
  %1201 = vst [vmem:[%s4 + $0x50] sm:$0xff] %v1169
  %1202 = vst [vmem:[%s4 + $0x58] sm:$0xff] %v1170
  %1203 = vst [vmem:[%s4 + $0x60] sm:$0xff] %v1171
  %1204 = vst [vmem:[%s4 + $0x68] sm:$0xff] %v1172
  %1205 = vst [vmem:[%s4 + $0x70] sm:$0xff] %v1173
  %1206 = vst [vmem:[%s4 + $0x78] sm:$0xff] %v1174
  // Predicated region
  $region18: #{generator_forward.8} parent=0 // pred_check
    _
  $region19: #{generator_forward.8} parent=0 // pred_check_branch
    %1208 = sbr.rel (0) target = $region21
  $region20: #{generator_forward.8} parent=0 // pred_region
    _
  $region21: #{generator_forward.8} parent=0 // pred_fallthru
    _
  // Predicated region
  $region22: #{generator_forward.8} parent=0 // pred_check
    _
  $region23: #{generator_forward.8} parent=0 // pred_check_branch
    %1210 = sbr.rel (0) target = $region25
  $region24: #{generator_forward.8} parent=0 // pred_region
    _
  $region25: #{generator_forward.8} parent=0 // pred_fallthru
    _

// kernel: generator_forward.9
$region0: #{generator_forward.9}
  #allocation0 [shape = 'u32[]', space=smem, size = 0x4, offset = 0x4, fixed_abs, tag = 'smem constant byte address 0x4 - core index']
  #allocation1 [shape = 'u32[144,128]{1,0:T(1,128)}', space=vmem, size = 0x12000, scoped, tag = 'internal scratch']
  %s0 = inlined_call_operand.vmem [shape: bf16[144,2048], index: 0, kind: input, shape index: {}]
  %s1 = inlined_call_operand.vmem [shape: bf16[16,144], index: 1, kind: input, shape index: {}]
  %s2 = inlined_call_operand.vmem [shape: f32[16,1], index: 2, kind: input, shape index: {}]
  %s3 = inlined_call_operand.vmem [shape: f32[16,2048], index: 3, kind: output, shape index: {}]
  %s4 = sld [smem:[#allocation0]]
  $region87: #{generator_forward.9} parent=0
    _
  %s6 = ssub.s32 1, %s4
  %s7 = scalar_select 0, %s6, %s4
  $region1: #{generator_forward.9} parent=0
    #allocation2 [shape = 'u8[589824]{0}', space=vmem, size = 0x90000, scoped, tag = 'input window, operand 0']
    #allocation3 [shape = 'u8[131072]{0}', space=vmem, size = 0x20000, scoped, tag = 'output window, operand 0']
    loop: start=0, step=1, limit=4
    $region2: #{generator_forward.9} parent=1 // loop_pre_header
      _
    $region3: #{generator_forward.9} parent=1 // loop_header
      %s9 = sphi 0, %s13
      %p10 = scmp.ge.s32.totalorder %s9, 4
      %s19 = sphi 0, %s21
      %s22 = sphi 0, %s19
      %s23 = sphi 0, %s22
      %s39 = sphi 0, %s23
      %s43 = sphi 0, %s43
      %s45 = sphi 0, %s43
      %s46 = sphi 0, %s45
      %s60 = sphi 0, %s46
      %s64 = sphi 0, %s64
      %s66 = sphi 0, %s64
      %s67 = sphi 0, %s66
      %s81 = sphi 0, %s67
      %s87 = sphi 0, %s89
      %s90 = sphi 0, %s87
      %s91 = sphi 0, %s90
      %s107 = sphi 0, %s91
    $region4: #{generator_forward.9} parent=1 // loop_header_branch
      %12 = sbr.rel (%p10) target = $region8
    $region5: #{generator_forward.9} parent=1 // loop_body
      %s14 = ssub.s32 %s9, 1
      %s15 = ssub.s32 %s9, 2
      %s16 = sadd.s32 %s9, 1
      %s17 = ssub.s32 %s9, %s16
      %p18 = scmp.eq.s32.totalorder %s17, 0
      %s20 = sadd.s32 %s19, 1
      %s21 = scalar_select %p18, %s19, %s20
      %p24 = pneg %p18
      %p25 = scmp.eq.s32.totalorder %s9, 1
      %p26 = por %p24, %p25
      %p27 = scmp.ne.s32.totalorder %s19, %s22
      %p28 = scmp.eq.s32.totalorder %s9, 0
      %p29 = por %p27, %p28
      %p30 = scmp.ne.s32.totalorder %s19, %s22
      %p31 = scmp.eq.s32.totalorder %s14, 1
      %p32 = por %p30, %p31
      %p33 = scmp.ne.s32.totalorder %s22, %s23
      %p34 = scmp.eq.s32.totalorder %s14, 0
      %p35 = por %p33, %p34
      %p36 = scmp.ne.s32.totalorder %s22, %s23
      %p37 = scmp.eq.s32.totalorder %s15, 1
      %p38 = por %p36, %p37
      %p40 = scmp.ne.s32.totalorder %s23, %s39
      %p41 = scmp.eq.s32.totalorder %s15, 0
      %p42 = por %p40, %p41
      %s44 = sadd.s32 %s43, 1
      %p47 = scmp.eq.s32.totalorder %s9, 1
      %p48 = scmp.ne.s32.totalorder %s43, %s45
      %p49 = scmp.eq.s32.totalorder %s9, 0
      %p50 = por %p48, %p49
      %p51 = scmp.ne.s32.totalorder %s43, %s45
      %p52 = scmp.eq.s32.totalorder %s14, 1
      %p53 = por %p51, %p52
      %p54 = scmp.ne.s32.totalorder %s45, %s46
      %p55 = scmp.eq.s32.totalorder %s14, 0
      %p56 = por %p54, %p55
      %p57 = scmp.ne.s32.totalorder %s45, %s46
      %p58 = scmp.eq.s32.totalorder %s15, 1
      %p59 = por %p57, %p58
      %p61 = scmp.ne.s32.totalorder %s46, %s60
      %p62 = scmp.eq.s32.totalorder %s15, 0
      %p63 = por %p61, %p62
      %s65 = sadd.s32 %s64, 1
      %p68 = scmp.eq.s32.totalorder %s9, 1
      %p69 = scmp.ne.s32.totalorder %s64, %s66
      %p70 = scmp.eq.s32.totalorder %s9, 0
      %p71 = por %p69, %p70
      %p72 = scmp.ne.s32.totalorder %s64, %s66
      %p73 = scmp.eq.s32.totalorder %s14, 1
      %p74 = por %p72, %p73
      %p75 = scmp.ne.s32.totalorder %s66, %s67
      %p76 = scmp.eq.s32.totalorder %s14, 0
      %p77 = por %p75, %p76
      %p78 = scmp.ne.s32.totalorder %s66, %s67
      %p79 = scmp.eq.s32.totalorder %s15, 1
      %p80 = por %p78, %p79
      %p82 = scmp.ne.s32.totalorder %s67, %s81
      %p83 = scmp.eq.s32.totalorder %s15, 0
      %p84 = por %p82, %p83
      %s85 = ssub.s32 %s9, %s16
      %p86 = scmp.eq.s32.totalorder %s85, 0
      %s88 = sadd.s32 %s87, 1
      %s89 = scalar_select %p86, %s87, %s88
      %p92 = pneg %p86
      %p93 = scmp.eq.s32.totalorder %s9, 1
      %p94 = por %p92, %p93
      %p95 = scmp.ne.s32.totalorder %s87, %s90
      %p96 = scmp.eq.s32.totalorder %s9, 0
      %p97 = por %p95, %p96
      %p98 = scmp.ne.s32.totalorder %s87, %s90
      %p99 = scmp.eq.s32.totalorder %s14, 1
      %p100 = por %p98, %p99
      %p101 = scmp.ne.s32.totalorder %s90, %s91
      %p102 = scmp.eq.s32.totalorder %s14, 0
      %p103 = por %p101, %p102
      %p104 = scmp.ne.s32.totalorder %s90, %s91
      %p105 = scmp.eq.s32.totalorder %s15, 1
      %p106 = por %p104, %p105
      %p108 = scmp.ne.s32.totalorder %s91, %s107
      %p109 = scmp.eq.s32.totalorder %s15, 0
      %p110 = por %p108, %p109
      %p111 = scmp.le.s32.totalorder 1, %s9
      %p112 = scmp.lt.s32.totalorder %s9, 3
      %p113 = pnand %p111, %p112
      %p114 = pneg %p113
      // Predicated region
      $region9: #{generator_forward.9} parent=5 // pred_check
        _
      $region10: #{generator_forward.9} parent=5 // pred_check_branch
        %116 = sbr.rel (%p113) target = $region12
      $region11: #{generator_forward.9} parent=5 // pred_region
        %s117 = ssub.s32 %s9, 1
        // Predicated region
        $region13: #{generator_forward.9} parent=11 // pred_check
          %p118 = pneg %p56
        $region14: #{generator_forward.9} parent=11 // pred_check_branch
          %120 = sbr.rel (%p118) target = $region16
        $region15: #{generator_forward.9} parent=11 // pred_region
          _
        $region16: #{generator_forward.9} parent=11 // pred_fallthru
          _
        // Predicated region
        $region17: #{generator_forward.9} parent=11 // pred_check
          %p121 = pneg %p77
        $region18: #{generator_forward.9} parent=11 // pred_check_branch
          %123 = sbr.rel (%p121) target = $region20
        $region19: #{generator_forward.9} parent=11 // pred_region
          _
        $region20: #{generator_forward.9} parent=11 // pred_fallthru
          _
      $region12: #{generator_forward.9} parent=5 // pred_fallthru
        _
      %p124 = scmp.lt.s32.totalorder %s9, 2
      // Predicated region
      $region21: #{generator_forward.9} parent=5 // pred_check
        %p125 = pneg %p124
      $region22: #{generator_forward.9} parent=5 // pred_check_branch
        %127 = sbr.rel (%p125) target = $region24
      $region23: #{generator_forward.9} parent=5 // pred_region
        // Predicated region
        $region25: #{generator_forward.9} parent=23 // pred_check
          %p128 = pneg %p29
        $region26: #{generator_forward.9} parent=23 // pred_check_branch
          %130 = sbr.rel (%p128) target = $region28
        $region27: #{generator_forward.9} parent=23 // pred_region
          %s131 = sand.u32 %s19, 1
          %s132 = sand.u32 %s19, 1
          %s133 = smul.addr %s132, 576
          %s134 = scalar_lea.vmem [#allocation2], %s133
          %s135 = smul.u32 8, %s9
          %s136 = smul.addr %s135, 4
          %s137 = scalar_lea.vmem %s0, %s136
          // Predicated region
          $region29: #{generator_forward.9} parent=27 // pred_check
            _
          $region30: #{generator_forward.9} parent=27 // pred_check_branch
            %139 = sbr.rel (0) target = $region32
          $region31: #{generator_forward.9} parent=27 // pred_region
            // Predicated region
            $region33: #{generator_forward.9} parent=31 // pred_check
              _
            $region34: #{generator_forward.9} parent=31 // pred_check_branch
              %141 = sbr.rel (0) target = $region36
            $region35: #{generator_forward.9} parent=31 // pred_region
              loop: start=0, step=1, limit=1
              $region37: #{generator_forward.9} parent=35 // loop_pre_header
                _
              $region38: #{generator_forward.9} parent=35 // loop_header
                %s143 = sphi 0, %s147
                %p144 = scmp.ge.s32.totalorder %s143, 1
                %s148 = sphi %s137, %s137
                %s149 = sphi %s134, %s134
              $region39: #{generator_forward.9} parent=35 // loop_header_branch
                %146 = sbr.rel (%p144) target = $region43
              $region40: #{generator_forward.9} parent=35 // loop_body
                %v150 = vld [vmem:[%s148] sm:$0xff]
                %151 = vst [vmem:[%s149] sm:$0xff] %v150
                %v152 = vld [vmem:[%s148 + $0x8] sm:$0xff]
                %153 = vst [vmem:[%s149 + $0x8] sm:$0xff] %v152
                %v154 = vld [vmem:[%s148 + $0x10] sm:$0xff]
                %155 = vst [vmem:[%s149 + $0x10] sm:$0xff] %v154
                %v156 = vld [vmem:[%s148 + $0x18] sm:$0xff]
                %157 = vst [vmem:[%s149 + $0x18] sm:$0xff] %v156
                %v158 = vld [vmem:[%s148 + $0x40] sm:$0xff]
                %159 = vst [vmem:[%s149 + $0x20] sm:$0xff] %v158
                %v160 = vld [vmem:[%s148 + $0x48] sm:$0xff]
                %161 = vst [vmem:[%s149 + $0x28] sm:$0xff] %v160
                %v162 = vld [vmem:[%s148 + $0x50] sm:$0xff]
                %163 = vst [vmem:[%s149 + $0x30] sm:$0xff] %v162
                %v164 = vld [vmem:[%s148 + $0x58] sm:$0xff]
                %165 = vst [vmem:[%s149 + $0x38] sm:$0xff] %v164
                %v166 = vld [vmem:[%s148 + $0x80] sm:$0xff]
                %167 = vst [vmem:[%s149 + $0x40] sm:$0xff] %v166
                %v168 = vld [vmem:[%s148 + $0x88] sm:$0xff]
                %169 = vst [vmem:[%s149 + $0x48] sm:$0xff] %v168
                %v170 = vld [vmem:[%s148 + $0x90] sm:$0xff]
                %171 = vst [vmem:[%s149 + $0x50] sm:$0xff] %v170
                %v172 = vld [vmem:[%s148 + $0x98] sm:$0xff]
                %173 = vst [vmem:[%s149 + $0x58] sm:$0xff] %v172
                %v174 = vld [vmem:[%s148 + $0xc0] sm:$0xff]
                %175 = vst [vmem:[%s149 + $0x60] sm:$0xff] %v174
                %v176 = vld [vmem:[%s148 + $0xc8] sm:$0xff]
                %177 = vst [vmem:[%s149 + $0x68] sm:$0xff] %v176
                %v178 = vld [vmem:[%s148 + $0xd0] sm:$0xff]
                %179 = vst [vmem:[%s149 + $0x70] sm:$0xff] %v178
                %v180 = vld [vmem:[%s148 + $0xd8] sm:$0xff]
                %181 = vst [vmem:[%s149 + $0x78] sm:$0xff] %v180
                %v182 = vld [vmem:[%s148 + $0x100] sm:$0xff]
                %183 = vst [vmem:[%s149 + $0x80] sm:$0xff] %v182
                %v184 = vld [vmem:[%s148 + $0x108] sm:$0xff]
                %185 = vst [vmem:[%s149 + $0x88] sm:$0xff] %v184
                %v186 = vld [vmem:[%s148 + $0x110] sm:$0xff]
                %187 = vst [vmem:[%s149 + $0x90] sm:$0xff] %v186
                %v188 = vld [vmem:[%s148 + $0x118] sm:$0xff]
                %189 = vst [vmem:[%s149 + $0x98] sm:$0xff] %v188
                %v190 = vld [vmem:[%s148 + $0x140] sm:$0xff]
                %191 = vst [vmem:[%s149 + $0xa0] sm:$0xff] %v190
                %v192 = vld [vmem:[%s148 + $0x148] sm:$0xff]
                %193 = vst [vmem:[%s149 + $0xa8] sm:$0xff] %v192
                %v194 = vld [vmem:[%s148 + $0x150] sm:$0xff]
                %195 = vst [vmem:[%s149 + $0xb0] sm:$0xff] %v194
                %v196 = vld [vmem:[%s148 + $0x158] sm:$0xff]
                %197 = vst [vmem:[%s149 + $0xb8] sm:$0xff] %v196
                %v198 = vld [vmem:[%s148 + $0x180] sm:$0xff]
                %199 = vst [vmem:[%s149 + $0xc0] sm:$0xff] %v198
                %v200 = vld [vmem:[%s148 + $0x188] sm:$0xff]
                %201 = vst [vmem:[%s149 + $0xc8] sm:$0xff] %v200
                %v202 = vld [vmem:[%s148 + $0x190] sm:$0xff]
                %203 = vst [vmem:[%s149 + $0xd0] sm:$0xff] %v202
                %v204 = vld [vmem:[%s148 + $0x198] sm:$0xff]
                %205 = vst [vmem:[%s149 + $0xd8] sm:$0xff] %v204
                %v206 = vld [vmem:[%s148 + $0x1c0] sm:$0xff]
                %207 = vst [vmem:[%s149 + $0xe0] sm:$0xff] %v206
                %v208 = vld [vmem:[%s148 + $0x1c8] sm:$0xff]
                %209 = vst [vmem:[%s149 + $0xe8] sm:$0xff] %v208
                %v210 = vld [vmem:[%s148 + $0x1d0] sm:$0xff]
                %211 = vst [vmem:[%s149 + $0xf0] sm:$0xff] %v210
                %v212 = vld [vmem:[%s148 + $0x1d8] sm:$0xff]
                %213 = vst [vmem:[%s149 + $0xf8] sm:$0xff] %v212
                %v214 = vld [vmem:[%s148 + $0x200] sm:$0xff]
                %215 = vst [vmem:[%s149 + $0x100] sm:$0xff] %v214
                %v216 = vld [vmem:[%s148 + $0x208] sm:$0xff]
                %217 = vst [vmem:[%s149 + $0x108] sm:$0xff] %v216
                %v218 = vld [vmem:[%s148 + $0x210] sm:$0xff]
                %219 = vst [vmem:[%s149 + $0x110] sm:$0xff] %v218
                %v220 = vld [vmem:[%s148 + $0x218] sm:$0xff]
                %221 = vst [vmem:[%s149 + $0x118] sm:$0xff] %v220
                %v222 = vld [vmem:[%s148 + $0x240] sm:$0xff]
                %223 = vst [vmem:[%s149 + $0x120] sm:$0xff] %v222
                %v224 = vld [vmem:[%s148 + $0x248] sm:$0xff]
                %225 = vst [vmem:[%s149 + $0x128] sm:$0xff] %v224
                %v226 = vld [vmem:[%s148 + $0x250] sm:$0xff]
                %227 = vst [vmem:[%s149 + $0x130] sm:$0xff] %v226
                %v228 = vld [vmem:[%s148 + $0x258] sm:$0xff]
                %229 = vst [vmem:[%s149 + $0x138] sm:$0xff] %v228
                %v230 = vld [vmem:[%s148 + $0x280] sm:$0xff]
                %231 = vst [vmem:[%s149 + $0x140] sm:$0xff] %v230
                %v232 = vld [vmem:[%s148 + $0x288] sm:$0xff]
                %233 = vst [vmem:[%s149 + $0x148] sm:$0xff] %v232
                %v234 = vld [vmem:[%s148 + $0x290] sm:$0xff]
                %235 = vst [vmem:[%s149 + $0x150] sm:$0xff] %v234
                %v236 = vld [vmem:[%s148 + $0x298] sm:$0xff]
                %237 = vst [vmem:[%s149 + $0x158] sm:$0xff] %v236
                %v238 = vld [vmem:[%s148 + $0x2c0] sm:$0xff]
                %239 = vst [vmem:[%s149 + $0x160] sm:$0xff] %v238
                %v240 = vld [vmem:[%s148 + $0x2c8] sm:$0xff]
                %241 = vst [vmem:[%s149 + $0x168] sm:$0xff] %v240
                %v242 = vld [vmem:[%s148 + $0x2d0] sm:$0xff]
                %243 = vst [vmem:[%s149 + $0x170] sm:$0xff] %v242
                %v244 = vld [vmem:[%s148 + $0x2d8] sm:$0xff]
                %245 = vst [vmem:[%s149 + $0x178] sm:$0xff] %v244
                %v246 = vld [vmem:[%s148 + $0x300] sm:$0xff]
                %247 = vst [vmem:[%s149 + $0x180] sm:$0xff] %v246
                %v248 = vld [vmem:[%s148 + $0x308] sm:$0xff]
                %249 = vst [vmem:[%s149 + $0x188] sm:$0xff] %v248
                %v250 = vld [vmem:[%s148 + $0x310] sm:$0xff]
                %251 = vst [vmem:[%s149 + $0x190] sm:$0xff] %v250
                %v252 = vld [vmem:[%s148 + $0x318] sm:$0xff]
                %253 = vst [vmem:[%s149 + $0x198] sm:$0xff] %v252
                %v254 = vld [vmem:[%s148 + $0x340] sm:$0xff]
                %255 = vst [vmem:[%s149 + $0x1a0] sm:$0xff] %v254
                %v256 = vld [vmem:[%s148 + $0x348] sm:$0xff]
                %257 = vst [vmem:[%s149 + $0x1a8] sm:$0xff] %v256
                %v258 = vld [vmem:[%s148 + $0x350] sm:$0xff]
                %259 = vst [vmem:[%s149 + $0x1b0] sm:$0xff] %v258
                %v260 = vld [vmem:[%s148 + $0x358] sm:$0xff]
                %261 = vst [vmem:[%s149 + $0x1b8] sm:$0xff] %v260
                %v262 = vld [vmem:[%s148 + $0x380] sm:$0xff]
                %263 = vst [vmem:[%s149 + $0x1c0] sm:$0xff] %v262
                %v264 = vld [vmem:[%s148 + $0x388] sm:$0xff]
                %265 = vst [vmem:[%s149 + $0x1c8] sm:$0xff] %v264
                %v266 = vld [vmem:[%s148 + $0x390] sm:$0xff]
                %267 = vst [vmem:[%s149 + $0x1d0] sm:$0xff] %v266
                %v268 = vld [vmem:[%s148 + $0x398] sm:$0xff]
                %269 = vst [vmem:[%s149 + $0x1d8] sm:$0xff] %v268
                %v270 = vld [vmem:[%s148 + $0x3c0] sm:$0xff]
                %271 = vst [vmem:[%s149 + $0x1e0] sm:$0xff] %v270
                %v272 = vld [vmem:[%s148 + $0x3c8] sm:$0xff]
                %273 = vst [vmem:[%s149 + $0x1e8] sm:$0xff] %v272
                %v274 = vld [vmem:[%s148 + $0x3d0] sm:$0xff]
                %275 = vst [vmem:[%s149 + $0x1f0] sm:$0xff] %v274
                %v276 = vld [vmem:[%s148 + $0x3d8] sm:$0xff]
                %277 = vst [vmem:[%s149 + $0x1f8] sm:$0xff] %v276
                %v278 = vld [vmem:[%s148 + $0x400] sm:$0xff]
                %279 = vst [vmem:[%s149 + $0x200] sm:$0xff] %v278
                %v280 = vld [vmem:[%s148 + $0x408] sm:$0xff]
                %281 = vst [vmem:[%s149 + $0x208] sm:$0xff] %v280
                %v282 = vld [vmem:[%s148 + $0x410] sm:$0xff]
                %283 = vst [vmem:[%s149 + $0x210] sm:$0xff] %v282
                %v284 = vld [vmem:[%s148 + $0x418] sm:$0xff]
                %285 = vst [vmem:[%s149 + $0x218] sm:$0xff] %v284
                %v286 = vld [vmem:[%s148 + $0x440] sm:$0xff]
                %287 = vst [vmem:[%s149 + $0x220] sm:$0xff] %v286
                %v288 = vld [vmem:[%s148 + $0x448] sm:$0xff]
                %289 = vst [vmem:[%s149 + $0x228] sm:$0xff] %v288
                %v290 = vld [vmem:[%s148 + $0x450] sm:$0xff]
                %291 = vst [vmem:[%s149 + $0x230] sm:$0xff] %v290
                %v292 = vld [vmem:[%s148 + $0x458] sm:$0xff]
                %293 = vst [vmem:[%s149 + $0x238] sm:$0xff] %v292
              $region41: #{generator_forward.9} parent=35 // loop_footer
                %s147 = sadd.s32 1, %s143
              $region42: #{generator_forward.9} parent=35 // loop_footer_branch
                %142 = sbr.rel target = $region38
              $region43: #{generator_forward.9} parent=35 // loop_exit
                _
            $region36: #{generator_forward.9} parent=31 // pred_fallthru
              _
            // Predicated region
            $region44: #{generator_forward.9} parent=31 // pred_check
              _
            $region45: #{generator_forward.9} parent=31 // pred_check_branch
              %295 = sbr.rel target = $region47
            $region46: #{generator_forward.9} parent=31 // pred_region
              _
            $region47: #{generator_forward.9} parent=31 // pred_fallthru
              _
          $region32: #{generator_forward.9} parent=27 // pred_fallthru
            _
          %296 = vnop
        $region28: #{generator_forward.9} parent=23 // pred_fallthru
          _
      $region24: #{generator_forward.9} parent=5 // pred_fallthru
        _
      %p297 = scmp.le.s32.totalorder 1, %s9
      %p298 = scmp.lt.s32.totalorder %s9, 3
      %p299 = pnand %p297, %p298
      %p300 = pneg %p299
      // Predicated region
      $region48: #{generator_forward.9} parent=5 // pred_check
        _
      $region49: #{generator_forward.9} parent=5 // pred_check_branch
        %302 = sbr.rel (%p299) target = $region51
      $region50: #{generator_forward.9} parent=5 // pred_region
        %s303 = ssub.s32 %s9, 1
        %s304 = sand.u32 %s22, 1
        %s305 = sand.u32 %s22, 1
        %s306 = smul.addr %s305, 576
        %s307 = scalar_lea.vmem [#allocation2], %s306
        // Predicated region
        $region52: #{generator_forward.9} parent=50 // pred_check
          %p308 = pneg %p35
        $region53: #{generator_forward.9} parent=50 // pred_check_branch
          %310 = sbr.rel (%p308) target = $region55
        $region54: #{generator_forward.9} parent=50 // pred_region
          _
        $region55: #{generator_forward.9} parent=50 // pred_fallthru
          _
        %s311 = sand.u32 %s22, 1
        %s312 = sand.u32 %s22, 1
        %s313 = smul.addr %s312, 576
        %s314 = scalar_lea.vmem [#allocation2], %s313
        %p315 = pneg %p35
        %p316 = pneg %p32
        %p317 = pneg %p56
        %p318 = pneg %p53
        %p319 = pneg %p77
        %p320 = pneg %p74
        %p321 = pneg %p103
        %p322 = pneg %p100
        %s323 = sand.u32 %s90, 1
        %s324 = sand.u32 %s90, 1
        %s325 = smul.addr %s324, 128
        %s326 = scalar_lea.vmem [#allocation3], %s325
        %s327 = smul.u32 8, %s14
        %s328 = smul.u32 8, %s14
        %v330 = vld [vmem:[%s1] sm:$0xff]
        %v331 = vld [vmem:[%s1 + $0x8] sm:$0xff]
        %v332 = vld [vmem:[%s307] sm:$0xff]
        %v333 = vld [vmem:[%s307 + $0x8] sm:$0xff]
        %v334 = vld [vmem:[%s307 + $0x10] sm:$0xff]
        %v335 = vld [vmem:[%s307 + $0x18] sm:$0xff]
        %v336 = vld [vmem:[%s307 + $0x20] sm:$0xff]
        %v337 = vld [vmem:[%s307 + $0x28] sm:$0xff]
        %v338 = vld [vmem:[%s307 + $0x30] sm:$0xff]
        %v339 = vld [vmem:[%s307 + $0x38] sm:$0xff]
        %v340 = vld [vmem:[%s307 + $0x40] sm:$0xff]
        %v341 = vld [vmem:[%s307 + $0x48] sm:$0xff]
        %v342 = vld [vmem:[%s307 + $0x50] sm:$0xff]
        %v343 = vld [vmem:[%s307 + $0x58] sm:$0xff]
        %v344 = vld [vmem:[%s307 + $0x60] sm:$0xff]
        %v345 = vld [vmem:[%s307 + $0x68] sm:$0xff]
        %v346 = vld [vmem:[%s307 + $0x70] sm:$0xff]
        %v347 = vld [vmem:[%s307 + $0x78] sm:$0xff]
        %v348 = vld [vmem:[%s307 + $0x80] sm:$0xff]
        %v349 = vld [vmem:[%s307 + $0x88] sm:$0xff]
        %v350 = vld [vmem:[%s307 + $0x90] sm:$0xff]
        %v351 = vld [vmem:[%s307 + $0x98] sm:$0xff]
        %v352 = vld [vmem:[%s307 + $0xa0] sm:$0xff]
        %v353 = vld [vmem:[%s307 + $0xa8] sm:$0xff]
        %v354 = vld [vmem:[%s307 + $0xb0] sm:$0xff]
        %v355 = vld [vmem:[%s307 + $0xb8] sm:$0xff]
        %v356 = vld [vmem:[%s307 + $0xc0] sm:$0xff]
        %v357 = vld [vmem:[%s307 + $0xc8] sm:$0xff]
        %v358 = vld [vmem:[%s307 + $0xd0] sm:$0xff]
        %v359 = vld [vmem:[%s307 + $0xd8] sm:$0xff]
        %v360 = vld [vmem:[%s307 + $0xe0] sm:$0xff]
        %v361 = vld [vmem:[%s307 + $0xe8] sm:$0xff]
        %v362 = vld [vmem:[%s307 + $0xf0] sm:$0xff]
        %v363 = vld [vmem:[%s307 + $0xf8] sm:$0xff]
        %v364 = vld [vmem:[%s307 + $0x100] sm:$0xff]
        %v365 = vld [vmem:[%s307 + $0x108] sm:$0xff]
        %v366 = vld [vmem:[%s307 + $0x110] sm:$0xff]
        %v367 = vld [vmem:[%s307 + $0x118] sm:$0xff]
        %v368 = vld [vmem:[%s307 + $0x120] sm:$0xff]
        %v369 = vld [vmem:[%s307 + $0x128] sm:$0xff]
        %v370 = vld [vmem:[%s307 + $0x130] sm:$0xff]
        %v371 = vld [vmem:[%s307 + $0x138] sm:$0xff]
        %v372 = vld [vmem:[%s307 + $0x140] sm:$0xff]
        %v373 = vld [vmem:[%s307 + $0x148] sm:$0xff]
        %v374 = vld [vmem:[%s307 + $0x150] sm:$0xff]
        %v375 = vld [vmem:[%s307 + $0x158] sm:$0xff]
        %v376 = vld [vmem:[%s307 + $0x160] sm:$0xff]
        %v377 = vld [vmem:[%s307 + $0x168] sm:$0xff]
        %v378 = vld [vmem:[%s307 + $0x170] sm:$0xff]
        %v379 = vld [vmem:[%s307 + $0x178] sm:$0xff]
        %v380 = vld [vmem:[%s307 + $0x180] sm:$0xff]
        %v381 = vld [vmem:[%s307 + $0x188] sm:$0xff]
        %v382 = vld [vmem:[%s307 + $0x190] sm:$0xff]
        %v383 = vld [vmem:[%s307 + $0x198] sm:$0xff]
        %v384 = vld [vmem:[%s307 + $0x1a0] sm:$0xff]
        %v385 = vld [vmem:[%s307 + $0x1a8] sm:$0xff]
        %v386 = vld [vmem:[%s307 + $0x1b0] sm:$0xff]
        %v387 = vld [vmem:[%s307 + $0x1b8] sm:$0xff]
        %v388 = vld [vmem:[%s307 + $0x1c0] sm:$0xff]
        %v389 = vld [vmem:[%s307 + $0x1c8] sm:$0xff]
        %v390 = vld [vmem:[%s307 + $0x1d0] sm:$0xff]
        %v391 = vld [vmem:[%s307 + $0x1d8] sm:$0xff]
        %v392 = vld [vmem:[%s307 + $0x1e0] sm:$0xff]
        %v393 = vld [vmem:[%s307 + $0x1e8] sm:$0xff]
        %v394 = vld [vmem:[%s307 + $0x1f0] sm:$0xff]
        %v395 = vld [vmem:[%s307 + $0x1f8] sm:$0xff]
        %v396 = vld [vmem:[%s307 + $0x200] sm:$0xff]
        %v397 = vld [vmem:[%s307 + $0x208] sm:$0xff]
        %v398 = vld [vmem:[%s307 + $0x210] sm:$0xff]
        %v399 = vld [vmem:[%s307 + $0x218] sm:$0xff]
        %v400 = vld [vmem:[%s307 + $0x220] sm:$0xff]
        %v401 = vld [vmem:[%s307 + $0x228] sm:$0xff]
        %v402 = vld [vmem:[%s307 + $0x230] sm:$0xff]
        %v403 = vld [vmem:[%s307 + $0x238] sm:$0xff]
        %v404 = vld [vmem:[%s2] sm:$0xff]
        %v405 = vld [vmem:[%s2 + $0x8] sm:$0xff]
        %407 = vset.pattern.permute.xlu0 0
        %408 = vperm.xlu0 %407, %v404
        %v409 = vpop.permute.xlu0 %408
        %412 = vset.pattern.permute.xlu0 0
        %413 = vperm.xlu0 %412, %v405
        %v414 = vpop.permute.xlu0 %413
        %v418 = vunpack.c.l.b16 %v330
        %v419 = vunpack.c.h.b16 %v330
        %v420 = vunpack.c.l.b16 %v331
        %v421 = vunpack.c.h.b16 %v331
        %v422 = vpack.c.b16 %v420, %v418
        %v423 = vpack.c.b16 %v421, %v419
        %v497 = vunpack.c.l.b16 %v332
        %v498 = vunpack.c.h.b16 %v332
        %v499 = vunpack.c.l.b16 %v333
        %v500 = vunpack.c.h.b16 %v333
        %v501 = vunpack.c.l.b16 %v334
        %v502 = vunpack.c.h.b16 %v334
        %v503 = vunpack.c.l.b16 %v335
        %v504 = vunpack.c.h.b16 %v335
        %v505 = vunpack.c.l.b16 %v336
        %v506 = vunpack.c.h.b16 %v336
        %v507 = vunpack.c.l.b16 %v337
        %v508 = vunpack.c.h.b16 %v337
        %v509 = vunpack.c.l.b16 %v338
        %v510 = vunpack.c.h.b16 %v338
        %v511 = vunpack.c.l.b16 %v339
        %v512 = vunpack.c.h.b16 %v339
        %v513 = vunpack.c.l.b16 %v340
        %v514 = vunpack.c.h.b16 %v340
        %v515 = vunpack.c.l.b16 %v341
        %v516 = vunpack.c.h.b16 %v341
        %v517 = vunpack.c.l.b16 %v342
        %v518 = vunpack.c.h.b16 %v342
        %v519 = vunpack.c.l.b16 %v343
        %v520 = vunpack.c.h.b16 %v343
        %v521 = vunpack.c.l.b16 %v344
        %v522 = vunpack.c.h.b16 %v344
        %v523 = vunpack.c.l.b16 %v345
        %v524 = vunpack.c.h.b16 %v345
        %v525 = vunpack.c.l.b16 %v346
        %v526 = vunpack.c.h.b16 %v346
        %v527 = vunpack.c.l.b16 %v347
        %v528 = vunpack.c.h.b16 %v347
        %v529 = vunpack.c.l.b16 %v348
        %v530 = vunpack.c.h.b16 %v348
        %v531 = vunpack.c.l.b16 %v349
        %v532 = vunpack.c.h.b16 %v349
        %v533 = vunpack.c.l.b16 %v350
        %v534 = vunpack.c.h.b16 %v350
        %v535 = vunpack.c.l.b16 %v351
        %v536 = vunpack.c.h.b16 %v351
        %v537 = vunpack.c.l.b16 %v352
        %v538 = vunpack.c.h.b16 %v352
        %v539 = vunpack.c.l.b16 %v353
        %v540 = vunpack.c.h.b16 %v353
        %v541 = vunpack.c.l.b16 %v354
        %v542 = vunpack.c.h.b16 %v354
        %v543 = vunpack.c.l.b16 %v355
        %v544 = vunpack.c.h.b16 %v355
        %v545 = vunpack.c.l.b16 %v356
        %v546 = vunpack.c.h.b16 %v356
        %v547 = vunpack.c.l.b16 %v357
        %v548 = vunpack.c.h.b16 %v357
        %v549 = vunpack.c.l.b16 %v358
        %v550 = vunpack.c.h.b16 %v358
        %v551 = vunpack.c.l.b16 %v359
        %v552 = vunpack.c.h.b16 %v359
        %v553 = vunpack.c.l.b16 %v360
        %v554 = vunpack.c.h.b16 %v360
        %v555 = vunpack.c.l.b16 %v361
        %v556 = vunpack.c.h.b16 %v361
        %v557 = vunpack.c.l.b16 %v362
        %v558 = vunpack.c.h.b16 %v362
        %v559 = vunpack.c.l.b16 %v363
        %v560 = vunpack.c.h.b16 %v363
        %v561 = vunpack.c.l.b16 %v364
        %v562 = vunpack.c.h.b16 %v364
        %v563 = vunpack.c.l.b16 %v365
        %v564 = vunpack.c.h.b16 %v365
        %v565 = vunpack.c.l.b16 %v366
        %v566 = vunpack.c.h.b16 %v366
        %v567 = vunpack.c.l.b16 %v367
        %v568 = vunpack.c.h.b16 %v367
        %v569 = vunpack.c.l.b16 %v368
        %v570 = vunpack.c.h.b16 %v368
        %v571 = vunpack.c.l.b16 %v369
        %v572 = vunpack.c.h.b16 %v369
        %v573 = vunpack.c.l.b16 %v370
        %v574 = vunpack.c.h.b16 %v370
        %v575 = vunpack.c.l.b16 %v371
        %v576 = vunpack.c.h.b16 %v371
        %v577 = vunpack.c.l.b16 %v372
        %v578 = vunpack.c.h.b16 %v372
        %v579 = vunpack.c.l.b16 %v373
        %v580 = vunpack.c.h.b16 %v373
        %v581 = vunpack.c.l.b16 %v374
        %v582 = vunpack.c.h.b16 %v374
        %v583 = vunpack.c.l.b16 %v375
        %v584 = vunpack.c.h.b16 %v375
        %v585 = vunpack.c.l.b16 %v376
        %v586 = vunpack.c.h.b16 %v376
        %v587 = vunpack.c.l.b16 %v377
        %v588 = vunpack.c.h.b16 %v377
        %v589 = vunpack.c.l.b16 %v378
        %v590 = vunpack.c.h.b16 %v378
        %v591 = vunpack.c.l.b16 %v379
        %v592 = vunpack.c.h.b16 %v379
        %v593 = vunpack.c.l.b16 %v380
        %v594 = vunpack.c.h.b16 %v380
        %v595 = vunpack.c.l.b16 %v381
        %v596 = vunpack.c.h.b16 %v381
        %v597 = vunpack.c.l.b16 %v382
        %v598 = vunpack.c.h.b16 %v382
        %v599 = vunpack.c.l.b16 %v383
        %v600 = vunpack.c.h.b16 %v383
        %v601 = vunpack.c.l.b16 %v384
        %v602 = vunpack.c.h.b16 %v384
        %v603 = vunpack.c.l.b16 %v385
        %v604 = vunpack.c.h.b16 %v385
        %v605 = vunpack.c.l.b16 %v386
        %v606 = vunpack.c.h.b16 %v386
        %v607 = vunpack.c.l.b16 %v387
        %v608 = vunpack.c.h.b16 %v387
        %v609 = vunpack.c.l.b16 %v388
        %v610 = vunpack.c.h.b16 %v388
        %v611 = vunpack.c.l.b16 %v389
        %v612 = vunpack.c.h.b16 %v389
        %v613 = vunpack.c.l.b16 %v390
        %v614 = vunpack.c.h.b16 %v390
        %v615 = vunpack.c.l.b16 %v391
        %v616 = vunpack.c.h.b16 %v391
        %v617 = vunpack.c.l.b16 %v392
        %v618 = vunpack.c.h.b16 %v392
        %v619 = vunpack.c.l.b16 %v393
        %v620 = vunpack.c.h.b16 %v393
        %v621 = vunpack.c.l.b16 %v394
        %v622 = vunpack.c.h.b16 %v394
        %v623 = vunpack.c.l.b16 %v395
        %v624 = vunpack.c.h.b16 %v395
        %v625 = vunpack.c.l.b16 %v396
        %v626 = vunpack.c.h.b16 %v396
        %v627 = vunpack.c.l.b16 %v397
        %v628 = vunpack.c.h.b16 %v397
        %v629 = vunpack.c.l.b16 %v398
        %v630 = vunpack.c.h.b16 %v398
        %v631 = vunpack.c.l.b16 %v399
        %v632 = vunpack.c.h.b16 %v399
        %v633 = vunpack.c.l.b16 %v400
        %v634 = vunpack.c.h.b16 %v400
        %v635 = vunpack.c.l.b16 %v401
        %v636 = vunpack.c.h.b16 %v401
        %v637 = vunpack.c.l.b16 %v402
        %v638 = vunpack.c.h.b16 %v402
        %v639 = vunpack.c.l.b16 %v403
        %v640 = vunpack.c.h.b16 %v403
        %v641 = vpack.c.b16 %v505, %v497
        %v642 = vpack.c.b16 %v506, %v498
        %v643 = vpack.c.b16 %v507, %v499
        %v644 = vpack.c.b16 %v508, %v500
        %v645 = vpack.c.b16 %v509, %v501
        %v646 = vpack.c.b16 %v510, %v502
        %v647 = vpack.c.b16 %v511, %v503
        %v648 = vpack.c.b16 %v512, %v504
        %v649 = vpack.c.b16 %v521, %v513
        %v650 = vpack.c.b16 %v522, %v514
        %v651 = vpack.c.b16 %v523, %v515
        %v652 = vpack.c.b16 %v524, %v516
        %v653 = vpack.c.b16 %v525, %v517
        %v654 = vpack.c.b16 %v526, %v518
        %v655 = vpack.c.b16 %v527, %v519
        %v656 = vpack.c.b16 %v528, %v520
        %v657 = vpack.c.b16 %v537, %v529
        %v658 = vpack.c.b16 %v538, %v530
        %v659 = vpack.c.b16 %v539, %v531
        %v660 = vpack.c.b16 %v540, %v532
        %v661 = vpack.c.b16 %v541, %v533
        %v662 = vpack.c.b16 %v542, %v534
        %v663 = vpack.c.b16 %v543, %v535
        %v664 = vpack.c.b16 %v544, %v536
        %v665 = vpack.c.b16 %v553, %v545
        %v666 = vpack.c.b16 %v554, %v546
        %v667 = vpack.c.b16 %v555, %v547
        %v668 = vpack.c.b16 %v556, %v548
        %v669 = vpack.c.b16 %v557, %v549
        %v670 = vpack.c.b16 %v558, %v550
        %v671 = vpack.c.b16 %v559, %v551
        %v672 = vpack.c.b16 %v560, %v552
        %v673 = vpack.c.b16 %v569, %v561
        %v674 = vpack.c.b16 %v570, %v562
        %v675 = vpack.c.b16 %v571, %v563
        %v676 = vpack.c.b16 %v572, %v564
        %v677 = vpack.c.b16 %v573, %v565
        %v678 = vpack.c.b16 %v574, %v566
        %v679 = vpack.c.b16 %v575, %v567
        %v680 = vpack.c.b16 %v576, %v568
        %v681 = vpack.c.b16 %v585, %v577
        %v682 = vpack.c.b16 %v586, %v578
        %v683 = vpack.c.b16 %v587, %v579
        %v684 = vpack.c.b16 %v588, %v580
        %v685 = vpack.c.b16 %v589, %v581
        %v686 = vpack.c.b16 %v590, %v582
        %v687 = vpack.c.b16 %v591, %v583
        %v688 = vpack.c.b16 %v592, %v584
        %v689 = vpack.c.b16 %v601, %v593
        %v690 = vpack.c.b16 %v602, %v594
        %v691 = vpack.c.b16 %v603, %v595
        %v692 = vpack.c.b16 %v604, %v596
        %v693 = vpack.c.b16 %v605, %v597
        %v694 = vpack.c.b16 %v606, %v598
        %v695 = vpack.c.b16 %v607, %v599
        %v696 = vpack.c.b16 %v608, %v600
        %v697 = vpack.c.b16 %v617, %v609
        %v698 = vpack.c.b16 %v618, %v610
        %v699 = vpack.c.b16 %v619, %v611
        %v700 = vpack.c.b16 %v620, %v612
        %v701 = vpack.c.b16 %v621, %v613
        %v702 = vpack.c.b16 %v622, %v614
        %v703 = vpack.c.b16 %v623, %v615
        %v704 = vpack.c.b16 %v624, %v616
        %v705 = vpack.c.b16 %v633, %v625
        %v706 = vpack.c.b16 %v634, %v626
        %v707 = vpack.c.b16 %v635, %v627
        %v708 = vpack.c.b16 %v636, %v628
        %v709 = vpack.c.b16 %v637, %v629
        %v710 = vpack.c.b16 %v638, %v630
        %v711 = vpack.c.b16 %v639, %v631
        %v712 = vpack.c.b16 %v640, %v632
        %vm785 = vcmask 130048
        %v787 = vsel %vm785, %v423, 0
        %789 = vmatprep.subr.bf16.mxu0 %v642
        %790 = vmatpush1.bf16.msra.mxu0 %v641
        %791 = vmatprep.subr.bf16.mxu0 %v650
        %792 = vmatpush1.bf16.msra.mxu0 %v649
        %793 = vmatprep.subr.bf16.mxu0 %v658
        %794 = vmatpush1.bf16.msra.mxu0 %v657
        %795 = vmatprep.subr.bf16.mxu0 %v666
        %796 = vmatpush1.bf16.msra.mxu0 %v665
        %797 = vmatprep.subr.bf16.mxu0 %v674
        %798 = vmatpush1.bf16.msra.mxu0 %v673
        %799 = vmatprep.subr.bf16.mxu0 %v682
        %800 = vmatpush1.bf16.msra.mxu0 %v681
        %801 = vmatprep.subr.bf16.mxu0 %v690
        %802 = vmatpush1.bf16.msra.mxu0 %v689
        %803 = vmatprep.subr.bf16.mxu0 %v698
        %804 = vmatpush1.bf16.msra.mxu0 %v697
        %805 = vmatprep.subr.bf16.mxu0 %v706
        %806 = vmatpush1.bf16.msra.mxu0 %v705
        %807 = vmatprep.subr.bf16.mxu0 0
        %808 = vmatpush1.bf16.msra.mxu0 0
        %809 = vmatprep.subr.bf16.mxu0 0
        %810 = vmatpush1.bf16.msra.mxu0 0
        %811 = vmatprep.subr.bf16.mxu0 0
        %812 = vmatpush1.bf16.msra.mxu0 0
        %813 = vmatprep.subr.bf16.mxu0 0
        %814 = vmatpush1.bf16.msra.mxu0 0
        %815 = vmatprep.subr.bf16.mxu0 0
        %816 = vmatpush1.bf16.msra.mxu0 0
        %817 = vmatprep.subr.bf16.mxu0 0
        %818 = vmatpush1.bf16.msra.mxu0 0
        %819 = vmatprep.subr.bf16.mxu0 0
        %820 = vmatpush1.bf16.msra.mxu0 0
        %821 = vmatprep.mubr.bf16.mxu0 %v787
        %822 = vmatmul.mubr.bf16.gmra.mrb[0].mxu0 %v422
        %v823 = vpop.f32.mrb[0].mxu0
        %v824 = vadd.f32 %v409, %v823
        %v825 = vpop.f32.mrb[0].mxu0
        %v826 = vadd.f32 %v409, %v825
        %v827 = vpop.f32.mrb[0].mxu0
        %v828 = vadd.f32 %v414, %v827
        %v829 = vpop.f32.mrb[0].mxu0
        %v830 = vadd.f32 %v414, %v829
        %831 = vdwg.mxu0
        %832 = vmatprep.subr.bf16.mxu0 %v644
        %833 = vmatpush1.bf16.msra.mxu0 %v643
        %834 = vmatprep.subr.bf16.mxu0 %v652
        %835 = vmatpush1.bf16.msra.mxu0 %v651
        %836 = vmatprep.subr.bf16.mxu0 %v660
        %837 = vmatpush1.bf16.msra.mxu0 %v659
        %838 = vmatprep.subr.bf16.mxu0 %v668
        %839 = vmatpush1.bf16.msra.mxu0 %v667
        %840 = vmatprep.subr.bf16.mxu0 %v676
        %841 = vmatpush1.bf16.msra.mxu0 %v675
        %842 = vmatprep.subr.bf16.mxu0 %v684
        %843 = vmatpush1.bf16.msra.mxu0 %v683
        %844 = vmatprep.subr.bf16.mxu0 %v692
        %845 = vmatpush1.bf16.msra.mxu0 %v691
        %846 = vmatprep.subr.bf16.mxu0 %v700
        %847 = vmatpush1.bf16.msra.mxu0 %v699
        %848 = vmatprep.subr.bf16.mxu0 %v708
        %849 = vmatpush1.bf16.msra.mxu0 %v707
        %850 = vmatprep.subr.bf16.mxu0 0
        %851 = vmatpush1.bf16.msra.mxu0 0
        %852 = vmatprep.subr.bf16.mxu0 0
        %853 = vmatpush1.bf16.msra.mxu0 0
        %854 = vmatprep.subr.bf16.mxu0 0
        %855 = vmatpush1.bf16.msra.mxu0 0
        %856 = vmatprep.subr.bf16.mxu0 0
        %857 = vmatpush1.bf16.msra.mxu0 0
        %858 = vmatprep.subr.bf16.mxu0 0
        %859 = vmatpush1.bf16.msra.mxu0 0
        %860 = vmatprep.subr.bf16.mxu0 0
        %861 = vmatpush1.bf16.msra.mxu0 0
        %862 = vmatprep.subr.bf16.mxu0 0
        %863 = vmatpush1.bf16.msra.mxu0 0
        %864 = vmatprep.mubr.bf16.mxu0 %v787
        %865 = vmatmul.mubr.bf16.gmra.mrb[0].mxu0 %v422
        %v866 = vpop.f32.mrb[0].mxu0
        %v867 = vadd.f32 %v409, %v866
        %v868 = vpop.f32.mrb[0].mxu0
        %v869 = vadd.f32 %v409, %v868
        %v870 = vpop.f32.mrb[0].mxu0
        %v871 = vadd.f32 %v414, %v870
        %v872 = vpop.f32.mrb[0].mxu0
        %v873 = vadd.f32 %v414, %v872
        %874 = vdwg.mxu0
        %875 = vmatprep.subr.bf16.mxu0 %v646
        %876 = vmatpush1.bf16.msra.mxu0 %v645
        %877 = vmatprep.subr.bf16.mxu0 %v654
        %878 = vmatpush1.bf16.msra.mxu0 %v653
        %879 = vmatprep.subr.bf16.mxu0 %v662
        %880 = vmatpush1.bf16.msra.mxu0 %v661
        %881 = vmatprep.subr.bf16.mxu0 %v670
        %882 = vmatpush1.bf16.msra.mxu0 %v669
        %883 = vmatprep.subr.bf16.mxu0 %v678
        %884 = vmatpush1.bf16.msra.mxu0 %v677
        %885 = vmatprep.subr.bf16.mxu0 %v686
        %886 = vmatpush1.bf16.msra.mxu0 %v685
        %887 = vmatprep.subr.bf16.mxu0 %v694
        %888 = vmatpush1.bf16.msra.mxu0 %v693
        %889 = vmatprep.subr.bf16.mxu0 %v702
        %890 = vmatpush1.bf16.msra.mxu0 %v701
        %891 = vmatprep.subr.bf16.mxu0 %v710
        %892 = vmatpush1.bf16.msra.mxu0 %v709
        %893 = vmatprep.subr.bf16.mxu0 0
        %894 = vmatpush1.bf16.msra.mxu0 0
        %895 = vmatprep.subr.bf16.mxu0 0
        %896 = vmatpush1.bf16.msra.mxu0 0
        %897 = vmatprep.subr.bf16.mxu0 0
        %898 = vmatpush1.bf16.msra.mxu0 0
        %899 = vmatprep.subr.bf16.mxu0 0
        %900 = vmatpush1.bf16.msra.mxu0 0
        %901 = vmatprep.subr.bf16.mxu0 0
        %902 = vmatpush1.bf16.msra.mxu0 0
        %903 = vmatprep.subr.bf16.mxu0 0
        %904 = vmatpush1.bf16.msra.mxu0 0
        %905 = vmatprep.subr.bf16.mxu0 0
        %906 = vmatpush1.bf16.msra.mxu0 0
        %907 = vmatprep.mubr.bf16.mxu0 %v787
        %908 = vmatmul.mubr.bf16.gmra.mrb[0].mxu0 %v422
        %v909 = vpop.f32.mrb[0].mxu0
        %v910 = vadd.f32 %v409, %v909
        %v911 = vpop.f32.mrb[0].mxu0
        %v912 = vadd.f32 %v409, %v911
        %v913 = vpop.f32.mrb[0].mxu0
        %v914 = vadd.f32 %v414, %v913
        %v915 = vpop.f32.mrb[0].mxu0
        %v916 = vadd.f32 %v414, %v915
        %917 = vdwg.mxu0
        %918 = vmatprep.subr.bf16.mxu0 %v648
        %919 = vmatpush1.bf16.msra.mxu0 %v647
        %920 = vmatprep.subr.bf16.mxu0 %v656
        %921 = vmatpush1.bf16.msra.mxu0 %v655
        %922 = vmatprep.subr.bf16.mxu0 %v664
        %923 = vmatpush1.bf16.msra.mxu0 %v663
        %924 = vmatprep.subr.bf16.mxu0 %v672
        %925 = vmatpush1.bf16.msra.mxu0 %v671
        %926 = vmatprep.subr.bf16.mxu0 %v680
        %927 = vmatpush1.bf16.msra.mxu0 %v679
        %928 = vmatprep.subr.bf16.mxu0 %v688
        %929 = vmatpush1.bf16.msra.mxu0 %v687
        %930 = vmatprep.subr.bf16.mxu0 %v696
        %931 = vmatpush1.bf16.msra.mxu0 %v695
        %932 = vmatprep.subr.bf16.mxu0 %v704
        %933 = vmatpush1.bf16.msra.mxu0 %v703
        %934 = vmatprep.subr.bf16.mxu0 %v712
        %935 = vmatpush1.bf16.msra.mxu0 %v711
        %936 = vmatprep.subr.bf16.mxu0 0
        %937 = vmatpush1.bf16.msra.mxu0 0
        %938 = vmatprep.subr.bf16.mxu0 0
        %939 = vmatpush1.bf16.msra.mxu0 0
        %940 = vmatprep.subr.bf16.mxu0 0
        %941 = vmatpush1.bf16.msra.mxu0 0
        %942 = vmatprep.subr.bf16.mxu0 0
        %943 = vmatpush1.bf16.msra.mxu0 0
        %944 = vmatprep.subr.bf16.mxu0 0
        %945 = vmatpush1.bf16.msra.mxu0 0
        %946 = vmatprep.subr.bf16.mxu0 0
        %947 = vmatpush1.bf16.msra.mxu0 0
        %948 = vmatprep.subr.bf16.mxu0 0
        %949 = vmatpush1.bf16.msra.mxu0 0
        %950 = vmatprep.mubr.bf16.mxu0 %v787
        %951 = vmatmul.mubr.bf16.gmra.mrb[0].mxu0 %v422
        %v952 = vpop.f32.mrb[0].mxu0
        %v953 = vadd.f32 %v409, %v952
        %v954 = vpop.f32.mrb[0].mxu0
        %v955 = vadd.f32 %v409, %v954
        %v956 = vpop.f32.mrb[0].mxu0
        %v957 = vadd.f32 %v414, %v956
        %v958 = vpop.f32.mrb[0].mxu0
        %v959 = vadd.f32 %v414, %v958
        %960 = vdwg.mxu0
        %v961 = vtanh.pop %v824
        %v962 = vtanh.pop %v826
        %v963 = vtanh.pop %v867
        %v964 = vtanh.pop %v869
        %v965 = vtanh.pop %v910
        %v966 = vtanh.pop %v912
        %v967 = vtanh.pop %v953
        %v968 = vtanh.pop %v955
        %v969 = vtanh.pop %v828
        %v970 = vtanh.pop %v830
        %v971 = vtanh.pop %v871
        %v972 = vtanh.pop %v873
        %v973 = vtanh.pop %v914
        %v974 = vtanh.pop %v916
        %v975 = vtanh.pop %v957
        %v976 = vtanh.pop %v959
        %977 = vst [vmem:[%s326] sm:$0xff] %v961
        %978 = vst [vmem:[%s326 + $0x8] sm:$0xff] %v962
        %979 = vst [vmem:[%s326 + $0x10] sm:$0xff] %v963
        %980 = vst [vmem:[%s326 + $0x18] sm:$0xff] %v964
        %981 = vst [vmem:[%s326 + $0x20] sm:$0xff] %v965
        %982 = vst [vmem:[%s326 + $0x28] sm:$0xff] %v966
        %983 = vst [vmem:[%s326 + $0x30] sm:$0xff] %v967
        %984 = vst [vmem:[%s326 + $0x38] sm:$0xff] %v968
        %985 = vst [vmem:[%s326 + $0x40] sm:$0xff] %v969
        %986 = vst [vmem:[%s326 + $0x48] sm:$0xff] %v970
        %987 = vst [vmem:[%s326 + $0x50] sm:$0xff] %v971
        %988 = vst [vmem:[%s326 + $0x58] sm:$0xff] %v972
        %989 = vst [vmem:[%s326 + $0x60] sm:$0xff] %v973
        %990 = vst [vmem:[%s326 + $0x68] sm:$0xff] %v974
        %991 = vst [vmem:[%s326 + $0x70] sm:$0xff] %v975
        %992 = vst [vmem:[%s326 + $0x78] sm:$0xff] %v976
        %s993 = sand.u32 %s90, 1
        %s994 = sand.u32 %s90, 1
        %s995 = smul.addr %s994, 128
        %s996 = scalar_lea.vmem [#allocation3], %s995
        // Predicated region
        $region56: #{generator_forward.9} parent=50 // pred_check
          %p997 = pneg %p100
        $region57: #{generator_forward.9} parent=50 // pred_check_branch
          %999 = sbr.rel (%p997) target = $region59
        $region58: #{generator_forward.9} parent=50 // pred_region
          %s1000 = smul.u32 8, %s14
          %s1001 = smul.addr %s1000, 8
          %s1002 = scalar_lea.vmem %s3, %s1001
          // Predicated region
          $region60: #{generator_forward.9} parent=58 // pred_check
            _
          $region61: #{generator_forward.9} parent=58 // pred_check_branch
            %1004 = sbr.rel (0) target = $region63
          $region62: #{generator_forward.9} parent=58 // pred_region
            // Predicated region
            $region64: #{generator_forward.9} parent=62 // pred_check
              _
            $region65: #{generator_forward.9} parent=62 // pred_check_branch
              %1006 = sbr.rel (0) target = $region67
            $region66: #{generator_forward.9} parent=62 // pred_region
              loop: start=0, step=1, limit=1
              $region68: #{generator_forward.9} parent=66 // loop_pre_header
                _
              $region69: #{generator_forward.9} parent=66 // loop_header
                %s1008 = sphi 0, %s1012
                %p1009 = scmp.ge.s32.totalorder %s1008, 1
                %s1013 = sphi %s996, %s996
                %s1014 = sphi %s1002, %s1002
              $region70: #{generator_forward.9} parent=66 // loop_header_branch
                %1011 = sbr.rel (%p1009) target = $region74
              $region71: #{generator_forward.9} parent=66 // loop_body
                %v1015 = vld [vmem:[%s1013] sm:$0xff]
                %1016 = vst [vmem:[%s1014] sm:$0xff] %v1015
                %v1017 = vld [vmem:[%s1013 + $0x8] sm:$0xff]
                %1018 = vst [vmem:[%s1014 + $0x8] sm:$0xff] %v1017
                %v1019 = vld [vmem:[%s1013 + $0x10] sm:$0xff]
                %1020 = vst [vmem:[%s1014 + $0x10] sm:$0xff] %v1019
                %v1021 = vld [vmem:[%s1013 + $0x18] sm:$0xff]
                %1022 = vst [vmem:[%s1014 + $0x18] sm:$0xff] %v1021
                %v1023 = vld [vmem:[%s1013 + $0x20] sm:$0xff]
                %1024 = vst [vmem:[%s1014 + $0x20] sm:$0xff] %v1023
                %v1025 = vld [vmem:[%s1013 + $0x28] sm:$0xff]
                %1026 = vst [vmem:[%s1014 + $0x28] sm:$0xff] %v1025
                %v1027 = vld [vmem:[%s1013 + $0x30] sm:$0xff]
                %1028 = vst [vmem:[%s1014 + $0x30] sm:$0xff] %v1027
                %v1029 = vld [vmem:[%s1013 + $0x38] sm:$0xff]
                %1030 = vst [vmem:[%s1014 + $0x38] sm:$0xff] %v1029
                %v1031 = vld [vmem:[%s1013 + $0x40] sm:$0xff]
                %1032 = vst [vmem:[%s1014 + $0x80] sm:$0xff] %v1031
                %v1033 = vld [vmem:[%s1013 + $0x48] sm:$0xff]
                %1034 = vst [vmem:[%s1014 + $0x88] sm:$0xff] %v1033
                %v1035 = vld [vmem:[%s1013 + $0x50] sm:$0xff]
                %1036 = vst [vmem:[%s1014 + $0x90] sm:$0xff] %v1035
                %v1037 = vld [vmem:[%s1013 + $0x58] sm:$0xff]
                %1038 = vst [vmem:[%s1014 + $0x98] sm:$0xff] %v1037
                %v1039 = vld [vmem:[%s1013 + $0x60] sm:$0xff]
                %1040 = vst [vmem:[%s1014 + $0xa0] sm:$0xff] %v1039
                %v1041 = vld [vmem:[%s1013 + $0x68] sm:$0xff]
                %1042 = vst [vmem:[%s1014 + $0xa8] sm:$0xff] %v1041
                %v1043 = vld [vmem:[%s1013 + $0x70] sm:$0xff]
                %1044 = vst [vmem:[%s1014 + $0xb0] sm:$0xff] %v1043
                %v1045 = vld [vmem:[%s1013 + $0x78] sm:$0xff]
                %1046 = vst [vmem:[%s1014 + $0xb8] sm:$0xff] %v1045
              $region72: #{generator_forward.9} parent=66 // loop_footer
                %s1012 = sadd.s32 1, %s1008
              $region73: #{generator_forward.9} parent=66 // loop_footer_branch
                %1007 = sbr.rel target = $region69
              $region74: #{generator_forward.9} parent=66 // loop_exit
                _
            $region67: #{generator_forward.9} parent=62 // pred_fallthru
              _
            // Predicated region
            $region75: #{generator_forward.9} parent=62 // pred_check
              _
            $region76: #{generator_forward.9} parent=62 // pred_check_branch
              %1048 = sbr.rel target = $region78
            $region77: #{generator_forward.9} parent=62 // pred_region
              _
            $region78: #{generator_forward.9} parent=62 // pred_fallthru
              _
          $region63: #{generator_forward.9} parent=58 // pred_fallthru
            _
          %1049 = vnop
        $region59: #{generator_forward.9} parent=50 // pred_fallthru
          _
      $region51: #{generator_forward.9} parent=5 // pred_fallthru
        _
      %p1050 = scmp.le.s32.totalorder 2, %s9
      // Predicated region
      $region79: #{generator_forward.9} parent=5 // pred_check
        %p1051 = pneg %p1050
      $region80: #{generator_forward.9} parent=5 // pred_check_branch
        %1053 = sbr.rel (%p1051) target = $region82
      $region81: #{generator_forward.9} parent=5 // pred_region
        %s1054 = ssub.s32 %s9, 2
        // Predicated region
        $region83: #{generator_forward.9} parent=81 // pred_check
          %p1055 = pneg %p106
        $region84: #{generator_forward.9} parent=81 // pred_check_branch
          %1057 = sbr.rel (%p1055) target = $region86
        $region85: #{generator_forward.9} parent=81 // pred_region
          %s1058 = sand.u32 %s91, 1
          %s1059 = sand.u32 %s91, 1
          %s1060 = smul.addr %s1059, 128
          %s1061 = scalar_lea.vmem [#allocation3], %s1060
        $region86: #{generator_forward.9} parent=81 // pred_fallthru
          _
      $region82: #{generator_forward.9} parent=5 // pred_fallthru
        _
    $region6: #{generator_forward.9} parent=1 // loop_footer
      %s13 = sadd.s32 1, %s9
    $region7: #{generator_forward.9} parent=1 // loop_footer_branch
      %8 = sbr.rel target = $region3
    $region8: #{generator_forward.9} parent=1 // loop_exit
      _

</llo_original>
